<compile_context>
chip_gen: v7x
topology: tpu7x:2x2x1
jax: 0.10.0
libtpu: 0.0.40
codegen_flags: <defaults>
</compile_context>

<pallas_src>
import functools

import jax
import jax.numpy as jnp
import numpy as np
from jax import lax
from jax.experimental import pallas as pl
from jax.experimental.pallas import tpu as pltpu

BN_EPS = 1e-5
WIN = 2                                  # win_size (required by F.fold(kernel_size=2, stride=2))
ASPP_DILS = (2, 4, 6)                    # conv2 / conv3 / conv4 dilations (= their paddings)


def _vmem_limit_bytes():
    """<= 3/4 of physical VMEM (48 MiB on v7x, ~96 MiB on v5e/v6e), robust fallback."""
    try:
        cap = pltpu.get_tpu_info().vmem_capacity_bytes
    except Exception:
        cap = 64 * 1024 * 1024
    return int(min(cap * 3 // 4, 100 * 1024 * 1024))


# ------------------------------ layout helpers (tiny, XLA) ------------------------------ #

def space_to_depth(x):          # == nn.Unfold(k=2, s=2) + view, NHWC, channel = c*4 + ky*2 + kx
    b, h, w, c = x.shape
    x = x.reshape(b, h // 2, 2, w // 2, 2, c)
    x = jnp.transpose(x, (0, 1, 3, 5, 2, 4))             # (b, i, j, c, ky, kx)
    return x.reshape(b, h // 2, w // 2, c * 4)


def depth_to_space(x):          # == F.fold(k=2, s=2), NHWC, same channel convention
    b, hf, wf, c4 = x.shape
    c = c4 // 4
    x = x.reshape(b, hf, wf, c, 2, 2)
    x = jnp.transpose(x, (0, 1, 4, 2, 5, 3))             # (b, i, ky, j, kx, c)
    return x.reshape(b, hf * 2, wf * 2, c)


# ------------------------------------ Pallas kernel ------------------------------------- #

def _fold_aspp_fused_kernel(x_ref, wd_ref, sd_ref, w1_ref, s1_ref, wA_ref, sA_ref,
                            w5_ref, s5_ref, wf14_ref, wf5_ref, sf_ref, wu_ref, bu_ref,
                            o_ref, pad_ref, *, hf, wf, halo, dils):
    """Whole FoldConv_aspp_with_gap forward for one image, in folded (Hf, Wf, fold_C) layout."""
    fold_c = o_ref.shape[-1]
    dd = w1_ref.shape[-1]
    npix = hf * wf

    # 1) down_conv 3x3 (pad 1) + BN + ReLU, expressed directly in folded space:
    #    one im2col (npix, 9*4*Cin) x (9*4*Cin, fold_C) MXU matmul.
    xs = x_ref[0]                                                    # (hf+2, wf+2, 4*Cin) bf16
    cols = [xs[ty:ty + hf, tx:tx + wf, :] for ty in range(3) for tx in range(3)]
    patches = jnp.concatenate(cols, axis=-1).reshape(npix, wd_ref.shape[0])
    d = jnp.dot(patches, wd_ref[...], preferred_element_type=jnp.float32)
    d = jnp.maximum(d + sd_ref[...], 0.0)
    d_bf = d.astype(jnp.bfloat16)                                    # folded feature (npix, fold_C)

    # 2) stash it zero-padded in VMEM so the dilated branches read their halos locally.
    pad_ref[...] = jnp.zeros(pad_ref.shape, pad_ref.dtype)
    pad_ref[pl.ds(halo, hf), pl.ds(halo, wf), :] = d_bf.reshape(hf, wf, fold_c)

    # 3) GAP branch (conv5): bilinear upsample of a 1x1 map is an exact constant broadcast,
    #    so its fuse contribution collapses into a per-image fuse shift.
    g = jnp.mean(d_bf.astype(jnp.float32), axis=0, keepdims=True)    # (1, fold_C)
    c5 = jnp.maximum(jnp.dot(g.astype(jnp.bfloat16), w5_ref[...],
                             preferred_element_type=jnp.float32) + s5_ref[...], 0.0)
    fuse_shift = sf_ref[...] + jnp.dot(c5.astype(jnp.bfloat16), wf5_ref[...],
                                       preferred_element_type=jnp.float32)   # (1, fold_C)

    # 4) conv1 (1x1) + BN + ReLU
    c1 = jnp.maximum(jnp.dot(d_bf, w1_ref[...], preferred_element_type=jnp.float32)
                     + s1_ref[...], 0.0).astype(jnp.bfloat16)

    # 5) conv2/3/4 (3x3, dilation 2/4/6): per-tap K=fold_C matmuls accumulated in f32
    #    (for fold_C <= 128 this beats the deep-K im2col concat; switch to im2col at C >= 256).
    def dil_branch(bi):
        dil = dils[bi]
        acc = jnp.zeros((npix, dd), jnp.float32)
        for t in range(9):
            ky, kx = t // 3, t % 3
            win = pad_ref[pl.ds(halo + (ky - 1) * dil, hf),
                          pl.ds(halo + (kx - 1) * dil, wf), :]
            acc += jnp.dot(win.reshape(npix, fold_c), wA_ref[bi, t],
                           preferred_element_type=jnp.float32)
        return jnp.maximum(acc + sA_ref[bi], 0.0).astype(jnp.bfloat16)

    c2, c3, c4 = dil_branch(0), dil_branch(1), dil_branch(2)

    # 6) fuse 1x1: single K = 4*down_dim matmul over the VMEM-resident branches
    #    (GAP branch already folded into fuse_shift).
    cat = jnp.concatenate([c1, c2, c3, c4], axis=-1)                 # (npix, 4*dd) bf16
    fused = jnp.dot(cat, wf14_ref[...], preferred_element_type=jnp.float32)
    fused = jnp.maximum(fused + fuse_shift, 0.0)                     # (npix, fold_C) f32

    # 7) up_conv 1x1 (+bias) on the folded layout: block-diagonal (fold_C, fold_C) matmul.
    out = jnp.dot(fused.astype(jnp.bfloat16), wu_ref[...],
                  preferred_element_type=jnp.float32) + bu_ref[...]
    o_ref[0] = out.reshape(hf, wf, fold_c).astype(o_ref.dtype)       # lane-dense 128-wide store


def _run_fused_kernel(xf_pad, kp, *, hf, wf, halo):
    b, hp, wp, cinf = xf_pad.shape
    fold_c = kp["wu"].shape[-1]
    dd = kp["w1"].shape[-1]

    kern = functools.partial(_fold_aspp_fused_kernel,
                             hf=hf, wf=wf, halo=halo, dils=ASPP_DILS)
    c2 = lambda i: (0, 0)
    c3 = lambda i: (0, 0, 0)
    c4 = lambda i: (0, 0, 0, 0)
    return pl.pallas_call(
        kern,
        out_shape=jax.ShapeDtypeStruct((b, hf, wf, fold_c), jnp.float32),
        grid=(b,),
        in_specs=[
            pl.BlockSpec((1, hp, wp, cinf), lambda i: (i, 0, 0, 0)),      # folded, padded input
            pl.BlockSpec((9 * cinf, fold_c), c2), pl.BlockSpec((1, fold_c), c2),   # down conv
            pl.BlockSpec((fold_c, dd), c2),       pl.BlockSpec((1, dd), c2),       # conv1
            pl.BlockSpec((3, 9, fold_c, dd), c4), pl.BlockSpec((3, 1, dd), c3),    # conv2/3/4
            pl.BlockSpec((fold_c, dd), c2),       pl.BlockSpec((1, dd), c2),       # conv5
            pl.BlockSpec((4 * dd, fold_c), c2),   pl.BlockSpec((dd, fold_c), c2),  # fuse (1..4 / 5)
            pl.BlockSpec((1, fold_c), c2),                                         # fuse shift
            pl.BlockSpec((fold_c, fold_c), c2),   pl.BlockSpec((1, fold_c), c2),   # up conv
        ],
        out_specs=pl.BlockSpec((1, hf, wf, fold_c), lambda i: (i, 0, 0, 0)),
        scratch_shapes=[pltpu.VMEM((hf + 2 * halo, wf + 2 * halo, fold_c), jnp.bfloat16)],
        compiler_params=pltpu.CompilerParams(
            dimension_semantics=("parallel",),           # one image per TensorCore on v7x megacore
            vmem_limit_bytes=_vmem_limit_bytes()),
    )(xf_pad, kp["down_wf"], kp["down_s"], kp["w1"], kp["s1"], kp["wA"], kp["sA"],
      kp["w5"], kp["s5"], kp["wf14"], kp["wf5"], kp["sf"], kp["wu"], kp["bu"])


# ------------------------------------- parameters -------------------------------------- #

def _make_conv_bn(key, kh, kw, cin, cout):
    ks = jax.random.split(key, 6)
    return {
        "w": 0.1 * jax.random.normal(ks[0], (kh, kw, cin, cout), jnp.float32),  # HWIO
        "b": 0.05 * jax.random.normal(ks[1], (cout,), jnp.float32),
        "gamma": 1.0 + 0.05 * jax.random.normal(ks[2], (cout,), jnp.float32),
        "beta": 0.05 * jax.random.normal(ks[3], (cout,), jnp.float32),
        "mean": 0.05 * jax.random.normal(ks[4], (cout,), jnp.float32),
        "var": 0.5 + jax.random.uniform(ks[5], (cout,), jnp.float32),
    }


def init_params(key, in_channel, out_channel):
    fold_c = out_channel * WIN * WIN
    down_dim = fold_c // 2
    ks = jax.random.split(key, 9)
    return {
        "down":  _make_conv_bn(ks[0], 3, 3, in_channel, out_channel),
        "conv1": _make_conv_bn(ks[1], 1, 1, fold_c, down_dim),
        "conv2": _make_conv_bn(ks[2], 3, 3, fold_c, down_dim),
        "conv3": _make_conv_bn(ks[3], 3, 3, fold_c, down_dim),
        "conv4": _make_conv_bn(ks[4], 3, 3, fold_c, down_dim),
        "conv5": _make_conv_bn(ks[5], 1, 1, fold_c, down_dim),
        "fuse":  _make_conv_bn(ks[6], 1, 1, 5 * down_dim, fold_c),
        "up_w":  0.1 * jax.random.normal(ks[7], (1, 1, out_channel, out_channel), jnp.float32),
        "up_b":  0.05 * jax.random.normal(ks[8], (out_channel,), jnp.float32),
    }


def _fold_bn_into_w(p):
    """Fold conv bias + inference BN into bf16 scaled weights + f32 shift."""
    scale = p["gamma"] * lax.rsqrt(p["var"] + BN_EPS)
    w = (p["w"] * scale).astype(jnp.bfloat16)             # HWIO: scale on Cout (last dim)
    shift = (p["beta"] + (p["b"] - p["mean"]) * scale).astype(jnp.float32)
    return w, shift


def prepare_params(raw):
    prep = {}
    for name in ("down", "conv1", "conv2", "conv3", "conv4", "conv5", "fuse"):
        w, s = _fold_bn_into_w(raw[name])
        prep[name + "_w"], prep[name + "_s"] = w, s
    prep["up_w"] = raw["up_w"].astype(jnp.bfloat16)
    prep["up_b"] = raw["up_b"].astype(jnp.float32)
    return prep


def _down_weight_to_folded_space(w_hwio):
    """Rewrite a stride-1 pad-1 3x3 conv weight (3,3,Cin,Cout) as an exactly-equivalent 3x3 pad-1
    conv weight (3,3,4*Cin,4*Cout) acting on the 2x2 space-to-depth'ed feature
    (channel convention: c*4 + ky*2 + kx)."""
    w = np.asarray(jnp.asarray(w_hwio, jnp.float32))
    cin, cout = w.shape[2], w.shape[3]
    wf = np.zeros((3, 3, 4 * cin, 4 * cout), np.float32)
    for ky in range(2):
        for kx in range(2):
            for ty in range(3):
                for tx in range(3):
                    ay, ax = ky + ty - 1, kx + tx - 1
                    dy, sy = ay // 2, ay % 2               # folded-grid offset / input sub-pos
                    dx, sx = ax // 2, ax % 2
                    wf[dy + 1, dx + 1, (sy * 2 + sx)::4, (ky * 2 + kx)::4] += w[ty, tx]
    return wf


def kernel_params(prep):
    """Build the kernel-ready (reshaped / folded) weight views from the BN-folded params."""
    fold_c = prep["fuse_w"].shape[-1]
    dd = prep["conv1_w"].shape[-1]
    out_ch = fold_c // 4

    wdf = _down_weight_to_folded_space(prep["down_w"])            # (3,3,4*Cin,fold_C) f32
    wfuse = prep["fuse_w"].reshape(5 * dd, fold_c)
    wu2 = prep["up_w"].reshape(out_ch, out_ch).astype(jnp.float32)
    return {
        "down_wf": jnp.asarray(wdf.reshape(-1, fold_c), jnp.bfloat16),      # (9*4*Cin, fold_C)
        "down_s": jnp.repeat(prep["down_s"], 4).reshape(1, fold_c),
        "w1": prep["conv1_w"].reshape(fold_c, dd),
        "s1": prep["conv1_s"].reshape(1, dd),
        "wA": jnp.stack([prep[f"conv{i}_w"].reshape(9, fold_c, dd) for i in (2, 3, 4)]),
        "sA": jnp.stack([prep[f"conv{i}_s"].reshape(1, dd) for i in (2, 3, 4)]),
        "w5": prep["conv5_w"].reshape(fold_c, dd),
        "s5": prep["conv5_s"].reshape(1, dd),
        "wf14": wfuse[:4 * dd],                                             # fuse cols for c1..c4
        "wf5": wfuse[4 * dd:],                                              # fuse cols for GAP br.
        "sf": prep["fuse_s"].reshape(1, fold_c),
        "wu": jnp.kron(wu2, jnp.eye(4, dtype=jnp.float32)).astype(jnp.bfloat16),  # block-diag up_conv
        "bu": jnp.repeat(prep["up_b"], 4).reshape(1, fold_c),
    }


# -------------------------------------- forward ----------------------------------------- #

def fold_conv_aspp_pallas(x_nchw, kp):
    b, _, h, w = x_nchw.shape
    assert h % 2 == 0 and w % 2 == 0, "unfold/F.fold(k=2, s=2) need even H, W"
    hf, wf = h // 2, w // 2
    halo = max(ASPP_DILS)

    x = jnp.transpose(x_nchw, (0, 2, 3, 1)).astype(jnp.bfloat16)      # NCHW -> NHWC
    xf_in = space_to_depth(x)                                         # (B, Hf, Wf, 4*Cin)
    xf_pad = jnp.pad(xf_in, ((0, 0), (1, 1), (1, 1), (0, 0)))         # halo 1 for folded down conv

    out_folded = _run_fused_kernel(xf_pad, kp, hf=hf, wf=wf, halo=halo)   # (B,Hf,Wf,fold_C) f32
    y = depth_to_space(out_folded)                                    # (B, H, W, out_ch) f32
    return jnp.transpose(y, (0, 3, 1, 2))                             # NHWC -> NCHW


# --------------------------------- pure-JAX reference ----------------------------------- #

def _conv_bn_relu_ref(x_bf16, w_hwio_bf16, shift, dil, pad):
    y = lax.conv_general_dilated(
        x_bf16, w_hwio_bf16, (1, 1), [(pad, pad), (pad, pad)],
        rhs_dilation=(dil, dil),
        dimension_numbers=("NHWC", "HWIO", "NHWC"),
        preferred_element_type=jnp.float32)
    return jnp.maximum(y + shift, 0.0)


def fold_conv_aspp_ref(x_nchw, prep):
    x = jnp.transpose(x_nchw, (0, 2, 3, 1)).astype(jnp.bfloat16)
    b = x.shape[0]
    dd = prep["conv1_w"].shape[-1]

    xd = _conv_bn_relu_ref(x, prep["down_w"], prep["down_s"], 1, 1).astype(jnp.bfloat16)
    xf = space_to_depth(xd)
    hf, wf_w = xf.shape[1], xf.shape[2]

    c1 = _conv_bn_relu_ref(xf, prep["conv1_w"], prep["conv1_s"], 1, 0)
    c2 = _conv_bn_relu_ref(xf, prep["conv2_w"], prep["conv2_s"], ASPP_DILS[0], ASPP_DILS[0])
    c3 = _conv_bn_relu_ref(xf, prep["conv3_w"], prep["conv3_s"], ASPP_DILS[1], ASPP_DILS[1])
    c4 = _conv_bn_relu_ref(xf, prep["conv4_w"], prep["conv4_s"], ASPP_DILS[2], ASPP_DILS[2])

    g = jnp.mean(xf.astype(jnp.float32), axis=(1, 2), keepdims=True)      # (B,1,1,fold_C)
    c5 = _conv_bn_relu_ref(g.astype(jnp.bfloat16), prep["conv5_w"], prep["conv5_s"], 1, 0)
    c5 = jnp.broadcast_to(c5, (b, hf, wf_w, dd))    # bilinear upsample of 1x1 == const broadcast

    cat = jnp.concatenate([c1, c2, c3, c4, c5], axis=-1).astype(jnp.bfloat16)
    fused = _conv_bn_relu_ref(cat, prep["fuse_w"], prep["fuse_s"], 1, 0).astype(jnp.bfloat16)

    y = depth_to_space(fused)
    out = lax.conv_general_dilated(
        y, prep["up_w"], (1, 1), [(0, 0), (0, 0)],
        dimension_numbers=("NHWC", "HWIO", "NHWC"),
        preferred_element_type=jnp.float32) + prep["up_b"]
    return jnp.transpose(out, (0, 3, 1, 2))


# ----------------------------------------- main ----------------------------------------- #

if __name__ == "__main__":
    # in_channel=4; out_channel=32 -> fold_C = 128 (lane-dense), down_dim = 64; 16x16 spatial
    # -> folded 8x8 (npix = 64 rows per image, one image per grid step / TensorCore).
    B, IN_CH, H, W = 2, 4, 16, 16
    OUT_CH = 32

    key = jax.random.PRNGKey(0)
    kx_, kp_ = jax.random.split(key)
    x = jax.random.normal(kx_, (B, IN_CH, H, W), jnp.float32)        # PyTorch NCHW input
    raw = init_params(kp_, IN_CH, OUT_CH)
    prep = prepare_params(raw)
    kp = kernel_params(prep)

    fwd = jax.jit(fold_conv_aspp_pallas)
    out = jax.block_until_ready(fwd(x, kp))
    ref = jax.block_until_ready(fold_conv_aspp_ref(x, prep))

    assert out.shape == (B, OUT_CH, H, W), out.shape
    # Both paths use identical bf16-rounded weights/activations with f32 accumulation, so the
    # residual mismatch is only summation-order noise; keep a loose tolerance anyway.
    np.testing.assert_allclose(np.asarray(out), np.asarray(ref), rtol=2e-2, atol=2e-2)
    print("KERNEL_OK")
</pallas_src>

<mosaic_0001>
module attributes {stable_mosaic.version = 11 : i64} {
  func.func @_fold_aspp_fused_kernel(%arg0: i32, %arg1: memref<1x10x10x16xbf16, #tpu.memory_space<vmem>>, %arg2: memref<144x128xbf16, #tpu.memory_space<vmem>>, %arg3: memref<1x128xf32, #tpu.memory_space<vmem>>, %arg4: memref<128x64xbf16, #tpu.memory_space<vmem>>, %arg5: memref<1x64xf32, #tpu.memory_space<vmem>>, %arg6: memref<3x9x128x64xbf16, #tpu.memory_space<vmem>>, %arg7: memref<3x1x64xf32, #tpu.memory_space<vmem>>, %arg8: memref<128x64xbf16, #tpu.memory_space<vmem>>, %arg9: memref<1x64xf32, #tpu.memory_space<vmem>>, %arg10: memref<256x128xbf16, #tpu.memory_space<vmem>>, %arg11: memref<64x128xbf16, #tpu.memory_space<vmem>>, %arg12: memref<1x128xf32, #tpu.memory_space<vmem>>, %arg13: memref<128x128xbf16, #tpu.memory_space<vmem>>, %arg14: memref<1x128xf32, #tpu.memory_space<vmem>>, %arg15: memref<1x8x8x128xf32, #tpu.memory_space<vmem>>, %arg16: memref<20x20x128xbf16, #tpu.memory_space<vmem>>) attributes {dimension_semantics = [#tpu.dimension_semantics<parallel>], iteration_bounds = array<i64: 2>, scalar_prefetch = 0 : i64, scratch_operands = 1 : i64, tpu.core_type = #tpu.core_type<tc>, window_params = [{transform_indices = @transform_0, window_bounds = array<i64: 1, 10, 10, 16>}, {pipeline_mode = #tpu.pipeline_mode<synchronous>, transform_indices = @transform_1, window_bounds = array<i64: 144, 128>}, {pipeline_mode = #tpu.pipeline_mode<synchronous>, transform_indices = @transform_2, window_bounds = array<i64: 1, 128>}, {pipeline_mode = #tpu.pipeline_mode<synchronous>, transform_indices = @transform_3, window_bounds = array<i64: 128, 64>}, {pipeline_mode = #tpu.pipeline_mode<synchronous>, transform_indices = @transform_4, window_bounds = array<i64: 1, 64>}, {pipeline_mode = #tpu.pipeline_mode<synchronous>, transform_indices = @transform_5, window_bounds = array<i64: 3, 9, 128, 64>}, {pipeline_mode = #tpu.pipeline_mode<synchronous>, transform_indices = @transform_6, window_bounds = array<i64: 3, 1, 64>}, {pipeline_mode = #tpu.pipeline_mode<synchronous>, transform_indices = @transform_7, window_bounds = array<i64: 128, 64>}, {pipeline_mode = #tpu.pipeline_mode<synchronous>, transform_indices = @transform_8, window_bounds = array<i64: 1, 64>}, {pipeline_mode = #tpu.pipeline_mode<synchronous>, transform_indices = @transform_9, window_bounds = array<i64: 256, 128>}, {pipeline_mode = #tpu.pipeline_mode<synchronous>, transform_indices = @transform_10, window_bounds = array<i64: 64, 128>}, {pipeline_mode = #tpu.pipeline_mode<synchronous>, transform_indices = @transform_11, window_bounds = array<i64: 1, 128>}, {pipeline_mode = #tpu.pipeline_mode<synchronous>, transform_indices = @transform_12, window_bounds = array<i64: 128, 128>}, {pipeline_mode = #tpu.pipeline_mode<synchronous>, transform_indices = @transform_13, window_bounds = array<i64: 1, 128>}, {transform_indices = @transform_14, window_bounds = array<i64: 1, 8, 8, 128>}]} {
    %c0 = arith.constant 0 : index
    %c0_0 = arith.constant 0 : index
    %c0_1 = arith.constant 0 : index
    %c0_2 = arith.constant 0 : index
    %0 = vector.load %arg1[%c0, %c0_0, %c0_1, %c0_2] : memref<1x10x10x16xbf16, #tpu.memory_space<vmem>>, vector<1x10x10x16xbf16>
    %1 = vector.shape_cast %0 : vector<1x10x10x16xbf16> to vector<10x10x16xbf16>
    %2 = vector.extract_strided_slice %1 {offsets = [0, 0, 0], sizes = [8, 8, 16], strides = [1, 1, 1]} : vector<10x10x16xbf16> to vector<8x8x16xbf16>
    %3 = vector.extract_strided_slice %1 {offsets = [0, 1, 0], sizes = [8, 8, 16], strides = [1, 1, 1]} : vector<10x10x16xbf16> to vector<8x8x16xbf16>
    %4 = vector.extract_strided_slice %1 {offsets = [0, 2, 0], sizes = [8, 8, 16], strides = [1, 1, 1]} : vector<10x10x16xbf16> to vector<8x8x16xbf16>
    %5 = vector.extract_strided_slice %1 {offsets = [1, 0, 0], sizes = [8, 8, 16], strides = [1, 1, 1]} : vector<10x10x16xbf16> to vector<8x8x16xbf16>
    %6 = vector.extract_strided_slice %1 {offsets = [1, 1, 0], sizes = [8, 8, 16], strides = [1, 1, 1]} : vector<10x10x16xbf16> to vector<8x8x16xbf16>
    %7 = vector.extract_strided_slice %1 {offsets = [1, 2, 0], sizes = [8, 8, 16], strides = [1, 1, 1]} : vector<10x10x16xbf16> to vector<8x8x16xbf16>
    %8 = vector.extract_strided_slice %1 {offsets = [2, 0, 0], sizes = [8, 8, 16], strides = [1, 1, 1]} : vector<10x10x16xbf16> to vector<8x8x16xbf16>
    %9 = vector.extract_strided_slice %1 {offsets = [2, 1, 0], sizes = [8, 8, 16], strides = [1, 1, 1]} : vector<10x10x16xbf16> to vector<8x8x16xbf16>
    %10 = vector.extract_strided_slice %1 {offsets = [2, 2, 0], sizes = [8, 8, 16], strides = [1, 1, 1]} : vector<10x10x16xbf16> to vector<8x8x16xbf16>
    %11 = tpu.concatenate %2, %3, %4, %5, %6, %7, %8, %9, %10 in 2 : vector<8x8x16xbf16>, vector<8x8x16xbf16>, vector<8x8x16xbf16>, vector<8x8x16xbf16>, vector<8x8x16xbf16>, vector<8x8x16xbf16>, vector<8x8x16xbf16>, vector<8x8x16xbf16>, vector<8x8x16xbf16> -> vector<8x8x144xbf16>
    %12 = vector.shape_cast %11 : vector<8x8x144xbf16> to vector<64x144xbf16>
    %c0_3 = arith.constant 0 : index
    %c0_4 = arith.constant 0 : index
    %13 = vector.load %arg2[%c0_3, %c0_4] : memref<144x128xbf16, #tpu.memory_space<vmem>>, vector<144x128xbf16>
    %cst = arith.constant dense<0.000000e+00> : vector<64x128xf32>
    %14 = tpu.matmul %12, %13, %cst {dimension_numbers = #tpu.dot_dimension_numbers<[1], [0], [0], [1], [0, 0, 1, 1], [], []>} : vector<64x144xbf16>, vector<144x128xbf16>, vector<64x128xf32> -> vector<64x128xf32>
    %c0_5 = arith.constant 0 : index
    %c0_6 = arith.constant 0 : index
    %15 = vector.load %arg3[%c0_5, %c0_6] : memref<1x128xf32, #tpu.memory_space<vmem>>, vector<1x128xf32>
    %16 = vector.broadcast %15 : vector<1x128xf32> to vector<64x128xf32>
    %17 = arith.addf %14, %16 : vector<64x128xf32>
    %cst_7 = arith.constant 0.000000e+00 : f32
    %18 = vector.broadcast %cst_7 : f32 to vector<64x128xf32>
    %19 = arith.maximumf %17, %18 : vector<64x128xf32>
    %20 = arith.truncf %19 : vector<64x128xf32> to vector<64x128xbf16>
    %cst_8 = arith.constant 0.000000e+00 : bf16
    %21 = vector.broadcast %cst_8 : bf16 to vector<20x20x128xbf16>
    %c0_9 = arith.constant 0 : index
    %c0_10 = arith.constant 0 : index
    %c0_11 = arith.constant 0 : index
    %22 = vector.load %arg16[%c0_9, %c0_10, %c0_11] : memref<20x20x128xbf16, #tpu.memory_space<vmem>>, vector<20x20x128xbf16>
    tpu.vector_store %arg16[%c0_9, %c0_10, %c0_11], %21 {strides = array<i32>} : memref<20x20x128xbf16, #tpu.memory_space<vmem>>, vector<20x20x128xbf16>,
    %23 = vector.shape_cast %20 : vector<64x128xbf16> to vector<8x8x128xbf16>
    %c6 = arith.constant 6 : index
    %c6_12 = arith.constant 6 : index
    %c0_13 = arith.constant 0 : index
    %24 = vector.load %arg16[%c6, %c6_12, %c0_13] : memref<20x20x128xbf16, #tpu.memory_space<vmem>>, vector<8x8x128xbf16>
    tpu.vector_store %arg16[%c6, %c6_12, %c0_13], %23 {strides = array<i32>} : memref<20x20x128xbf16, #tpu.memory_space<vmem>>, vector<8x8x128xbf16>,
    %25 = arith.extf %20 : vector<64x128xbf16> to vector<64x128xf32>
    %cst_14 = arith.constant dense<0.000000e+00> : vector<128xf32>
    %26 = vector.multi_reduction <add>, %25, %cst_14 [0] : vector<64x128xf32> to vector<128xf32>
    %27 = vector.shape_cast %26 : vector<128xf32> to vector<1x128xf32>
    %cst_15 = arith.constant 6.400000e+01 : f32
    %28 = vector.broadcast %cst_15 : f32 to vector<1x128xf32>
    %29 = arith.divf %27, %28 : vector<1x128xf32>
    %30 = arith.truncf %29 : vector<1x128xf32> to vector<1x128xbf16>
    %c0_16 = arith.constant 0 : index
    %c0_17 = arith.constant 0 : index
    %31 = vector.load %arg8[%c0_16, %c0_17] : memref<128x64xbf16, #tpu.memory_space<vmem>>, vector<128x64xbf16>
    %cst_18 = arith.constant dense<0.000000e+00> : vector<1x64xf32>
    %32 = tpu.matmul %30, %31, %cst_18 {dimension_numbers = #tpu.dot_dimension_numbers<[1], [0], [0], [1], [0, 0, 1, 1], [], []>} : vector<1x128xbf16>, vector<128x64xbf16>, vector<1x64xf32> -> vector<1x64xf32>
    %c0_19 = arith.constant 0 : index
    %c0_20 = arith.constant 0 : index
    %33 = vector.load %arg9[%c0_19, %c0_20] : memref<1x64xf32, #tpu.memory_space<vmem>>, vector<1x64xf32>
    %34 = arith.addf %32, %33 : vector<1x64xf32>
    %cst_21 = arith.constant 0.000000e+00 : f32
    %35 = vector.broadcast %cst_21 : f32 to vector<1x64xf32>
    %36 = arith.maximumf %34, %35 : vector<1x64xf32>
    %c0_22 = arith.constant 0 : index
    %c0_23 = arith.constant 0 : index
    %37 = vector.load %arg12[%c0_22, %c0_23] : memref<1x128xf32, #tpu.memory_space<vmem>>, vector<1x128xf32>
    %38 = arith.truncf %36 : vector<1x64xf32> to vector<1x64xbf16>
    %c0_24 = arith.constant 0 : index
    %c0_25 = arith.constant 0 : index
    %39 = vector.load %arg11[%c0_24, %c0_25] : memref<64x128xbf16, #tpu.memory_space<vmem>>, vector<64x128xbf16>
    %cst_26 = arith.constant dense<0.000000e+00> : vector<1x128xf32>
    %40 = tpu.matmul %38, %39, %cst_26 {dimension_numbers = #tpu.dot_dimension_numbers<[1], [0], [0], [1], [0, 0, 1, 1], [], []>} : vector<1x64xbf16>, vector<64x128xbf16>, vector<1x128xf32> -> vector<1x128xf32>
    %41 = arith.addf %37, %40 : vector<1x128xf32>
    %c0_27 = arith.constant 0 : index
    %c0_28 = arith.constant 0 : index
    %42 = vector.load %arg4[%c0_27, %c0_28] : memref<128x64xbf16, #tpu.memory_space<vmem>>, vector<128x64xbf16>
    %cst_29 = arith.constant dense<0.000000e+00> : vector<64x64xf32>
    %43 = tpu.matmul %20, %42, %cst_29 {dimension_numbers = #tpu.dot_dimension_numbers<[1], [0], [0], [1], [0, 0, 1, 1], [], []>} : vector<64x128xbf16>, vector<128x64xbf16>, vector<64x64xf32> -> vector<64x64xf32>
    %c0_30 = arith.constant 0 : index
    %c0_31 = arith.constant 0 : index
    %44 = vector.load %arg5[%c0_30, %c0_31] : memref<1x64xf32, #tpu.memory_space<vmem>>, vector<1x64xf32>
    %45 = vector.broadcast %44 : vector<1x64xf32> to vector<64x64xf32>
    %46 = arith.addf %43, %45 : vector<64x64xf32>
    %cst_32 = arith.constant 0.000000e+00 : f32
    %47 = vector.broadcast %cst_32 : f32 to vector<64x64xf32>
    %48 = arith.maximumf %46, %47 : vector<64x64xf32>
    %49 = arith.truncf %48 : vector<64x64xf32> to vector<64x64xbf16>
    %cst_33 = arith.constant 0.000000e+00 : f32
    %50 = vector.broadcast %cst_33 : f32 to vector<64x64xf32>
    %c4 = arith.constant 4 : index
    %c4_34 = arith.constant 4 : index
    %c0_35 = arith.constant 0 : index
    %51 = vector.load %arg16[%c4, %c4_34, %c0_35] : memref<20x20x128xbf16, #tpu.memory_space<vmem>>, vector<8x8x128xbf16>
    %52 = vector.shape_cast %51 : vector<8x8x128xbf16> to vector<64x128xbf16>
    %c0_36 = arith.constant 0 : index
    %c0_37 = arith.constant 0 : index
    %c0_38 = arith.constant 0 : index
    %c0_39 = arith.constant 0 : index
    %53 = vector.load %arg6[%c0_36, %c0_37, %c0_38, %c0_39] : memref<3x9x128x64xbf16, #tpu.memory_space<vmem>>, vector<1x1x128x64xbf16>
    %54 = vector.shape_cast %53 : vector<1x1x128x64xbf16> to vector<128x64xbf16>
    %cst_40 = arith.constant dense<0.000000e+00> : vector<64x64xf32>
    %55 = tpu.matmul %52, %54, %cst_40 {dimension_numbers = #tpu.dot_dimension_numbers<[1], [0], [0], [1], [0, 0, 1, 1], [], []>} : vector<64x128xbf16>, vector<128x64xbf16>, vector<64x64xf32> -> vector<64x64xf32>
    %56 = arith.addf %50, %55 : vector<64x64xf32>
    %c4_41 = arith.constant 4 : index
    %c6_42 = arith.constant 6 : index
    %c0_43 = arith.constant 0 : index
    %57 = vector.load %arg16[%c4_41, %c6_42, %c0_43] : memref<20x20x128xbf16, #tpu.memory_space<vmem>>, vector<8x8x128xbf16>
    %58 = vector.shape_cast %57 : vector<8x8x128xbf16> to vector<64x128xbf16>
    %c0_44 = arith.constant 0 : index
    %c1 = arith.constant 1 : index
    %c0_45 = arith.constant 0 : index
    %c0_46 = arith.constant 0 : index
    %59 = vector.load %arg6[%c0_44, %c1, %c0_45, %c0_46] : memref<3x9x128x64xbf16, #tpu.memory_space<vmem>>, vector<1x1x128x64xbf16>
    %60 = vector.shape_cast %59 : vector<1x1x128x64xbf16> to vector<128x64xbf16>
    %cst_47 = arith.constant dense<0.000000e+00> : vector<64x64xf32>
    %61 = tpu.matmul %58, %60, %cst_47 {dimension_numbers = #tpu.dot_dimension_numbers<[1], [0], [0], [1], [0, 0, 1, 1], [], []>} : vector<64x128xbf16>, vector<128x64xbf16>, vector<64x64xf32> -> vector<64x64xf32>
    %62 = arith.addf %56, %61 : vector<64x64xf32>
    %c4_48 = arith.constant 4 : index
    %c8 = arith.constant 8 : index
    %c0_49 = arith.constant 0 : index
    %63 = vector.load %arg16[%c4_48, %c8, %c0_49] : memref<20x20x128xbf16, #tpu.memory_space<vmem>>, vector<8x8x128xbf16>
    %64 = vector.shape_cast %63 : vector<8x8x128xbf16> to vector<64x128xbf16>
    %c0_50 = arith.constant 0 : index
    %c2 = arith.constant 2 : index
    %c0_51 = arith.constant 0 : index
    %c0_52 = arith.constant 0 : index
    %65 = vector.load %arg6[%c0_50, %c2, %c0_51, %c0_52] : memref<3x9x128x64xbf16, #tpu.memory_space<vmem>>, vector<1x1x128x64xbf16>
    %66 = vector.shape_cast %65 : vector<1x1x128x64xbf16> to vector<128x64xbf16>
    %cst_53 = arith.constant dense<0.000000e+00> : vector<64x64xf32>
    %67 = tpu.matmul %64, %66, %cst_53 {dimension_numbers = #tpu.dot_dimension_numbers<[1], [0], [0], [1], [0, 0, 1, 1], [], []>} : vector<64x128xbf16>, vector<128x64xbf16>, vector<64x64xf32> -> vector<64x64xf32>
    %68 = arith.addf %62, %67 : vector<64x64xf32>
    %c6_54 = arith.constant 6 : index
    %c4_55 = arith.constant 4 : index
    %c0_56 = arith.constant 0 : index
    %69 = vector.load %arg16[%c6_54, %c4_55, %c0_56] : memref<20x20x128xbf16, #tpu.memory_space<vmem>>, vector<8x8x128xbf16>
    %70 = vector.shape_cast %69 : vector<8x8x128xbf16> to vector<64x128xbf16>
    %c0_57 = arith.constant 0 : index
    %c3 = arith.constant 3 : index
    %c0_58 = arith.constant 0 : index
    %c0_59 = arith.constant 0 : index
    %71 = vector.load %arg6[%c0_57, %c3, %c0_58, %c0_59] : memref<3x9x128x64xbf16, #tpu.memory_space<vmem>>, vector<1x1x128x64xbf16>
    %72 = vector.shape_cast %71 : vector<1x1x128x64xbf16> to vector<128x64xbf16>
    %cst_60 = arith.constant dense<0.000000e+00> : vector<64x64xf32>
    %73 = tpu.matmul %70, %72, %cst_60 {dimension_numbers = #tpu.dot_dimension_numbers<[1], [0], [0], [1], [0, 0, 1, 1], [], []>} : vector<64x128xbf16>, vector<128x64xbf16>, vector<64x64xf32> -> vector<64x64xf32>
    %74 = arith.addf %68, %73 : vector<64x64xf32>
    %c6_61 = arith.constant 6 : index
    %c6_62 = arith.constant 6 : index
    %c0_63 = arith.constant 0 : index
    %75 = vector.load %arg16[%c6_61, %c6_62, %c0_63] : memref<20x20x128xbf16, #tpu.memory_space<vmem>>, vector<8x8x128xbf16>
    %76 = vector.shape_cast %75 : vector<8x8x128xbf16> to vector<64x128xbf16>
    %c0_64 = arith.constant 0 : index
    %c4_65 = arith.constant 4 : index
    %c0_66 = arith.constant 0 : index
    %c0_67 = arith.constant 0 : index
    %77 = vector.load %arg6[%c0_64, %c4_65, %c0_66, %c0_67] : memref<3x9x128x64xbf16, #tpu.memory_space<vmem>>, vector<1x1x128x64xbf16>
    %78 = vector.shape_cast %77 : vector<1x1x128x64xbf16> to vector<128x64xbf16>
    %cst_68 = arith.constant dense<0.000000e+00> : vector<64x64xf32>
    %79 = tpu.matmul %76, %78, %cst_68 {dimension_numbers = #tpu.dot_dimension_numbers<[1], [0], [0], [1], [0, 0, 1, 1], [], []>} : vector<64x128xbf16>, vector<128x64xbf16>, vector<64x64xf32> -> vector<64x64xf32>
    %80 = arith.addf %74, %79 : vector<64x64xf32>
    %c6_69 = arith.constant 6 : index
    %c8_70 = arith.constant 8 : index
    %c0_71 = arith.constant 0 : index
    %81 = vector.load %arg16[%c6_69, %c8_70, %c0_71] : memref<20x20x128xbf16, #tpu.memory_space<vmem>>, vector<8x8x128xbf16>
    %82 = vector.shape_cast %81 : vector<8x8x128xbf16> to vector<64x128xbf16>
    %c0_72 = arith.constant 0 : index
    %c5 = arith.constant 5 : index
    %c0_73 = arith.constant 0 : index
    %c0_74 = arith.constant 0 : index
    %83 = vector.load %arg6[%c0_72, %c5, %c0_73, %c0_74] : memref<3x9x128x64xbf16, #tpu.memory_space<vmem>>, vector<1x1x128x64xbf16>
    %84 = vector.shape_cast %83 : vector<1x1x128x64xbf16> to vector<128x64xbf16>
    %cst_75 = arith.constant dense<0.000000e+00> : vector<64x64xf32>
    %85 = tpu.matmul %82, %84, %cst_75 {dimension_numbers = #tpu.dot_dimension_numbers<[1], [0], [0], [1], [0, 0, 1, 1], [], []>} : vector<64x128xbf16>, vector<128x64xbf16>, vector<64x64xf32> -> vector<64x64xf32>
    %86 = arith.addf %80, %85 : vector<64x64xf32>
    %c8_76 = arith.constant 8 : index
    %c4_77 = arith.constant 4 : index
    %c0_78 = arith.constant 0 : index
    %87 = vector.load %arg16[%c8_76, %c4_77, %c0_78] : memref<20x20x128xbf16, #tpu.memory_space<vmem>>, vector<8x8x128xbf16>
    %88 = vector.shape_cast %87 : vector<8x8x128xbf16> to vector<64x128xbf16>
    %c0_79 = arith.constant 0 : index
    %c6_80 = arith.constant 6 : index
    %c0_81 = arith.constant 0 : index
    %c0_82 = arith.constant 0 : index
    %89 = vector.load %arg6[%c0_79, %c6_80, %c0_81, %c0_82] : memref<3x9x128x64xbf16, #tpu.memory_space<vmem>>, vector<1x1x128x64xbf16>
    %90 = vector.shape_cast %89 : vector<1x1x128x64xbf16> to vector<128x64xbf16>
    %cst_83 = arith.constant dense<0.000000e+00> : vector<64x64xf32>
    %91 = tpu.matmul %88, %90, %cst_83 {dimension_numbers = #tpu.dot_dimension_numbers<[1], [0], [0], [1], [0, 0, 1, 1], [], []>} : vector<64x128xbf16>, vector<128x64xbf16>, vector<64x64xf32> -> vector<64x64xf32>
    %92 = arith.addf %86, %91 : vector<64x64xf32>
    %c8_84 = arith.constant 8 : index
    %c6_85 = arith.constant 6 : index
    %c0_86 = arith.constant 0 : index
    %93 = vector.load %arg16[%c8_84, %c6_85, %c0_86] : memref<20x20x128xbf16, #tpu.memory_space<vmem>>, vector<8x8x128xbf16>
    %94 = vector.shape_cast %93 : vector<8x8x128xbf16> to vector<64x128xbf16>
    %c0_87 = arith.constant 0 : index
    %c7 = arith.constant 7 : index
    %c0_88 = arith.constant 0 : index
    %c0_89 = arith.constant 0 : index
    %95 = vector.load %arg6[%c0_87, %c7, %c0_88, %c0_89] : memref<3x9x128x64xbf16, #tpu.memory_space<vmem>>, vector<1x1x128x64xbf16>
    %96 = vector.shape_cast %95 : vector<1x1x128x64xbf16> to vector<128x64xbf16>
    %cst_90 = arith.constant dense<0.000000e+00> : vector<64x64xf32>
    %97 = tpu.matmul %94, %96, %cst_90 {dimension_numbers = #tpu.dot_dimension_numbers<[1], [0], [0], [1], [0, 0, 1, 1], [], []>} : vector<64x128xbf16>, vector<128x64xbf16>, vector<64x64xf32> -> vector<64x64xf32>
    %98 = arith.addf %92, %97 : vector<64x64xf32>
    %c8_91 = arith.constant 8 : index
    %c8_92 = arith.constant 8 : index
    %c0_93 = arith.constant 0 : index
    %99 = vector.load %arg16[%c8_91, %c8_92, %c0_93] : memref<20x20x128xbf16, #tpu.memory_space<vmem>>, vector<8x8x128xbf16>
    %100 = vector.shape_cast %99 : vector<8x8x128xbf16> to vector<64x128xbf16>
    %c0_94 = arith.constant 0 : index
    %c8_95 = arith.constant 8 : index
    %c0_96 = arith.constant 0 : index
    %c0_97 = arith.constant 0 : index
    %101 = vector.load %arg6[%c0_94, %c8_95, %c0_96, %c0_97] : memref<3x9x128x64xbf16, #tpu.memory_space<vmem>>, vector<1x1x128x64xbf16>
    %102 = vector.shape_cast %101 : vector<1x1x128x64xbf16> to vector<128x64xbf16>
    %cst_98 = arith.constant dense<0.000000e+00> : vector<64x64xf32>
    %103 = tpu.matmul %100, %102, %cst_98 {dimension_numbers = #tpu.dot_dimension_numbers<[1], [0], [0], [1], [0, 0, 1, 1], [], []>} : vector<64x128xbf16>, vector<128x64xbf16>, vector<64x64xf32> -> vector<64x64xf32>
    %104 = arith.addf %98, %103 : vector<64x64xf32>
    %c0_99 = arith.constant 0 : index
    %c0_100 = arith.constant 0 : index
    %c0_101 = arith.constant 0 : index
    %105 = vector.load %arg7[%c0_99, %c0_100, %c0_101] : memref<3x1x64xf32, #tpu.memory_space<vmem>>, vector<1x1x64xf32>
    %106 = vector.shape_cast %105 : vector<1x1x64xf32> to vector<1x64xf32>
    %107 = vector.broadcast %106 : vector<1x64xf32> to vector<64x64xf32>
    %108 = arith.addf %104, %107 : vector<64x64xf32>
    %cst_102 = arith.constant 0.000000e+00 : f32
    %109 = vector.broadcast %cst_102 : f32 to vector<64x64xf32>
    %110 = arith.maximumf %108, %109 : vector<64x64xf32>
    %111 = arith.truncf %110 : vector<64x64xf32> to vector<64x64xbf16>
    %cst_103 = arith.constant 0.000000e+00 : f32
    %112 = vector.broadcast %cst_103 : f32 to vector<64x64xf32>
    %c2_104 = arith.constant 2 : index
    %c2_105 = arith.constant 2 : index
    %c0_106 = arith.constant 0 : index
    %113 = vector.load %arg16[%c2_104, %c2_105, %c0_106] : memref<20x20x128xbf16, #tpu.memory_space<vmem>>, vector<8x8x128xbf16>
    %114 = vector.shape_cast %113 : vector<8x8x128xbf16> to vector<64x128xbf16>
    %c1_107 = arith.constant 1 : index
    %c0_108 = arith.constant 0 : index
    %c0_109 = arith.constant 0 : index
    %c0_110 = arith.constant 0 : index
    %115 = vector.load %arg6[%c1_107, %c0_108, %c0_109, %c0_110] : memref<3x9x128x64xbf16, #tpu.memory_space<vmem>>, vector<1x1x128x64xbf16>
    %116 = vector.shape_cast %115 : vector<1x1x128x64xbf16> to vector<128x64xbf16>
    %cst_111 = arith.constant dense<0.000000e+00> : vector<64x64xf32>
    %117 = tpu.matmul %114, %116, %cst_111 {dimension_numbers = #tpu.dot_dimension_numbers<[1], [0], [0], [1], [0, 0, 1, 1], [], []>} : vector<64x128xbf16>, vector<128x64xbf16>, vector<64x64xf32> -> vector<64x64xf32>
    %118 = arith.addf %112, %117 : vector<64x64xf32>
    %c2_112 = arith.constant 2 : index
    %c6_113 = arith.constant 6 : index
    %c0_114 = arith.constant 0 : index
    %119 = vector.load %arg16[%c2_112, %c6_113, %c0_114] : memref<20x20x128xbf16, #tpu.memory_space<vmem>>, vector<8x8x128xbf16>
    %120 = vector.shape_cast %119 : vector<8x8x128xbf16> to vector<64x128xbf16>
    %c1_115 = arith.constant 1 : index
    %c1_116 = arith.constant 1 : index
    %c0_117 = arith.constant 0 : index
    %c0_118 = arith.constant 0 : index
    %121 = vector.load %arg6[%c1_115, %c1_116, %c0_117, %c0_118] : memref<3x9x128x64xbf16, #tpu.memory_space<vmem>>, vector<1x1x128x64xbf16>
    %122 = vector.shape_cast %121 : vector<1x1x128x64xbf16> to vector<128x64xbf16>
    %cst_119 = arith.constant dense<0.000000e+00> : vector<64x64xf32>
    %123 = tpu.matmul %120, %122, %cst_119 {dimension_numbers = #tpu.dot_dimension_numbers<[1], [0], [0], [1], [0, 0, 1, 1], [], []>} : vector<64x128xbf16>, vector<128x64xbf16>, vector<64x64xf32> -> vector<64x64xf32>
    %124 = arith.addf %118, %123 : vector<64x64xf32>
    %c2_120 = arith.constant 2 : index
    %c10 = arith.constant 10 : index
    %c0_121 = arith.constant 0 : index
    %125 = vector.load %arg16[%c2_120, %c10, %c0_121] : memref<20x20x128xbf16, #tpu.memory_space<vmem>>, vector<8x8x128xbf16>
    %126 = vector.shape_cast %125 : vector<8x8x128xbf16> to vector<64x128xbf16>
    %c1_122 = arith.constant 1 : index
    %c2_123 = arith.constant 2 : index
    %c0_124 = arith.constant 0 : index
    %c0_125 = arith.constant 0 : index
    %127 = vector.load %arg6[%c1_122, %c2_123, %c0_124, %c0_125] : memref<3x9x128x64xbf16, #tpu.memory_space<vmem>>, vector<1x1x128x64xbf16>
    %128 = vector.shape_cast %127 : vector<1x1x128x64xbf16> to vector<128x64xbf16>
    %cst_126 = arith.constant dense<0.000000e+00> : vector<64x64xf32>
    %129 = tpu.matmul %126, %128, %cst_126 {dimension_numbers = #tpu.dot_dimension_numbers<[1], [0], [0], [1], [0, 0, 1, 1], [], []>} : vector<64x128xbf16>, vector<128x64xbf16>, vector<64x64xf32> -> vector<64x64xf32>
    %130 = arith.addf %124, %129 : vector<64x64xf32>
    %c6_127 = arith.constant 6 : index
    %c2_128 = arith.constant 2 : index
    %c0_129 = arith.constant 0 : index
    %131 = vector.load %arg16[%c6_127, %c2_128, %c0_129] : memref<20x20x128xbf16, #tpu.memory_space<vmem>>, vector<8x8x128xbf16>
    %132 = vector.shape_cast %131 : vector<8x8x128xbf16> to vector<64x128xbf16>
    %c1_130 = arith.constant 1 : index
    %c3_131 = arith.constant 3 : index
    %c0_132 = arith.constant 0 : index
    %c0_133 = arith.constant 0 : index
    %133 = vector.load %arg6[%c1_130, %c3_131, %c0_132, %c0_133] : memref<3x9x128x64xbf16, #tpu.memory_space<vmem>>, vector<1x1x128x64xbf16>
    %134 = vector.shape_cast %133 : vector<1x1x128x64xbf16> to vector<128x64xbf16>
    %cst_134 = arith.constant dense<0.000000e+00> : vector<64x64xf32>
    %135 = tpu.matmul %132, %134, %cst_134 {dimension_numbers = #tpu.dot_dimension_numbers<[1], [0], [0], [1], [0, 0, 1, 1], [], []>} : vector<64x128xbf16>, vector<128x64xbf16>, vector<64x64xf32> -> vector<64x64xf32>
    %136 = arith.addf %130, %135 : vector<64x64xf32>
    %c6_135 = arith.constant 6 : index
    %c6_136 = arith.constant 6 : index
    %c0_137 = arith.constant 0 : index
    %137 = vector.load %arg16[%c6_135, %c6_136, %c0_137] : memref<20x20x128xbf16, #tpu.memory_space<vmem>>, vector<8x8x128xbf16>
    %138 = vector.shape_cast %137 : vector<8x8x128xbf16> to vector<64x128xbf16>
    %c1_138 = arith.constant 1 : index
    %c4_139 = arith.constant 4 : index
    %c0_140 = arith.constant 0 : index
    %c0_141 = arith.constant 0 : index
    %139 = vector.load %arg6[%c1_138, %c4_139, %c0_140, %c0_141] : memref<3x9x128x64xbf16, #tpu.memory_space<vmem>>, vector<1x1x128x64xbf16>
    %140 = vector.shape_cast %139 : vector<1x1x128x64xbf16> to vector<128x64xbf16>
    %cst_142 = arith.constant dense<0.000000e+00> : vector<64x64xf32>
    %141 = tpu.matmul %138, %140, %cst_142 {dimension_numbers = #tpu.dot_dimension_numbers<[1], [0], [0], [1], [0, 0, 1, 1], [], []>} : vector<64x128xbf16>, vector<128x64xbf16>, vector<64x64xf32> -> vector<64x64xf32>
    %142 = arith.addf %136, %141 : vector<64x64xf32>
    %c6_143 = arith.constant 6 : index
    %c10_144 = arith.constant 10 : index
    %c0_145 = arith.constant 0 : index
    %143 = vector.load %arg16[%c6_143, %c10_144, %c0_145] : memref<20x20x128xbf16, #tpu.memory_space<vmem>>, vector<8x8x128xbf16>
    %144 = vector.shape_cast %143 : vector<8x8x128xbf16> to vector<64x128xbf16>
    %c1_146 = arith.constant 1 : index
    %c5_147 = arith.constant 5 : index
    %c0_148 = arith.constant 0 : index
    %c0_149 = arith.constant 0 : index
    %145 = vector.load %arg6[%c1_146, %c5_147, %c0_148, %c0_149] : memref<3x9x128x64xbf16, #tpu.memory_space<vmem>>, vector<1x1x128x64xbf16>
    %146 = vector.shape_cast %145 : vector<1x1x128x64xbf16> to vector<128x64xbf16>
    %cst_150 = arith.constant dense<0.000000e+00> : vector<64x64xf32>
    %147 = tpu.matmul %144, %146, %cst_150 {dimension_numbers = #tpu.dot_dimension_numbers<[1], [0], [0], [1], [0, 0, 1, 1], [], []>} : vector<64x128xbf16>, vector<128x64xbf16>, vector<64x64xf32> -> vector<64x64xf32>
    %148 = arith.addf %142, %147 : vector<64x64xf32>
    %c10_151 = arith.constant 10 : index
    %c2_152 = arith.constant 2 : index
    %c0_153 = arith.constant 0 : index
    %149 = vector.load %arg16[%c10_151, %c2_152, %c0_153] : memref<20x20x128xbf16, #tpu.memory_space<vmem>>, vector<8x8x128xbf16>
    %150 = vector.shape_cast %149 : vector<8x8x128xbf16> to vector<64x128xbf16>
    %c1_154 = arith.constant 1 : index
    %c6_155 = arith.constant 6 : index
    %c0_156 = arith.constant 0 : index
    %c0_157 = arith.constant 0 : index
    %151 = vector.load %arg6[%c1_154, %c6_155, %c0_156, %c0_157] : memref<3x9x128x64xbf16, #tpu.memory_space<vmem>>, vector<1x1x128x64xbf16>
    %152 = vector.shape_cast %151 : vector<1x1x128x64xbf16> to vector<128x64xbf16>
    %cst_158 = arith.constant dense<0.000000e+00> : vector<64x64xf32>
    %153 = tpu.matmul %150, %152, %cst_158 {dimension_numbers = #tpu.dot_dimension_numbers<[1], [0], [0], [1], [0, 0, 1, 1], [], []>} : vector<64x128xbf16>, vector<128x64xbf16>, vector<64x64xf32> -> vector<64x64xf32>
    %154 = arith.addf %148, %153 : vector<64x64xf32>
    %c10_159 = arith.constant 10 : index
    %c6_160 = arith.constant 6 : index
    %c0_161 = arith.constant 0 : index
    %155 = vector.load %arg16[%c10_159, %c6_160, %c0_161] : memref<20x20x128xbf16, #tpu.memory_space<vmem>>, vector<8x8x128xbf16>
    %156 = vector.shape_cast %155 : vector<8x8x128xbf16> to vector<64x128xbf16>
    %c1_162 = arith.constant 1 : index
    %c7_163 = arith.constant 7 : index
    %c0_164 = arith.constant 0 : index
    %c0_165 = arith.constant 0 : index
    %157 = vector.load %arg6[%c1_162, %c7_163, %c0_164, %c0_165] : memref<3x9x128x64xbf16, #tpu.memory_space<vmem>>, vector<1x1x128x64xbf16>
    %158 = vector.shape_cast %157 : vector<1x1x128x64xbf16> to vector<128x64xbf16>
    %cst_166 = arith.constant dense<0.000000e+00> : vector<64x64xf32>
    %159 = tpu.matmul %156, %158, %cst_166 {dimension_numbers = #tpu.dot_dimension_numbers<[1], [0], [0], [1], [0, 0, 1, 1], [], []>} : vector<64x128xbf16>, vector<128x64xbf16>, vector<64x64xf32> -> vector<64x64xf32>
    %160 = arith.addf %154, %159 : vector<64x64xf32>
    %c10_167 = arith.constant 10 : index
    %c10_168 = arith.constant 10 : index
    %c0_169 = arith.constant 0 : index
    %161 = vector.load %arg16[%c10_167, %c10_168, %c0_169] : memref<20x20x128xbf16, #tpu.memory_space<vmem>>, vector<8x8x128xbf16>
    %162 = vector.shape_cast %161 : vector<8x8x128xbf16> to vector<64x128xbf16>
    %c1_170 = arith.constant 1 : index
    %c8_171 = arith.constant 8 : index
    %c0_172 = arith.constant 0 : index
    %c0_173 = arith.constant 0 : index
    %163 = vector.load %arg6[%c1_170, %c8_171, %c0_172, %c0_173] : memref<3x9x128x64xbf16, #tpu.memory_space<vmem>>, vector<1x1x128x64xbf16>
    %164 = vector.shape_cast %163 : vector<1x1x128x64xbf16> to vector<128x64xbf16>
    %cst_174 = arith.constant dense<0.000000e+00> : vector<64x64xf32>
    %165 = tpu.matmul %162, %164, %cst_174 {dimension_numbers = #tpu.dot_dimension_numbers<[1], [0], [0], [1], [0, 0, 1, 1], [], []>} : vector<64x128xbf16>, vector<128x64xbf16>, vector<64x64xf32> -> vector<64x64xf32>
    %166 = arith.addf %160, %165 : vector<64x64xf32>
    %c1_175 = arith.constant 1 : index
    %c0_176 = arith.constant 0 : index
    %c0_177 = arith.constant 0 : index
    %167 = vector.load %arg7[%c1_175, %c0_176, %c0_177] : memref<3x1x64xf32, #tpu.memory_space<vmem>>, vector<1x1x64xf32>
    %168 = vector.shape_cast %167 : vector<1x1x64xf32> to vector<1x64xf32>
    %169 = vector.broadcast %168 : vector<1x64xf32> to vector<64x64xf32>
    %170 = arith.addf %166, %169 : vector<64x64xf32>
    %cst_178 = arith.constant 0.000000e+00 : f32
    %171 = vector.broadcast %cst_178 : f32 to vector<64x64xf32>
    %172 = arith.maximumf %170, %171 : vector<64x64xf32>
    %173 = arith.truncf %172 : vector<64x64xf32> to vector<64x64xbf16>
    %cst_179 = arith.constant 0.000000e+00 : f32
    %174 = vector.broadcast %cst_179 : f32 to vector<64x64xf32>
    %c0_180 = arith.constant 0 : index
    %c0_181 = arith.constant 0 : index
    %c0_182 = arith.constant 0 : index
    %175 = vector.load %arg16[%c0_180, %c0_181, %c0_182] : memref<20x20x128xbf16, #tpu.memory_space<vmem>>, vector<8x8x128xbf16>
    %176 = vector.shape_cast %175 : vector<8x8x128xbf16> to vector<64x128xbf16>
    %c2_183 = arith.constant 2 : index
    %c0_184 = arith.constant 0 : index
    %c0_185 = arith.constant 0 : index
    %c0_186 = arith.constant 0 : index
    %177 = vector.load %arg6[%c2_183, %c0_184, %c0_185, %c0_186] : memref<3x9x128x64xbf16, #tpu.memory_space<vmem>>, vector<1x1x128x64xbf16>
    %178 = vector.shape_cast %177 : vector<1x1x128x64xbf16> to vector<128x64xbf16>
    %cst_187 = arith.constant dense<0.000000e+00> : vector<64x64xf32>
    %179 = tpu.matmul %176, %178, %cst_187 {dimension_numbers = #tpu.dot_dimension_numbers<[1], [0], [0], [1], [0, 0, 1, 1], [], []>} : vector<64x128xbf16>, vector<128x64xbf16>, vector<64x64xf32> -> vector<64x64xf32>
    %180 = arith.addf %174, %179 : vector<64x64xf32>
    %c0_188 = arith.constant 0 : index
    %c6_189 = arith.constant 6 : index
    %c0_190 = arith.constant 0 : index
    %181 = vector.load %arg16[%c0_188, %c6_189, %c0_190] : memref<20x20x128xbf16, #tpu.memory_space<vmem>>, vector<8x8x128xbf16>
    %182 = vector.shape_cast %181 : vector<8x8x128xbf16> to vector<64x128xbf16>
    %c2_191 = arith.constant 2 : index
    %c1_192 = arith.constant 1 : index
    %c0_193 = arith.constant 0 : index
    %c0_194 = arith.constant 0 : index
    %183 = vector.load %arg6[%c2_191, %c1_192, %c0_193, %c0_194] : memref<3x9x128x64xbf16, #tpu.memory_space<vmem>>, vector<1x1x128x64xbf16>
    %184 = vector.shape_cast %183 : vector<1x1x128x64xbf16> to vector<128x64xbf16>
    %cst_195 = arith.constant dense<0.000000e+00> : vector<64x64xf32>
    %185 = tpu.matmul %182, %184, %cst_195 {dimension_numbers = #tpu.dot_dimension_numbers<[1], [0], [0], [1], [0, 0, 1, 1], [], []>} : vector<64x128xbf16>, vector<128x64xbf16>, vector<64x64xf32> -> vector<64x64xf32>
    %186 = arith.addf %180, %185 : vector<64x64xf32>
    %c0_196 = arith.constant 0 : index
    %c12 = arith.constant 12 : index
    %c0_197 = arith.constant 0 : index
    %187 = vector.load %arg16[%c0_196, %c12, %c0_197] : memref<20x20x128xbf16, #tpu.memory_space<vmem>>, vector<8x8x128xbf16>
    %188 = vector.shape_cast %187 : vector<8x8x128xbf16> to vector<64x128xbf16>
    %c2_198 = arith.constant 2 : index
    %c2_199 = arith.constant 2 : index
    %c0_200 = arith.constant 0 : index
    %c0_201 = arith.constant 0 : index
    %189 = vector.load %arg6[%c2_198, %c2_199, %c0_200, %c0_201] : memref<3x9x128x64xbf16, #tpu.memory_space<vmem>>, vector<1x1x128x64xbf16>
    %190 = vector.shape_cast %189 : vector<1x1x128x64xbf16> to vector<128x64xbf16>
    %cst_202 = arith.constant dense<0.000000e+00> : vector<64x64xf32>
    %191 = tpu.matmul %188, %190, %cst_202 {dimension_numbers = #tpu.dot_dimension_numbers<[1], [0], [0], [1], [0, 0, 1, 1], [], []>} : vector<64x128xbf16>, vector<128x64xbf16>, vector<64x64xf32> -> vector<64x64xf32>
    %192 = arith.addf %186, %191 : vector<64x64xf32>
    %c6_203 = arith.constant 6 : index
    %c0_204 = arith.constant 0 : index
    %c0_205 = arith.constant 0 : index
    %193 = vector.load %arg16[%c6_203, %c0_204, %c0_205] : memref<20x20x128xbf16, #tpu.memory_space<vmem>>, vector<8x8x128xbf16>
    %194 = vector.shape_cast %193 : vector<8x8x128xbf16> to vector<64x128xbf16>
    %c2_206 = arith.constant 2 : index
    %c3_207 = arith.constant 3 : index
    %c0_208 = arith.constant 0 : index
    %c0_209 = arith.constant 0 : index
    %195 = vector.load %arg6[%c2_206, %c3_207, %c0_208, %c0_209] : memref<3x9x128x64xbf16, #tpu.memory_space<vmem>>, vector<1x1x128x64xbf16>
    %196 = vector.shape_cast %195 : vector<1x1x128x64xbf16> to vector<128x64xbf16>
    %cst_210 = arith.constant dense<0.000000e+00> : vector<64x64xf32>
    %197 = tpu.matmul %194, %196, %cst_210 {dimension_numbers = #tpu.dot_dimension_numbers<[1], [0], [0], [1], [0, 0, 1, 1], [], []>} : vector<64x128xbf16>, vector<128x64xbf16>, vector<64x64xf32> -> vector<64x64xf32>
    %198 = arith.addf %192, %197 : vector<64x64xf32>
    %c6_211 = arith.constant 6 : index
    %c6_212 = arith.constant 6 : index
    %c0_213 = arith.constant 0 : index
    %199 = vector.load %arg16[%c6_211, %c6_212, %c0_213] : memref<20x20x128xbf16, #tpu.memory_space<vmem>>, vector<8x8x128xbf16>
    %200 = vector.shape_cast %199 : vector<8x8x128xbf16> to vector<64x128xbf16>
    %c2_214 = arith.constant 2 : index
    %c4_215 = arith.constant 4 : index
    %c0_216 = arith.constant 0 : index
    %c0_217 = arith.constant 0 : index
    %201 = vector.load %arg6[%c2_214, %c4_215, %c0_216, %c0_217] : memref<3x9x128x64xbf16, #tpu.memory_space<vmem>>, vector<1x1x128x64xbf16>
    %202 = vector.shape_cast %201 : vector<1x1x128x64xbf16> to vector<128x64xbf16>
    %cst_218 = arith.constant dense<0.000000e+00> : vector<64x64xf32>
    %203 = tpu.matmul %200, %202, %cst_218 {dimension_numbers = #tpu.dot_dimension_numbers<[1], [0], [0], [1], [0, 0, 1, 1], [], []>} : vector<64x128xbf16>, vector<128x64xbf16>, vector<64x64xf32> -> vector<64x64xf32>
    %204 = arith.addf %198, %203 : vector<64x64xf32>
    %c6_219 = arith.constant 6 : index
    %c12_220 = arith.constant 12 : index
    %c0_221 = arith.constant 0 : index
    %205 = vector.load %arg16[%c6_219, %c12_220, %c0_221] : memref<20x20x128xbf16, #tpu.memory_space<vmem>>, vector<8x8x128xbf16>
    %206 = vector.shape_cast %205 : vector<8x8x128xbf16> to vector<64x128xbf16>
    %c2_222 = arith.constant 2 : index
    %c5_223 = arith.constant 5 : index
    %c0_224 = arith.constant 0 : index
    %c0_225 = arith.constant 0 : index
    %207 = vector.load %arg6[%c2_222, %c5_223, %c0_224, %c0_225] : memref<3x9x128x64xbf16, #tpu.memory_space<vmem>>, vector<1x1x128x64xbf16>
    %208 = vector.shape_cast %207 : vector<1x1x128x64xbf16> to vector<128x64xbf16>
    %cst_226 = arith.constant dense<0.000000e+00> : vector<64x64xf32>
    %209 = tpu.matmul %206, %208, %cst_226 {dimension_numbers = #tpu.dot_dimension_numbers<[1], [0], [0], [1], [0, 0, 1, 1], [], []>} : vector<64x128xbf16>, vector<128x64xbf16>, vector<64x64xf32> -> vector<64x64xf32>
    %210 = arith.addf %204, %209 : vector<64x64xf32>
    %c12_227 = arith.constant 12 : index
    %c0_228 = arith.constant 0 : index
    %c0_229 = arith.constant 0 : index
    %211 = vector.load %arg16[%c12_227, %c0_228, %c0_229] : memref<20x20x128xbf16, #tpu.memory_space<vmem>>, vector<8x8x128xbf16>
    %212 = vector.shape_cast %211 : vector<8x8x128xbf16> to vector<64x128xbf16>
    %c2_230 = arith.constant 2 : index
    %c6_231 = arith.constant 6 : index
    %c0_232 = arith.constant 0 : index
    %c0_233 = arith.constant 0 : index
    %213 = vector.load %arg6[%c2_230, %c6_231, %c0_232, %c0_233] : memref<3x9x128x64xbf16, #tpu.memory_space<vmem>>, vector<1x1x128x64xbf16>
    %214 = vector.shape_cast %213 : vector<1x1x128x64xbf16> to vector<128x64xbf16>
    %cst_234 = arith.constant dense<0.000000e+00> : vector<64x64xf32>
    %215 = tpu.matmul %212, %214, %cst_234 {dimension_numbers = #tpu.dot_dimension_numbers<[1], [0], [0], [1], [0, 0, 1, 1], [], []>} : vector<64x128xbf16>, vector<128x64xbf16>, vector<64x64xf32> -> vector<64x64xf32>
    %216 = arith.addf %210, %215 : vector<64x64xf32>
    %c12_235 = arith.constant 12 : index
    %c6_236 = arith.constant 6 : index
    %c0_237 = arith.constant 0 : index
    %217 = vector.load %arg16[%c12_235, %c6_236, %c0_237] : memref<20x20x128xbf16, #tpu.memory_space<vmem>>, vector<8x8x128xbf16>
    %218 = vector.shape_cast %217 : vector<8x8x128xbf16> to vector<64x128xbf16>
    %c2_238 = arith.constant 2 : index
    %c7_239 = arith.constant 7 : index
    %c0_240 = arith.constant 0 : index
    %c0_241 = arith.constant 0 : index
    %219 = vector.load %arg6[%c2_238, %c7_239, %c0_240, %c0_241] : memref<3x9x128x64xbf16, #tpu.memory_space<vmem>>, vector<1x1x128x64xbf16>
    %220 = vector.shape_cast %219 : vector<1x1x128x64xbf16> to vector<128x64xbf16>
    %cst_242 = arith.constant dense<0.000000e+00> : vector<64x64xf32>
    %221 = tpu.matmul %218, %220, %cst_242 {dimension_numbers = #tpu.dot_dimension_numbers<[1], [0], [0], [1], [0, 0, 1, 1], [], []>} : vector<64x128xbf16>, vector<128x64xbf16>, vector<64x64xf32> -> vector<64x64xf32>
    %222 = arith.addf %216, %221 : vector<64x64xf32>
    %c12_243 = arith.constant 12 : index
    %c12_244 = arith.constant 12 : index
    %c0_245 = arith.constant 0 : index
    %223 = vector.load %arg16[%c12_243, %c12_244, %c0_245] : memref<20x20x128xbf16, #tpu.memory_space<vmem>>, vector<8x8x128xbf16>
    %224 = vector.shape_cast %223 : vector<8x8x128xbf16> to vector<64x128xbf16>
    %c2_246 = arith.constant 2 : index
    %c8_247 = arith.constant 8 : index
    %c0_248 = arith.constant 0 : index
    %c0_249 = arith.constant 0 : index
    %225 = vector.load %arg6[%c2_246, %c8_247, %c0_248, %c0_249] : memref<3x9x128x64xbf16, #tpu.memory_space<vmem>>, vector<1x1x128x64xbf16>
    %226 = vector.shape_cast %225 : vector<1x1x128x64xbf16> to vector<128x64xbf16>
    %cst_250 = arith.constant dense<0.000000e+00> : vector<64x64xf32>
    %227 = tpu.matmul %224, %226, %cst_250 {dimension_numbers = #tpu.dot_dimension_numbers<[1], [0], [0], [1], [0, 0, 1, 1], [], []>} : vector<64x128xbf16>, vector<128x64xbf16>, vector<64x64xf32> -> vector<64x64xf32>
    %228 = arith.addf %222, %227 : vector<64x64xf32>
    %c2_251 = arith.constant 2 : index
    %c0_252 = arith.constant 0 : index
    %c0_253 = arith.constant 0 : index
    %229 = vector.load %arg7[%c2_251, %c0_252, %c0_253] : memref<3x1x64xf32, #tpu.memory_space<vmem>>, vector<1x1x64xf32>
    %230 = vector.shape_cast %229 : vector<1x1x64xf32> to vector<1x64xf32>
    %231 = vector.broadcast %230 : vector<1x64xf32> to vector<64x64xf32>
    %232 = arith.addf %228, %231 : vector<64x64xf32>
    %cst_254 = arith.constant 0.000000e+00 : f32
    %233 = vector.broadcast %cst_254 : f32 to vector<64x64xf32>
    %234 = arith.maximumf %232, %233 : vector<64x64xf32>
    %235 = arith.truncf %234 : vector<64x64xf32> to vector<64x64xbf16>
    %236 = tpu.concatenate %49, %111, %173, %235 in 1 : vector<64x64xbf16>, vector<64x64xbf16>, vector<64x64xbf16>, vector<64x64xbf16> -> vector<64x256xbf16>
    %c0_255 = arith.constant 0 : index
    %c0_256 = arith.constant 0 : index
    %237 = vector.load %arg10[%c0_255, %c0_256] : memref<256x128xbf16, #tpu.memory_space<vmem>>, vector<256x128xbf16>
    %cst_257 = arith.constant dense<0.000000e+00> : vector<64x128xf32>
    %238 = tpu.matmul %236, %237, %cst_257 {dimension_numbers = #tpu.dot_dimension_numbers<[1], [0], [0], [1], [0, 0, 1, 1], [], []>} : vector<64x256xbf16>, vector<256x128xbf16>, vector<64x128xf32> -> vector<64x128xf32>
    %239 = vector.broadcast %41 : vector<1x128xf32> to vector<64x128xf32>
    %240 = arith.addf %238, %239 : vector<64x128xf32>
    %cst_258 = arith.constant 0.000000e+00 : f32
    %241 = vector.broadcast %cst_258 : f32 to vector<64x128xf32>
    %242 = arith.maximumf %240, %241 : vector<64x128xf32>
    %243 = arith.truncf %242 : vector<64x128xf32> to vector<64x128xbf16>
    %c0_259 = arith.constant 0 : index
    %c0_260 = arith.constant 0 : index
    %244 = vector.load %arg13[%c0_259, %c0_260] : memref<128x128xbf16, #tpu.memory_space<vmem>>, vector<128x128xbf16>
    %cst_261 = arith.constant dense<0.000000e+00> : vector<64x128xf32>
    %245 = tpu.matmul %243, %244, %cst_261 {dimension_numbers = #tpu.dot_dimension_numbers<[1], [0], [0], [1], [0, 0, 1, 1], [], []>} : vector<64x128xbf16>, vector<128x128xbf16>, vector<64x128xf32> -> vector<64x128xf32>
    %c0_262 = arith.constant 0 : index
    %c0_263 = arith.constant 0 : index
    %246 = vector.load %arg14[%c0_262, %c0_263] : memref<1x128xf32, #tpu.memory_space<vmem>>, vector<1x128xf32>
    %247 = vector.broadcast %246 : vector<1x128xf32> to vector<64x128xf32>
    %248 = arith.addf %245, %247 : vector<64x128xf32>
    %249 = vector.shape_cast %248 : vector<64x128xf32> to vector<8x8x128xf32>
    %c0_264 = arith.constant 0 : index
    %c0_265 = arith.constant 0 : index
    %c0_266 = arith.constant 0 : index
    %c0_267 = arith.constant 0 : index
    %250 = vector.load %arg15[%c0_264, %c0_265, %c0_266, %c0_267] : memref<1x8x8x128xf32, #tpu.memory_space<vmem>>, vector<1x8x8x128xf32>
    %251 = vector.shape_cast %250 : vector<1x8x8x128xf32> to vector<8x8x128xf32>
    %252 = vector.shape_cast %249 : vector<8x8x128xf32> to vector<1x8x8x128xf32>
    tpu.vector_store %arg15[%c0_264, %c0_265, %c0_266, %c0_267], %252 {strides = array<i32>} : memref<1x8x8x128xf32, #tpu.memory_space<vmem>>, vector<1x8x8x128xf32>,
    return
  }
  func.func @transform_0(%arg0: i32) -> (i32, i32, i32, i32) {
    %c0_i32 = arith.constant 0 : i32
    %c0_i32_0 = arith.constant 0 : i32
    %c0_i32_1 = arith.constant 0 : i32
    %c0_i32_2 = arith.constant 0 : i32
    return %arg0, %c0_i32, %c0_i32_0, %c0_i32_1 : i32, i32, i32, i32
  }
  func.func @transform_1(%arg0: i32) -> (i32, i32) {
    %c0_i32 = arith.constant 0 : i32
    %c0_i32_0 = arith.constant 0 : i32
    %c0_i32_1 = arith.constant 0 : i32
    return %c0_i32, %c0_i32_0 : i32, i32
  }
  func.func @transform_2(%arg0: i32) -> (i32, i32) {
    %c0_i32 = arith.constant 0 : i32
    %c0_i32_0 = arith.constant 0 : i32
    %c0_i32_1 = arith.constant 0 : i32
    return %c0_i32, %c0_i32_0 : i32, i32
  }
  func.func @transform_3(%arg0: i32) -> (i32, i32) {
    %c0_i32 = arith.constant 0 : i32
    %c0_i32_0 = arith.constant 0 : i32
    %c0_i32_1 = arith.constant 0 : i32
    return %c0_i32, %c0_i32_0 : i32, i32
  }
  func.func @transform_4(%arg0: i32) -> (i32, i32) {
    %c0_i32 = arith.constant 0 : i32
    %c0_i32_0 = arith.constant 0 : i32
    %c0_i32_1 = arith.constant 0 : i32
    return %c0_i32, %c0_i32_0 : i32, i32
  }
  func.func @transform_5(%arg0: i32) -> (i32, i32, i32, i32) {
    %c0_i32 = arith.constant 0 : i32
    %c0_i32_0 = arith.constant 0 : i32
    %c0_i32_1 = arith.constant 0 : i32
    %c0_i32_2 = arith.constant 0 : i32
    %c0_i32_3 = arith.constant 0 : i32
    return %c0_i32, %c0_i32_0, %c0_i32_1, %c0_i32_2 : i32, i32, i32, i32
  }
  func.func @transform_6(%arg0: i32) -> (i32, i32, i32) {
    %c0_i32 = arith.constant 0 : i32
    %c0_i32_0 = arith.constant 0 : i32
    %c0_i32_1 = arith.constant 0 : i32
    %c0_i32_2 = arith.constant 0 : i32
    return %c0_i32, %c0_i32_0, %c0_i32_1 : i32, i32, i32
  }
  func.func @transform_7(%arg0: i32) -> (i32, i32) {
    %c0_i32 = arith.constant 0 : i32
    %c0_i32_0 = arith.constant 0 : i32
    %c0_i32_1 = arith.constant 0 : i32
    return %c0_i32, %c0_i32_0 : i32, i32
  }
  func.func @transform_8(%arg0: i32) -> (i32, i32) {
    %c0_i32 = arith.constant 0 : i32
    %c0_i32_0 = arith.constant 0 : i32
    %c0_i32_1 = arith.constant 0 : i32
    return %c0_i32, %c0_i32_0 : i32, i32
  }
  func.func @transform_9(%arg0: i32) -> (i32, i32) {
    %c0_i32 = arith.constant 0 : i32
    %c0_i32_0 = arith.constant 0 : i32
    %c0_i32_1 = arith.constant 0 : i32
    return %c0_i32, %c0_i32_0 : i32, i32
  }
  func.func @transform_10(%arg0: i32) -> (i32, i32) {
    %c0_i32 = arith.constant 0 : i32
    %c0_i32_0 = arith.constant 0 : i32
    %c0_i32_1 = arith.constant 0 : i32
    return %c0_i32, %c0_i32_0 : i32, i32
  }
  func.func @transform_11(%arg0: i32) -> (i32, i32) {
    %c0_i32 = arith.constant 0 : i32
    %c0_i32_0 = arith.constant 0 : i32
    %c0_i32_1 = arith.constant 0 : i32
    return %c0_i32, %c0_i32_0 : i32, i32
  }
  func.func @transform_12(%arg0: i32) -> (i32, i32) {
    %c0_i32 = arith.constant 0 : i32
    %c0_i32_0 = arith.constant 0 : i32
    %c0_i32_1 = arith.constant 0 : i32
    return %c0_i32, %c0_i32_0 : i32, i32
  }
  func.func @transform_13(%arg0: i32) -> (i32, i32) {
    %c0_i32 = arith.constant 0 : i32
    %c0_i32_0 = arith.constant 0 : i32
    %c0_i32_1 = arith.constant 0 : i32
    return %c0_i32, %c0_i32_0 : i32, i32
  }
  func.func @transform_14(%arg0: i32) -> (i32, i32, i32, i32) {
    %c0_i32 = arith.constant 0 : i32
    %c0_i32_0 = arith.constant 0 : i32
    %c0_i32_1 = arith.constant 0 : i32
    %c0_i32_2 = arith.constant 0 : i32
    return %arg0, %c0_i32, %c0_i32_0, %c0_i32_1 : i32, i32, i32, i32
  }
}

</mosaic_0001>

<llo_original>
// kernel: fold_conv_aspp_pallas.1
$region0: #{fold_conv_aspp_pallas.1}
  #allocation0 [shape = 'u32[]', space=smem, size = 0x4, offset = 0x4, fixed_abs, tag = 'smem constant byte address 0x4 - core index']
  #allocation1 [shape = 'u32[144,128]{1,0:T(1,128)}', space=vmem, size = 0x12000, scoped, tag = 'internal scratch']
  #allocation2 [shape = 'bf16[20,20,128]{2,1,0:T(8,128)(2,1)}', space=vmem, size = 0x1e000, scoped, tag = 'scratch operand']
  %s0 = inlined_call_operand.vmem [shape: bf16[2,10,10,16], index: 0, kind: input, shape index: {}]
  %s1 = inlined_call_operand.vmem [shape: bf16[144,128], index: 1, kind: input, shape index: {}]
  %s2 = inlined_call_operand.vmem [shape: f32[1,128], index: 2, kind: input, shape index: {}]
  %s3 = inlined_call_operand.vmem [shape: bf16[128,64], index: 3, kind: input, shape index: {}]
  %s4 = inlined_call_operand.vmem [shape: f32[1,64], index: 4, kind: input, shape index: {}]
  %s5 = inlined_call_operand.vmem [shape: bf16[3,9,128,64], index: 5, kind: input, shape index: {}]
  %s6 = inlined_call_operand.vmem [shape: f32[3,1,64], index: 6, kind: input, shape index: {}]
  %s7 = inlined_call_operand.vmem [shape: bf16[128,64], index: 7, kind: input, shape index: {}]
  %s8 = inlined_call_operand.vmem [shape: f32[1,64], index: 8, kind: input, shape index: {}]
  %s9 = inlined_call_operand.vmem [shape: bf16[256,128], index: 9, kind: input, shape index: {}]
  %s10 = inlined_call_operand.vmem [shape: bf16[64,128], index: 10, kind: input, shape index: {}]
  %s11 = inlined_call_operand.vmem [shape: f32[1,128], index: 11, kind: input, shape index: {}]
  %s12 = inlined_call_operand.vmem [shape: bf16[128,128], index: 12, kind: input, shape index: {}]
  %s13 = inlined_call_operand.vmem [shape: f32[1,128], index: 13, kind: input, shape index: {}]
  %s14 = inlined_call_operand.vmem [shape: f32[2,8,8,128], index: 14, kind: output, shape index: {}]
  %s15 = sld [smem:[#allocation0]]
  $region89: #{fold_conv_aspp_pallas.1} parent=0
    _
  %s17 = ssub.s32 1, %s15
  %s18 = scalar_select 0, %s17, %s15
  loop: start=0, step=1, limit=4
  $region2: #{fold_conv_aspp_pallas.1} parent=0 // loop_pre_header
    _
  $region3: #{fold_conv_aspp_pallas.1} parent=0 // loop_header
    %s20 = sphi 0, %s24
    %p21 = scmp.ge.s32.totalorder %s20, 4
    %s30 = sphi 0, %s32
    %s33 = sphi 0, %s30
    %s34 = sphi 0, %s33
    %s50 = sphi 0, %s34
    %s54 = sphi 0, %s54
    %s56 = sphi 0, %s54
    %s57 = sphi 0, %s56
    %s71 = sphi 0, %s57
    %s75 = sphi 0, %s75
    %s77 = sphi 0, %s75
    %s78 = sphi 0, %s77
    %s92 = sphi 0, %s78
    %s96 = sphi 0, %s96
    %s98 = sphi 0, %s96
    %s99 = sphi 0, %s98
    %s113 = sphi 0, %s99
    %s117 = sphi 0, %s117
    %s119 = sphi 0, %s117
    %s120 = sphi 0, %s119
    %s134 = sphi 0, %s120
    %s138 = sphi 0, %s138
    %s140 = sphi 0, %s138
    %s141 = sphi 0, %s140
    %s155 = sphi 0, %s141
    %s159 = sphi 0, %s159
    %s161 = sphi 0, %s159
    %s162 = sphi 0, %s161
    %s176 = sphi 0, %s162
    %s180 = sphi 0, %s180
    %s182 = sphi 0, %s180
    %s183 = sphi 0, %s182
    %s197 = sphi 0, %s183
    %s201 = sphi 0, %s201
    %s203 = sphi 0, %s201
    %s204 = sphi 0, %s203
    %s218 = sphi 0, %s204
    %s222 = sphi 0, %s222
    %s224 = sphi 0, %s222
    %s225 = sphi 0, %s224
    %s239 = sphi 0, %s225
    %s243 = sphi 0, %s243
    %s245 = sphi 0, %s243
    %s246 = sphi 0, %s245
    %s260 = sphi 0, %s246
    %s264 = sphi 0, %s264
    %s266 = sphi 0, %s264
    %s267 = sphi 0, %s266
    %s281 = sphi 0, %s267
    %s285 = sphi 0, %s285
    %s287 = sphi 0, %s285
    %s288 = sphi 0, %s287
    %s302 = sphi 0, %s288
    %s306 = sphi 0, %s306
    %s308 = sphi 0, %s306
    %s309 = sphi 0, %s308
    %s323 = sphi 0, %s309
    %s329 = sphi 0, %s331
    %s332 = sphi 0, %s329
    %s333 = sphi 0, %s332
    %s349 = sphi 0, %s333
  $region4: #{fold_conv_aspp_pallas.1} parent=0 // loop_header_branch
    %23 = sbr.rel (%p21) target = $region8
  $region5: #{fold_conv_aspp_pallas.1} parent=0 // loop_body
    %s25 = ssub.s32 %s20, 1
    %s26 = ssub.s32 %s20, 2
    %s27 = sadd.s32 %s20, 1
    %s28 = ssub.s32 %s20, %s27
    %p29 = scmp.eq.s32.totalorder %s28, 0
    %s31 = sadd.s32 %s30, 1
    %s32 = scalar_select %p29, %s30, %s31
    %p35 = pneg %p29
    %p36 = scmp.eq.s32.totalorder %s20, 1
    %p37 = por %p35, %p36
    %p38 = scmp.ne.s32.totalorder %s30, %s33
    %p39 = scmp.eq.s32.totalorder %s20, 0
    %p40 = por %p38, %p39
    %p41 = scmp.ne.s32.totalorder %s30, %s33
    %p42 = scmp.eq.s32.totalorder %s25, 1
    %p43 = por %p41, %p42
    %p44 = scmp.ne.s32.totalorder %s33, %s34
    %p45 = scmp.eq.s32.totalorder %s25, 0
    %p46 = por %p44, %p45
    %p47 = scmp.ne.s32.totalorder %s33, %s34
    %p48 = scmp.eq.s32.totalorder %s26, 1
    %p49 = por %p47, %p48
    %p51 = scmp.ne.s32.totalorder %s34, %s50
    %p52 = scmp.eq.s32.totalorder %s26, 0
    %p53 = por %p51, %p52
    %s55 = sadd.s32 %s54, 1
    %p58 = scmp.eq.s32.totalorder %s20, 1
    %p59 = scmp.ne.s32.totalorder %s54, %s56
    %p60 = scmp.eq.s32.totalorder %s20, 0
    %p61 = por %p59, %p60
    %p62 = scmp.ne.s32.totalorder %s54, %s56
    %p63 = scmp.eq.s32.totalorder %s25, 1
    %p64 = por %p62, %p63
    %p65 = scmp.ne.s32.totalorder %s56, %s57
    %p66 = scmp.eq.s32.totalorder %s25, 0
    %p67 = por %p65, %p66
    %p68 = scmp.ne.s32.totalorder %s56, %s57
    %p69 = scmp.eq.s32.totalorder %s26, 1
    %p70 = por %p68, %p69
    %p72 = scmp.ne.s32.totalorder %s57, %s71
    %p73 = scmp.eq.s32.totalorder %s26, 0
    %p74 = por %p72, %p73
    %s76 = sadd.s32 %s75, 1
    %p79 = scmp.eq.s32.totalorder %s20, 1
    %p80 = scmp.ne.s32.totalorder %s75, %s77
    %p81 = scmp.eq.s32.totalorder %s20, 0
    %p82 = por %p80, %p81
    %p83 = scmp.ne.s32.totalorder %s75, %s77
    %p84 = scmp.eq.s32.totalorder %s25, 1
    %p85 = por %p83, %p84
    %p86 = scmp.ne.s32.totalorder %s77, %s78
    %p87 = scmp.eq.s32.totalorder %s25, 0
    %p88 = por %p86, %p87
    %p89 = scmp.ne.s32.totalorder %s77, %s78
    %p90 = scmp.eq.s32.totalorder %s26, 1
    %p91 = por %p89, %p90
    %p93 = scmp.ne.s32.totalorder %s78, %s92
    %p94 = scmp.eq.s32.totalorder %s26, 0
    %p95 = por %p93, %p94
    %s97 = sadd.s32 %s96, 1
    %p100 = scmp.eq.s32.totalorder %s20, 1
    %p101 = scmp.ne.s32.totalorder %s96, %s98
    %p102 = scmp.eq.s32.totalorder %s20, 0
    %p103 = por %p101, %p102
    %p104 = scmp.ne.s32.totalorder %s96, %s98
    %p105 = scmp.eq.s32.totalorder %s25, 1
    %p106 = por %p104, %p105
    %p107 = scmp.ne.s32.totalorder %s98, %s99
    %p108 = scmp.eq.s32.totalorder %s25, 0
    %p109 = por %p107, %p108
    %p110 = scmp.ne.s32.totalorder %s98, %s99
    %p111 = scmp.eq.s32.totalorder %s26, 1
    %p112 = por %p110, %p111
    %p114 = scmp.ne.s32.totalorder %s99, %s113
    %p115 = scmp.eq.s32.totalorder %s26, 0
    %p116 = por %p114, %p115
    %s118 = sadd.s32 %s117, 1
    %p121 = scmp.eq.s32.totalorder %s20, 1
    %p122 = scmp.ne.s32.totalorder %s117, %s119
    %p123 = scmp.eq.s32.totalorder %s20, 0
    %p124 = por %p122, %p123
    %p125 = scmp.ne.s32.totalorder %s117, %s119
    %p126 = scmp.eq.s32.totalorder %s25, 1
    %p127 = por %p125, %p126
    %p128 = scmp.ne.s32.totalorder %s119, %s120
    %p129 = scmp.eq.s32.totalorder %s25, 0
    %p130 = por %p128, %p129
    %p131 = scmp.ne.s32.totalorder %s119, %s120
    %p132 = scmp.eq.s32.totalorder %s26, 1
    %p133 = por %p131, %p132
    %p135 = scmp.ne.s32.totalorder %s120, %s134
    %p136 = scmp.eq.s32.totalorder %s26, 0
    %p137 = por %p135, %p136
    %s139 = sadd.s32 %s138, 1
    %p142 = scmp.eq.s32.totalorder %s20, 1
    %p143 = scmp.ne.s32.totalorder %s138, %s140
    %p144 = scmp.eq.s32.totalorder %s20, 0
    %p145 = por %p143, %p144
    %p146 = scmp.ne.s32.totalorder %s138, %s140
    %p147 = scmp.eq.s32.totalorder %s25, 1
    %p148 = por %p146, %p147
    %p149 = scmp.ne.s32.totalorder %s140, %s141
    %p150 = scmp.eq.s32.totalorder %s25, 0
    %p151 = por %p149, %p150
    %p152 = scmp.ne.s32.totalorder %s140, %s141
    %p153 = scmp.eq.s32.totalorder %s26, 1
    %p154 = por %p152, %p153
    %p156 = scmp.ne.s32.totalorder %s141, %s155
    %p157 = scmp.eq.s32.totalorder %s26, 0
    %p158 = por %p156, %p157
    %s160 = sadd.s32 %s159, 1
    %p163 = scmp.eq.s32.totalorder %s20, 1
    %p164 = scmp.ne.s32.totalorder %s159, %s161
    %p165 = scmp.eq.s32.totalorder %s20, 0
    %p166 = por %p164, %p165
    %p167 = scmp.ne.s32.totalorder %s159, %s161
    %p168 = scmp.eq.s32.totalorder %s25, 1
    %p169 = por %p167, %p168
    %p170 = scmp.ne.s32.totalorder %s161, %s162
    %p171 = scmp.eq.s32.totalorder %s25, 0
    %p172 = por %p170, %p171
    %p173 = scmp.ne.s32.totalorder %s161, %s162
    %p174 = scmp.eq.s32.totalorder %s26, 1
    %p175 = por %p173, %p174
    %p177 = scmp.ne.s32.totalorder %s162, %s176
    %p178 = scmp.eq.s32.totalorder %s26, 0
    %p179 = por %p177, %p178
    %s181 = sadd.s32 %s180, 1
    %p184 = scmp.eq.s32.totalorder %s20, 1
    %p185 = scmp.ne.s32.totalorder %s180, %s182
    %p186 = scmp.eq.s32.totalorder %s20, 0
    %p187 = por %p185, %p186
    %p188 = scmp.ne.s32.totalorder %s180, %s182
    %p189 = scmp.eq.s32.totalorder %s25, 1
    %p190 = por %p188, %p189
    %p191 = scmp.ne.s32.totalorder %s182, %s183
    %p192 = scmp.eq.s32.totalorder %s25, 0
    %p193 = por %p191, %p192
    %p194 = scmp.ne.s32.totalorder %s182, %s183
    %p195 = scmp.eq.s32.totalorder %s26, 1
    %p196 = por %p194, %p195
    %p198 = scmp.ne.s32.totalorder %s183, %s197
    %p199 = scmp.eq.s32.totalorder %s26, 0
    %p200 = por %p198, %p199
    %s202 = sadd.s32 %s201, 1
    %p205 = scmp.eq.s32.totalorder %s20, 1
    %p206 = scmp.ne.s32.totalorder %s201, %s203
    %p207 = scmp.eq.s32.totalorder %s20, 0
    %p208 = por %p206, %p207
    %p209 = scmp.ne.s32.totalorder %s201, %s203
    %p210 = scmp.eq.s32.totalorder %s25, 1
    %p211 = por %p209, %p210
    %p212 = scmp.ne.s32.totalorder %s203, %s204
    %p213 = scmp.eq.s32.totalorder %s25, 0
    %p214 = por %p212, %p213
    %p215 = scmp.ne.s32.totalorder %s203, %s204
    %p216 = scmp.eq.s32.totalorder %s26, 1
    %p217 = por %p215, %p216
    %p219 = scmp.ne.s32.totalorder %s204, %s218
    %p220 = scmp.eq.s32.totalorder %s26, 0
    %p221 = por %p219, %p220
    %s223 = sadd.s32 %s222, 1
    %p226 = scmp.eq.s32.totalorder %s20, 1
    %p227 = scmp.ne.s32.totalorder %s222, %s224
    %p228 = scmp.eq.s32.totalorder %s20, 0
    %p229 = por %p227, %p228
    %p230 = scmp.ne.s32.totalorder %s222, %s224
    %p231 = scmp.eq.s32.totalorder %s25, 1
    %p232 = por %p230, %p231
    %p233 = scmp.ne.s32.totalorder %s224, %s225
    %p234 = scmp.eq.s32.totalorder %s25, 0
    %p235 = por %p233, %p234
    %p236 = scmp.ne.s32.totalorder %s224, %s225
    %p237 = scmp.eq.s32.totalorder %s26, 1
    %p238 = por %p236, %p237
    %p240 = scmp.ne.s32.totalorder %s225, %s239
    %p241 = scmp.eq.s32.totalorder %s26, 0
    %p242 = por %p240, %p241
    %s244 = sadd.s32 %s243, 1
    %p247 = scmp.eq.s32.totalorder %s20, 1
    %p248 = scmp.ne.s32.totalorder %s243, %s245
    %p249 = scmp.eq.s32.totalorder %s20, 0
    %p250 = por %p248, %p249
    %p251 = scmp.ne.s32.totalorder %s243, %s245
    %p252 = scmp.eq.s32.totalorder %s25, 1
    %p253 = por %p251, %p252
    %p254 = scmp.ne.s32.totalorder %s245, %s246
    %p255 = scmp.eq.s32.totalorder %s25, 0
    %p256 = por %p254, %p255
    %p257 = scmp.ne.s32.totalorder %s245, %s246
    %p258 = scmp.eq.s32.totalorder %s26, 1
    %p259 = por %p257, %p258
    %p261 = scmp.ne.s32.totalorder %s246, %s260
    %p262 = scmp.eq.s32.totalorder %s26, 0
    %p263 = por %p261, %p262
    %s265 = sadd.s32 %s264, 1
    %p268 = scmp.eq.s32.totalorder %s20, 1
    %p269 = scmp.ne.s32.totalorder %s264, %s266
    %p270 = scmp.eq.s32.totalorder %s20, 0
    %p271 = por %p269, %p270
    %p272 = scmp.ne.s32.totalorder %s264, %s266
    %p273 = scmp.eq.s32.totalorder %s25, 1
    %p274 = por %p272, %p273
    %p275 = scmp.ne.s32.totalorder %s266, %s267
    %p276 = scmp.eq.s32.totalorder %s25, 0
    %p277 = por %p275, %p276
    %p278 = scmp.ne.s32.totalorder %s266, %s267
    %p279 = scmp.eq.s32.totalorder %s26, 1
    %p280 = por %p278, %p279
    %p282 = scmp.ne.s32.totalorder %s267, %s281
    %p283 = scmp.eq.s32.totalorder %s26, 0
    %p284 = por %p282, %p283
    %s286 = sadd.s32 %s285, 1
    %p289 = scmp.eq.s32.totalorder %s20, 1
    %p290 = scmp.ne.s32.totalorder %s285, %s287
    %p291 = scmp.eq.s32.totalorder %s20, 0
    %p292 = por %p290, %p291
    %p293 = scmp.ne.s32.totalorder %s285, %s287
    %p294 = scmp.eq.s32.totalorder %s25, 1
    %p295 = por %p293, %p294
    %p296 = scmp.ne.s32.totalorder %s287, %s288
    %p297 = scmp.eq.s32.totalorder %s25, 0
    %p298 = por %p296, %p297
    %p299 = scmp.ne.s32.totalorder %s287, %s288
    %p300 = scmp.eq.s32.totalorder %s26, 1
    %p301 = por %p299, %p300
    %p303 = scmp.ne.s32.totalorder %s288, %s302
    %p304 = scmp.eq.s32.totalorder %s26, 0
    %p305 = por %p303, %p304
    %s307 = sadd.s32 %s306, 1
    %p310 = scmp.eq.s32.totalorder %s20, 1
    %p311 = scmp.ne.s32.totalorder %s306, %s308
    %p312 = scmp.eq.s32.totalorder %s20, 0
    %p313 = por %p311, %p312
    %p314 = scmp.ne.s32.totalorder %s306, %s308
    %p315 = scmp.eq.s32.totalorder %s25, 1
    %p316 = por %p314, %p315
    %p317 = scmp.ne.s32.totalorder %s308, %s309
    %p318 = scmp.eq.s32.totalorder %s25, 0
    %p319 = por %p317, %p318
    %p320 = scmp.ne.s32.totalorder %s308, %s309
    %p321 = scmp.eq.s32.totalorder %s26, 1
    %p322 = por %p320, %p321
    %p324 = scmp.ne.s32.totalorder %s309, %s323
    %p325 = scmp.eq.s32.totalorder %s26, 0
    %p326 = por %p324, %p325
    %s327 = ssub.s32 %s20, %s27
    %p328 = scmp.eq.s32.totalorder %s327, 0
    %s330 = sadd.s32 %s329, 1
    %s331 = scalar_select %p328, %s329, %s330
    %p334 = pneg %p328
    %p335 = scmp.eq.s32.totalorder %s20, 1
    %p336 = por %p334, %p335
    %p337 = scmp.ne.s32.totalorder %s329, %s332
    %p338 = scmp.eq.s32.totalorder %s20, 0
    %p339 = por %p337, %p338
    %p340 = scmp.ne.s32.totalorder %s329, %s332
    %p341 = scmp.eq.s32.totalorder %s25, 1
    %p342 = por %p340, %p341
    %p343 = scmp.ne.s32.totalorder %s332, %s333
    %p344 = scmp.eq.s32.totalorder %s25, 0
    %p345 = por %p343, %p344
    %p346 = scmp.ne.s32.totalorder %s332, %s333
    %p347 = scmp.eq.s32.totalorder %s26, 1
    %p348 = por %p346, %p347
    %p350 = scmp.ne.s32.totalorder %s333, %s349
    %p351 = scmp.eq.s32.totalorder %s26, 0
    %p352 = por %p350, %p351
    %p353 = scmp.le.s32.totalorder 1, %s20
    %p354 = scmp.lt.s32.totalorder %s20, 3
    %p355 = pnand %p353, %p354
    %p356 = pneg %p355
    // Predicated region
    $region9: #{fold_conv_aspp_pallas.1} parent=5 // pred_check
      _
    $region10: #{fold_conv_aspp_pallas.1} parent=5 // pred_check_branch
      %358 = sbr.rel (%p355) target = $region12
    $region11: #{fold_conv_aspp_pallas.1} parent=5 // pred_region
      %s359 = ssub.s32 %s20, 1
      // Predicated region
      $region13: #{fold_conv_aspp_pallas.1} parent=11 // pred_check
        %p360 = pneg %p67
      $region14: #{fold_conv_aspp_pallas.1} parent=11 // pred_check_branch
        %362 = sbr.rel (%p360) target = $region16
      $region15: #{fold_conv_aspp_pallas.1} parent=11 // pred_region
        _
      $region16: #{fold_conv_aspp_pallas.1} parent=11 // pred_fallthru
        _
      // Predicated region
      $region17: #{fold_conv_aspp_pallas.1} parent=11 // pred_check
        %p363 = pneg %p88
      $region18: #{fold_conv_aspp_pallas.1} parent=11 // pred_check_branch
        %365 = sbr.rel (%p363) target = $region20
      $region19: #{fold_conv_aspp_pallas.1} parent=11 // pred_region
        _
      $region20: #{fold_conv_aspp_pallas.1} parent=11 // pred_fallthru
        _
      // Predicated region
      $region21: #{fold_conv_aspp_pallas.1} parent=11 // pred_check
        %p366 = pneg %p109
      $region22: #{fold_conv_aspp_pallas.1} parent=11 // pred_check_branch
        %368 = sbr.rel (%p366) target = $region24
      $region23: #{fold_conv_aspp_pallas.1} parent=11 // pred_region
        _
      $region24: #{fold_conv_aspp_pallas.1} parent=11 // pred_fallthru
        _
      // Predicated region
      $region25: #{fold_conv_aspp_pallas.1} parent=11 // pred_check
        %p369 = pneg %p130
      $region26: #{fold_conv_aspp_pallas.1} parent=11 // pred_check_branch
        %371 = sbr.rel (%p369) target = $region28
      $region27: #{fold_conv_aspp_pallas.1} parent=11 // pred_region
        _
      $region28: #{fold_conv_aspp_pallas.1} parent=11 // pred_fallthru
        _
      // Predicated region
      $region29: #{fold_conv_aspp_pallas.1} parent=11 // pred_check
        %p372 = pneg %p151
      $region30: #{fold_conv_aspp_pallas.1} parent=11 // pred_check_branch
        %374 = sbr.rel (%p372) target = $region32
      $region31: #{fold_conv_aspp_pallas.1} parent=11 // pred_region
        _
      $region32: #{fold_conv_aspp_pallas.1} parent=11 // pred_fallthru
        _
      // Predicated region
      $region33: #{fold_conv_aspp_pallas.1} parent=11 // pred_check
        %p375 = pneg %p172
      $region34: #{fold_conv_aspp_pallas.1} parent=11 // pred_check_branch
        %377 = sbr.rel (%p375) target = $region36
      $region35: #{fold_conv_aspp_pallas.1} parent=11 // pred_region
        _
      $region36: #{fold_conv_aspp_pallas.1} parent=11 // pred_fallthru
        _
      // Predicated region
      $region37: #{fold_conv_aspp_pallas.1} parent=11 // pred_check
        %p378 = pneg %p193
      $region38: #{fold_conv_aspp_pallas.1} parent=11 // pred_check_branch
        %380 = sbr.rel (%p378) target = $region40
      $region39: #{fold_conv_aspp_pallas.1} parent=11 // pred_region
        _
      $region40: #{fold_conv_aspp_pallas.1} parent=11 // pred_fallthru
        _
      // Predicated region
      $region41: #{fold_conv_aspp_pallas.1} parent=11 // pred_check
        %p381 = pneg %p214
      $region42: #{fold_conv_aspp_pallas.1} parent=11 // pred_check_branch
        %383 = sbr.rel (%p381) target = $region44
      $region43: #{fold_conv_aspp_pallas.1} parent=11 // pred_region
        _
      $region44: #{fold_conv_aspp_pallas.1} parent=11 // pred_fallthru
        _
      // Predicated region
      $region45: #{fold_conv_aspp_pallas.1} parent=11 // pred_check
        %p384 = pneg %p235
      $region46: #{fold_conv_aspp_pallas.1} parent=11 // pred_check_branch
        %386 = sbr.rel (%p384) target = $region48
      $region47: #{fold_conv_aspp_pallas.1} parent=11 // pred_region
        _
      $region48: #{fold_conv_aspp_pallas.1} parent=11 // pred_fallthru
        _
      // Predicated region
      $region49: #{fold_conv_aspp_pallas.1} parent=11 // pred_check
        %p387 = pneg %p256
      $region50: #{fold_conv_aspp_pallas.1} parent=11 // pred_check_branch
        %389 = sbr.rel (%p387) target = $region52
      $region51: #{fold_conv_aspp_pallas.1} parent=11 // pred_region
        _
      $region52: #{fold_conv_aspp_pallas.1} parent=11 // pred_fallthru
        _
      // Predicated region
      $region53: #{fold_conv_aspp_pallas.1} parent=11 // pred_check
        %p390 = pneg %p277
      $region54: #{fold_conv_aspp_pallas.1} parent=11 // pred_check_branch
        %392 = sbr.rel (%p390) target = $region56
      $region55: #{fold_conv_aspp_pallas.1} parent=11 // pred_region
        _
      $region56: #{fold_conv_aspp_pallas.1} parent=11 // pred_fallthru
        _
      // Predicated region
      $region57: #{fold_conv_aspp_pallas.1} parent=11 // pred_check
        %p393 = pneg %p298
      $region58: #{fold_conv_aspp_pallas.1} parent=11 // pred_check_branch
        %395 = sbr.rel (%p393) target = $region60
      $region59: #{fold_conv_aspp_pallas.1} parent=11 // pred_region
        _
      $region60: #{fold_conv_aspp_pallas.1} parent=11 // pred_fallthru
        _
      // Predicated region
      $region61: #{fold_conv_aspp_pallas.1} parent=11 // pred_check
        %p396 = pneg %p319
      $region62: #{fold_conv_aspp_pallas.1} parent=11 // pred_check_branch
        %398 = sbr.rel (%p396) target = $region64
      $region63: #{fold_conv_aspp_pallas.1} parent=11 // pred_region
        _
      $region64: #{fold_conv_aspp_pallas.1} parent=11 // pred_fallthru
        _
    $region12: #{fold_conv_aspp_pallas.1} parent=5 // pred_fallthru
      _
    %p399 = scmp.lt.s32.totalorder %s20, 2
    // Predicated region
    $region65: #{fold_conv_aspp_pallas.1} parent=5 // pred_check
      %p400 = pneg %p399
    $region66: #{fold_conv_aspp_pallas.1} parent=5 // pred_check_branch
      %402 = sbr.rel (%p400) target = $region68
    $region67: #{fold_conv_aspp_pallas.1} parent=5 // pred_region
      // Predicated region
      $region69: #{fold_conv_aspp_pallas.1} parent=67 // pred_check
        %p403 = pneg %p40
      $region70: #{fold_conv_aspp_pallas.1} parent=67 // pred_check_branch
        %405 = sbr.rel (%p403) target = $region72
      $region71: #{fold_conv_aspp_pallas.1} parent=67 // pred_region
        %p406 = scmp.lt.s32.totalorder %s20, 1
        %s407 = scalar_select %p406, %s20, 1
        %s408 = smul.addr %s407, 20
        %s409 = smul.addr %s408, 4
        %s410 = scalar_lea.vmem %s0, %s409
      $region72: #{fold_conv_aspp_pallas.1} parent=67 // pred_fallthru
        _
    $region68: #{fold_conv_aspp_pallas.1} parent=5 // pred_fallthru
      _
    %p411 = scmp.le.s32.totalorder 1, %s20
    %p412 = scmp.lt.s32.totalorder %s20, 3
    %p413 = pnand %p411, %p412
    %p414 = pneg %p413
    // Predicated region
    $region73: #{fold_conv_aspp_pallas.1} parent=5 // pred_check
      _
    $region74: #{fold_conv_aspp_pallas.1} parent=5 // pred_check_branch
      %416 = sbr.rel (%p413) target = $region76
    $region75: #{fold_conv_aspp_pallas.1} parent=5 // pred_region
      %s417 = ssub.s32 %s20, 1
      %p418 = scmp.lt.s32.totalorder %s25, 1
      %s419 = scalar_select %p418, %s25, 1
      %s420 = smul.addr %s419, 20
      %s421 = smul.addr %s420, 4
      %s422 = scalar_lea.vmem %s0, %s421
      %p423 = pneg %p46
      %p424 = pneg %p43
      %p425 = pneg %p67
      %p426 = pneg %p64
      %p427 = pneg %p88
      %p428 = pneg %p85
      %p429 = pneg %p109
      %p430 = pneg %p106
      %p431 = pneg %p130
      %p432 = pneg %p127
      %p433 = pneg %p151
      %p434 = pneg %p148
      %p435 = pneg %p172
      %p436 = pneg %p169
      %p437 = pneg %p193
      %p438 = pneg %p190
      %p439 = pneg %p214
      %p440 = pneg %p211
      %p441 = pneg %p235
      %p442 = pneg %p232
      %p443 = pneg %p256
      %p444 = pneg %p253
      %p445 = pneg %p277
      %p446 = pneg %p274
      %p447 = pneg %p298
      %p448 = pneg %p295
      %p449 = pneg %p319
      %p450 = pneg %p316
      %p451 = pneg %p345
      %p452 = pneg %p342
      %p453 = scmp.lt.s32.totalorder %s25, 1
      %s454 = scalar_select %p453, %s25, 1
      %s455 = smul.addr %s454, 8
      %s456 = smul.addr %s455, 8
      %s457 = scalar_lea.vmem %s14, %s456
      %p458 = scmp.lt.s32.totalorder %s25, 1
      %s459 = scalar_select %p458, %s25, 1
      %s460 = smul.addr %s459, 20
      %s461 = smul.addr %s460, 4
      %s462 = scalar_lea.vmem %s0, %s461
      %p463 = scmp.lt.s32.totalorder %s25, 1
      %s464 = scalar_select %p463, %s25, 1
      %s465 = smul.addr %s464, 8
      %s466 = smul.addr %s465, 8
      %s467 = scalar_lea.vmem %s14, %s466
      %v469 = vld [vmem:[%s462] sm:$0xf]
      %v470 = vld [vmem:[%s462 + $0x4] sm:$0x1]
      %v471 = vld [vmem:[%s462 + $0x8] sm:$0xf]
      %v472 = vld [vmem:[%s462 + $0xc] sm:$0x1]
      %v473 = vld [vmem:[%s462 + $0x10] sm:$0xf]
      %v474 = vld [vmem:[%s462 + $0x14] sm:$0x1]
      %v475 = vld [vmem:[%s462 + $0x18] sm:$0xf]
      %v476 = vld [vmem:[%s462 + $0x1c] sm:$0x1]
      %v477 = vld [vmem:[%s462 + $0x20] sm:$0xf]
      %v478 = vld [vmem:[%s462 + $0x24] sm:$0x1]
      %v479 = vld [vmem:[%s462 + $0x28] sm:$0xf]
      %v480 = vld [vmem:[%s462 + $0x2c] sm:$0x1]
      %v481 = vld [vmem:[%s462 + $0x30] sm:$0xf]
      %v482 = vld [vmem:[%s462 + $0x34] sm:$0x1]
      %v483 = vld [vmem:[%s462 + $0x38] sm:$0xf]
      %v484 = vld [vmem:[%s462 + $0x3c] sm:$0x1]
      %v485 = vld [vmem:[%s462 + $0x40] sm:$0xf]
      %v486 = vld [vmem:[%s462 + $0x44] sm:$0x1]
      %v487 = vld [vmem:[%s462 + $0x48] sm:$0xf]
      %v488 = vld [vmem:[%s462 + $0x4c] sm:$0x1]
      %v505 = vunpack.c.l.b16 %v469
      %v506 = vunpack.c.l.b16 %v470
      %v507 = vunpack.c.l.b16 %v471
      %v508 = vunpack.c.l.b16 %v472
      %v509 = vunpack.c.l.b16 %v473
      %v510 = vunpack.c.l.b16 %v474
      %v511 = vunpack.c.l.b16 %v475
      %v512 = vunpack.c.l.b16 %v476
      %v513 = vunpack.c.l.b16 %v477
      %v514 = vunpack.c.l.b16 %v478
      %v515 = vunpack.c.l.b16 %v479
      %v516 = vunpack.c.l.b16 %v480
      %v517 = vunpack.c.l.b16 %v481
      %v518 = vunpack.c.l.b16 %v482
      %v519 = vunpack.c.l.b16 %v483
      %v520 = vunpack.c.l.b16 %v484
      %v521 = vpack.c.b16 %v506, %v505
      %v522 = vpack.c.b16 %v508, %v507
      %v523 = vpack.c.b16 %v510, %v509
      %v524 = vpack.c.b16 %v512, %v511
      %v525 = vpack.c.b16 %v514, %v513
      %v526 = vpack.c.b16 %v516, %v515
      %v527 = vpack.c.b16 %v518, %v517
      %v528 = vpack.c.b16 %v520, %v519
      %v530 = vshrl.u32 %v521, 16
      %v532 = vshll.u32 %v521, 16
      %v534 = vrot.slane %v532, 1
      %v535 = vor.u32 %v530, %v534
      %v537 = vshrl.u32 %v522, 16
      %v539 = vshll.u32 %v522, 16
      %v541 = vrot.slane %v539, 1
      %v542 = vor.u32 %v537, %v541
      %v544 = vshrl.u32 %v523, 16
      %v546 = vshll.u32 %v523, 16
      %v548 = vrot.slane %v546, 1
      %v549 = vor.u32 %v544, %v548
      %v551 = vshrl.u32 %v524, 16
      %v553 = vshll.u32 %v524, 16
      %v555 = vrot.slane %v553, 1
      %v556 = vor.u32 %v551, %v555
      %v558 = vshrl.u32 %v525, 16
      %v560 = vshll.u32 %v525, 16
      %v562 = vrot.slane %v560, 1
      %v563 = vor.u32 %v558, %v562
      %v565 = vshrl.u32 %v526, 16
      %v567 = vshll.u32 %v526, 16
      %v569 = vrot.slane %v567, 1
      %v570 = vor.u32 %v565, %v569
      %v572 = vshrl.u32 %v527, 16
      %v574 = vshll.u32 %v527, 16
      %v576 = vrot.slane %v574, 1
      %v577 = vor.u32 %v572, %v576
      %v579 = vshrl.u32 %v528, 16
      %v581 = vshll.u32 %v528, 16
      %v583 = vrot.slane %v581, 1
      %v584 = vor.u32 %v579, %v583
      %585 = vrot.lane.b32.xlu0 %v535, 16
      %v586 = vpop.permute.xlu0 %585
      %587 = vrot.lane.b32.xlu0 %v542, 16
      %v588 = vpop.permute.xlu0 %587
      %589 = vrot.lane.b32.xlu0 %v549, 16
      %v590 = vpop.permute.xlu0 %589
      %591 = vrot.lane.b32.xlu0 %v556, 16
      %v592 = vpop.permute.xlu0 %591
      %593 = vrot.lane.b32.xlu0 %v563, 16
      %v594 = vpop.permute.xlu0 %593
      %595 = vrot.lane.b32.xlu0 %v570, 16
      %v596 = vpop.permute.xlu0 %595
      %597 = vrot.lane.b32.xlu0 %v577, 16
      %v598 = vpop.permute.xlu0 %597
      %599 = vrot.lane.b32.xlu0 %v584, 16
      %v600 = vpop.permute.xlu0 %599
      %v601 = vrot.slane %v521, 1
      %v602 = vrot.slane %v522, 1
      %v603 = vrot.slane %v523, 1
      %v604 = vrot.slane %v524, 1
      %v605 = vrot.slane %v525, 1
      %v606 = vrot.slane %v526, 1
      %v607 = vrot.slane %v527, 1
      %v608 = vrot.slane %v528, 1
      %609 = vrot.lane.b32.xlu0 %v601, 32
      %v610 = vpop.permute.xlu0 %609
      %611 = vrot.lane.b32.xlu0 %v602, 32
      %v612 = vpop.permute.xlu0 %611
      %613 = vrot.lane.b32.xlu0 %v603, 32
      %v614 = vpop.permute.xlu0 %613
      %615 = vrot.lane.b32.xlu0 %v604, 32
      %v616 = vpop.permute.xlu0 %615
      %617 = vrot.lane.b32.xlu0 %v605, 32
      %v618 = vpop.permute.xlu0 %617
      %619 = vrot.lane.b32.xlu0 %v606, 32
      %v620 = vpop.permute.xlu0 %619
      %621 = vrot.lane.b32.xlu0 %v607, 32
      %v622 = vpop.permute.xlu0 %621
      %623 = vrot.lane.b32.xlu0 %v608, 32
      %v624 = vpop.permute.xlu0 %623
      %v626 = vunpack.c.l.b16 %v485
      %v627 = vpack.c.b16 %v507, %v507
      %v628 = vpack.c.b16 %v509, %v509
      %v629 = vpack.c.b16 %v511, %v511
      %v630 = vpack.c.b16 %v513, %v513
      %v631 = vpack.c.b16 %v515, %v515
      %v632 = vpack.c.b16 %v517, %v517
      %v633 = vpack.c.b16 %v519, %v519
      %v634 = vpack.c.b16 %v626, %v626
      %635 = vrot.lane.b32.xlu0 %v627, 48
      %v636 = vpop.permute.xlu0 %635
      %637 = vrot.lane.b32.xlu0 %v628, 48
      %v638 = vpop.permute.xlu0 %637
      %639 = vrot.lane.b32.xlu0 %v629, 48
      %v640 = vpop.permute.xlu0 %639
      %641 = vrot.lane.b32.xlu0 %v630, 48
      %v642 = vpop.permute.xlu0 %641
      %643 = vrot.lane.b32.xlu0 %v631, 48
      %v644 = vpop.permute.xlu0 %643
      %645 = vrot.lane.b32.xlu0 %v632, 48
      %v646 = vpop.permute.xlu0 %645
      %647 = vrot.lane.b32.xlu0 %v633, 48
      %v648 = vpop.permute.xlu0 %647
      %649 = vrot.lane.b32.xlu0 %v634, 48
      %v650 = vpop.permute.xlu0 %649
      %v652 = vunpack.c.l.b16 %v486
      %v653 = vpack.c.b16 %v652, %v626
      %v655 = vshrl.u32 %v653, 16
      %v657 = vshll.u32 %v653, 16
      %v659 = vrot.slane %v657, 1
      %v660 = vor.u32 %v655, %v659
      %661 = vrot.lane.b32.xlu0 %v542, 64
      %v662 = vpop.permute.xlu0 %661
      %663 = vrot.lane.b32.xlu0 %v549, 64
      %v664 = vpop.permute.xlu0 %663
      %665 = vrot.lane.b32.xlu0 %v556, 64
      %v666 = vpop.permute.xlu0 %665
      %667 = vrot.lane.b32.xlu0 %v563, 64
      %v668 = vpop.permute.xlu0 %667
      %669 = vrot.lane.b32.xlu0 %v570, 64
      %v670 = vpop.permute.xlu0 %669
      %671 = vrot.lane.b32.xlu0 %v577, 64
      %v672 = vpop.permute.xlu0 %671
      %673 = vrot.lane.b32.xlu0 %v584, 64
      %v674 = vpop.permute.xlu0 %673
      %675 = vrot.lane.b32.xlu0 %v660, 64
      %v676 = vpop.permute.xlu0 %675
      %v677 = vrot.slane %v653, 1
      %678 = vrot.lane.b32.xlu0 %v602, 80
      %v679 = vpop.permute.xlu0 %678
      %680 = vrot.lane.b32.xlu0 %v603, 80
      %v681 = vpop.permute.xlu0 %680
      %682 = vrot.lane.b32.xlu0 %v604, 80
      %v683 = vpop.permute.xlu0 %682
      %684 = vrot.lane.b32.xlu0 %v605, 80
      %v685 = vpop.permute.xlu0 %684
      %686 = vrot.lane.b32.xlu0 %v606, 80
      %v687 = vpop.permute.xlu0 %686
      %688 = vrot.lane.b32.xlu0 %v607, 80
      %v689 = vpop.permute.xlu0 %688
      %690 = vrot.lane.b32.xlu0 %v608, 80
      %v691 = vpop.permute.xlu0 %690
      %692 = vrot.lane.b32.xlu0 %v677, 80
      %v693 = vpop.permute.xlu0 %692
      %v695 = vunpack.c.l.b16 %v487
      %v696 = vpack.c.b16 %v695, %v695
      %697 = vrot.lane.b32.xlu0 %v628, 96
      %v698 = vpop.permute.xlu0 %697
      %699 = vrot.lane.b32.xlu0 %v629, 96
      %v700 = vpop.permute.xlu0 %699
      %701 = vrot.lane.b32.xlu0 %v630, 96
      %v702 = vpop.permute.xlu0 %701
      %703 = vrot.lane.b32.xlu0 %v631, 96
      %v704 = vpop.permute.xlu0 %703
      %705 = vrot.lane.b32.xlu0 %v632, 96
      %v706 = vpop.permute.xlu0 %705
      %707 = vrot.lane.b32.xlu0 %v633, 96
      %v708 = vpop.permute.xlu0 %707
      %709 = vrot.lane.b32.xlu0 %v634, 96
      %v710 = vpop.permute.xlu0 %709
      %711 = vrot.lane.b32.xlu0 %v696, 96
      %v712 = vpop.permute.xlu0 %711
      %v714 = vunpack.c.l.b16 %v488
      %v715 = vpack.c.b16 %v714, %v695
      %v717 = vshrl.u32 %v715, 16
      %v719 = vshll.u32 %v715, 16
      %v721 = vrot.slane %v719, 1
      %v722 = vor.u32 %v717, %v721
      %723 = vrot.lane.b32.xlu0 %v549, 112
      %v724 = vpop.permute.xlu0 %723
      %725 = vrot.lane.b32.xlu0 %v556, 112
      %v726 = vpop.permute.xlu0 %725
      %727 = vrot.lane.b32.xlu0 %v563, 112
      %v728 = vpop.permute.xlu0 %727
      %729 = vrot.lane.b32.xlu0 %v570, 112
      %v730 = vpop.permute.xlu0 %729
      %731 = vrot.lane.b32.xlu0 %v577, 112
      %v732 = vpop.permute.xlu0 %731
      %733 = vrot.lane.b32.xlu0 %v584, 112
      %v734 = vpop.permute.xlu0 %733
      %735 = vrot.lane.b32.xlu0 %v660, 112
      %v736 = vpop.permute.xlu0 %735
      %737 = vrot.lane.b32.xlu0 %v722, 112
      %v738 = vpop.permute.xlu0 %737
      %v739 = vrot.slane %v715, 1
      %vm740 = vcmask 130048
      %v743 = vsel %vm740, %v469, %v586
      %v746 = vsel %vm740, %v471, %v588
      %v749 = vsel %vm740, %v473, %v590
      %v752 = vsel %vm740, %v475, %v592
      %v755 = vsel %vm740, %v477, %v594
      %v758 = vsel %vm740, %v479, %v596
      %v761 = vsel %vm740, %v481, %v598
      %v764 = vsel %vm740, %v483, %v600
      %vm765 = vcmask 261120
      %v767 = vsel %vm765, %v743, %v610
      %v769 = vsel %vm765, %v746, %v612
      %v771 = vsel %vm765, %v749, %v614
      %v773 = vsel %vm765, %v752, %v616
      %v775 = vsel %vm765, %v755, %v618
      %v777 = vsel %vm765, %v758, %v620
      %v779 = vsel %vm765, %v761, %v622
      %v781 = vsel %vm765, %v764, %v624
      %vm782 = vcmask 392192
      %v784 = vsel %vm782, %v767, %v636
      %v786 = vsel %vm782, %v769, %v638
      %v788 = vsel %vm782, %v771, %v640
      %v790 = vsel %vm782, %v773, %v642
      %v792 = vsel %vm782, %v775, %v644
      %v794 = vsel %vm782, %v777, %v646
      %v796 = vsel %vm782, %v779, %v648
      %v798 = vsel %vm782, %v781, %v650
      %vm799 = vcmask 523264
      %v801 = vsel %vm799, %v784, %v662
      %v803 = vsel %vm799, %v786, %v664
      %v805 = vsel %vm799, %v788, %v666
      %v807 = vsel %vm799, %v790, %v668
      %v809 = vsel %vm799, %v792, %v670
      %v811 = vsel %vm799, %v794, %v672
      %v813 = vsel %vm799, %v796, %v674
      %v815 = vsel %vm799, %v798, %v676
      %vm816 = vcmask 654336
      %v818 = vsel %vm816, %v801, %v679
      %v820 = vsel %vm816, %v803, %v681
      %v822 = vsel %vm816, %v805, %v683
      %v824 = vsel %vm816, %v807, %v685
      %v826 = vsel %vm816, %v809, %v687
      %v828 = vsel %vm816, %v811, %v689
      %v830 = vsel %vm816, %v813, %v691
      %v832 = vsel %vm816, %v815, %v693
      %vm833 = vcmask 785408
      %v835 = vsel %vm833, %v818, %v698
      %v837 = vsel %vm833, %v820, %v700
      %v839 = vsel %vm833, %v822, %v702
      %v841 = vsel %vm833, %v824, %v704
      %v843 = vsel %vm833, %v826, %v706
      %v845 = vsel %vm833, %v828, %v708
      %v847 = vsel %vm833, %v830, %v710
      %v849 = vsel %vm833, %v832, %v712
      %vm850 = vcmask 916480
      %v852 = vsel %vm850, %v835, %v724
      %v854 = vsel %vm850, %v837, %v726
      %v856 = vsel %vm850, %v839, %v728
      %v858 = vsel %vm850, %v841, %v730
      %v860 = vsel %vm850, %v843, %v732
      %v862 = vsel %vm850, %v845, %v734
      %v864 = vsel %vm850, %v847, %v736
      %v866 = vsel %vm850, %v849, %v738
      %v875 = vunpack.c.l.b16 %v852
      %v876 = vunpack.c.l.b16 %v603
      %v877 = vunpack.c.l.b16 %v854
      %v878 = vunpack.c.l.b16 %v604
      %v879 = vunpack.c.l.b16 %v856
      %v880 = vunpack.c.l.b16 %v605
      %v881 = vunpack.c.l.b16 %v858
      %v882 = vunpack.c.l.b16 %v606
      %v883 = vunpack.c.l.b16 %v860
      %v884 = vunpack.c.l.b16 %v607
      %v885 = vunpack.c.l.b16 %v862
      %v886 = vunpack.c.l.b16 %v608
      %v887 = vunpack.c.l.b16 %v864
      %v888 = vunpack.c.l.b16 %v677
      %v889 = vunpack.c.l.b16 %v866
      %v890 = vunpack.c.l.b16 %v739
      %v891 = vld [vmem:[%s1] sm:$0xf]
      %v892 = vld [vmem:[%s1 + $0x4] sm:$0xf]
      %v893 = vld [vmem:[%s1 + $0x8] sm:$0xf]
      %v894 = vld [vmem:[%s1 + $0xc] sm:$0xf]
      %v895 = vld [vmem:[%s1 + $0x10] sm:$0xf]
      %v896 = vld [vmem:[%s1 + $0x14] sm:$0xf]
      %v897 = vld [vmem:[%s1 + $0x18] sm:$0xf]
      %v898 = vld [vmem:[%s1 + $0x1c] sm:$0xf]
      %v899 = vld [vmem:[%s1 + $0x20] sm:$0xf]
      %v900 = vld [vmem:[%s1 + $0x24] sm:$0xf]
      %v901 = vld [vmem:[%s1 + $0x28] sm:$0xf]
      %v902 = vld [vmem:[%s1 + $0x2c] sm:$0xf]
      %v903 = vld [vmem:[%s1 + $0x30] sm:$0xf]
      %v904 = vld [vmem:[%s1 + $0x34] sm:$0xf]
      %v905 = vld [vmem:[%s1 + $0x38] sm:$0xf]
      %v906 = vld [vmem:[%s1 + $0x3c] sm:$0xf]
      %v907 = vld [vmem:[%s1 + $0x40] sm:$0xf]
      %v908 = vld [vmem:[%s1 + $0x44] sm:$0xf]
      %v909 = vld [vmem:[%s2] sm:$0x1]
      %v911 = vlaneseq
      %v912 = vshrl.u32 %v911, 7
      %v913 = vsub.s32 0, %v912
      %v914 = vrot.slane %v909, %v913
      %v916 = vpack.c.b16 %v877, %v875
      %v917 = vpack.c.b16 %v878, %v876
      %v918 = vpack.c.b16 %v881, %v879
      %v919 = vpack.c.b16 %v882, %v880
      %v920 = vpack.c.b16 %v885, %v883
      %v921 = vpack.c.b16 %v886, %v884
      %v922 = vpack.c.b16 %v889, %v887
      %v923 = vpack.c.b16 %v890, %v888
      %v946 = vunpack.c.l.b16 %v891
      %v947 = vunpack.c.l.b16 %v892
      %v948 = vunpack.c.l.b16 %v893
      %v949 = vunpack.c.l.b16 %v894
      %v950 = vunpack.c.l.b16 %v895
      %v951 = vunpack.c.l.b16 %v896
      %v952 = vunpack.c.l.b16 %v897
      %v953 = vunpack.c.l.b16 %v898
      %v954 = vunpack.c.l.b16 %v899
      %v955 = vunpack.c.l.b16 %v900
      %v956 = vunpack.c.l.b16 %v901
      %v957 = vunpack.c.l.b16 %v902
      %v958 = vunpack.c.l.b16 %v903
      %v959 = vunpack.c.l.b16 %v904
      %v960 = vunpack.c.l.b16 %v905
      %v961 = vunpack.c.l.b16 %v906
      %v962 = vunpack.c.l.b16 %v907
      %v963 = vunpack.c.l.b16 %v908
      %v964 = vpack.c.b16 %v947, %v946
      %v965 = vpack.c.b16 %v949, %v948
      %v966 = vpack.c.b16 %v951, %v950
      %v967 = vpack.c.b16 %v953, %v952
      %v968 = vpack.c.b16 %v955, %v954
      %v969 = vpack.c.b16 %v957, %v956
      %v970 = vpack.c.b16 %v959, %v958
      %v971 = vpack.c.b16 %v961, %v960
      %v972 = vpack.c.b16 %v963, %v962
      %v983 = vsel %vm740, %v917, 0
      %v986 = vsel %vm740, %v919, 0
      %v989 = vsel %vm740, %v921, 0
      %v992 = vsel %vm740, %v923, 0
      %994 = vmatprep.subr.bf16.mxu0 0
      %995 = vmatpush1.bf16.msra.mxu0 %v964
      %996 = vmatprep.subr.bf16.mxu0 0
      %997 = vmatpush1.bf16.msra.mxu0 %v965
      %998 = vmatprep.subr.bf16.mxu0 0
      %999 = vmatpush1.bf16.msra.mxu0 %v966
      %1000 = vmatprep.subr.bf16.mxu0 0
      %1001 = vmatpush1.bf16.msra.mxu0 %v967
      %1002 = vmatprep.subr.bf16.mxu0 0
      %1003 = vmatpush1.bf16.msra.mxu0 %v968
      %1004 = vmatprep.subr.bf16.mxu0 0
      %1005 = vmatpush1.bf16.msra.mxu0 %v969
      %1006 = vmatprep.subr.bf16.mxu0 0
      %1007 = vmatpush1.bf16.msra.mxu0 %v970
      %1008 = vmatprep.subr.bf16.mxu0 0
      %1009 = vmatpush1.bf16.msra.mxu0 %v971
      %1010 = vmatprep.subr.bf16.mxu0 0
      %1011 = vmatpush1.bf16.msra.mxu0 %v972
      %1012 = vmatprep.subr.bf16.mxu0 0
      %1013 = vmatpush1.bf16.msra.mxu0 0
      %1014 = vmatprep.subr.bf16.mxu0 0
      %1015 = vmatpush1.bf16.msra.mxu0 0
      %1016 = vmatprep.subr.bf16.mxu0 0
      %1017 = vmatpush1.bf16.msra.mxu0 0
      %1018 = vmatprep.subr.bf16.mxu0 0
      %1019 = vmatpush1.bf16.msra.mxu0 0
      %1020 = vmatprep.subr.bf16.mxu0 0
      %1021 = vmatpush1.bf16.msra.mxu0 0
      %1022 = vmatprep.subr.bf16.mxu0 0
      %1023 = vmatpush1.bf16.msra.mxu0 0
      %1024 = vmatprep.subr.bf16.mxu0 0
      %1025 = vmatpush1.bf16.msra.mxu0 0
      %1026 = vmatprep.mubr.bf16.mxu0 %v983
      %1027 = vmatmul.mubr.bf16.gmra.mrb[0].mxu0 %v916
      %v1028 = vpop.f32.mrb[0].mxu0
      %v1029 = vadd.f32 %v914, %v1028
      %v1030 = vpop.f32.mrb[0].mxu0
      %v1031 = vpop.f32.mrb[0].mxu0
      %v1032 = vadd.f32 %v914, %v1031
      %v1033 = vpop.f32.mrb[0].mxu0
      %1034 = vmatprep.mubr.bf16.mxu0 %v986
      %1035 = vmatmul.mubr.bf16.gmra.mrb[0].mxu0 %v918
      %v1036 = vpop.f32.mrb[0].mxu0
      %v1037 = vadd.f32 %v914, %v1036
      %v1038 = vpop.f32.mrb[0].mxu0
      %v1039 = vpop.f32.mrb[0].mxu0
      %v1040 = vadd.f32 %v914, %v1039
      %v1041 = vpop.f32.mrb[0].mxu0
      %1042 = vmatprep.mubr.bf16.mxu0 %v989
      %1043 = vmatmul.mubr.bf16.gmra.mrb[0].mxu0 %v920
      %v1044 = vpop.f32.mrb[0].mxu0
      %v1045 = vadd.f32 %v914, %v1044
      %v1046 = vpop.f32.mrb[0].mxu0
      %v1047 = vpop.f32.mrb[0].mxu0
      %v1048 = vadd.f32 %v914, %v1047
      %v1049 = vpop.f32.mrb[0].mxu0
      %1050 = vmatprep.mubr.bf16.mxu0 %v992
      %1051 = vmatmul.mubr.bf16.gmra.mrb[0].mxu0 %v922
      %v1052 = vpop.f32.mrb[0].mxu0
      %v1053 = vadd.f32 %v914, %v1052
      %v1054 = vpop.f32.mrb[0].mxu0
      %v1055 = vpop.f32.mrb[0].mxu0
      %v1056 = vadd.f32 %v914, %v1055
      %v1057 = vpop.f32.mrb[0].mxu0
      %1058 = vdwg.mxu0
      %v1059 = vmax.f32 %v1029, 0.0
      %v1060 = vmax.f32 %v1032, 0.0
      %v1061 = vmax.f32 %v1037, 0.0
      %v1062 = vmax.f32 %v1040, 0.0
      %v1063 = vmax.f32 %v1045, 0.0
      %v1064 = vmax.f32 %v1048, 0.0
      %v1065 = vmax.f32 %v1053, 0.0
      %v1066 = vmax.f32 %v1056, 0.0
      %v1067 = vpack.c.bf16 %v1060, %v1059
      %v1068 = vpack.c.bf16 %v1062, %v1061
      %v1069 = vpack.c.bf16 %v1064, %v1063
      %v1070 = vpack.c.bf16 %v1066, %v1065
      %1071 = vst [vmem:[#allocation2] sm:$0xf] 0
      %1072 = vst [vmem:[#allocation2 + $0x4] sm:$0xf] 0
      %1073 = vst [vmem:[#allocation2 + $0x8] sm:$0x3] 0
      %1074 = vst [vmem:[#allocation2 + $0xc] sm:$0xf] 0
      %1075 = vst [vmem:[#allocation2 + $0x10] sm:$0xf] 0
      %1076 = vst [vmem:[#allocation2 + $0x14] sm:$0x3] 0
      %1077 = vst [vmem:[#allocation2 + $0x18] sm:$0xf] 0
      %1078 = vst [vmem:[#allocation2 + $0x1c] sm:$0xf] 0
      %1079 = vst [vmem:[#allocation2 + $0x20] sm:$0x3] 0
      %1080 = vst [vmem:[#allocation2 + $0x24] sm:$0xf] 0
      %1081 = vst [vmem:[#allocation2 + $0x28] sm:$0xf] 0
      %1082 = vst [vmem:[#allocation2 + $0x2c] sm:$0x3] 0
      %1083 = vst [vmem:[#allocation2 + $0x30] sm:$0xf] 0
      %1084 = vst [vmem:[#allocation2 + $0x34] sm:$0xf] 0
      %1085 = vst [vmem:[#allocation2 + $0x38] sm:$0x3] 0
      %1086 = vst [vmem:[#allocation2 + $0x3c] sm:$0xf] 0
      %1087 = vst [vmem:[#allocation2 + $0x40] sm:$0xf] 0
      %1088 = vst [vmem:[#allocation2 + $0x44] sm:$0x3] 0
      %1089 = vst [vmem:[#allocation2 + $0x48] sm:$0xf] 0
      %1090 = vst [vmem:[#allocation2 + $0x4c] sm:$0xf] 0
      %1091 = vst [vmem:[#allocation2 + $0x50] sm:$0x3] 0
      %1092 = vst [vmem:[#allocation2 + $0x54] sm:$0xf] 0
      %1093 = vst [vmem:[#allocation2 + $0x58] sm:$0xf] 0
      %1094 = vst [vmem:[#allocation2 + $0x5c] sm:$0x3] 0
      %1095 = vst [vmem:[#allocation2 + $0x60] sm:$0xf] 0
      %1096 = vst [vmem:[#allocation2 + $0x64] sm:$0xf] 0
      %1097 = vst [vmem:[#allocation2 + $0x68] sm:$0x3] 0
      %1098 = vst [vmem:[#allocation2 + $0x6c] sm:$0xf] 0
      %1099 = vst [vmem:[#allocation2 + $0x70] sm:$0xf] 0
      %1100 = vst [vmem:[#allocation2 + $0x74] sm:$0x3] 0
      %1101 = vst [vmem:[#allocation2 + $0x78] sm:$0xf] 0
      %1102 = vst [vmem:[#allocation2 + $0x7c] sm:$0xf] 0
      %1103 = vst [vmem:[#allocation2 + $0x80] sm:$0x3] 0
      %1104 = vst [vmem:[#allocation2 + $0x84] sm:$0xf] 0
      %1105 = vst [vmem:[#allocation2 + $0x88] sm:$0xf] 0
      %1106 = vst [vmem:[#allocation2 + $0x8c] sm:$0x3] 0
      %1107 = vst [vmem:[#allocation2 + $0x90] sm:$0xf] 0
      %1108 = vst [vmem:[#allocation2 + $0x94] sm:$0xf] 0
      %1109 = vst [vmem:[#allocation2 + $0x98] sm:$0x3] 0
      %1110 = vst [vmem:[#allocation2 + $0x9c] sm:$0xf] 0
      %1111 = vst [vmem:[#allocation2 + $0xa0] sm:$0xf] 0
      %1112 = vst [vmem:[#allocation2 + $0xa4] sm:$0x3] 0
      %1113 = vst [vmem:[#allocation2 + $0xa8] sm:$0xf] 0
      %1114 = vst [vmem:[#allocation2 + $0xac] sm:$0xf] 0
      %1115 = vst [vmem:[#allocation2 + $0xb0] sm:$0x3] 0
      %1116 = vst [vmem:[#allocation2 + $0xb4] sm:$0xf] 0
      %1117 = vst [vmem:[#allocation2 + $0xb8] sm:$0xf] 0
      %1118 = vst [vmem:[#allocation2 + $0xbc] sm:$0x3] 0
      %1119 = vst [vmem:[#allocation2 + $0xc0] sm:$0xf] 0
      %1120 = vst [vmem:[#allocation2 + $0xc4] sm:$0xf] 0
      %1121 = vst [vmem:[#allocation2 + $0xc8] sm:$0x3] 0
      %1122 = vst [vmem:[#allocation2 + $0xcc] sm:$0xf] 0
      %1123 = vst [vmem:[#allocation2 + $0xd0] sm:$0xf] 0
      %1124 = vst [vmem:[#allocation2 + $0xd4] sm:$0x3] 0
      %1125 = vst [vmem:[#allocation2 + $0xd8] sm:$0xf] 0
      %1126 = vst [vmem:[#allocation2 + $0xdc] sm:$0xf] 0
      %1127 = vst [vmem:[#allocation2 + $0xe0] sm:$0x3] 0
      %1128 = vst [vmem:[#allocation2 + $0xe4] sm:$0xf] 0
      %1129 = vst [vmem:[#allocation2 + $0xe8] sm:$0xf] 0
      %1130 = vst [vmem:[#allocation2 + $0xec] sm:$0x3] 0
      %v1135 = vunpack.c.l.b16 %v1067
      %v1136 = vunpack.c.h.b16 %v1067
      %v1137 = vunpack.c.l.b16 %v1068
      %v1138 = vunpack.c.h.b16 %v1068
      %v1139 = vunpack.c.l.b16 %v1069
      %v1140 = vunpack.c.h.b16 %v1069
      %v1141 = vunpack.c.l.b16 %v1070
      %v1142 = vunpack.c.h.b16 %v1070
      %v1143 = vpack.c.b16 %v1135, %v1135
      %v1144 = vpack.c.b16 %v1136, %v1136
      %v1145 = vpack.c.b16 %v1137, %v1137
      %v1146 = vpack.c.b16 %v1138, %v1138
      %v1147 = vpack.c.b16 %v1139, %v1139
      %v1148 = vpack.c.b16 %v1140, %v1140
      %v1149 = vpack.c.b16 %v1141, %v1141
      %v1150 = vpack.c.b16 %v1142, %v1142
      %v1151 = vrot.slane %v1143, 5
      %v1152 = vrot.slane %v1151, 4
      %v1153 = vrot.slane %v1144, 5
      %v1154 = vrot.slane %v1153, 4
      %v1155 = vrot.slane %v1145, 5
      %v1156 = vrot.slane %v1155, 4
      %v1157 = vrot.slane %v1146, 5
      %v1158 = vrot.slane %v1157, 4
      %v1159 = vrot.slane %v1147, 5
      %v1160 = vrot.slane %v1159, 4
      %v1161 = vrot.slane %v1148, 5
      %v1162 = vrot.slane %v1161, 4
      %v1163 = vrot.slane %v1149, 5
      %v1164 = vrot.slane %v1163, 4
      %v1165 = vrot.slane %v1150, 5
      %v1166 = vrot.slane %v1165, 4
      %s1183 = scalar_lea.vmem [#allocation2], 72
      %1184 = vst [vmem:[%s1183] sm:$0x8] %v1151
      %1185 = vst [vmem:[%s1183 + $0x4] sm:$0x7] %v1152
      %1186 = vst [vmem:[%s1183 + $0xc] sm:$0x8] %v1153
      %1187 = vst [vmem:[%s1183 + $0x10] sm:$0x7] %v1154
      %1188 = vst [vmem:[%s1183 + $0x18] sm:$0x8] %v1155
      %1189 = vst [vmem:[%s1183 + $0x1c] sm:$0x7] %v1156
      %1190 = vst [vmem:[%s1183 + $0x24] sm:$0x8] %v1157
      %1191 = vst [vmem:[%s1183 + $0x28] sm:$0x7] %v1158
      %1192 = vst [vmem:[%s1183 + $0x30] sm:$0x8] %v1159
      %1193 = vst [vmem:[%s1183 + $0x34] sm:$0x7] %v1160
      %1194 = vst [vmem:[%s1183 + $0x3c] sm:$0x8] %v1161
      %1195 = vst [vmem:[%s1183 + $0x40] sm:$0x7] %v1162
      %1196 = vst [vmem:[%s1183 + $0x48] sm:$0x8] %v1163
      %1197 = vst [vmem:[%s1183 + $0x4c] sm:$0x7] %v1164
      %1198 = vst [vmem:[%s1183 + $0x54] sm:$0x8] %v1165
      %1199 = vst [vmem:[%s1183 + $0x58] sm:$0x7] %v1166
      %v1200 = vunpack.c.l.bf16 %v1067
      %v1201 = vunpack.c.h.bf16 %v1067
      %v1202 = vunpack.c.l.bf16 %v1068
      %v1203 = vunpack.c.h.bf16 %v1068
      %v1204 = vunpack.c.l.bf16 %v1069
      %v1205 = vunpack.c.h.bf16 %v1069
      %v1206 = vunpack.c.l.bf16 %v1070
      %v1207 = vunpack.c.h.bf16 %v1070
      %v1208 = vadd.f32 %v1200, %v1201
      %v1209 = vadd.f32 %v1208, %v1202
      %v1210 = vadd.f32 %v1209, %v1203
      %v1211 = vadd.f32 %v1210, %v1204
      %v1212 = vadd.f32 %v1211, %v1205
      %v1213 = vadd.f32 %v1212, %v1206
      %v1214 = vadd.f32 %v1213, %v1207
      %v1215 = vrot.slane %v1214, 4
      %v1216 = vadd.f32 %v1214, %v1215
      %v1217 = vrot.slane %v1216, 2
      %v1218 = vadd.f32 %v1216, %v1217
      %v1219 = vrot.slane %v1218, 1
      %v1220 = vadd.f32 %v1218, %v1219
      %v1221 = vrcp.pop 64.0
      %v1222 = vmul.f32 %v1220, %v1221
      %v1223 = vpack.c.bf16 %v1222, %v1222
      %v1224 = vld [vmem:[%s7] sm:$0xf]
      %v1225 = vld [vmem:[%s7 + $0x4] sm:$0xf]
      %v1226 = vld [vmem:[%s7 + $0x8] sm:$0xf]
      %v1227 = vld [vmem:[%s7 + $0xc] sm:$0xf]
      %v1228 = vld [vmem:[%s7 + $0x10] sm:$0xf]
      %v1229 = vld [vmem:[%s7 + $0x14] sm:$0xf]
      %v1230 = vld [vmem:[%s7 + $0x18] sm:$0xf]
      %v1231 = vld [vmem:[%s7 + $0x1c] sm:$0xf]
      %v1232 = vld [vmem:[%s7 + $0x20] sm:$0xf]
      %v1233 = vld [vmem:[%s7 + $0x24] sm:$0xf]
      %v1234 = vld [vmem:[%s7 + $0x28] sm:$0xf]
      %v1235 = vld [vmem:[%s7 + $0x2c] sm:$0xf]
      %v1236 = vld [vmem:[%s7 + $0x30] sm:$0xf]
      %v1237 = vld [vmem:[%s7 + $0x34] sm:$0xf]
      %v1238 = vld [vmem:[%s7 + $0x38] sm:$0xf]
      %v1239 = vld [vmem:[%s7 + $0x3c] sm:$0xf]
      %v1240 = vld [vmem:[%s8] sm:$0x1]
      %v1257 = vunpack.c.l.b16 %v1224
      %v1258 = vunpack.c.l.b16 %v1225
      %v1259 = vunpack.c.l.b16 %v1226
      %v1260 = vunpack.c.l.b16 %v1227
      %v1261 = vunpack.c.l.b16 %v1228
      %v1262 = vunpack.c.l.b16 %v1229
      %v1263 = vunpack.c.l.b16 %v1230
      %v1264 = vunpack.c.l.b16 %v1231
      %v1265 = vunpack.c.l.b16 %v1232
      %v1266 = vunpack.c.l.b16 %v1233
      %v1267 = vunpack.c.l.b16 %v1234
      %v1268 = vunpack.c.l.b16 %v1235
      %v1269 = vunpack.c.l.b16 %v1236
      %v1270 = vunpack.c.l.b16 %v1237
      %v1271 = vunpack.c.l.b16 %v1238
      %v1272 = vunpack.c.l.b16 %v1239
      %v1273 = vpack.c.b16 %v1258, %v1257
      %v1274 = vpack.c.b16 %v1260, %v1259
      %v1275 = vpack.c.b16 %v1262, %v1261
      %v1276 = vpack.c.b16 %v1264, %v1263
      %v1277 = vpack.c.b16 %v1266, %v1265
      %v1278 = vpack.c.b16 %v1268, %v1267
      %v1279 = vpack.c.b16 %v1270, %v1269
      %v1280 = vpack.c.b16 %v1272, %v1271
      %1289 = vmatprep.subr.bf16.mxu0 0
      %1290 = vmatpush1.bf16.msra.mxu0 %v1273
      %1291 = vmatprep.subr.bf16.mxu0 0
      %1292 = vmatpush1.bf16.msra.mxu0 %v1274
      %1293 = vmatprep.subr.bf16.mxu0 0
      %1294 = vmatpush1.bf16.msra.mxu0 %v1275
      %1295 = vmatprep.subr.bf16.mxu0 0
      %1296 = vmatpush1.bf16.msra.mxu0 %v1276
      %1297 = vmatprep.subr.bf16.mxu0 0
      %1298 = vmatpush1.bf16.msra.mxu0 %v1277
      %1299 = vmatprep.subr.bf16.mxu0 0
      %1300 = vmatpush1.bf16.msra.mxu0 %v1278
      %1301 = vmatprep.subr.bf16.mxu0 0
      %1302 = vmatpush1.bf16.msra.mxu0 %v1279
      %1303 = vmatprep.subr.bf16.mxu0 0
      %1304 = vmatpush1.bf16.msra.mxu0 %v1280
      %1305 = vmatprep.subr.bf16.mxu0 0
      %1306 = vmatpush1.bf16.msra.mxu0 0
      %1307 = vmatprep.subr.bf16.mxu0 0
      %1308 = vmatpush1.bf16.msra.mxu0 0
      %1309 = vmatprep.subr.bf16.mxu0 0
      %1310 = vmatpush1.bf16.msra.mxu0 0
      %1311 = vmatprep.subr.bf16.mxu0 0
      %1312 = vmatpush1.bf16.msra.mxu0 0
      %1313 = vmatprep.subr.bf16.mxu0 0
      %1314 = vmatpush1.bf16.msra.mxu0 0
      %1315 = vmatprep.subr.bf16.mxu0 0
      %1316 = vmatpush1.bf16.msra.mxu0 0
      %1317 = vmatprep.subr.bf16.mxu0 0
      %1318 = vmatpush1.bf16.msra.mxu0 0
      %1319 = vmatprep.subr.bf16.mxu0 0
      %1320 = vmatpush1.bf16.msra.mxu0 0
      %1321 = vmatprep.mubr.bf16.mxu0 0
      %1322 = vmatmul.mubr.bf16.gmra.mrb[0].mxu0 %v1223
      %v1323 = vpop.f32.mrb[0].mxu0
      %v1324 = vadd.f32 %v1240, %v1323
      %v1325 = vpop.f32.mrb[0].mxu0
      %v1326 = vpop.f32.mrb[0].mxu0
      %v1327 = vpop.f32.mrb[0].mxu0
      %1328 = vdwg.mxu0
      %v1329 = vmax.f32 %v1324, 0.0
      %v1330 = vld [vmem:[%s11] sm:$0x1]
      %v1331 = vpack.c.bf16 %v1329, %v1329
      %v1332 = vld [vmem:[%s10] sm:$0xf]
      %v1333 = vld [vmem:[%s10 + $0x4] sm:$0xf]
      %v1334 = vld [vmem:[%s10 + $0x8] sm:$0xf]
      %v1335 = vld [vmem:[%s10 + $0xc] sm:$0xf]
      %v1336 = vld [vmem:[%s10 + $0x10] sm:$0xf]
      %v1337 = vld [vmem:[%s10 + $0x14] sm:$0xf]
      %v1338 = vld [vmem:[%s10 + $0x18] sm:$0xf]
      %v1339 = vld [vmem:[%s10 + $0x1c] sm:$0xf]
      %v1348 = vunpack.c.l.b16 %v1332
      %v1349 = vunpack.c.l.b16 %v1333
      %v1350 = vunpack.c.l.b16 %v1334
      %v1351 = vunpack.c.l.b16 %v1335
      %v1352 = vunpack.c.l.b16 %v1336
      %v1353 = vunpack.c.l.b16 %v1337
      %v1354 = vunpack.c.l.b16 %v1338
      %v1355 = vunpack.c.l.b16 %v1339
      %v1356 = vpack.c.b16 %v1349, %v1348
      %v1357 = vpack.c.b16 %v1351, %v1350
      %v1358 = vpack.c.b16 %v1353, %v1352
      %v1359 = vpack.c.b16 %v1355, %v1354
      %v1365 = vsel %vm799, %v1331, 0
      %1367 = vmatprep.subr.bf16.mxu0 0
      %1368 = vmatpush1.bf16.msra.mxu0 %v1356
      %1369 = vmatprep.subr.bf16.mxu0 0
      %1370 = vmatpush1.bf16.msra.mxu0 %v1357
      %1371 = vmatprep.subr.bf16.mxu0 0
      %1372 = vmatpush1.bf16.msra.mxu0 %v1358
      %1373 = vmatprep.subr.bf16.mxu0 0
      %1374 = vmatpush1.bf16.msra.mxu0 %v1359
      %1375 = vmatprep.subr.bf16.mxu0 0
      %1376 = vmatpush1.bf16.msra.mxu0 0
      %1377 = vmatprep.subr.bf16.mxu0 0
      %1378 = vmatpush1.bf16.msra.mxu0 0
      %1379 = vmatprep.subr.bf16.mxu0 0
      %1380 = vmatpush1.bf16.msra.mxu0 0
      %1381 = vmatprep.subr.bf16.mxu0 0
      %1382 = vmatpush1.bf16.msra.mxu0 0
      %1383 = vmatprep.subr.bf16.mxu0 0
      %1384 = vmatpush1.bf16.msra.mxu0 0
      %1385 = vmatprep.subr.bf16.mxu0 0
      %1386 = vmatpush1.bf16.msra.mxu0 0
      %1387 = vmatprep.subr.bf16.mxu0 0
      %1388 = vmatpush1.bf16.msra.mxu0 0
      %1389 = vmatprep.subr.bf16.mxu0 0
      %1390 = vmatpush1.bf16.msra.mxu0 0
      %1391 = vmatprep.subr.bf16.mxu0 0
      %1392 = vmatpush1.bf16.msra.mxu0 0
      %1393 = vmatprep.subr.bf16.mxu0 0
      %1394 = vmatpush1.bf16.msra.mxu0 0
      %1395 = vmatprep.subr.bf16.mxu0 0
      %1396 = vmatpush1.bf16.msra.mxu0 0
      %1397 = vmatprep.subr.bf16.mxu0 0
      %1398 = vmatpush1.bf16.msra.mxu0 0
      %1399 = vmatprep.mubr.bf16.mxu0 0
      %1400 = vmatmul.mubr.bf16.gmra.mrb[0].mxu0 %v1365
      %v1401 = vpop.f32.mrb[0].mxu0
      %v1402 = vadd.f32 0.0, %v1401
      %v1403 = vpop.f32.mrb[0].mxu0
      %v1404 = vpop.f32.mrb[0].mxu0
      %v1405 = vpop.f32.mrb[0].mxu0
      %1406 = vdwg.mxu0
      %v1407 = vadd.f32 %v1330, %v1402
      %v1408 = vld [vmem:[%s3] sm:$0xf]
      %v1409 = vld [vmem:[%s3 + $0x4] sm:$0xf]
      %v1410 = vld [vmem:[%s3 + $0x8] sm:$0xf]
      %v1411 = vld [vmem:[%s3 + $0xc] sm:$0xf]
      %v1412 = vld [vmem:[%s3 + $0x10] sm:$0xf]
      %v1413 = vld [vmem:[%s3 + $0x14] sm:$0xf]
      %v1414 = vld [vmem:[%s3 + $0x18] sm:$0xf]
      %v1415 = vld [vmem:[%s3 + $0x1c] sm:$0xf]
      %v1416 = vld [vmem:[%s3 + $0x20] sm:$0xf]
      %v1417 = vld [vmem:[%s3 + $0x24] sm:$0xf]
      %v1418 = vld [vmem:[%s3 + $0x28] sm:$0xf]
      %v1419 = vld [vmem:[%s3 + $0x2c] sm:$0xf]
      %v1420 = vld [vmem:[%s3 + $0x30] sm:$0xf]
      %v1421 = vld [vmem:[%s3 + $0x34] sm:$0xf]
      %v1422 = vld [vmem:[%s3 + $0x38] sm:$0xf]
      %v1423 = vld [vmem:[%s3 + $0x3c] sm:$0xf]
      %v1424 = vld [vmem:[%s4] sm:$0x1]
      %v1426 = vlaneseq
      %v1427 = vshrl.u32 %v1426, 7
      %v1428 = vsub.s32 0, %v1427
      %v1429 = vrot.slane %v1424, %v1428
      %v1447 = vunpack.c.l.b16 %v1408
      %v1448 = vunpack.c.l.b16 %v1409
      %v1449 = vunpack.c.l.b16 %v1410
      %v1450 = vunpack.c.l.b16 %v1411
      %v1451 = vunpack.c.l.b16 %v1412
      %v1452 = vunpack.c.l.b16 %v1413
      %v1453 = vunpack.c.l.b16 %v1414
      %v1454 = vunpack.c.l.b16 %v1415
      %v1455 = vunpack.c.l.b16 %v1416
      %v1456 = vunpack.c.l.b16 %v1417
      %v1457 = vunpack.c.l.b16 %v1418
      %v1458 = vunpack.c.l.b16 %v1419
      %v1459 = vunpack.c.l.b16 %v1420
      %v1460 = vunpack.c.l.b16 %v1421
      %v1461 = vunpack.c.l.b16 %v1422
      %v1462 = vunpack.c.l.b16 %v1423
      %v1463 = vpack.c.b16 %v1448, %v1447
      %v1464 = vpack.c.b16 %v1450, %v1449
      %v1465 = vpack.c.b16 %v1452, %v1451
      %v1466 = vpack.c.b16 %v1454, %v1453
      %v1467 = vpack.c.b16 %v1456, %v1455
      %v1468 = vpack.c.b16 %v1458, %v1457
      %v1469 = vpack.c.b16 %v1460, %v1459
      %v1470 = vpack.c.b16 %v1462, %v1461
      %1479 = vmatprep.subr.bf16.mxu0 0
      %1480 = vmatpush1.bf16.msra.mxu0 %v1463
      %1481 = vmatprep.subr.bf16.mxu0 0
      %1482 = vmatpush1.bf16.msra.mxu0 %v1464
      %1483 = vmatprep.subr.bf16.mxu0 0
      %1484 = vmatpush1.bf16.msra.mxu0 %v1465
      %1485 = vmatprep.subr.bf16.mxu0 0
      %1486 = vmatpush1.bf16.msra.mxu0 %v1466
      %1487 = vmatprep.subr.bf16.mxu0 0
      %1488 = vmatpush1.bf16.msra.mxu0 %v1467
      %1489 = vmatprep.subr.bf16.mxu0 0
      %1490 = vmatpush1.bf16.msra.mxu0 %v1468
      %1491 = vmatprep.subr.bf16.mxu0 0
      %1492 = vmatpush1.bf16.msra.mxu0 %v1469
      %1493 = vmatprep.subr.bf16.mxu0 0
      %1494 = vmatpush1.bf16.msra.mxu0 %v1470
      %1495 = vmatprep.subr.bf16.mxu0 0
      %1496 = vmatpush1.bf16.msra.mxu0 0
      %1497 = vmatprep.subr.bf16.mxu0 0
      %1498 = vmatpush1.bf16.msra.mxu0 0
      %1499 = vmatprep.subr.bf16.mxu0 0
      %1500 = vmatpush1.bf16.msra.mxu0 0
      %1501 = vmatprep.subr.bf16.mxu0 0
      %1502 = vmatpush1.bf16.msra.mxu0 0
      %1503 = vmatprep.subr.bf16.mxu0 0
      %1504 = vmatpush1.bf16.msra.mxu0 0
      %1505 = vmatprep.subr.bf16.mxu0 0
      %1506 = vmatpush1.bf16.msra.mxu0 0
      %1507 = vmatprep.subr.bf16.mxu0 0
      %1508 = vmatpush1.bf16.msra.mxu0 0
      %1509 = vmatprep.subr.bf16.mxu0 0
      %1510 = vmatpush1.bf16.msra.mxu0 0
      %1511 = vmatprep.mubr.bf16.mxu0 0
      %1512 = vmatmul.mubr.bf16.gmra.mrb[0].mxu0 %v1067
      %v1513 = vpop.f32.mrb[0].mxu0
      %v1514 = vadd.f32 %v1429, %v1513
      %v1515 = vpop.f32.mrb[0].mxu0
      %v1516 = vpop.f32.mrb[0].mxu0
      %v1517 = vadd.f32 %v1429, %v1516
      %v1518 = vpop.f32.mrb[0].mxu0
      %1519 = vmatprep.mubr.bf16.mxu0 0
      %1520 = vmatmul.mubr.bf16.gmra.mrb[0].mxu0 %v1068
      %v1521 = vpop.f32.mrb[0].mxu0
      %v1522 = vadd.f32 %v1429, %v1521
      %v1523 = vpop.f32.mrb[0].mxu0
      %v1524 = vpop.f32.mrb[0].mxu0
      %v1525 = vadd.f32 %v1429, %v1524
      %v1526 = vpop.f32.mrb[0].mxu0
      %1527 = vmatprep.mubr.bf16.mxu0 0
      %1528 = vmatmul.mubr.bf16.gmra.mrb[0].mxu0 %v1069
      %v1529 = vpop.f32.mrb[0].mxu0
      %v1530 = vadd.f32 %v1429, %v1529
      %v1531 = vpop.f32.mrb[0].mxu0
      %v1532 = vpop.f32.mrb[0].mxu0
      %v1533 = vadd.f32 %v1429, %v1532
      %v1534 = vpop.f32.mrb[0].mxu0
      %1535 = vmatprep.mubr.bf16.mxu0 0
      %1536 = vmatmul.mubr.bf16.gmra.mrb[0].mxu0 %v1070
      %v1537 = vpop.f32.mrb[0].mxu0
      %v1538 = vadd.f32 %v1429, %v1537
      %v1539 = vpop.f32.mrb[0].mxu0
      %v1540 = vpop.f32.mrb[0].mxu0
      %v1541 = vadd.f32 %v1429, %v1540
      %v1542 = vpop.f32.mrb[0].mxu0
      %1543 = vdwg.mxu0
      %v1544 = vmax.f32 %v1514, 0.0
      %v1545 = vmax.f32 %v1517, 0.0
      %v1546 = vmax.f32 %v1522, 0.0
      %v1547 = vmax.f32 %v1525, 0.0
      %v1548 = vmax.f32 %v1530, 0.0
      %v1549 = vmax.f32 %v1533, 0.0
      %v1550 = vmax.f32 %v1538, 0.0
      %v1551 = vmax.f32 %v1541, 0.0
      %v1552 = vpack.c.bf16 %v1545, %v1544
      %v1553 = vpack.c.bf16 %v1547, %v1546
      %v1554 = vpack.c.bf16 %v1549, %v1548
      %v1555 = vpack.c.bf16 %v1551, %v1550
      %s1556 = scalar_lea.vmem [#allocation2], 48
      %v1557 = vld [vmem:[%s1556] sm:$0xc]
      %v1558 = vld [vmem:[%s1556 + $0x4] sm:$0x3]
      %v1559 = vld [vmem:[%s1556 + $0xc] sm:$0xc]
      %v1560 = vld [vmem:[%s1556 + $0x10] sm:$0x3]
      %v1561 = vld [vmem:[%s1556 + $0x18] sm:$0xc]
      %v1562 = vld [vmem:[%s1556 + $0x1c] sm:$0x3]
      %v1563 = vld [vmem:[%s1556 + $0x24] sm:$0xc]
      %v1564 = vld [vmem:[%s1556 + $0x28] sm:$0x3]
      %v1565 = vld [vmem:[%s1556 + $0x30] sm:$0xc]
      %v1566 = vld [vmem:[%s1556 + $0x34] sm:$0x3]
      %v1567 = vld [vmem:[%s1556 + $0x3c] sm:$0xc]
      %v1568 = vld [vmem:[%s1556 + $0x40] sm:$0x3]
      %v1569 = vld [vmem:[%s1556 + $0x48] sm:$0xc]
      %v1570 = vld [vmem:[%s1556 + $0x4c] sm:$0x3]
      %v1571 = vld [vmem:[%s1556 + $0x54] sm:$0xc]
      %v1572 = vld [vmem:[%s1556 + $0x58] sm:$0x3]
      %vm1589 = vcmask 1041408
      %vm1590 = vcmask 1045508
      %vm1591 = vmor %vm1589, %vm1590
      %v1592 = vrot.slane %v1557, 6
      %v1593 = vrot.slane %v1592, 4
      %v1594 = vrot.slane %v1558, 6
      %v1595 = vsel %vm1591, %v1593, %v1594
      %v1596 = vrot.slane %v1559, 6
      %v1597 = vrot.slane %v1596, 4
      %v1598 = vrot.slane %v1560, 6
      %v1599 = vsel %vm1591, %v1597, %v1598
      %v1600 = vrot.slane %v1561, 6
      %v1601 = vrot.slane %v1600, 4
      %v1602 = vrot.slane %v1562, 6
      %v1603 = vsel %vm1591, %v1601, %v1602
      %v1604 = vrot.slane %v1563, 6
      %v1605 = vrot.slane %v1604, 4
      %v1606 = vrot.slane %v1564, 6
      %v1607 = vsel %vm1591, %v1605, %v1606
      %v1608 = vrot.slane %v1565, 6
      %v1609 = vrot.slane %v1608, 4
      %v1610 = vrot.slane %v1566, 6
      %v1611 = vsel %vm1591, %v1609, %v1610
      %v1612 = vrot.slane %v1567, 6
      %v1613 = vrot.slane %v1612, 4
      %v1614 = vrot.slane %v1568, 6
      %v1615 = vsel %vm1591, %v1613, %v1614
      %v1616 = vrot.slane %v1569, 6
      %v1617 = vrot.slane %v1616, 4
      %v1618 = vrot.slane %v1570, 6
      %v1619 = vsel %vm1591, %v1617, %v1618
      %v1620 = vrot.slane %v1571, 6
      %v1621 = vrot.slane %v1620, 4
      %v1622 = vrot.slane %v1572, 6
      %v1623 = vsel %vm1591, %v1621, %v1622
      %v1624 = vld [vmem:[%s5] sm:$0xf]
      %v1625 = vld [vmem:[%s5 + $0x4] sm:$0xf]
      %v1626 = vld [vmem:[%s5 + $0x8] sm:$0xf]
      %v1627 = vld [vmem:[%s5 + $0xc] sm:$0xf]
      %v1628 = vld [vmem:[%s5 + $0x10] sm:$0xf]
      %v1629 = vld [vmem:[%s5 + $0x14] sm:$0xf]
      %v1630 = vld [vmem:[%s5 + $0x18] sm:$0xf]
      %v1631 = vld [vmem:[%s5 + $0x1c] sm:$0xf]
      %v1632 = vld [vmem:[%s5 + $0x20] sm:$0xf]
      %v1633 = vld [vmem:[%s5 + $0x24] sm:$0xf]
      %v1634 = vld [vmem:[%s5 + $0x28] sm:$0xf]
      %v1635 = vld [vmem:[%s5 + $0x2c] sm:$0xf]
      %v1636 = vld [vmem:[%s5 + $0x30] sm:$0xf]
      %v1637 = vld [vmem:[%s5 + $0x34] sm:$0xf]
      %v1638 = vld [vmem:[%s5 + $0x38] sm:$0xf]
      %v1639 = vld [vmem:[%s5 + $0x3c] sm:$0xf]
      %v1640 = vld [vmem:[%s1556] sm:$0x8]
      %v1641 = vld [vmem:[%s1556 + $0x4] sm:$0x7]
      %v1642 = vld [vmem:[%s1556 + $0xc] sm:$0x8]
      %v1643 = vld [vmem:[%s1556 + $0x10] sm:$0x7]
      %v1644 = vld [vmem:[%s1556 + $0x18] sm:$0x8]
      %v1645 = vld [vmem:[%s1556 + $0x1c] sm:$0x7]
      %v1646 = vld [vmem:[%s1556 + $0x24] sm:$0x8]
      %v1647 = vld [vmem:[%s1556 + $0x28] sm:$0x7]
      %v1648 = vld [vmem:[%s1556 + $0x30] sm:$0x8]
      %v1649 = vld [vmem:[%s1556 + $0x34] sm:$0x7]
      %v1650 = vld [vmem:[%s1556 + $0x3c] sm:$0x8]
      %v1651 = vld [vmem:[%s1556 + $0x40] sm:$0x7]
      %v1652 = vld [vmem:[%s1556 + $0x48] sm:$0x8]
      %v1653 = vld [vmem:[%s1556 + $0x4c] sm:$0x7]
      %v1654 = vld [vmem:[%s1556 + $0x54] sm:$0x8]
      %v1655 = vld [vmem:[%s1556 + $0x58] sm:$0x7]
      %vm1672 = vcmask 1040384
      %vm1673 = vcmask 1044484
      %vm1674 = vmor %vm1672, %vm1673
      %v1675 = vrot.slane %v1640, 7
      %v1676 = vrot.slane %v1675, 4
      %v1677 = vrot.slane %v1641, 7
      %v1678 = vsel %vm1674, %v1676, %v1677
      %v1679 = vrot.slane %v1642, 7
      %v1680 = vrot.slane %v1679, 4
      %v1681 = vrot.slane %v1643, 7
      %v1682 = vsel %vm1674, %v1680, %v1681
      %v1683 = vrot.slane %v1644, 7
      %v1684 = vrot.slane %v1683, 4
      %v1685 = vrot.slane %v1645, 7
      %v1686 = vsel %vm1674, %v1684, %v1685
      %v1687 = vrot.slane %v1646, 7
      %v1688 = vrot.slane %v1687, 4
      %v1689 = vrot.slane %v1647, 7
      %v1690 = vsel %vm1674, %v1688, %v1689
      %v1691 = vrot.slane %v1648, 7
      %v1692 = vrot.slane %v1691, 4
      %v1693 = vrot.slane %v1649, 7
      %v1694 = vsel %vm1674, %v1692, %v1693
      %v1695 = vrot.slane %v1650, 7
      %v1696 = vrot.slane %v1695, 4
      %v1697 = vrot.slane %v1651, 7
      %v1698 = vsel %vm1674, %v1696, %v1697
      %v1699 = vrot.slane %v1652, 7
      %v1700 = vrot.slane %v1699, 4
      %v1701 = vrot.slane %v1653, 7
      %v1702 = vsel %vm1674, %v1700, %v1701
      %v1703 = vrot.slane %v1654, 7
      %v1704 = vrot.slane %v1703, 4
      %v1705 = vrot.slane %v1655, 7
      %v1706 = vsel %vm1674, %v1704, %v1705
      %s1707 = scalar_lea.vmem %s5, 64
      %v1708 = vld [vmem:[%s1707] sm:$0xf]
      %v1709 = vld [vmem:[%s1707 + $0x4] sm:$0xf]
      %v1710 = vld [vmem:[%s1707 + $0x8] sm:$0xf]
      %v1711 = vld [vmem:[%s1707 + $0xc] sm:$0xf]
      %v1712 = vld [vmem:[%s1707 + $0x10] sm:$0xf]
      %v1713 = vld [vmem:[%s1707 + $0x14] sm:$0xf]
      %v1714 = vld [vmem:[%s1707 + $0x18] sm:$0xf]
      %v1715 = vld [vmem:[%s1707 + $0x1c] sm:$0xf]
      %v1716 = vld [vmem:[%s1707 + $0x20] sm:$0xf]
      %v1717 = vld [vmem:[%s1707 + $0x24] sm:$0xf]
      %v1718 = vld [vmem:[%s1707 + $0x28] sm:$0xf]
      %v1719 = vld [vmem:[%s1707 + $0x2c] sm:$0xf]
      %v1720 = vld [vmem:[%s1707 + $0x30] sm:$0xf]
      %v1721 = vld [vmem:[%s1707 + $0x34] sm:$0xf]
      %v1722 = vld [vmem:[%s1707 + $0x38] sm:$0xf]
      %v1723 = vld [vmem:[%s1707 + $0x3c] sm:$0xf]
      %v1724 = vunpack.c.l.b16 %v1678
      %v1725 = vunpack.c.l.b16 %v1682
      %v1726 = vunpack.c.l.b16 %v1686
      %v1727 = vunpack.c.l.b16 %v1690
      %v1728 = vunpack.c.l.b16 %v1694
      %v1729 = vunpack.c.l.b16 %v1698
      %v1730 = vunpack.c.l.b16 %v1702
      %v1731 = vunpack.c.l.b16 %v1706
      %v1732 = vpack.c.b16 %v1725, %v1724
      %v1733 = vpack.c.b16 %v1727, %v1726
      %v1734 = vpack.c.b16 %v1729, %v1728
      %v1735 = vpack.c.b16 %v1731, %v1730
      %v1756 = vunpack.c.l.b16 %v1708
      %v1757 = vunpack.c.l.b16 %v1709
      %v1758 = vunpack.c.l.b16 %v1710
      %v1759 = vunpack.c.l.b16 %v1711
      %v1760 = vunpack.c.l.b16 %v1712
      %v1761 = vunpack.c.l.b16 %v1713
      %v1762 = vunpack.c.l.b16 %v1714
      %v1763 = vunpack.c.l.b16 %v1715
      %v1764 = vunpack.c.l.b16 %v1716
      %v1765 = vunpack.c.l.b16 %v1717
      %v1766 = vunpack.c.l.b16 %v1718
      %v1767 = vunpack.c.l.b16 %v1719
      %v1768 = vunpack.c.l.b16 %v1720
      %v1769 = vunpack.c.l.b16 %v1721
      %v1770 = vunpack.c.l.b16 %v1722
      %v1771 = vunpack.c.l.b16 %v1723
      %v1772 = vpack.c.b16 %v1757, %v1756
      %v1773 = vpack.c.b16 %v1759, %v1758
      %v1774 = vpack.c.b16 %v1761, %v1760
      %v1775 = vpack.c.b16 %v1763, %v1762
      %v1776 = vpack.c.b16 %v1765, %v1764
      %v1777 = vpack.c.b16 %v1767, %v1766
      %v1778 = vpack.c.b16 %v1769, %v1768
      %v1779 = vpack.c.b16 %v1771, %v1770
      %1788 = vmatprep.subr.bf16.mxu0 0
      %1789 = vmatpush1.bf16.msra.mxu0 %v1772
      %1790 = vmatprep.subr.bf16.mxu0 0
      %1791 = vmatpush1.bf16.msra.mxu0 %v1773
      %1792 = vmatprep.subr.bf16.mxu0 0
      %1793 = vmatpush1.bf16.msra.mxu0 %v1774
      %1794 = vmatprep.subr.bf16.mxu0 0
      %1795 = vmatpush1.bf16.msra.mxu0 %v1775
      %1796 = vmatprep.subr.bf16.mxu0 0
      %1797 = vmatpush1.bf16.msra.mxu0 %v1776
      %1798 = vmatprep.subr.bf16.mxu0 0
      %1799 = vmatpush1.bf16.msra.mxu0 %v1777
      %1800 = vmatprep.subr.bf16.mxu0 0
      %1801 = vmatpush1.bf16.msra.mxu0 %v1778
      %1802 = vmatprep.subr.bf16.mxu0 0
      %1803 = vmatpush1.bf16.msra.mxu0 %v1779
      %1804 = vmatprep.subr.bf16.mxu0 0
      %1805 = vmatpush1.bf16.msra.mxu0 0
      %1806 = vmatprep.subr.bf16.mxu0 0
      %1807 = vmatpush1.bf16.msra.mxu0 0
      %1808 = vmatprep.subr.bf16.mxu0 0
      %1809 = vmatpush1.bf16.msra.mxu0 0
      %1810 = vmatprep.subr.bf16.mxu0 0
      %1811 = vmatpush1.bf16.msra.mxu0 0
      %1812 = vmatprep.subr.bf16.mxu0 0
      %1813 = vmatpush1.bf16.msra.mxu0 0
      %1814 = vmatprep.subr.bf16.mxu0 0
      %1815 = vmatpush1.bf16.msra.mxu0 0
      %1816 = vmatprep.subr.bf16.mxu0 0
      %1817 = vmatpush1.bf16.msra.mxu0 0
      %1818 = vmatprep.subr.bf16.mxu0 0
      %1819 = vmatpush1.bf16.msra.mxu0 0
      %1820 = vmatprep.mubr.bf16.mxu0 0
      %1821 = vmatmul.mubr.bf16.gmra.mrb[0].mxu0 %v1732
      %v1822 = vpop.f32.mrb[0].mxu0
      %v1823 = vadd.f32 0.0, %v1822
      %v1824 = vpop.f32.mrb[0].mxu0
      %v1825 = vpop.f32.mrb[0].mxu0
      %v1826 = vadd.f32 0.0, %v1825
      %v1827 = vpop.f32.mrb[0].mxu0
      %1828 = vmatprep.mubr.bf16.mxu0 0
      %1829 = vmatmul.mubr.bf16.gmra.mrb[0].mxu0 %v1733
      %v1830 = vpop.f32.mrb[0].mxu0
      %v1831 = vadd.f32 0.0, %v1830
      %v1832 = vpop.f32.mrb[0].mxu0
      %v1833 = vpop.f32.mrb[0].mxu0
      %v1834 = vadd.f32 0.0, %v1833
      %v1835 = vpop.f32.mrb[0].mxu0
      %1836 = vmatprep.mubr.bf16.mxu0 0
      %1837 = vmatmul.mubr.bf16.gmra.mrb[0].mxu0 %v1734
      %v1838 = vpop.f32.mrb[0].mxu0
      %v1839 = vadd.f32 0.0, %v1838
      %v1840 = vpop.f32.mrb[0].mxu0
      %v1841 = vpop.f32.mrb[0].mxu0
      %v1842 = vadd.f32 0.0, %v1841
      %v1843 = vpop.f32.mrb[0].mxu0
      %1844 = vmatprep.mubr.bf16.mxu0 0
      %1845 = vmatmul.mubr.bf16.gmra.mrb[0].mxu0 %v1735
      %v1846 = vpop.f32.mrb[0].mxu0
      %v1847 = vadd.f32 0.0, %v1846
      %v1848 = vpop.f32.mrb[0].mxu0
      %v1849 = vpop.f32.mrb[0].mxu0
      %v1850 = vadd.f32 0.0, %v1849
      %v1851 = vpop.f32.mrb[0].mxu0
      %1852 = vdwg.mxu0
      %v1853 = vunpack.c.l.b16 %v1595
      %v1854 = vunpack.c.l.b16 %v1599
      %v1855 = vunpack.c.l.b16 %v1603
      %v1856 = vunpack.c.l.b16 %v1607
      %v1857 = vunpack.c.l.b16 %v1611
      %v1858 = vunpack.c.l.b16 %v1615
      %v1859 = vunpack.c.l.b16 %v1619
      %v1860 = vunpack.c.l.b16 %v1623
      %v1861 = vpack.c.b16 %v1854, %v1853
      %v1862 = vpack.c.b16 %v1856, %v1855
      %v1863 = vpack.c.b16 %v1858, %v1857
      %v1864 = vpack.c.b16 %v1860, %v1859
      %v1885 = vunpack.c.l.b16 %v1624
      %v1886 = vunpack.c.l.b16 %v1625
      %v1887 = vunpack.c.l.b16 %v1626
      %v1888 = vunpack.c.l.b16 %v1627
      %v1889 = vunpack.c.l.b16 %v1628
      %v1890 = vunpack.c.l.b16 %v1629
      %v1891 = vunpack.c.l.b16 %v1630
      %v1892 = vunpack.c.l.b16 %v1631
      %v1893 = vunpack.c.l.b16 %v1632
      %v1894 = vunpack.c.l.b16 %v1633
      %v1895 = vunpack.c.l.b16 %v1634
      %v1896 = vunpack.c.l.b16 %v1635
      %v1897 = vunpack.c.l.b16 %v1636
      %v1898 = vunpack.c.l.b16 %v1637
      %v1899 = vunpack.c.l.b16 %v1638
      %v1900 = vunpack.c.l.b16 %v1639
      %v1901 = vpack.c.b16 %v1886, %v1885
      %v1902 = vpack.c.b16 %v1888, %v1887
      %v1903 = vpack.c.b16 %v1890, %v1889
      %v1904 = vpack.c.b16 %v1892, %v1891
      %v1905 = vpack.c.b16 %v1894, %v1893
      %v1906 = vpack.c.b16 %v1896, %v1895
      %v1907 = vpack.c.b16 %v1898, %v1897
      %v1908 = vpack.c.b16 %v1900, %v1899
      %1917 = vmatprep.subr.bf16.mxu0 0
      %1918 = vmatpush1.bf16.msra.mxu0 %v1901
      %1919 = vmatprep.subr.bf16.mxu0 0
      %1920 = vmatpush1.bf16.msra.mxu0 %v1902
      %1921 = vmatprep.subr.bf16.mxu0 0
      %1922 = vmatpush1.bf16.msra.mxu0 %v1903
      %1923 = vmatprep.subr.bf16.mxu0 0
      %1924 = vmatpush1.bf16.msra.mxu0 %v1904
      %1925 = vmatprep.subr.bf16.mxu0 0
      %1926 = vmatpush1.bf16.msra.mxu0 %v1905
      %1927 = vmatprep.subr.bf16.mxu0 0
      %1928 = vmatpush1.bf16.msra.mxu0 %v1906
      %1929 = vmatprep.subr.bf16.mxu0 0
      %1930 = vmatpush1.bf16.msra.mxu0 %v1907
      %1931 = vmatprep.subr.bf16.mxu0 0
      %1932 = vmatpush1.bf16.msra.mxu0 %v1908
      %1933 = vmatprep.subr.bf16.mxu0 0
      %1934 = vmatpush1.bf16.msra.mxu0 0
      %1935 = vmatprep.subr.bf16.mxu0 0
      %1936 = vmatpush1.bf16.msra.mxu0 0
      %1937 = vmatprep.subr.bf16.mxu0 0
      %1938 = vmatpush1.bf16.msra.mxu0 0
      %1939 = vmatprep.subr.bf16.mxu0 0
      %1940 = vmatpush1.bf16.msra.mxu0 0
      %1941 = vmatprep.subr.bf16.mxu0 0
      %1942 = vmatpush1.bf16.msra.mxu0 0
      %1943 = vmatprep.subr.bf16.mxu0 0
      %1944 = vmatpush1.bf16.msra.mxu0 0
      %1945 = vmatprep.subr.bf16.mxu0 0
      %1946 = vmatpush1.bf16.msra.mxu0 0
      %1947 = vmatprep.subr.bf16.mxu0 0
      %1948 = vmatpush1.bf16.msra.mxu0 0
      %1949 = vmatprep.mubr.bf16.mxu0 0
      %1950 = vmatmul.mubr.bf16.gmra.mrb[0].mxu0 %v1861
      %v1951 = vpop.f32.mrb[0].mxu0
      %v1952 = vadd.f32 %v1823, %v1951
      %v1953 = vpop.f32.mrb[0].mxu0
      %v1954 = vpop.f32.mrb[0].mxu0
      %v1955 = vadd.f32 %v1826, %v1954
      %v1956 = vpop.f32.mrb[0].mxu0
      %1957 = vmatprep.mubr.bf16.mxu0 0
      %1958 = vmatmul.mubr.bf16.gmra.mrb[0].mxu0 %v1862
      %v1959 = vpop.f32.mrb[0].mxu0
      %v1960 = vadd.f32 %v1831, %v1959
      %v1961 = vpop.f32.mrb[0].mxu0
      %v1962 = vpop.f32.mrb[0].mxu0
      %v1963 = vadd.f32 %v1834, %v1962
      %v1964 = vpop.f32.mrb[0].mxu0
      %1965 = vmatprep.mubr.bf16.mxu0 0
      %1966 = vmatmul.mubr.bf16.gmra.mrb[0].mxu0 %v1863
      %v1967 = vpop.f32.mrb[0].mxu0
      %v1968 = vadd.f32 %v1839, %v1967
      %v1969 = vpop.f32.mrb[0].mxu0
      %v1970 = vpop.f32.mrb[0].mxu0
      %v1971 = vadd.f32 %v1842, %v1970
      %v1972 = vpop.f32.mrb[0].mxu0
      %1973 = vmatprep.mubr.bf16.mxu0 0
      %1974 = vmatmul.mubr.bf16.gmra.mrb[0].mxu0 %v1864
      %v1975 = vpop.f32.mrb[0].mxu0
      %v1976 = vadd.f32 %v1847, %v1975
      %v1977 = vpop.f32.mrb[0].mxu0
      %v1978 = vpop.f32.mrb[0].mxu0
      %v1979 = vadd.f32 %v1850, %v1978
      %v1980 = vpop.f32.mrb[0].mxu0
      %1981 = vdwg.mxu0
      %v1982 = vld [vmem:[%s1556 + $0x4] sm:$0xf]
      %v1983 = vld [vmem:[%s1556 + $0x10] sm:$0xf]
      %v1984 = vld [vmem:[%s1556 + $0x1c] sm:$0xf]
      %v1985 = vld [vmem:[%s1556 + $0x28] sm:$0xf]
      %v1986 = vld [vmem:[%s1556 + $0x34] sm:$0xf]
      %v1987 = vld [vmem:[%s1556 + $0x40] sm:$0xf]
      %v1988 = vld [vmem:[%s1556 + $0x4c] sm:$0xf]
      %v1989 = vld [vmem:[%s1556 + $0x58] sm:$0xf]
      %s1990 = scalar_lea.vmem %s5, 128
      %v1991 = vld [vmem:[%s1990] sm:$0xf]
      %v1992 = vld [vmem:[%s1990 + $0x4] sm:$0xf]
      %v1993 = vld [vmem:[%s1990 + $0x8] sm:$0xf]
      %v1994 = vld [vmem:[%s1990 + $0xc] sm:$0xf]
      %v1995 = vld [vmem:[%s1990 + $0x10] sm:$0xf]
      %v1996 = vld [vmem:[%s1990 + $0x14] sm:$0xf]
      %v1997 = vld [vmem:[%s1990 + $0x18] sm:$0xf]
      %v1998 = vld [vmem:[%s1990 + $0x1c] sm:$0xf]
      %v1999 = vld [vmem:[%s1990 + $0x20] sm:$0xf]
      %v2000 = vld [vmem:[%s1990 + $0x24] sm:$0xf]
      %v2001 = vld [vmem:[%s1990 + $0x28] sm:$0xf]
      %v2002 = vld [vmem:[%s1990 + $0x2c] sm:$0xf]
      %v2003 = vld [vmem:[%s1990 + $0x30] sm:$0xf]
      %v2004 = vld [vmem:[%s1990 + $0x34] sm:$0xf]
      %v2005 = vld [vmem:[%s1990 + $0x38] sm:$0xf]
      %v2006 = vld [vmem:[%s1990 + $0x3c] sm:$0xf]
      %v2015 = vunpack.c.l.b16 %v1982
      %v2016 = vunpack.c.l.b16 %v1983
      %v2017 = vunpack.c.l.b16 %v1984
      %v2018 = vunpack.c.l.b16 %v1985
      %v2019 = vunpack.c.l.b16 %v1986
      %v2020 = vunpack.c.l.b16 %v1987
      %v2021 = vunpack.c.l.b16 %v1988
      %v2022 = vunpack.c.l.b16 %v1989
      %v2023 = vpack.c.b16 %v2016, %v2015
      %v2024 = vpack.c.b16 %v2018, %v2017
      %v2025 = vpack.c.b16 %v2020, %v2019
      %v2026 = vpack.c.b16 %v2022, %v2021
      %v2047 = vunpack.c.l.b16 %v1991
      %v2048 = vunpack.c.l.b16 %v1992
      %v2049 = vunpack.c.l.b16 %v1993
      %v2050 = vunpack.c.l.b16 %v1994
      %v2051 = vunpack.c.l.b16 %v1995
      %v2052 = vunpack.c.l.b16 %v1996
      %v2053 = vunpack.c.l.b16 %v1997
      %v2054 = vunpack.c.l.b16 %v1998
      %v2055 = vunpack.c.l.b16 %v1999
      %v2056 = vunpack.c.l.b16 %v2000
      %v2057 = vunpack.c.l.b16 %v2001
      %v2058 = vunpack.c.l.b16 %v2002
      %v2059 = vunpack.c.l.b16 %v2003
      %v2060 = vunpack.c.l.b16 %v2004
      %v2061 = vunpack.c.l.b16 %v2005
      %v2062 = vunpack.c.l.b16 %v2006
      %v2063 = vpack.c.b16 %v2048, %v2047
      %v2064 = vpack.c.b16 %v2050, %v2049
      %v2065 = vpack.c.b16 %v2052, %v2051
      %v2066 = vpack.c.b16 %v2054, %v2053
      %v2067 = vpack.c.b16 %v2056, %v2055
      %v2068 = vpack.c.b16 %v2058, %v2057
      %v2069 = vpack.c.b16 %v2060, %v2059
      %v2070 = vpack.c.b16 %v2062, %v2061
      %2079 = vmatprep.subr.bf16.mxu0 0
      %2080 = vmatpush1.bf16.msra.mxu0 %v2063
      %2081 = vmatprep.subr.bf16.mxu0 0
      %2082 = vmatpush1.bf16.msra.mxu0 %v2064
      %2083 = vmatprep.subr.bf16.mxu0 0
      %2084 = vmatpush1.bf16.msra.mxu0 %v2065
      %2085 = vmatprep.subr.bf16.mxu0 0
      %2086 = vmatpush1.bf16.msra.mxu0 %v2066
      %2087 = vmatprep.subr.bf16.mxu0 0
      %2088 = vmatpush1.bf16.msra.mxu0 %v2067
      %2089 = vmatprep.subr.bf16.mxu0 0
      %2090 = vmatpush1.bf16.msra.mxu0 %v2068
      %2091 = vmatprep.subr.bf16.mxu0 0
      %2092 = vmatpush1.bf16.msra.mxu0 %v2069
      %2093 = vmatprep.subr.bf16.mxu0 0
      %2094 = vmatpush1.bf16.msra.mxu0 %v2070
      %2095 = vmatprep.subr.bf16.mxu0 0
      %2096 = vmatpush1.bf16.msra.mxu0 0
      %2097 = vmatprep.subr.bf16.mxu0 0
      %2098 = vmatpush1.bf16.msra.mxu0 0
      %2099 = vmatprep.subr.bf16.mxu0 0
      %2100 = vmatpush1.bf16.msra.mxu0 0
      %2101 = vmatprep.subr.bf16.mxu0 0
      %2102 = vmatpush1.bf16.msra.mxu0 0
      %2103 = vmatprep.subr.bf16.mxu0 0
      %2104 = vmatpush1.bf16.msra.mxu0 0
      %2105 = vmatprep.subr.bf16.mxu0 0
      %2106 = vmatpush1.bf16.msra.mxu0 0
      %2107 = vmatprep.subr.bf16.mxu0 0
      %2108 = vmatpush1.bf16.msra.mxu0 0
      %2109 = vmatprep.subr.bf16.mxu0 0
      %2110 = vmatpush1.bf16.msra.mxu0 0
      %2111 = vmatprep.mubr.bf16.mxu0 0
      %2112 = vmatmul.mubr.bf16.gmra.mrb[0].mxu0 %v2023
      %v2113 = vpop.f32.mrb[0].mxu0
      %v2114 = vadd.f32 0.0, %v2113
      %v2115 = vpop.f32.mrb[0].mxu0
      %v2116 = vpop.f32.mrb[0].mxu0
      %v2117 = vadd.f32 0.0, %v2116
      %v2118 = vpop.f32.mrb[0].mxu0
      %2119 = vmatprep.mubr.bf16.mxu0 0
      %2120 = vmatmul.mubr.bf16.gmra.mrb[0].mxu0 %v2024
      %v2121 = vpop.f32.mrb[0].mxu0
      %v2122 = vadd.f32 0.0, %v2121
      %v2123 = vpop.f32.mrb[0].mxu0
      %v2124 = vpop.f32.mrb[0].mxu0
      %v2125 = vadd.f32 0.0, %v2124
      %v2126 = vpop.f32.mrb[0].mxu0
      %2127 = vmatprep.mubr.bf16.mxu0 0
      %2128 = vmatmul.mubr.bf16.gmra.mrb[0].mxu0 %v2025
      %v2129 = vpop.f32.mrb[0].mxu0
      %v2130 = vadd.f32 0.0, %v2129
      %v2131 = vpop.f32.mrb[0].mxu0
      %v2132 = vpop.f32.mrb[0].mxu0
      %v2133 = vadd.f32 0.0, %v2132
      %v2134 = vpop.f32.mrb[0].mxu0
      %2135 = vmatprep.mubr.bf16.mxu0 0
      %2136 = vmatmul.mubr.bf16.gmra.mrb[0].mxu0 %v2026
      %v2137 = vpop.f32.mrb[0].mxu0
      %v2138 = vadd.f32 0.0, %v2137
      %v2139 = vpop.f32.mrb[0].mxu0
      %v2140 = vpop.f32.mrb[0].mxu0
      %v2141 = vadd.f32 0.0, %v2140
      %v2142 = vpop.f32.mrb[0].mxu0
      %2143 = vdwg.mxu0
      %v2144 = vadd.f32 %v1952, %v2114
      %v2145 = vadd.f32 %v1955, %v2117
      %v2146 = vadd.f32 %v1960, %v2122
      %v2147 = vadd.f32 %v1963, %v2125
      %v2148 = vadd.f32 %v1968, %v2130
      %v2149 = vadd.f32 %v1971, %v2133
      %v2150 = vadd.f32 %v1976, %v2138
      %v2151 = vadd.f32 %v1979, %v2141
      %v2152 = vld [vmem:[%s1183] sm:$0xc]
      %v2153 = vld [vmem:[%s1183 + $0x4] sm:$0x3]
      %v2154 = vld [vmem:[%s1183 + $0xc] sm:$0xc]
      %v2155 = vld [vmem:[%s1183 + $0x10] sm:$0x3]
      %v2156 = vld [vmem:[%s1183 + $0x18] sm:$0xc]
      %v2157 = vld [vmem:[%s1183 + $0x1c] sm:$0x3]
      %v2158 = vld [vmem:[%s1183 + $0x24] sm:$0xc]
      %v2159 = vld [vmem:[%s1183 + $0x28] sm:$0x3]
      %v2160 = vld [vmem:[%s1183 + $0x30] sm:$0xc]
      %v2161 = vld [vmem:[%s1183 + $0x34] sm:$0x3]
      %v2162 = vld [vmem:[%s1183 + $0x3c] sm:$0xc]
      %v2163 = vld [vmem:[%s1183 + $0x40] sm:$0x3]
      %v2164 = vld [vmem:[%s1183 + $0x48] sm:$0xc]
      %v2165 = vld [vmem:[%s1183 + $0x4c] sm:$0x3]
      %v2166 = vld [vmem:[%s1183 + $0x54] sm:$0xc]
      %v2167 = vld [vmem:[%s1183 + $0x58] sm:$0x3]
      %v2184 = vrot.slane %v2152, 6
      %v2185 = vrot.slane %v2184, 4
      %v2186 = vrot.slane %v2153, 6
      %v2187 = vsel %vm1591, %v2185, %v2186
      %v2188 = vrot.slane %v2154, 6
      %v2189 = vrot.slane %v2188, 4
      %v2190 = vrot.slane %v2155, 6
      %v2191 = vsel %vm1591, %v2189, %v2190
      %v2192 = vrot.slane %v2156, 6
      %v2193 = vrot.slane %v2192, 4
      %v2194 = vrot.slane %v2157, 6
      %v2195 = vsel %vm1591, %v2193, %v2194
      %v2196 = vrot.slane %v2158, 6
      %v2197 = vrot.slane %v2196, 4
      %v2198 = vrot.slane %v2159, 6
      %v2199 = vsel %vm1591, %v2197, %v2198
      %v2200 = vrot.slane %v2160, 6
      %v2201 = vrot.slane %v2200, 4
      %v2202 = vrot.slane %v2161, 6
      %v2203 = vsel %vm1591, %v2201, %v2202
      %v2204 = vrot.slane %v2162, 6
      %v2205 = vrot.slane %v2204, 4
      %v2206 = vrot.slane %v2163, 6
      %v2207 = vsel %vm1591, %v2205, %v2206
      %v2208 = vrot.slane %v2164, 6
      %v2209 = vrot.slane %v2208, 4
      %v2210 = vrot.slane %v2165, 6
      %v2211 = vsel %vm1591, %v2209, %v2210
      %v2212 = vrot.slane %v2166, 6
      %v2213 = vrot.slane %v2212, 4
      %v2214 = vrot.slane %v2167, 6
      %v2215 = vsel %vm1591, %v2213, %v2214
      %s2216 = scalar_lea.vmem %s5, 192
      %v2217 = vld [vmem:[%s2216] sm:$0xf]
      %v2218 = vld [vmem:[%s2216 + $0x4] sm:$0xf]
      %v2219 = vld [vmem:[%s2216 + $0x8] sm:$0xf]
      %v2220 = vld [vmem:[%s2216 + $0xc] sm:$0xf]
      %v2221 = vld [vmem:[%s2216 + $0x10] sm:$0xf]
      %v2222 = vld [vmem:[%s2216 + $0x14] sm:$0xf]
      %v2223 = vld [vmem:[%s2216 + $0x18] sm:$0xf]
      %v2224 = vld [vmem:[%s2216 + $0x1c] sm:$0xf]
      %v2225 = vld [vmem:[%s2216 + $0x20] sm:$0xf]
      %v2226 = vld [vmem:[%s2216 + $0x24] sm:$0xf]
      %v2227 = vld [vmem:[%s2216 + $0x28] sm:$0xf]
      %v2228 = vld [vmem:[%s2216 + $0x2c] sm:$0xf]
      %v2229 = vld [vmem:[%s2216 + $0x30] sm:$0xf]
      %v2230 = vld [vmem:[%s2216 + $0x34] sm:$0xf]
      %v2231 = vld [vmem:[%s2216 + $0x38] sm:$0xf]
      %v2232 = vld [vmem:[%s2216 + $0x3c] sm:$0xf]
      %v2233 = vunpack.c.l.b16 %v2187
      %v2234 = vunpack.c.l.b16 %v2191
      %v2235 = vunpack.c.l.b16 %v2195
      %v2236 = vunpack.c.l.b16 %v2199
      %v2237 = vunpack.c.l.b16 %v2203
      %v2238 = vunpack.c.l.b16 %v2207
      %v2239 = vunpack.c.l.b16 %v2211
      %v2240 = vunpack.c.l.b16 %v2215
      %v2241 = vpack.c.b16 %v2234, %v2233
      %v2242 = vpack.c.b16 %v2236, %v2235
      %v2243 = vpack.c.b16 %v2238, %v2237
      %v2244 = vpack.c.b16 %v2240, %v2239
      %v2265 = vunpack.c.l.b16 %v2217
      %v2266 = vunpack.c.l.b16 %v2218
      %v2267 = vunpack.c.l.b16 %v2219
      %v2268 = vunpack.c.l.b16 %v2220
      %v2269 = vunpack.c.l.b16 %v2221
      %v2270 = vunpack.c.l.b16 %v2222
      %v2271 = vunpack.c.l.b16 %v2223
      %v2272 = vunpack.c.l.b16 %v2224
      %v2273 = vunpack.c.l.b16 %v2225
      %v2274 = vunpack.c.l.b16 %v2226
      %v2275 = vunpack.c.l.b16 %v2227
      %v2276 = vunpack.c.l.b16 %v2228
      %v2277 = vunpack.c.l.b16 %v2229
      %v2278 = vunpack.c.l.b16 %v2230
      %v2279 = vunpack.c.l.b16 %v2231
      %v2280 = vunpack.c.l.b16 %v2232
      %v2281 = vpack.c.b16 %v2266, %v2265
      %v2282 = vpack.c.b16 %v2268, %v2267
      %v2283 = vpack.c.b16 %v2270, %v2269
      %v2284 = vpack.c.b16 %v2272, %v2271
      %v2285 = vpack.c.b16 %v2274, %v2273
      %v2286 = vpack.c.b16 %v2276, %v2275
      %v2287 = vpack.c.b16 %v2278, %v2277
      %v2288 = vpack.c.b16 %v2280, %v2279
      %2297 = vmatprep.subr.bf16.mxu0 0
      %2298 = vmatpush1.bf16.msra.mxu0 %v2281
      %2299 = vmatprep.subr.bf16.mxu0 0
      %2300 = vmatpush1.bf16.msra.mxu0 %v2282
      %2301 = vmatprep.subr.bf16.mxu0 0
      %2302 = vmatpush1.bf16.msra.mxu0 %v2283
      %2303 = vmatprep.subr.bf16.mxu0 0
      %2304 = vmatpush1.bf16.msra.mxu0 %v2284
      %2305 = vmatprep.subr.bf16.mxu0 0
      %2306 = vmatpush1.bf16.msra.mxu0 %v2285
      %2307 = vmatprep.subr.bf16.mxu0 0
      %2308 = vmatpush1.bf16.msra.mxu0 %v2286
      %2309 = vmatprep.subr.bf16.mxu0 0
      %2310 = vmatpush1.bf16.msra.mxu0 %v2287
      %2311 = vmatprep.subr.bf16.mxu0 0
      %2312 = vmatpush1.bf16.msra.mxu0 %v2288
      %2313 = vmatprep.subr.bf16.mxu0 0
      %2314 = vmatpush1.bf16.msra.mxu0 0
      %2315 = vmatprep.subr.bf16.mxu0 0
      %2316 = vmatpush1.bf16.msra.mxu0 0
      %2317 = vmatprep.subr.bf16.mxu0 0
      %2318 = vmatpush1.bf16.msra.mxu0 0
      %2319 = vmatprep.subr.bf16.mxu0 0
      %2320 = vmatpush1.bf16.msra.mxu0 0
      %2321 = vmatprep.subr.bf16.mxu0 0
      %2322 = vmatpush1.bf16.msra.mxu0 0
      %2323 = vmatprep.subr.bf16.mxu0 0
      %2324 = vmatpush1.bf16.msra.mxu0 0
      %2325 = vmatprep.subr.bf16.mxu0 0
      %2326 = vmatpush1.bf16.msra.mxu0 0
      %2327 = vmatprep.subr.bf16.mxu0 0
      %2328 = vmatpush1.bf16.msra.mxu0 0
      %2329 = vmatprep.mubr.bf16.mxu0 0
      %2330 = vmatmul.mubr.bf16.gmra.mrb[0].mxu0 %v2241
      %v2331 = vpop.f32.mrb[0].mxu0
      %v2332 = vadd.f32 0.0, %v2331
      %v2333 = vpop.f32.mrb[0].mxu0
      %v2334 = vpop.f32.mrb[0].mxu0
      %v2335 = vadd.f32 0.0, %v2334
      %v2336 = vpop.f32.mrb[0].mxu0
      %2337 = vmatprep.mubr.bf16.mxu0 0
      %2338 = vmatmul.mubr.bf16.gmra.mrb[0].mxu0 %v2242
      %v2339 = vpop.f32.mrb[0].mxu0
      %v2340 = vadd.f32 0.0, %v2339
      %v2341 = vpop.f32.mrb[0].mxu0
      %v2342 = vpop.f32.mrb[0].mxu0
      %v2343 = vadd.f32 0.0, %v2342
      %v2344 = vpop.f32.mrb[0].mxu0
      %2345 = vmatprep.mubr.bf16.mxu0 0
      %2346 = vmatmul.mubr.bf16.gmra.mrb[0].mxu0 %v2243
      %v2347 = vpop.f32.mrb[0].mxu0
      %v2348 = vadd.f32 0.0, %v2347
      %v2349 = vpop.f32.mrb[0].mxu0
      %v2350 = vpop.f32.mrb[0].mxu0
      %v2351 = vadd.f32 0.0, %v2350
      %v2352 = vpop.f32.mrb[0].mxu0
      %2353 = vmatprep.mubr.bf16.mxu0 0
      %2354 = vmatmul.mubr.bf16.gmra.mrb[0].mxu0 %v2244
      %v2355 = vpop.f32.mrb[0].mxu0
      %v2356 = vadd.f32 0.0, %v2355
      %v2357 = vpop.f32.mrb[0].mxu0
      %v2358 = vpop.f32.mrb[0].mxu0
      %v2359 = vadd.f32 0.0, %v2358
      %v2360 = vpop.f32.mrb[0].mxu0
      %2361 = vdwg.mxu0
      %v2362 = vadd.f32 %v2144, %v2332
      %v2363 = vadd.f32 %v2145, %v2335
      %v2364 = vadd.f32 %v2146, %v2340
      %v2365 = vadd.f32 %v2147, %v2343
      %v2366 = vadd.f32 %v2148, %v2348
      %v2367 = vadd.f32 %v2149, %v2351
      %v2368 = vadd.f32 %v2150, %v2356
      %v2369 = vadd.f32 %v2151, %v2359
      %v2370 = vld [vmem:[%s1183] sm:$0x8]
      %v2371 = vld [vmem:[%s1183 + $0x4] sm:$0x7]
      %v2372 = vld [vmem:[%s1183 + $0xc] sm:$0x8]
      %v2373 = vld [vmem:[%s1183 + $0x10] sm:$0x7]
      %v2374 = vld [vmem:[%s1183 + $0x18] sm:$0x8]
      %v2375 = vld [vmem:[%s1183 + $0x1c] sm:$0x7]
      %v2376 = vld [vmem:[%s1183 + $0x24] sm:$0x8]
      %v2377 = vld [vmem:[%s1183 + $0x28] sm:$0x7]
      %v2378 = vld [vmem:[%s1183 + $0x30] sm:$0x8]
      %v2379 = vld [vmem:[%s1183 + $0x34] sm:$0x7]
      %v2380 = vld [vmem:[%s1183 + $0x3c] sm:$0x8]
      %v2381 = vld [vmem:[%s1183 + $0x40] sm:$0x7]
      %v2382 = vld [vmem:[%s1183 + $0x48] sm:$0x8]
      %v2383 = vld [vmem:[%s1183 + $0x4c] sm:$0x7]
      %v2384 = vld [vmem:[%s1183 + $0x54] sm:$0x8]
      %v2385 = vld [vmem:[%s1183 + $0x58] sm:$0x7]
      %v2402 = vrot.slane %v2370, 7
      %v2403 = vrot.slane %v2402, 4
      %v2404 = vrot.slane %v2371, 7
      %v2405 = vsel %vm1674, %v2403, %v2404
      %v2406 = vrot.slane %v2372, 7
      %v2407 = vrot.slane %v2406, 4
      %v2408 = vrot.slane %v2373, 7
      %v2409 = vsel %vm1674, %v2407, %v2408
      %v2410 = vrot.slane %v2374, 7
      %v2411 = vrot.slane %v2410, 4
      %v2412 = vrot.slane %v2375, 7
      %v2413 = vsel %vm1674, %v2411, %v2412
      %v2414 = vrot.slane %v2376, 7
      %v2415 = vrot.slane %v2414, 4
      %v2416 = vrot.slane %v2377, 7
      %v2417 = vsel %vm1674, %v2415, %v2416
      %v2418 = vrot.slane %v2378, 7
      %v2419 = vrot.slane %v2418, 4
      %v2420 = vrot.slane %v2379, 7
      %v2421 = vsel %vm1674, %v2419, %v2420
      %v2422 = vrot.slane %v2380, 7
      %v2423 = vrot.slane %v2422, 4
      %v2424 = vrot.slane %v2381, 7
      %v2425 = vsel %vm1674, %v2423, %v2424
      %v2426 = vrot.slane %v2382, 7
      %v2427 = vrot.slane %v2426, 4
      %v2428 = vrot.slane %v2383, 7
      %v2429 = vsel %vm1674, %v2427, %v2428
      %v2430 = vrot.slane %v2384, 7
      %v2431 = vrot.slane %v2430, 4
      %v2432 = vrot.slane %v2385, 7
      %v2433 = vsel %vm1674, %v2431, %v2432
      %s2434 = scalar_lea.vmem %s5, 256
      %v2435 = vld [vmem:[%s2434] sm:$0xf]
      %v2436 = vld [vmem:[%s2434 + $0x4] sm:$0xf]
      %v2437 = vld [vmem:[%s2434 + $0x8] sm:$0xf]
      %v2438 = vld [vmem:[%s2434 + $0xc] sm:$0xf]
      %v2439 = vld [vmem:[%s2434 + $0x10] sm:$0xf]
      %v2440 = vld [vmem:[%s2434 + $0x14] sm:$0xf]
      %v2441 = vld [vmem:[%s2434 + $0x18] sm:$0xf]
      %v2442 = vld [vmem:[%s2434 + $0x1c] sm:$0xf]
      %v2443 = vld [vmem:[%s2434 + $0x20] sm:$0xf]
      %v2444 = vld [vmem:[%s2434 + $0x24] sm:$0xf]
      %v2445 = vld [vmem:[%s2434 + $0x28] sm:$0xf]
      %v2446 = vld [vmem:[%s2434 + $0x2c] sm:$0xf]
      %v2447 = vld [vmem:[%s2434 + $0x30] sm:$0xf]
      %v2448 = vld [vmem:[%s2434 + $0x34] sm:$0xf]
      %v2449 = vld [vmem:[%s2434 + $0x38] sm:$0xf]
      %v2450 = vld [vmem:[%s2434 + $0x3c] sm:$0xf]
      %v2451 = vunpack.c.l.b16 %v2405
      %v2452 = vunpack.c.l.b16 %v2409
      %v2453 = vunpack.c.l.b16 %v2413
      %v2454 = vunpack.c.l.b16 %v2417
      %v2455 = vunpack.c.l.b16 %v2421
      %v2456 = vunpack.c.l.b16 %v2425
      %v2457 = vunpack.c.l.b16 %v2429
      %v2458 = vunpack.c.l.b16 %v2433
      %v2459 = vpack.c.b16 %v2452, %v2451
      %v2460 = vpack.c.b16 %v2454, %v2453
      %v2461 = vpack.c.b16 %v2456, %v2455
      %v2462 = vpack.c.b16 %v2458, %v2457
      %v2483 = vunpack.c.l.b16 %v2435
      %v2484 = vunpack.c.l.b16 %v2436
      %v2485 = vunpack.c.l.b16 %v2437
      %v2486 = vunpack.c.l.b16 %v2438
      %v2487 = vunpack.c.l.b16 %v2439
      %v2488 = vunpack.c.l.b16 %v2440
      %v2489 = vunpack.c.l.b16 %v2441
      %v2490 = vunpack.c.l.b16 %v2442
      %v2491 = vunpack.c.l.b16 %v2443
      %v2492 = vunpack.c.l.b16 %v2444
      %v2493 = vunpack.c.l.b16 %v2445
      %v2494 = vunpack.c.l.b16 %v2446
      %v2495 = vunpack.c.l.b16 %v2447
      %v2496 = vunpack.c.l.b16 %v2448
      %v2497 = vunpack.c.l.b16 %v2449
      %v2498 = vunpack.c.l.b16 %v2450
      %v2499 = vpack.c.b16 %v2484, %v2483
      %v2500 = vpack.c.b16 %v2486, %v2485
      %v2501 = vpack.c.b16 %v2488, %v2487
      %v2502 = vpack.c.b16 %v2490, %v2489
      %v2503 = vpack.c.b16 %v2492, %v2491
      %v2504 = vpack.c.b16 %v2494, %v2493
      %v2505 = vpack.c.b16 %v2496, %v2495
      %v2506 = vpack.c.b16 %v2498, %v2497
      %2515 = vmatprep.subr.bf16.mxu0 0
      %2516 = vmatpush1.bf16.msra.mxu0 %v2499
      %2517 = vmatprep.subr.bf16.mxu0 0
      %2518 = vmatpush1.bf16.msra.mxu0 %v2500
      %2519 = vmatprep.subr.bf16.mxu0 0
      %2520 = vmatpush1.bf16.msra.mxu0 %v2501
      %2521 = vmatprep.subr.bf16.mxu0 0
      %2522 = vmatpush1.bf16.msra.mxu0 %v2502
      %2523 = vmatprep.subr.bf16.mxu0 0
      %2524 = vmatpush1.bf16.msra.mxu0 %v2503
      %2525 = vmatprep.subr.bf16.mxu0 0
      %2526 = vmatpush1.bf16.msra.mxu0 %v2504
      %2527 = vmatprep.subr.bf16.mxu0 0
      %2528 = vmatpush1.bf16.msra.mxu0 %v2505
      %2529 = vmatprep.subr.bf16.mxu0 0
      %2530 = vmatpush1.bf16.msra.mxu0 %v2506
      %2531 = vmatprep.subr.bf16.mxu0 0
      %2532 = vmatpush1.bf16.msra.mxu0 0
      %2533 = vmatprep.subr.bf16.mxu0 0
      %2534 = vmatpush1.bf16.msra.mxu0 0
      %2535 = vmatprep.subr.bf16.mxu0 0
      %2536 = vmatpush1.bf16.msra.mxu0 0
      %2537 = vmatprep.subr.bf16.mxu0 0
      %2538 = vmatpush1.bf16.msra.mxu0 0
      %2539 = vmatprep.subr.bf16.mxu0 0
      %2540 = vmatpush1.bf16.msra.mxu0 0
      %2541 = vmatprep.subr.bf16.mxu0 0
      %2542 = vmatpush1.bf16.msra.mxu0 0
      %2543 = vmatprep.subr.bf16.mxu0 0
      %2544 = vmatpush1.bf16.msra.mxu0 0
      %2545 = vmatprep.subr.bf16.mxu0 0
      %2546 = vmatpush1.bf16.msra.mxu0 0
      %2547 = vmatprep.mubr.bf16.mxu0 0
      %2548 = vmatmul.mubr.bf16.gmra.mrb[0].mxu0 %v2459
      %v2549 = vpop.f32.mrb[0].mxu0
      %v2550 = vadd.f32 0.0, %v2549
      %v2551 = vpop.f32.mrb[0].mxu0
      %v2552 = vpop.f32.mrb[0].mxu0
      %v2553 = vadd.f32 0.0, %v2552
      %v2554 = vpop.f32.mrb[0].mxu0
      %2555 = vmatprep.mubr.bf16.mxu0 0
      %2556 = vmatmul.mubr.bf16.gmra.mrb[0].mxu0 %v2460
      %v2557 = vpop.f32.mrb[0].mxu0
      %v2558 = vadd.f32 0.0, %v2557
      %v2559 = vpop.f32.mrb[0].mxu0
      %v2560 = vpop.f32.mrb[0].mxu0
      %v2561 = vadd.f32 0.0, %v2560
      %v2562 = vpop.f32.mrb[0].mxu0
      %2563 = vmatprep.mubr.bf16.mxu0 0
      %2564 = vmatmul.mubr.bf16.gmra.mrb[0].mxu0 %v2461
      %v2565 = vpop.f32.mrb[0].mxu0
      %v2566 = vadd.f32 0.0, %v2565
      %v2567 = vpop.f32.mrb[0].mxu0
      %v2568 = vpop.f32.mrb[0].mxu0
      %v2569 = vadd.f32 0.0, %v2568
      %v2570 = vpop.f32.mrb[0].mxu0
      %2571 = vmatprep.mubr.bf16.mxu0 0
      %2572 = vmatmul.mubr.bf16.gmra.mrb[0].mxu0 %v2462
      %v2573 = vpop.f32.mrb[0].mxu0
      %v2574 = vadd.f32 0.0, %v2573
      %v2575 = vpop.f32.mrb[0].mxu0
      %v2576 = vpop.f32.mrb[0].mxu0
      %v2577 = vadd.f32 0.0, %v2576
      %v2578 = vpop.f32.mrb[0].mxu0
      %2579 = vdwg.mxu0
      %v2580 = vadd.f32 %v2362, %v2550
      %v2581 = vadd.f32 %v2363, %v2553
      %v2582 = vadd.f32 %v2364, %v2558
      %v2583 = vadd.f32 %v2365, %v2561
      %v2584 = vadd.f32 %v2366, %v2566
      %v2585 = vadd.f32 %v2367, %v2569
      %v2586 = vadd.f32 %v2368, %v2574
      %v2587 = vadd.f32 %v2369, %v2577
      %v2588 = vld [vmem:[%s1183 + $0x4] sm:$0xf]
      %v2589 = vld [vmem:[%s1183 + $0x10] sm:$0xf]
      %v2590 = vld [vmem:[%s1183 + $0x1c] sm:$0xf]
      %v2591 = vld [vmem:[%s1183 + $0x28] sm:$0xf]
      %v2592 = vld [vmem:[%s1183 + $0x34] sm:$0xf]
      %v2593 = vld [vmem:[%s1183 + $0x40] sm:$0xf]
      %v2594 = vld [vmem:[%s1183 + $0x4c] sm:$0xf]
      %v2595 = vld [vmem:[%s1183 + $0x58] sm:$0xf]
      %s2596 = scalar_lea.vmem %s5, 320
      %v2597 = vld [vmem:[%s2596] sm:$0xf]
      %v2598 = vld [vmem:[%s2596 + $0x4] sm:$0xf]
      %v2599 = vld [vmem:[%s2596 + $0x8] sm:$0xf]
      %v2600 = vld [vmem:[%s2596 + $0xc] sm:$0xf]
      %v2601 = vld [vmem:[%s2596 + $0x10] sm:$0xf]
      %v2602 = vld [vmem:[%s2596 + $0x14] sm:$0xf]
      %v2603 = vld [vmem:[%s2596 + $0x18] sm:$0xf]
      %v2604 = vld [vmem:[%s2596 + $0x1c] sm:$0xf]
      %v2605 = vld [vmem:[%s2596 + $0x20] sm:$0xf]
      %v2606 = vld [vmem:[%s2596 + $0x24] sm:$0xf]
      %v2607 = vld [vmem:[%s2596 + $0x28] sm:$0xf]
      %v2608 = vld [vmem:[%s2596 + $0x2c] sm:$0xf]
      %v2609 = vld [vmem:[%s2596 + $0x30] sm:$0xf]
      %v2610 = vld [vmem:[%s2596 + $0x34] sm:$0xf]
      %v2611 = vld [vmem:[%s2596 + $0x38] sm:$0xf]
      %v2612 = vld [vmem:[%s2596 + $0x3c] sm:$0xf]
      %v2621 = vunpack.c.l.b16 %v2588
      %v2622 = vunpack.c.l.b16 %v2589
      %v2623 = vunpack.c.l.b16 %v2590
      %v2624 = vunpack.c.l.b16 %v2591
      %v2625 = vunpack.c.l.b16 %v2592
      %v2626 = vunpack.c.l.b16 %v2593
      %v2627 = vunpack.c.l.b16 %v2594
      %v2628 = vunpack.c.l.b16 %v2595
      %v2629 = vpack.c.b16 %v2622, %v2621
      %v2630 = vpack.c.b16 %v2624, %v2623
      %v2631 = vpack.c.b16 %v2626, %v2625
      %v2632 = vpack.c.b16 %v2628, %v2627
      %v2653 = vunpack.c.l.b16 %v2597
      %v2654 = vunpack.c.l.b16 %v2598
      %v2655 = vunpack.c.l.b16 %v2599
      %v2656 = vunpack.c.l.b16 %v2600
      %v2657 = vunpack.c.l.b16 %v2601
      %v2658 = vunpack.c.l.b16 %v2602
      %v2659 = vunpack.c.l.b16 %v2603
      %v2660 = vunpack.c.l.b16 %v2604
      %v2661 = vunpack.c.l.b16 %v2605
      %v2662 = vunpack.c.l.b16 %v2606
      %v2663 = vunpack.c.l.b16 %v2607
      %v2664 = vunpack.c.l.b16 %v2608
      %v2665 = vunpack.c.l.b16 %v2609
      %v2666 = vunpack.c.l.b16 %v2610
      %v2667 = vunpack.c.l.b16 %v2611
      %v2668 = vunpack.c.l.b16 %v2612
      %v2669 = vpack.c.b16 %v2654, %v2653
      %v2670 = vpack.c.b16 %v2656, %v2655
      %v2671 = vpack.c.b16 %v2658, %v2657
      %v2672 = vpack.c.b16 %v2660, %v2659
      %v2673 = vpack.c.b16 %v2662, %v2661
      %v2674 = vpack.c.b16 %v2664, %v2663
      %v2675 = vpack.c.b16 %v2666, %v2665
      %v2676 = vpack.c.b16 %v2668, %v2667
      %2685 = vmatprep.subr.bf16.mxu0 0
      %2686 = vmatpush1.bf16.msra.mxu0 %v2669
      %2687 = vmatprep.subr.bf16.mxu0 0
      %2688 = vmatpush1.bf16.msra.mxu0 %v2670
      %2689 = vmatprep.subr.bf16.mxu0 0
      %2690 = vmatpush1.bf16.msra.mxu0 %v2671
      %2691 = vmatprep.subr.bf16.mxu0 0
      %2692 = vmatpush1.bf16.msra.mxu0 %v2672
      %2693 = vmatprep.subr.bf16.mxu0 0
      %2694 = vmatpush1.bf16.msra.mxu0 %v2673
      %2695 = vmatprep.subr.bf16.mxu0 0
      %2696 = vmatpush1.bf16.msra.mxu0 %v2674
      %2697 = vmatprep.subr.bf16.mxu0 0
      %2698 = vmatpush1.bf16.msra.mxu0 %v2675
      %2699 = vmatprep.subr.bf16.mxu0 0
      %2700 = vmatpush1.bf16.msra.mxu0 %v2676
      %2701 = vmatprep.subr.bf16.mxu0 0
      %2702 = vmatpush1.bf16.msra.mxu0 0
      %2703 = vmatprep.subr.bf16.mxu0 0
      %2704 = vmatpush1.bf16.msra.mxu0 0
      %2705 = vmatprep.subr.bf16.mxu0 0
      %2706 = vmatpush1.bf16.msra.mxu0 0
      %2707 = vmatprep.subr.bf16.mxu0 0
      %2708 = vmatpush1.bf16.msra.mxu0 0
      %2709 = vmatprep.subr.bf16.mxu0 0
      %2710 = vmatpush1.bf16.msra.mxu0 0
      %2711 = vmatprep.subr.bf16.mxu0 0
      %2712 = vmatpush1.bf16.msra.mxu0 0
      %2713 = vmatprep.subr.bf16.mxu0 0
      %2714 = vmatpush1.bf16.msra.mxu0 0
      %2715 = vmatprep.subr.bf16.mxu0 0
      %2716 = vmatpush1.bf16.msra.mxu0 0
      %2717 = vmatprep.mubr.bf16.mxu0 0
      %2718 = vmatmul.mubr.bf16.gmra.mrb[0].mxu0 %v2629
      %v2719 = vpop.f32.mrb[0].mxu0
      %v2720 = vadd.f32 0.0, %v2719
      %v2721 = vpop.f32.mrb[0].mxu0
      %v2722 = vpop.f32.mrb[0].mxu0
      %v2723 = vadd.f32 0.0, %v2722
      %v2724 = vpop.f32.mrb[0].mxu0
      %2725 = vmatprep.mubr.bf16.mxu0 0
      %2726 = vmatmul.mubr.bf16.gmra.mrb[0].mxu0 %v2630
      %v2727 = vpop.f32.mrb[0].mxu0
      %v2728 = vadd.f32 0.0, %v2727
      %v2729 = vpop.f32.mrb[0].mxu0
      %v2730 = vpop.f32.mrb[0].mxu0
      %v2731 = vadd.f32 0.0, %v2730
      %v2732 = vpop.f32.mrb[0].mxu0
      %2733 = vmatprep.mubr.bf16.mxu0 0
      %2734 = vmatmul.mubr.bf16.gmra.mrb[0].mxu0 %v2631
      %v2735 = vpop.f32.mrb[0].mxu0
      %v2736 = vadd.f32 0.0, %v2735
      %v2737 = vpop.f32.mrb[0].mxu0
      %v2738 = vpop.f32.mrb[0].mxu0
      %v2739 = vadd.f32 0.0, %v2738
      %v2740 = vpop.f32.mrb[0].mxu0
      %2741 = vmatprep.mubr.bf16.mxu0 0
      %2742 = vmatmul.mubr.bf16.gmra.mrb[0].mxu0 %v2632
      %v2743 = vpop.f32.mrb[0].mxu0
      %v2744 = vadd.f32 0.0, %v2743
      %v2745 = vpop.f32.mrb[0].mxu0
      %v2746 = vpop.f32.mrb[0].mxu0
      %v2747 = vadd.f32 0.0, %v2746
      %v2748 = vpop.f32.mrb[0].mxu0
      %2749 = vdwg.mxu0
      %v2750 = vadd.f32 %v2580, %v2720
      %v2751 = vadd.f32 %v2581, %v2723
      %v2752 = vadd.f32 %v2582, %v2728
      %v2753 = vadd.f32 %v2583, %v2731
      %v2754 = vadd.f32 %v2584, %v2736
      %v2755 = vadd.f32 %v2585, %v2739
      %v2756 = vadd.f32 %v2586, %v2744
      %v2757 = vadd.f32 %v2587, %v2747
      %s2758 = scalar_lea.vmem [#allocation2], 96
      %v2759 = vld [vmem:[%s2758] sm:$0xc]
      %v2760 = vld [vmem:[%s2758 + $0x4] sm:$0x3]
      %v2761 = vld [vmem:[%s2758 + $0xc] sm:$0xc]
      %v2762 = vld [vmem:[%s2758 + $0x10] sm:$0x3]
      %v2763 = vld [vmem:[%s2758 + $0x18] sm:$0xc]
      %v2764 = vld [vmem:[%s2758 + $0x1c] sm:$0x3]
      %v2765 = vld [vmem:[%s2758 + $0x24] sm:$0xc]
      %v2766 = vld [vmem:[%s2758 + $0x28] sm:$0x3]
      %v2767 = vld [vmem:[%s2758 + $0x30] sm:$0xc]
      %v2768 = vld [vmem:[%s2758 + $0x34] sm:$0x3]
      %v2769 = vld [vmem:[%s2758 + $0x3c] sm:$0xc]
      %v2770 = vld [vmem:[%s2758 + $0x40] sm:$0x3]
      %v2771 = vld [vmem:[%s2758 + $0x48] sm:$0xc]
      %v2772 = vld [vmem:[%s2758 + $0x4c] sm:$0x3]
      %v2773 = vld [vmem:[%s2758 + $0x54] sm:$0xc]
      %v2774 = vld [vmem:[%s2758 + $0x58] sm:$0x3]
      %v2791 = vrot.slane %v2759, 6
      %v2792 = vrot.slane %v2791, 4
      %v2793 = vrot.slane %v2760, 6
      %v2794 = vsel %vm1591, %v2792, %v2793
      %v2795 = vrot.slane %v2761, 6
      %v2796 = vrot.slane %v2795, 4
      %v2797 = vrot.slane %v2762, 6
      %v2798 = vsel %vm1591, %v2796, %v2797
      %v2799 = vrot.slane %v2763, 6
      %v2800 = vrot.slane %v2799, 4
      %v2801 = vrot.slane %v2764, 6
      %v2802 = vsel %vm1591, %v2800, %v2801
      %v2803 = vrot.slane %v2765, 6
      %v2804 = vrot.slane %v2803, 4
      %v2805 = vrot.slane %v2766, 6
      %v2806 = vsel %vm1591, %v2804, %v2805
      %v2807 = vrot.slane %v2767, 6
      %v2808 = vrot.slane %v2807, 4
      %v2809 = vrot.slane %v2768, 6
      %v2810 = vsel %vm1591, %v2808, %v2809
      %v2811 = vrot.slane %v2769, 6
      %v2812 = vrot.slane %v2811, 4
      %v2813 = vrot.slane %v2770, 6
      %v2814 = vsel %vm1591, %v2812, %v2813
      %v2815 = vrot.slane %v2771, 6
      %v2816 = vrot.slane %v2815, 4
      %v2817 = vrot.slane %v2772, 6
      %v2818 = vsel %vm1591, %v2816, %v2817
      %v2819 = vrot.slane %v2773, 6
      %v2820 = vrot.slane %v2819, 4
      %v2821 = vrot.slane %v2774, 6
      %v2822 = vsel %vm1591, %v2820, %v2821
      %s2823 = scalar_lea.vmem %s5, 384
      %v2824 = vld [vmem:[%s2823] sm:$0xf]
      %v2825 = vld [vmem:[%s2823 + $0x4] sm:$0xf]
      %v2826 = vld [vmem:[%s2823 + $0x8] sm:$0xf]
      %v2827 = vld [vmem:[%s2823 + $0xc] sm:$0xf]
      %v2828 = vld [vmem:[%s2823 + $0x10] sm:$0xf]
      %v2829 = vld [vmem:[%s2823 + $0x14] sm:$0xf]
      %v2830 = vld [vmem:[%s2823 + $0x18] sm:$0xf]
      %v2831 = vld [vmem:[%s2823 + $0x1c] sm:$0xf]
      %v2832 = vld [vmem:[%s2823 + $0x20] sm:$0xf]
      %v2833 = vld [vmem:[%s2823 + $0x24] sm:$0xf]
      %v2834 = vld [vmem:[%s2823 + $0x28] sm:$0xf]
      %v2835 = vld [vmem:[%s2823 + $0x2c] sm:$0xf]
      %v2836 = vld [vmem:[%s2823 + $0x30] sm:$0xf]
      %v2837 = vld [vmem:[%s2823 + $0x34] sm:$0xf]
      %v2838 = vld [vmem:[%s2823 + $0x38] sm:$0xf]
      %v2839 = vld [vmem:[%s2823 + $0x3c] sm:$0xf]
      %v2840 = vunpack.c.l.b16 %v2794
      %v2841 = vunpack.c.l.b16 %v2798
      %v2842 = vunpack.c.l.b16 %v2802
      %v2843 = vunpack.c.l.b16 %v2806
      %v2844 = vunpack.c.l.b16 %v2810
      %v2845 = vunpack.c.l.b16 %v2814
      %v2846 = vunpack.c.l.b16 %v2818
      %v2847 = vunpack.c.l.b16 %v2822
      %v2848 = vpack.c.b16 %v2841, %v2840
      %v2849 = vpack.c.b16 %v2843, %v2842
      %v2850 = vpack.c.b16 %v2845, %v2844
      %v2851 = vpack.c.b16 %v2847, %v2846
      %v2872 = vunpack.c.l.b16 %v2824
      %v2873 = vunpack.c.l.b16 %v2825
      %v2874 = vunpack.c.l.b16 %v2826
      %v2875 = vunpack.c.l.b16 %v2827
      %v2876 = vunpack.c.l.b16 %v2828
      %v2877 = vunpack.c.l.b16 %v2829
      %v2878 = vunpack.c.l.b16 %v2830
      %v2879 = vunpack.c.l.b16 %v2831
      %v2880 = vunpack.c.l.b16 %v2832
      %v2881 = vunpack.c.l.b16 %v2833
      %v2882 = vunpack.c.l.b16 %v2834
      %v2883 = vunpack.c.l.b16 %v2835
      %v2884 = vunpack.c.l.b16 %v2836
      %v2885 = vunpack.c.l.b16 %v2837
      %v2886 = vunpack.c.l.b16 %v2838
      %v2887 = vunpack.c.l.b16 %v2839
      %v2888 = vpack.c.b16 %v2873, %v2872
      %v2889 = vpack.c.b16 %v2875, %v2874
      %v2890 = vpack.c.b16 %v2877, %v2876
      %v2891 = vpack.c.b16 %v2879, %v2878
      %v2892 = vpack.c.b16 %v2881, %v2880
      %v2893 = vpack.c.b16 %v2883, %v2882
      %v2894 = vpack.c.b16 %v2885, %v2884
      %v2895 = vpack.c.b16 %v2887, %v2886
      %2904 = vmatprep.subr.bf16.mxu0 0
      %2905 = vmatpush1.bf16.msra.mxu0 %v2888
      %2906 = vmatprep.subr.bf16.mxu0 0
      %2907 = vmatpush1.bf16.msra.mxu0 %v2889
      %2908 = vmatprep.subr.bf16.mxu0 0
      %2909 = vmatpush1.bf16.msra.mxu0 %v2890
      %2910 = vmatprep.subr.bf16.mxu0 0
      %2911 = vmatpush1.bf16.msra.mxu0 %v2891
      %2912 = vmatprep.subr.bf16.mxu0 0
      %2913 = vmatpush1.bf16.msra.mxu0 %v2892
      %2914 = vmatprep.subr.bf16.mxu0 0
      %2915 = vmatpush1.bf16.msra.mxu0 %v2893
      %2916 = vmatprep.subr.bf16.mxu0 0
      %2917 = vmatpush1.bf16.msra.mxu0 %v2894
      %2918 = vmatprep.subr.bf16.mxu0 0
      %2919 = vmatpush1.bf16.msra.mxu0 %v2895
      %2920 = vmatprep.subr.bf16.mxu0 0
      %2921 = vmatpush1.bf16.msra.mxu0 0
      %2922 = vmatprep.subr.bf16.mxu0 0
      %2923 = vmatpush1.bf16.msra.mxu0 0
      %2924 = vmatprep.subr.bf16.mxu0 0
      %2925 = vmatpush1.bf16.msra.mxu0 0
      %2926 = vmatprep.subr.bf16.mxu0 0
      %2927 = vmatpush1.bf16.msra.mxu0 0
      %2928 = vmatprep.subr.bf16.mxu0 0
      %2929 = vmatpush1.bf16.msra.mxu0 0
      %2930 = vmatprep.subr.bf16.mxu0 0
      %2931 = vmatpush1.bf16.msra.mxu0 0
      %2932 = vmatprep.subr.bf16.mxu0 0
      %2933 = vmatpush1.bf16.msra.mxu0 0
      %2934 = vmatprep.subr.bf16.mxu0 0
      %2935 = vmatpush1.bf16.msra.mxu0 0
      %2936 = vmatprep.mubr.bf16.mxu0 0
      %2937 = vmatmul.mubr.bf16.gmra.mrb[0].mxu0 %v2848
      %v2938 = vpop.f32.mrb[0].mxu0
      %v2939 = vadd.f32 0.0, %v2938
      %v2940 = vpop.f32.mrb[0].mxu0
      %v2941 = vpop.f32.mrb[0].mxu0
      %v2942 = vadd.f32 0.0, %v2941
      %v2943 = vpop.f32.mrb[0].mxu0
      %2944 = vmatprep.mubr.bf16.mxu0 0
      %2945 = vmatmul.mubr.bf16.gmra.mrb[0].mxu0 %v2849
      %v2946 = vpop.f32.mrb[0].mxu0
      %v2947 = vadd.f32 0.0, %v2946
      %v2948 = vpop.f32.mrb[0].mxu0
      %v2949 = vpop.f32.mrb[0].mxu0
      %v2950 = vadd.f32 0.0, %v2949
      %v2951 = vpop.f32.mrb[0].mxu0
      %2952 = vmatprep.mubr.bf16.mxu0 0
      %2953 = vmatmul.mubr.bf16.gmra.mrb[0].mxu0 %v2850
      %v2954 = vpop.f32.mrb[0].mxu0
      %v2955 = vadd.f32 0.0, %v2954
      %v2956 = vpop.f32.mrb[0].mxu0
      %v2957 = vpop.f32.mrb[0].mxu0
      %v2958 = vadd.f32 0.0, %v2957
      %v2959 = vpop.f32.mrb[0].mxu0
      %2960 = vmatprep.mubr.bf16.mxu0 0
      %2961 = vmatmul.mubr.bf16.gmra.mrb[0].mxu0 %v2851
      %v2962 = vpop.f32.mrb[0].mxu0
      %v2963 = vadd.f32 0.0, %v2962
      %v2964 = vpop.f32.mrb[0].mxu0
      %v2965 = vpop.f32.mrb[0].mxu0
      %v2966 = vadd.f32 0.0, %v2965
      %v2967 = vpop.f32.mrb[0].mxu0
      %2968 = vdwg.mxu0
      %v2969 = vadd.f32 %v2750, %v2939
      %v2970 = vadd.f32 %v2751, %v2942
      %v2971 = vadd.f32 %v2752, %v2947
      %v2972 = vadd.f32 %v2753, %v2950
      %v2973 = vadd.f32 %v2754, %v2955
      %v2974 = vadd.f32 %v2755, %v2958
      %v2975 = vadd.f32 %v2756, %v2963
      %v2976 = vadd.f32 %v2757, %v2966
      %v2977 = vld [vmem:[%s2758] sm:$0x8]
      %v2978 = vld [vmem:[%s2758 + $0x4] sm:$0x7]
      %v2979 = vld [vmem:[%s2758 + $0xc] sm:$0x8]
      %v2980 = vld [vmem:[%s2758 + $0x10] sm:$0x7]
      %v2981 = vld [vmem:[%s2758 + $0x18] sm:$0x8]
      %v2982 = vld [vmem:[%s2758 + $0x1c] sm:$0x7]
      %v2983 = vld [vmem:[%s2758 + $0x24] sm:$0x8]
      %v2984 = vld [vmem:[%s2758 + $0x28] sm:$0x7]
      %v2985 = vld [vmem:[%s2758 + $0x30] sm:$0x8]
      %v2986 = vld [vmem:[%s2758 + $0x34] sm:$0x7]
      %v2987 = vld [vmem:[%s2758 + $0x3c] sm:$0x8]
      %v2988 = vld [vmem:[%s2758 + $0x40] sm:$0x7]
      %v2989 = vld [vmem:[%s2758 + $0x48] sm:$0x8]
      %v2990 = vld [vmem:[%s2758 + $0x4c] sm:$0x7]
      %v2991 = vld [vmem:[%s2758 + $0x54] sm:$0x8]
      %v2992 = vld [vmem:[%s2758 + $0x58] sm:$0x7]
      %v3009 = vrot.slane %v2977, 7
      %v3010 = vrot.slane %v3009, 4
      %v3011 = vrot.slane %v2978, 7
      %v3012 = vsel %vm1674, %v3010, %v3011
      %v3013 = vrot.slane %v2979, 7
      %v3014 = vrot.slane %v3013, 4
      %v3015 = vrot.slane %v2980, 7
      %v3016 = vsel %vm1674, %v3014, %v3015
      %v3017 = vrot.slane %v2981, 7
      %v3018 = vrot.slane %v3017, 4
      %v3019 = vrot.slane %v2982, 7
      %v3020 = vsel %vm1674, %v3018, %v3019
      %v3021 = vrot.slane %v2983, 7
      %v3022 = vrot.slane %v3021, 4
      %v3023 = vrot.slane %v2984, 7
      %v3024 = vsel %vm1674, %v3022, %v3023
      %v3025 = vrot.slane %v2985, 7
      %v3026 = vrot.slane %v3025, 4
      %v3027 = vrot.slane %v2986, 7
      %v3028 = vsel %vm1674, %v3026, %v3027
      %v3029 = vrot.slane %v2987, 7
      %v3030 = vrot.slane %v3029, 4
      %v3031 = vrot.slane %v2988, 7
      %v3032 = vsel %vm1674, %v3030, %v3031
      %v3033 = vrot.slane %v2989, 7
      %v3034 = vrot.slane %v3033, 4
      %v3035 = vrot.slane %v2990, 7
      %v3036 = vsel %vm1674, %v3034, %v3035
      %v3037 = vrot.slane %v2991, 7
      %v3038 = vrot.slane %v3037, 4
      %v3039 = vrot.slane %v2992, 7
      %v3040 = vsel %vm1674, %v3038, %v3039
      %s3041 = scalar_lea.vmem %s5, 448
      %v3042 = vld [vmem:[%s3041] sm:$0xf]
      %v3043 = vld [vmem:[%s3041 + $0x4] sm:$0xf]
      %v3044 = vld [vmem:[%s3041 + $0x8] sm:$0xf]
      %v3045 = vld [vmem:[%s3041 + $0xc] sm:$0xf]
      %v3046 = vld [vmem:[%s3041 + $0x10] sm:$0xf]
      %v3047 = vld [vmem:[%s3041 + $0x14] sm:$0xf]
      %v3048 = vld [vmem:[%s3041 + $0x18] sm:$0xf]
      %v3049 = vld [vmem:[%s3041 + $0x1c] sm:$0xf]
      %v3050 = vld [vmem:[%s3041 + $0x20] sm:$0xf]
      %v3051 = vld [vmem:[%s3041 + $0x24] sm:$0xf]
      %v3052 = vld [vmem:[%s3041 + $0x28] sm:$0xf]
      %v3053 = vld [vmem:[%s3041 + $0x2c] sm:$0xf]
      %v3054 = vld [vmem:[%s3041 + $0x30] sm:$0xf]
      %v3055 = vld [vmem:[%s3041 + $0x34] sm:$0xf]
      %v3056 = vld [vmem:[%s3041 + $0x38] sm:$0xf]
      %v3057 = vld [vmem:[%s3041 + $0x3c] sm:$0xf]
      %v3058 = vunpack.c.l.b16 %v3012
      %v3059 = vunpack.c.l.b16 %v3016
      %v3060 = vunpack.c.l.b16 %v3020
      %v3061 = vunpack.c.l.b16 %v3024
      %v3062 = vunpack.c.l.b16 %v3028
      %v3063 = vunpack.c.l.b16 %v3032
      %v3064 = vunpack.c.l.b16 %v3036
      %v3065 = vunpack.c.l.b16 %v3040
      %v3066 = vpack.c.b16 %v3059, %v3058
      %v3067 = vpack.c.b16 %v3061, %v3060
      %v3068 = vpack.c.b16 %v3063, %v3062
      %v3069 = vpack.c.b16 %v3065, %v3064
      %v3090 = vunpack.c.l.b16 %v3042
      %v3091 = vunpack.c.l.b16 %v3043
      %v3092 = vunpack.c.l.b16 %v3044
      %v3093 = vunpack.c.l.b16 %v3045
      %v3094 = vunpack.c.l.b16 %v3046
      %v3095 = vunpack.c.l.b16 %v3047
      %v3096 = vunpack.c.l.b16 %v3048
      %v3097 = vunpack.c.l.b16 %v3049
      %v3098 = vunpack.c.l.b16 %v3050
      %v3099 = vunpack.c.l.b16 %v3051
      %v3100 = vunpack.c.l.b16 %v3052
      %v3101 = vunpack.c.l.b16 %v3053
      %v3102 = vunpack.c.l.b16 %v3054
      %v3103 = vunpack.c.l.b16 %v3055
      %v3104 = vunpack.c.l.b16 %v3056
      %v3105 = vunpack.c.l.b16 %v3057
      %v3106 = vpack.c.b16 %v3091, %v3090
      %v3107 = vpack.c.b16 %v3093, %v3092
      %v3108 = vpack.c.b16 %v3095, %v3094
      %v3109 = vpack.c.b16 %v3097, %v3096
      %v3110 = vpack.c.b16 %v3099, %v3098
      %v3111 = vpack.c.b16 %v3101, %v3100
      %v3112 = vpack.c.b16 %v3103, %v3102
      %v3113 = vpack.c.b16 %v3105, %v3104
      %3122 = vmatprep.subr.bf16.mxu0 0
      %3123 = vmatpush1.bf16.msra.mxu0 %v3106
      %3124 = vmatprep.subr.bf16.mxu0 0
      %3125 = vmatpush1.bf16.msra.mxu0 %v3107
      %3126 = vmatprep.subr.bf16.mxu0 0
      %3127 = vmatpush1.bf16.msra.mxu0 %v3108
      %3128 = vmatprep.subr.bf16.mxu0 0
      %3129 = vmatpush1.bf16.msra.mxu0 %v3109
      %3130 = vmatprep.subr.bf16.mxu0 0
      %3131 = vmatpush1.bf16.msra.mxu0 %v3110
      %3132 = vmatprep.subr.bf16.mxu0 0
      %3133 = vmatpush1.bf16.msra.mxu0 %v3111
      %3134 = vmatprep.subr.bf16.mxu0 0
      %3135 = vmatpush1.bf16.msra.mxu0 %v3112
      %3136 = vmatprep.subr.bf16.mxu0 0
      %3137 = vmatpush1.bf16.msra.mxu0 %v3113
      %3138 = vmatprep.subr.bf16.mxu0 0
      %3139 = vmatpush1.bf16.msra.mxu0 0
      %3140 = vmatprep.subr.bf16.mxu0 0
      %3141 = vmatpush1.bf16.msra.mxu0 0
      %3142 = vmatprep.subr.bf16.mxu0 0
      %3143 = vmatpush1.bf16.msra.mxu0 0
      %3144 = vmatprep.subr.bf16.mxu0 0
      %3145 = vmatpush1.bf16.msra.mxu0 0
      %3146 = vmatprep.subr.bf16.mxu0 0
      %3147 = vmatpush1.bf16.msra.mxu0 0
      %3148 = vmatprep.subr.bf16.mxu0 0
      %3149 = vmatpush1.bf16.msra.mxu0 0
      %3150 = vmatprep.subr.bf16.mxu0 0
      %3151 = vmatpush1.bf16.msra.mxu0 0
      %3152 = vmatprep.subr.bf16.mxu0 0
      %3153 = vmatpush1.bf16.msra.mxu0 0
      %3154 = vmatprep.mubr.bf16.mxu0 0
      %3155 = vmatmul.mubr.bf16.gmra.mrb[0].mxu0 %v3066
      %v3156 = vpop.f32.mrb[0].mxu0
      %v3157 = vadd.f32 0.0, %v3156
      %v3158 = vpop.f32.mrb[0].mxu0
      %v3159 = vpop.f32.mrb[0].mxu0
      %v3160 = vadd.f32 0.0, %v3159
      %v3161 = vpop.f32.mrb[0].mxu0
      %3162 = vmatprep.mubr.bf16.mxu0 0
      %3163 = vmatmul.mubr.bf16.gmra.mrb[0].mxu0 %v3067
      %v3164 = vpop.f32.mrb[0].mxu0
      %v3165 = vadd.f32 0.0, %v3164
      %v3166 = vpop.f32.mrb[0].mxu0
      %v3167 = vpop.f32.mrb[0].mxu0
      %v3168 = vadd.f32 0.0, %v3167
      %v3169 = vpop.f32.mrb[0].mxu0
      %3170 = vmatprep.mubr.bf16.mxu0 0
      %3171 = vmatmul.mubr.bf16.gmra.mrb[0].mxu0 %v3068
      %v3172 = vpop.f32.mrb[0].mxu0
      %v3173 = vadd.f32 0.0, %v3172
      %v3174 = vpop.f32.mrb[0].mxu0
      %v3175 = vpop.f32.mrb[0].mxu0
      %v3176 = vadd.f32 0.0, %v3175
      %v3177 = vpop.f32.mrb[0].mxu0
      %3178 = vmatprep.mubr.bf16.mxu0 0
      %3179 = vmatmul.mubr.bf16.gmra.mrb[0].mxu0 %v3069
      %v3180 = vpop.f32.mrb[0].mxu0
      %v3181 = vadd.f32 0.0, %v3180
      %v3182 = vpop.f32.mrb[0].mxu0
      %v3183 = vpop.f32.mrb[0].mxu0
      %v3184 = vadd.f32 0.0, %v3183
      %v3185 = vpop.f32.mrb[0].mxu0
      %3186 = vdwg.mxu0
      %v3187 = vadd.f32 %v2969, %v3157
      %v3188 = vadd.f32 %v2970, %v3160
      %v3189 = vadd.f32 %v2971, %v3165
      %v3190 = vadd.f32 %v2972, %v3168
      %v3191 = vadd.f32 %v2973, %v3173
      %v3192 = vadd.f32 %v2974, %v3176
      %v3193 = vadd.f32 %v2975, %v3181
      %v3194 = vadd.f32 %v2976, %v3184
      %v3195 = vld [vmem:[%s2758 + $0x4] sm:$0xf]
      %v3196 = vld [vmem:[%s2758 + $0x10] sm:$0xf]
      %v3197 = vld [vmem:[%s2758 + $0x1c] sm:$0xf]
      %v3198 = vld [vmem:[%s2758 + $0x28] sm:$0xf]
      %v3199 = vld [vmem:[%s2758 + $0x34] sm:$0xf]
      %v3200 = vld [vmem:[%s2758 + $0x40] sm:$0xf]
      %v3201 = vld [vmem:[%s2758 + $0x4c] sm:$0xf]
      %v3202 = vld [vmem:[%s2758 + $0x58] sm:$0xf]
      %s3203 = scalar_lea.vmem %s5, 512
      %v3204 = vld [vmem:[%s3203] sm:$0xf]
      %v3205 = vld [vmem:[%s3203 + $0x4] sm:$0xf]
      %v3206 = vld [vmem:[%s3203 + $0x8] sm:$0xf]
      %v3207 = vld [vmem:[%s3203 + $0xc] sm:$0xf]
      %v3208 = vld [vmem:[%s3203 + $0x10] sm:$0xf]
      %v3209 = vld [vmem:[%s3203 + $0x14] sm:$0xf]
      %v3210 = vld [vmem:[%s3203 + $0x18] sm:$0xf]
      %v3211 = vld [vmem:[%s3203 + $0x1c] sm:$0xf]
      %v3212 = vld [vmem:[%s3203 + $0x20] sm:$0xf]
      %v3213 = vld [vmem:[%s3203 + $0x24] sm:$0xf]
      %v3214 = vld [vmem:[%s3203 + $0x28] sm:$0xf]
      %v3215 = vld [vmem:[%s3203 + $0x2c] sm:$0xf]
      %v3216 = vld [vmem:[%s3203 + $0x30] sm:$0xf]
      %v3217 = vld [vmem:[%s3203 + $0x34] sm:$0xf]
      %v3218 = vld [vmem:[%s3203 + $0x38] sm:$0xf]
      %v3219 = vld [vmem:[%s3203 + $0x3c] sm:$0xf]
      %v3228 = vunpack.c.l.b16 %v3195
      %v3229 = vunpack.c.l.b16 %v3196
      %v3230 = vunpack.c.l.b16 %v3197
      %v3231 = vunpack.c.l.b16 %v3198
      %v3232 = vunpack.c.l.b16 %v3199
      %v3233 = vunpack.c.l.b16 %v3200
      %v3234 = vunpack.c.l.b16 %v3201
      %v3235 = vunpack.c.l.b16 %v3202
      %v3236 = vpack.c.b16 %v3229, %v3228
      %v3237 = vpack.c.b16 %v3231, %v3230
      %v3238 = vpack.c.b16 %v3233, %v3232
      %v3239 = vpack.c.b16 %v3235, %v3234
      %v3260 = vunpack.c.l.b16 %v3204
      %v3261 = vunpack.c.l.b16 %v3205
      %v3262 = vunpack.c.l.b16 %v3206
      %v3263 = vunpack.c.l.b16 %v3207
      %v3264 = vunpack.c.l.b16 %v3208
      %v3265 = vunpack.c.l.b16 %v3209
      %v3266 = vunpack.c.l.b16 %v3210
      %v3267 = vunpack.c.l.b16 %v3211
      %v3268 = vunpack.c.l.b16 %v3212
      %v3269 = vunpack.c.l.b16 %v3213
      %v3270 = vunpack.c.l.b16 %v3214
      %v3271 = vunpack.c.l.b16 %v3215
      %v3272 = vunpack.c.l.b16 %v3216
      %v3273 = vunpack.c.l.b16 %v3217
      %v3274 = vunpack.c.l.b16 %v3218
      %v3275 = vunpack.c.l.b16 %v3219
      %v3276 = vpack.c.b16 %v3261, %v3260
      %v3277 = vpack.c.b16 %v3263, %v3262
      %v3278 = vpack.c.b16 %v3265, %v3264
      %v3279 = vpack.c.b16 %v3267, %v3266
      %v3280 = vpack.c.b16 %v3269, %v3268
      %v3281 = vpack.c.b16 %v3271, %v3270
      %v3282 = vpack.c.b16 %v3273, %v3272
      %v3283 = vpack.c.b16 %v3275, %v3274
      %3292 = vmatprep.subr.bf16.mxu0 0
      %3293 = vmatpush1.bf16.msra.mxu0 %v3276
      %3294 = vmatprep.subr.bf16.mxu0 0
      %3295 = vmatpush1.bf16.msra.mxu0 %v3277
      %3296 = vmatprep.subr.bf16.mxu0 0
      %3297 = vmatpush1.bf16.msra.mxu0 %v3278
      %3298 = vmatprep.subr.bf16.mxu0 0
      %3299 = vmatpush1.bf16.msra.mxu0 %v3279
      %3300 = vmatprep.subr.bf16.mxu0 0
      %3301 = vmatpush1.bf16.msra.mxu0 %v3280
      %3302 = vmatprep.subr.bf16.mxu0 0
      %3303 = vmatpush1.bf16.msra.mxu0 %v3281
      %3304 = vmatprep.subr.bf16.mxu0 0
      %3305 = vmatpush1.bf16.msra.mxu0 %v3282
      %3306 = vmatprep.subr.bf16.mxu0 0
      %3307 = vmatpush1.bf16.msra.mxu0 %v3283
      %3308 = vmatprep.subr.bf16.mxu0 0
      %3309 = vmatpush1.bf16.msra.mxu0 0
      %3310 = vmatprep.subr.bf16.mxu0 0
      %3311 = vmatpush1.bf16.msra.mxu0 0
      %3312 = vmatprep.subr.bf16.mxu0 0
      %3313 = vmatpush1.bf16.msra.mxu0 0
      %3314 = vmatprep.subr.bf16.mxu0 0
      %3315 = vmatpush1.bf16.msra.mxu0 0
      %3316 = vmatprep.subr.bf16.mxu0 0
      %3317 = vmatpush1.bf16.msra.mxu0 0
      %3318 = vmatprep.subr.bf16.mxu0 0
      %3319 = vmatpush1.bf16.msra.mxu0 0
      %3320 = vmatprep.subr.bf16.mxu0 0
      %3321 = vmatpush1.bf16.msra.mxu0 0
      %3322 = vmatprep.subr.bf16.mxu0 0
      %3323 = vmatpush1.bf16.msra.mxu0 0
      %3324 = vmatprep.mubr.bf16.mxu0 0
      %3325 = vmatmul.mubr.bf16.gmra.mrb[0].mxu0 %v3236
      %v3326 = vpop.f32.mrb[0].mxu0
      %v3327 = vadd.f32 0.0, %v3326
      %v3328 = vpop.f32.mrb[0].mxu0
      %v3329 = vpop.f32.mrb[0].mxu0
      %v3330 = vadd.f32 0.0, %v3329
      %v3331 = vpop.f32.mrb[0].mxu0
      %3332 = vmatprep.mubr.bf16.mxu0 0
      %3333 = vmatmul.mubr.bf16.gmra.mrb[0].mxu0 %v3237
      %v3334 = vpop.f32.mrb[0].mxu0
      %v3335 = vadd.f32 0.0, %v3334
      %v3336 = vpop.f32.mrb[0].mxu0
      %v3337 = vpop.f32.mrb[0].mxu0
      %v3338 = vadd.f32 0.0, %v3337
      %v3339 = vpop.f32.mrb[0].mxu0
      %3340 = vmatprep.mubr.bf16.mxu0 0
      %3341 = vmatmul.mubr.bf16.gmra.mrb[0].mxu0 %v3238
      %v3342 = vpop.f32.mrb[0].mxu0
      %v3343 = vadd.f32 0.0, %v3342
      %v3344 = vpop.f32.mrb[0].mxu0
      %v3345 = vpop.f32.mrb[0].mxu0
      %v3346 = vadd.f32 0.0, %v3345
      %v3347 = vpop.f32.mrb[0].mxu0
      %3348 = vmatprep.mubr.bf16.mxu0 0
      %3349 = vmatmul.mubr.bf16.gmra.mrb[0].mxu0 %v3239
      %v3350 = vpop.f32.mrb[0].mxu0
      %v3351 = vadd.f32 0.0, %v3350
      %v3352 = vpop.f32.mrb[0].mxu0
      %v3353 = vpop.f32.mrb[0].mxu0
      %v3354 = vadd.f32 0.0, %v3353
      %v3355 = vpop.f32.mrb[0].mxu0
      %3356 = vdwg.mxu0
      %v3357 = vadd.f32 %v3187, %v3327
      %v3358 = vadd.f32 %v3188, %v3330
      %v3359 = vadd.f32 %v3189, %v3335
      %v3360 = vadd.f32 %v3190, %v3338
      %v3361 = vadd.f32 %v3191, %v3343
      %v3362 = vadd.f32 %v3192, %v3346
      %v3363 = vadd.f32 %v3193, %v3351
      %v3364 = vadd.f32 %v3194, %v3354
      %v3365 = vld [vmem:[%s6] sm:$0x1]
      %v3367 = vlaneseq
      %v3368 = vshrl.u32 %v3367, 7
      %v3369 = vsub.s32 0, %v3368
      %v3370 = vrot.slane %v3365, %v3369
      %v3372 = vadd.f32 %v3357, %v3370
      %v3373 = vadd.f32 %v3358, %v3370
      %v3374 = vadd.f32 %v3359, %v3370
      %v3375 = vadd.f32 %v3360, %v3370
      %v3376 = vadd.f32 %v3361, %v3370
      %v3377 = vadd.f32 %v3362, %v3370
      %v3378 = vadd.f32 %v3363, %v3370
      %v3379 = vadd.f32 %v3364, %v3370
      %v3380 = vmax.f32 %v3372, 0.0
      %v3381 = vmax.f32 %v3373, 0.0
      %v3382 = vmax.f32 %v3374, 0.0
      %v3383 = vmax.f32 %v3375, 0.0
      %v3384 = vmax.f32 %v3376, 0.0
      %v3385 = vmax.f32 %v3377, 0.0
      %v3386 = vmax.f32 %v3378, 0.0
      %v3387 = vmax.f32 %v3379, 0.0
      %v3388 = vpack.c.bf16 %v3381, %v3380
      %v3389 = vpack.c.bf16 %v3383, %v3382
      %v3390 = vpack.c.bf16 %v3385, %v3384
      %v3391 = vpack.c.bf16 %v3387, %v3386
      %s3392 = scalar_lea.vmem [#allocation2], 24
      %v3393 = vld [vmem:[%s3392] sm:$0xe]
      %v3394 = vld [vmem:[%s3392 + $0x4] sm:$0x1]
      %v3395 = vld [vmem:[%s3392 + $0xc] sm:$0xe]
      %v3396 = vld [vmem:[%s3392 + $0x10] sm:$0x1]
      %v3397 = vld [vmem:[%s3392 + $0x18] sm:$0xe]
      %v3398 = vld [vmem:[%s3392 + $0x1c] sm:$0x1]
      %v3399 = vld [vmem:[%s3392 + $0x24] sm:$0xe]
      %v3400 = vld [vmem:[%s3392 + $0x28] sm:$0x1]
      %v3401 = vld [vmem:[%s3392 + $0x30] sm:$0xe]
      %v3402 = vld [vmem:[%s3392 + $0x34] sm:$0x1]
      %v3403 = vld [vmem:[%s3392 + $0x3c] sm:$0xe]
      %v3404 = vld [vmem:[%s3392 + $0x40] sm:$0x1]
      %v3405 = vld [vmem:[%s3392 + $0x48] sm:$0xe]
      %v3406 = vld [vmem:[%s3392 + $0x4c] sm:$0x1]
      %v3407 = vld [vmem:[%s3392 + $0x54] sm:$0xe]
      %v3408 = vld [vmem:[%s3392 + $0x58] sm:$0x1]
      %vm3425 = vcmask 1042432
      %vm3426 = vcmask 1046532
      %vm3427 = vmor %vm3425, %vm3426
      %v3428 = vrot.slane %v3393, 5
      %v3429 = vrot.slane %v3428, 4
      %v3430 = vrot.slane %v3394, 5
      %v3431 = vsel %vm3427, %v3429, %v3430
      %v3432 = vrot.slane %v3395, 5
      %v3433 = vrot.slane %v3432, 4
      %v3434 = vrot.slane %v3396, 5
      %v3435 = vsel %vm3427, %v3433, %v3434
      %v3436 = vrot.slane %v3397, 5
      %v3437 = vrot.slane %v3436, 4
      %v3438 = vrot.slane %v3398, 5
      %v3439 = vsel %vm3427, %v3437, %v3438
      %v3440 = vrot.slane %v3399, 5
      %v3441 = vrot.slane %v3440, 4
      %v3442 = vrot.slane %v3400, 5
      %v3443 = vsel %vm3427, %v3441, %v3442
      %v3444 = vrot.slane %v3401, 5
      %v3445 = vrot.slane %v3444, 4
      %v3446 = vrot.slane %v3402, 5
      %v3447 = vsel %vm3427, %v3445, %v3446
      %v3448 = vrot.slane %v3403, 5
      %v3449 = vrot.slane %v3448, 4
      %v3450 = vrot.slane %v3404, 5
      %v3451 = vsel %vm3427, %v3449, %v3450
      %v3452 = vrot.slane %v3405, 5
      %v3453 = vrot.slane %v3452, 4
      %v3454 = vrot.slane %v3406, 5
      %v3455 = vsel %vm3427, %v3453, %v3454
      %v3456 = vrot.slane %v3407, 5
      %v3457 = vrot.slane %v3456, 4
      %v3458 = vrot.slane %v3408, 5
      %v3459 = vsel %vm3427, %v3457, %v3458
      %s3460 = scalar_lea.vmem %s5, 576
      %v3461 = vld [vmem:[%s3460] sm:$0xf]
      %v3462 = vld [vmem:[%s3460 + $0x4] sm:$0xf]
      %v3463 = vld [vmem:[%s3460 + $0x8] sm:$0xf]
      %v3464 = vld [vmem:[%s3460 + $0xc] sm:$0xf]
      %v3465 = vld [vmem:[%s3460 + $0x10] sm:$0xf]
      %v3466 = vld [vmem:[%s3460 + $0x14] sm:$0xf]
      %v3467 = vld [vmem:[%s3460 + $0x18] sm:$0xf]
      %v3468 = vld [vmem:[%s3460 + $0x1c] sm:$0xf]
      %v3469 = vld [vmem:[%s3460 + $0x20] sm:$0xf]
      %v3470 = vld [vmem:[%s3460 + $0x24] sm:$0xf]
      %v3471 = vld [vmem:[%s3460 + $0x28] sm:$0xf]
      %v3472 = vld [vmem:[%s3460 + $0x2c] sm:$0xf]
      %v3473 = vld [vmem:[%s3460 + $0x30] sm:$0xf]
      %v3474 = vld [vmem:[%s3460 + $0x34] sm:$0xf]
      %v3475 = vld [vmem:[%s3460 + $0x38] sm:$0xf]
      %v3476 = vld [vmem:[%s3460 + $0x3c] sm:$0xf]
      %v3477 = vld [vmem:[%s3392] sm:$0x8]
      %v3478 = vld [vmem:[%s3392 + $0x4] sm:$0x7]
      %v3479 = vld [vmem:[%s3392 + $0xc] sm:$0x8]
      %v3480 = vld [vmem:[%s3392 + $0x10] sm:$0x7]
      %v3481 = vld [vmem:[%s3392 + $0x18] sm:$0x8]
      %v3482 = vld [vmem:[%s3392 + $0x1c] sm:$0x7]
      %v3483 = vld [vmem:[%s3392 + $0x24] sm:$0x8]
      %v3484 = vld [vmem:[%s3392 + $0x28] sm:$0x7]
      %v3485 = vld [vmem:[%s3392 + $0x30] sm:$0x8]
      %v3486 = vld [vmem:[%s3392 + $0x34] sm:$0x7]
      %v3487 = vld [vmem:[%s3392 + $0x3c] sm:$0x8]
      %v3488 = vld [vmem:[%s3392 + $0x40] sm:$0x7]
      %v3489 = vld [vmem:[%s3392 + $0x48] sm:$0x8]
      %v3490 = vld [vmem:[%s3392 + $0x4c] sm:$0x7]
      %v3491 = vld [vmem:[%s3392 + $0x54] sm:$0x8]
      %v3492 = vld [vmem:[%s3392 + $0x58] sm:$0x7]
      %v3509 = vrot.slane %v3477, 7
      %v3510 = vrot.slane %v3509, 4
      %v3511 = vrot.slane %v3478, 7
      %v3512 = vsel %vm1674, %v3510, %v3511
      %v3513 = vrot.slane %v3479, 7
      %v3514 = vrot.slane %v3513, 4
      %v3515 = vrot.slane %v3480, 7
      %v3516 = vsel %vm1674, %v3514, %v3515
      %v3517 = vrot.slane %v3481, 7
      %v3518 = vrot.slane %v3517, 4
      %v3519 = vrot.slane %v3482, 7
      %v3520 = vsel %vm1674, %v3518, %v3519
      %v3521 = vrot.slane %v3483, 7
      %v3522 = vrot.slane %v3521, 4
      %v3523 = vrot.slane %v3484, 7
      %v3524 = vsel %vm1674, %v3522, %v3523
      %v3525 = vrot.slane %v3485, 7
      %v3526 = vrot.slane %v3525, 4
      %v3527 = vrot.slane %v3486, 7
      %v3528 = vsel %vm1674, %v3526, %v3527
      %v3529 = vrot.slane %v3487, 7
      %v3530 = vrot.slane %v3529, 4
      %v3531 = vrot.slane %v3488, 7
      %v3532 = vsel %vm1674, %v3530, %v3531
      %v3533 = vrot.slane %v3489, 7
      %v3534 = vrot.slane %v3533, 4
      %v3535 = vrot.slane %v3490, 7
      %v3536 = vsel %vm1674, %v3534, %v3535
      %v3537 = vrot.slane %v3491, 7
      %v3538 = vrot.slane %v3537, 4
      %v3539 = vrot.slane %v3492, 7
      %v3540 = vsel %vm1674, %v3538, %v3539
      %s3541 = scalar_lea.vmem %s5, 640
      %v3542 = vld [vmem:[%s3541] sm:$0xf]
      %v3543 = vld [vmem:[%s3541 + $0x4] sm:$0xf]
      %v3544 = vld [vmem:[%s3541 + $0x8] sm:$0xf]
      %v3545 = vld [vmem:[%s3541 + $0xc] sm:$0xf]
      %v3546 = vld [vmem:[%s3541 + $0x10] sm:$0xf]
      %v3547 = vld [vmem:[%s3541 + $0x14] sm:$0xf]
      %v3548 = vld [vmem:[%s3541 + $0x18] sm:$0xf]
      %v3549 = vld [vmem:[%s3541 + $0x1c] sm:$0xf]
      %v3550 = vld [vmem:[%s3541 + $0x20] sm:$0xf]
      %v3551 = vld [vmem:[%s3541 + $0x24] sm:$0xf]
      %v3552 = vld [vmem:[%s3541 + $0x28] sm:$0xf]
      %v3553 = vld [vmem:[%s3541 + $0x2c] sm:$0xf]
      %v3554 = vld [vmem:[%s3541 + $0x30] sm:$0xf]
      %v3555 = vld [vmem:[%s3541 + $0x34] sm:$0xf]
      %v3556 = vld [vmem:[%s3541 + $0x38] sm:$0xf]
      %v3557 = vld [vmem:[%s3541 + $0x3c] sm:$0xf]
      %v3558 = vunpack.c.l.b16 %v3512
      %v3559 = vunpack.c.l.b16 %v3516
      %v3560 = vunpack.c.l.b16 %v3520
      %v3561 = vunpack.c.l.b16 %v3524
      %v3562 = vunpack.c.l.b16 %v3528
      %v3563 = vunpack.c.l.b16 %v3532
      %v3564 = vunpack.c.l.b16 %v3536
      %v3565 = vunpack.c.l.b16 %v3540
      %v3566 = vpack.c.b16 %v3559, %v3558
      %v3567 = vpack.c.b16 %v3561, %v3560
      %v3568 = vpack.c.b16 %v3563, %v3562
      %v3569 = vpack.c.b16 %v3565, %v3564
      %v3590 = vunpack.c.l.b16 %v3542
      %v3591 = vunpack.c.l.b16 %v3543
      %v3592 = vunpack.c.l.b16 %v3544
      %v3593 = vunpack.c.l.b16 %v3545
      %v3594 = vunpack.c.l.b16 %v3546
      %v3595 = vunpack.c.l.b16 %v3547
      %v3596 = vunpack.c.l.b16 %v3548
      %v3597 = vunpack.c.l.b16 %v3549
      %v3598 = vunpack.c.l.b16 %v3550
      %v3599 = vunpack.c.l.b16 %v3551
      %v3600 = vunpack.c.l.b16 %v3552
      %v3601 = vunpack.c.l.b16 %v3553
      %v3602 = vunpack.c.l.b16 %v3554
      %v3603 = vunpack.c.l.b16 %v3555
      %v3604 = vunpack.c.l.b16 %v3556
      %v3605 = vunpack.c.l.b16 %v3557
      %v3606 = vpack.c.b16 %v3591, %v3590
      %v3607 = vpack.c.b16 %v3593, %v3592
      %v3608 = vpack.c.b16 %v3595, %v3594
      %v3609 = vpack.c.b16 %v3597, %v3596
      %v3610 = vpack.c.b16 %v3599, %v3598
      %v3611 = vpack.c.b16 %v3601, %v3600
      %v3612 = vpack.c.b16 %v3603, %v3602
      %v3613 = vpack.c.b16 %v3605, %v3604
      %3622 = vmatprep.subr.bf16.mxu0 0
      %3623 = vmatpush1.bf16.msra.mxu0 %v3606
      %3624 = vmatprep.subr.bf16.mxu0 0
      %3625 = vmatpush1.bf16.msra.mxu0 %v3607
      %3626 = vmatprep.subr.bf16.mxu0 0
      %3627 = vmatpush1.bf16.msra.mxu0 %v3608
      %3628 = vmatprep.subr.bf16.mxu0 0
      %3629 = vmatpush1.bf16.msra.mxu0 %v3609
      %3630 = vmatprep.subr.bf16.mxu0 0
      %3631 = vmatpush1.bf16.msra.mxu0 %v3610
      %3632 = vmatprep.subr.bf16.mxu0 0
      %3633 = vmatpush1.bf16.msra.mxu0 %v3611
      %3634 = vmatprep.subr.bf16.mxu0 0
      %3635 = vmatpush1.bf16.msra.mxu0 %v3612
      %3636 = vmatprep.subr.bf16.mxu0 0
      %3637 = vmatpush1.bf16.msra.mxu0 %v3613
      %3638 = vmatprep.subr.bf16.mxu0 0
      %3639 = vmatpush1.bf16.msra.mxu0 0
      %3640 = vmatprep.subr.bf16.mxu0 0
      %3641 = vmatpush1.bf16.msra.mxu0 0
      %3642 = vmatprep.subr.bf16.mxu0 0
      %3643 = vmatpush1.bf16.msra.mxu0 0
      %3644 = vmatprep.subr.bf16.mxu0 0
      %3645 = vmatpush1.bf16.msra.mxu0 0
      %3646 = vmatprep.subr.bf16.mxu0 0
      %3647 = vmatpush1.bf16.msra.mxu0 0
      %3648 = vmatprep.subr.bf16.mxu0 0
      %3649 = vmatpush1.bf16.msra.mxu0 0
      %3650 = vmatprep.subr.bf16.mxu0 0
      %3651 = vmatpush1.bf16.msra.mxu0 0
      %3652 = vmatprep.subr.bf16.mxu0 0
      %3653 = vmatpush1.bf16.msra.mxu0 0
      %3654 = vmatprep.mubr.bf16.mxu0 0
      %3655 = vmatmul.mubr.bf16.gmra.mrb[0].mxu0 %v3566
      %v3656 = vpop.f32.mrb[0].mxu0
      %v3657 = vadd.f32 0.0, %v3656
      %v3658 = vpop.f32.mrb[0].mxu0
      %v3659 = vpop.f32.mrb[0].mxu0
      %v3660 = vadd.f32 0.0, %v3659
      %v3661 = vpop.f32.mrb[0].mxu0
      %3662 = vmatprep.mubr.bf16.mxu0 0
      %3663 = vmatmul.mubr.bf16.gmra.mrb[0].mxu0 %v3567
      %v3664 = vpop.f32.mrb[0].mxu0
      %v3665 = vadd.f32 0.0, %v3664
      %v3666 = vpop.f32.mrb[0].mxu0
      %v3667 = vpop.f32.mrb[0].mxu0
      %v3668 = vadd.f32 0.0, %v3667
      %v3669 = vpop.f32.mrb[0].mxu0
      %3670 = vmatprep.mubr.bf16.mxu0 0
      %3671 = vmatmul.mubr.bf16.gmra.mrb[0].mxu0 %v3568
      %v3672 = vpop.f32.mrb[0].mxu0
      %v3673 = vadd.f32 0.0, %v3672
      %v3674 = vpop.f32.mrb[0].mxu0
      %v3675 = vpop.f32.mrb[0].mxu0
      %v3676 = vadd.f32 0.0, %v3675
      %v3677 = vpop.f32.mrb[0].mxu0
      %3678 = vmatprep.mubr.bf16.mxu0 0
      %3679 = vmatmul.mubr.bf16.gmra.mrb[0].mxu0 %v3569
      %v3680 = vpop.f32.mrb[0].mxu0
      %v3681 = vadd.f32 0.0, %v3680
      %v3682 = vpop.f32.mrb[0].mxu0
      %v3683 = vpop.f32.mrb[0].mxu0
      %v3684 = vadd.f32 0.0, %v3683
      %v3685 = vpop.f32.mrb[0].mxu0
      %3686 = vdwg.mxu0
      %v3687 = vunpack.c.l.b16 %v3431
      %v3688 = vunpack.c.l.b16 %v3435
      %v3689 = vunpack.c.l.b16 %v3439
      %v3690 = vunpack.c.l.b16 %v3443
      %v3691 = vunpack.c.l.b16 %v3447
      %v3692 = vunpack.c.l.b16 %v3451
      %v3693 = vunpack.c.l.b16 %v3455
      %v3694 = vunpack.c.l.b16 %v3459
      %v3695 = vpack.c.b16 %v3688, %v3687
      %v3696 = vpack.c.b16 %v3690, %v3689
      %v3697 = vpack.c.b16 %v3692, %v3691
      %v3698 = vpack.c.b16 %v3694, %v3693
      %v3719 = vunpack.c.l.b16 %v3461
      %v3720 = vunpack.c.l.b16 %v3462
      %v3721 = vunpack.c.l.b16 %v3463
      %v3722 = vunpack.c.l.b16 %v3464
      %v3723 = vunpack.c.l.b16 %v3465
      %v3724 = vunpack.c.l.b16 %v3466
      %v3725 = vunpack.c.l.b16 %v3467
      %v3726 = vunpack.c.l.b16 %v3468
      %v3727 = vunpack.c.l.b16 %v3469
      %v3728 = vunpack.c.l.b16 %v3470
      %v3729 = vunpack.c.l.b16 %v3471
      %v3730 = vunpack.c.l.b16 %v3472
      %v3731 = vunpack.c.l.b16 %v3473
      %v3732 = vunpack.c.l.b16 %v3474
      %v3733 = vunpack.c.l.b16 %v3475
      %v3734 = vunpack.c.l.b16 %v3476
      %v3735 = vpack.c.b16 %v3720, %v3719
      %v3736 = vpack.c.b16 %v3722, %v3721
      %v3737 = vpack.c.b16 %v3724, %v3723
      %v3738 = vpack.c.b16 %v3726, %v3725
      %v3739 = vpack.c.b16 %v3728, %v3727
      %v3740 = vpack.c.b16 %v3730, %v3729
      %v3741 = vpack.c.b16 %v3732, %v3731
      %v3742 = vpack.c.b16 %v3734, %v3733
      %3751 = vmatprep.subr.bf16.mxu0 0
      %3752 = vmatpush1.bf16.msra.mxu0 %v3735
      %3753 = vmatprep.subr.bf16.mxu0 0
      %3754 = vmatpush1.bf16.msra.mxu0 %v3736
      %3755 = vmatprep.subr.bf16.mxu0 0
      %3756 = vmatpush1.bf16.msra.mxu0 %v3737
      %3757 = vmatprep.subr.bf16.mxu0 0
      %3758 = vmatpush1.bf16.msra.mxu0 %v3738
      %3759 = vmatprep.subr.bf16.mxu0 0
      %3760 = vmatpush1.bf16.msra.mxu0 %v3739
      %3761 = vmatprep.subr.bf16.mxu0 0
      %3762 = vmatpush1.bf16.msra.mxu0 %v3740
      %3763 = vmatprep.subr.bf16.mxu0 0
      %3764 = vmatpush1.bf16.msra.mxu0 %v3741
      %3765 = vmatprep.subr.bf16.mxu0 0
      %3766 = vmatpush1.bf16.msra.mxu0 %v3742
      %3767 = vmatprep.subr.bf16.mxu0 0
      %3768 = vmatpush1.bf16.msra.mxu0 0
      %3769 = vmatprep.subr.bf16.mxu0 0
      %3770 = vmatpush1.bf16.msra.mxu0 0
      %3771 = vmatprep.subr.bf16.mxu0 0
      %3772 = vmatpush1.bf16.msra.mxu0 0
      %3773 = vmatprep.subr.bf16.mxu0 0
      %3774 = vmatpush1.bf16.msra.mxu0 0
      %3775 = vmatprep.subr.bf16.mxu0 0
      %3776 = vmatpush1.bf16.msra.mxu0 0
      %3777 = vmatprep.subr.bf16.mxu0 0
      %3778 = vmatpush1.bf16.msra.mxu0 0
      %3779 = vmatprep.subr.bf16.mxu0 0
      %3780 = vmatpush1.bf16.msra.mxu0 0
      %3781 = vmatprep.subr.bf16.mxu0 0
      %3782 = vmatpush1.bf16.msra.mxu0 0
      %3783 = vmatprep.mubr.bf16.mxu0 0
      %3784 = vmatmul.mubr.bf16.gmra.mrb[0].mxu0 %v3695
      %v3785 = vpop.f32.mrb[0].mxu0
      %v3786 = vadd.f32 %v3657, %v3785
      %v3787 = vpop.f32.mrb[0].mxu0
      %v3788 = vpop.f32.mrb[0].mxu0
      %v3789 = vadd.f32 %v3660, %v3788
      %v3790 = vpop.f32.mrb[0].mxu0
      %3791 = vmatprep.mubr.bf16.mxu0 0
      %3792 = vmatmul.mubr.bf16.gmra.mrb[0].mxu0 %v3696
      %v3793 = vpop.f32.mrb[0].mxu0
      %v3794 = vadd.f32 %v3665, %v3793
      %v3795 = vpop.f32.mrb[0].mxu0
      %v3796 = vpop.f32.mrb[0].mxu0
      %v3797 = vadd.f32 %v3668, %v3796
      %v3798 = vpop.f32.mrb[0].mxu0
      %3799 = vmatprep.mubr.bf16.mxu0 0
      %3800 = vmatmul.mubr.bf16.gmra.mrb[0].mxu0 %v3697
      %v3801 = vpop.f32.mrb[0].mxu0
      %v3802 = vadd.f32 %v3673, %v3801
      %v3803 = vpop.f32.mrb[0].mxu0
      %v3804 = vpop.f32.mrb[0].mxu0
      %v3805 = vadd.f32 %v3676, %v3804
      %v3806 = vpop.f32.mrb[0].mxu0
      %3807 = vmatprep.mubr.bf16.mxu0 0
      %3808 = vmatmul.mubr.bf16.gmra.mrb[0].mxu0 %v3698
      %v3809 = vpop.f32.mrb[0].mxu0
      %v3810 = vadd.f32 %v3681, %v3809
      %v3811 = vpop.f32.mrb[0].mxu0
      %v3812 = vpop.f32.mrb[0].mxu0
      %v3813 = vadd.f32 %v3684, %v3812
      %v3814 = vpop.f32.mrb[0].mxu0
      %3815 = vdwg.mxu0
      %v3816 = vld [vmem:[%s3392 + $0x4] sm:$0xe]
      %v3817 = vld [vmem:[%s3392 + $0x8] sm:$0x1]
      %v3818 = vld [vmem:[%s3392 + $0x10] sm:$0xe]
      %v3819 = vld [vmem:[%s3392 + $0x14] sm:$0x1]
      %v3820 = vld [vmem:[%s3392 + $0x1c] sm:$0xe]
      %v3821 = vld [vmem:[%s3392 + $0x20] sm:$0x1]
      %v3822 = vld [vmem:[%s3392 + $0x28] sm:$0xe]
      %v3823 = vld [vmem:[%s3392 + $0x2c] sm:$0x1]
      %v3824 = vld [vmem:[%s3392 + $0x34] sm:$0xe]
      %v3825 = vld [vmem:[%s3392 + $0x38] sm:$0x1]
      %v3826 = vld [vmem:[%s3392 + $0x40] sm:$0xe]
      %v3827 = vld [vmem:[%s3392 + $0x44] sm:$0x1]
      %v3828 = vld [vmem:[%s3392 + $0x4c] sm:$0xe]
      %v3829 = vld [vmem:[%s3392 + $0x50] sm:$0x1]
      %v3830 = vld [vmem:[%s3392 + $0x58] sm:$0xe]
      %v3831 = vld [vmem:[%s3392 + $0x5c] sm:$0x1]
      %v3848 = vrot.slane %v3816, 5
      %v3849 = vrot.slane %v3848, 4
      %v3850 = vrot.slane %v3817, 5
      %v3851 = vsel %vm3427, %v3849, %v3850
      %v3852 = vrot.slane %v3818, 5
      %v3853 = vrot.slane %v3852, 4
      %v3854 = vrot.slane %v3819, 5
      %v3855 = vsel %vm3427, %v3853, %v3854
      %v3856 = vrot.slane %v3820, 5
      %v3857 = vrot.slane %v3856, 4
      %v3858 = vrot.slane %v3821, 5
      %v3859 = vsel %vm3427, %v3857, %v3858
      %v3860 = vrot.slane %v3822, 5
      %v3861 = vrot.slane %v3860, 4
      %v3862 = vrot.slane %v3823, 5
      %v3863 = vsel %vm3427, %v3861, %v3862
      %v3864 = vrot.slane %v3824, 5
      %v3865 = vrot.slane %v3864, 4
      %v3866 = vrot.slane %v3825, 5
      %v3867 = vsel %vm3427, %v3865, %v3866
      %v3868 = vrot.slane %v3826, 5
      %v3869 = vrot.slane %v3868, 4
      %v3870 = vrot.slane %v3827, 5
      %v3871 = vsel %vm3427, %v3869, %v3870
      %v3872 = vrot.slane %v3828, 5
      %v3873 = vrot.slane %v3872, 4
      %v3874 = vrot.slane %v3829, 5
      %v3875 = vsel %vm3427, %v3873, %v3874
      %v3876 = vrot.slane %v3830, 5
      %v3877 = vrot.slane %v3876, 4
      %v3878 = vrot.slane %v3831, 5
      %v3879 = vsel %vm3427, %v3877, %v3878
      %s3880 = scalar_lea.vmem %s5, 704
      %v3881 = vld [vmem:[%s3880] sm:$0xf]
      %v3882 = vld [vmem:[%s3880 + $0x4] sm:$0xf]
      %v3883 = vld [vmem:[%s3880 + $0x8] sm:$0xf]
      %v3884 = vld [vmem:[%s3880 + $0xc] sm:$0xf]
      %v3885 = vld [vmem:[%s3880 + $0x10] sm:$0xf]
      %v3886 = vld [vmem:[%s3880 + $0x14] sm:$0xf]
      %v3887 = vld [vmem:[%s3880 + $0x18] sm:$0xf]
      %v3888 = vld [vmem:[%s3880 + $0x1c] sm:$0xf]
      %v3889 = vld [vmem:[%s3880 + $0x20] sm:$0xf]
      %v3890 = vld [vmem:[%s3880 + $0x24] sm:$0xf]
      %v3891 = vld [vmem:[%s3880 + $0x28] sm:$0xf]
      %v3892 = vld [vmem:[%s3880 + $0x2c] sm:$0xf]
      %v3893 = vld [vmem:[%s3880 + $0x30] sm:$0xf]
      %v3894 = vld [vmem:[%s3880 + $0x34] sm:$0xf]
      %v3895 = vld [vmem:[%s3880 + $0x38] sm:$0xf]
      %v3896 = vld [vmem:[%s3880 + $0x3c] sm:$0xf]
      %v3897 = vunpack.c.l.b16 %v3851
      %v3898 = vunpack.c.l.b16 %v3855
      %v3899 = vunpack.c.l.b16 %v3859
      %v3900 = vunpack.c.l.b16 %v3863
      %v3901 = vunpack.c.l.b16 %v3867
      %v3902 = vunpack.c.l.b16 %v3871
      %v3903 = vunpack.c.l.b16 %v3875
      %v3904 = vunpack.c.l.b16 %v3879
      %v3905 = vpack.c.b16 %v3898, %v3897
      %v3906 = vpack.c.b16 %v3900, %v3899
      %v3907 = vpack.c.b16 %v3902, %v3901
      %v3908 = vpack.c.b16 %v3904, %v3903
      %v3929 = vunpack.c.l.b16 %v3881
      %v3930 = vunpack.c.l.b16 %v3882
      %v3931 = vunpack.c.l.b16 %v3883
      %v3932 = vunpack.c.l.b16 %v3884
      %v3933 = vunpack.c.l.b16 %v3885
      %v3934 = vunpack.c.l.b16 %v3886
      %v3935 = vunpack.c.l.b16 %v3887
      %v3936 = vunpack.c.l.b16 %v3888
      %v3937 = vunpack.c.l.b16 %v3889
      %v3938 = vunpack.c.l.b16 %v3890
      %v3939 = vunpack.c.l.b16 %v3891
      %v3940 = vunpack.c.l.b16 %v3892
      %v3941 = vunpack.c.l.b16 %v3893
      %v3942 = vunpack.c.l.b16 %v3894
      %v3943 = vunpack.c.l.b16 %v3895
      %v3944 = vunpack.c.l.b16 %v3896
      %v3945 = vpack.c.b16 %v3930, %v3929
      %v3946 = vpack.c.b16 %v3932, %v3931
      %v3947 = vpack.c.b16 %v3934, %v3933
      %v3948 = vpack.c.b16 %v3936, %v3935
      %v3949 = vpack.c.b16 %v3938, %v3937
      %v3950 = vpack.c.b16 %v3940, %v3939
      %v3951 = vpack.c.b16 %v3942, %v3941
      %v3952 = vpack.c.b16 %v3944, %v3943
      %3961 = vmatprep.subr.bf16.mxu0 0
      %3962 = vmatpush1.bf16.msra.mxu0 %v3945
      %3963 = vmatprep.subr.bf16.mxu0 0
      %3964 = vmatpush1.bf16.msra.mxu0 %v3946
      %3965 = vmatprep.subr.bf16.mxu0 0
      %3966 = vmatpush1.bf16.msra.mxu0 %v3947
      %3967 = vmatprep.subr.bf16.mxu0 0
      %3968 = vmatpush1.bf16.msra.mxu0 %v3948
      %3969 = vmatprep.subr.bf16.mxu0 0
      %3970 = vmatpush1.bf16.msra.mxu0 %v3949
      %3971 = vmatprep.subr.bf16.mxu0 0
      %3972 = vmatpush1.bf16.msra.mxu0 %v3950
      %3973 = vmatprep.subr.bf16.mxu0 0
      %3974 = vmatpush1.bf16.msra.mxu0 %v3951
      %3975 = vmatprep.subr.bf16.mxu0 0
      %3976 = vmatpush1.bf16.msra.mxu0 %v3952
      %3977 = vmatprep.subr.bf16.mxu0 0
      %3978 = vmatpush1.bf16.msra.mxu0 0
      %3979 = vmatprep.subr.bf16.mxu0 0
      %3980 = vmatpush1.bf16.msra.mxu0 0
      %3981 = vmatprep.subr.bf16.mxu0 0
      %3982 = vmatpush1.bf16.msra.mxu0 0
      %3983 = vmatprep.subr.bf16.mxu0 0
      %3984 = vmatpush1.bf16.msra.mxu0 0
      %3985 = vmatprep.subr.bf16.mxu0 0
      %3986 = vmatpush1.bf16.msra.mxu0 0
      %3987 = vmatprep.subr.bf16.mxu0 0
      %3988 = vmatpush1.bf16.msra.mxu0 0
      %3989 = vmatprep.subr.bf16.mxu0 0
      %3990 = vmatpush1.bf16.msra.mxu0 0
      %3991 = vmatprep.subr.bf16.mxu0 0
      %3992 = vmatpush1.bf16.msra.mxu0 0
      %3993 = vmatprep.mubr.bf16.mxu0 0
      %3994 = vmatmul.mubr.bf16.gmra.mrb[0].mxu0 %v3905
      %v3995 = vpop.f32.mrb[0].mxu0
      %v3996 = vadd.f32 0.0, %v3995
      %v3997 = vpop.f32.mrb[0].mxu0
      %v3998 = vpop.f32.mrb[0].mxu0
      %v3999 = vadd.f32 0.0, %v3998
      %v4000 = vpop.f32.mrb[0].mxu0
      %4001 = vmatprep.mubr.bf16.mxu0 0
      %4002 = vmatmul.mubr.bf16.gmra.mrb[0].mxu0 %v3906
      %v4003 = vpop.f32.mrb[0].mxu0
      %v4004 = vadd.f32 0.0, %v4003
      %v4005 = vpop.f32.mrb[0].mxu0
      %v4006 = vpop.f32.mrb[0].mxu0
      %v4007 = vadd.f32 0.0, %v4006
      %v4008 = vpop.f32.mrb[0].mxu0
      %4009 = vmatprep.mubr.bf16.mxu0 0
      %4010 = vmatmul.mubr.bf16.gmra.mrb[0].mxu0 %v3907
      %v4011 = vpop.f32.mrb[0].mxu0
      %v4012 = vadd.f32 0.0, %v4011
      %v4013 = vpop.f32.mrb[0].mxu0
      %v4014 = vpop.f32.mrb[0].mxu0
      %v4015 = vadd.f32 0.0, %v4014
      %v4016 = vpop.f32.mrb[0].mxu0
      %4017 = vmatprep.mubr.bf16.mxu0 0
      %4018 = vmatmul.mubr.bf16.gmra.mrb[0].mxu0 %v3908
      %v4019 = vpop.f32.mrb[0].mxu0
      %v4020 = vadd.f32 0.0, %v4019
      %v4021 = vpop.f32.mrb[0].mxu0
      %v4022 = vpop.f32.mrb[0].mxu0
      %v4023 = vadd.f32 0.0, %v4022
      %v4024 = vpop.f32.mrb[0].mxu0
      %4025 = vdwg.mxu0
      %v4026 = vadd.f32 %v3786, %v3996
      %v4027 = vadd.f32 %v3789, %v3999
      %v4028 = vadd.f32 %v3794, %v4004
      %v4029 = vadd.f32 %v3797, %v4007
      %v4030 = vadd.f32 %v3802, %v4012
      %v4031 = vadd.f32 %v3805, %v4015
      %v4032 = vadd.f32 %v3810, %v4020
      %v4033 = vadd.f32 %v3813, %v4023
      %v4034 = vld [vmem:[%s1183] sm:$0xe]
      %v4035 = vld [vmem:[%s1183 + $0x4] sm:$0x1]
      %v4036 = vld [vmem:[%s1183 + $0xc] sm:$0xe]
      %v4037 = vld [vmem:[%s1183 + $0x10] sm:$0x1]
      %v4038 = vld [vmem:[%s1183 + $0x18] sm:$0xe]
      %v4039 = vld [vmem:[%s1183 + $0x1c] sm:$0x1]
      %v4040 = vld [vmem:[%s1183 + $0x24] sm:$0xe]
      %v4041 = vld [vmem:[%s1183 + $0x28] sm:$0x1]
      %v4042 = vld [vmem:[%s1183 + $0x30] sm:$0xe]
      %v4043 = vld [vmem:[%s1183 + $0x34] sm:$0x1]
      %v4044 = vld [vmem:[%s1183 + $0x3c] sm:$0xe]
      %v4045 = vld [vmem:[%s1183 + $0x40] sm:$0x1]
      %v4046 = vld [vmem:[%s1183 + $0x48] sm:$0xe]
      %v4047 = vld [vmem:[%s1183 + $0x4c] sm:$0x1]
      %v4048 = vld [vmem:[%s1183 + $0x54] sm:$0xe]
      %v4049 = vld [vmem:[%s1183 + $0x58] sm:$0x1]
      %v4066 = vrot.slane %v4034, 5
      %v4067 = vrot.slane %v4066, 4
      %v4068 = vrot.slane %v4035, 5
      %v4069 = vsel %vm3427, %v4067, %v4068
      %v4070 = vrot.slane %v4036, 5
      %v4071 = vrot.slane %v4070, 4
      %v4072 = vrot.slane %v4037, 5
      %v4073 = vsel %vm3427, %v4071, %v4072
      %v4074 = vrot.slane %v4038, 5
      %v4075 = vrot.slane %v4074, 4
      %v4076 = vrot.slane %v4039, 5
      %v4077 = vsel %vm3427, %v4075, %v4076
      %v4078 = vrot.slane %v4040, 5
      %v4079 = vrot.slane %v4078, 4
      %v4080 = vrot.slane %v4041, 5
      %v4081 = vsel %vm3427, %v4079, %v4080
      %v4082 = vrot.slane %v4042, 5
      %v4083 = vrot.slane %v4082, 4
      %v4084 = vrot.slane %v4043, 5
      %v4085 = vsel %vm3427, %v4083, %v4084
      %v4086 = vrot.slane %v4044, 5
      %v4087 = vrot.slane %v4086, 4
      %v4088 = vrot.slane %v4045, 5
      %v4089 = vsel %vm3427, %v4087, %v4088
      %v4090 = vrot.slane %v4046, 5
      %v4091 = vrot.slane %v4090, 4
      %v4092 = vrot.slane %v4047, 5
      %v4093 = vsel %vm3427, %v4091, %v4092
      %v4094 = vrot.slane %v4048, 5
      %v4095 = vrot.slane %v4094, 4
      %v4096 = vrot.slane %v4049, 5
      %v4097 = vsel %vm3427, %v4095, %v4096
      %s4098 = scalar_lea.vmem %s5, 768
      %v4099 = vld [vmem:[%s4098] sm:$0xf]
      %v4100 = vld [vmem:[%s4098 + $0x4] sm:$0xf]
      %v4101 = vld [vmem:[%s4098 + $0x8] sm:$0xf]
      %v4102 = vld [vmem:[%s4098 + $0xc] sm:$0xf]
      %v4103 = vld [vmem:[%s4098 + $0x10] sm:$0xf]
      %v4104 = vld [vmem:[%s4098 + $0x14] sm:$0xf]
      %v4105 = vld [vmem:[%s4098 + $0x18] sm:$0xf]
      %v4106 = vld [vmem:[%s4098 + $0x1c] sm:$0xf]
      %v4107 = vld [vmem:[%s4098 + $0x20] sm:$0xf]
      %v4108 = vld [vmem:[%s4098 + $0x24] sm:$0xf]
      %v4109 = vld [vmem:[%s4098 + $0x28] sm:$0xf]
      %v4110 = vld [vmem:[%s4098 + $0x2c] sm:$0xf]
      %v4111 = vld [vmem:[%s4098 + $0x30] sm:$0xf]
      %v4112 = vld [vmem:[%s4098 + $0x34] sm:$0xf]
      %v4113 = vld [vmem:[%s4098 + $0x38] sm:$0xf]
      %v4114 = vld [vmem:[%s4098 + $0x3c] sm:$0xf]
      %v4115 = vunpack.c.l.b16 %v4069
      %v4116 = vunpack.c.l.b16 %v4073
      %v4117 = vunpack.c.l.b16 %v4077
      %v4118 = vunpack.c.l.b16 %v4081
      %v4119 = vunpack.c.l.b16 %v4085
      %v4120 = vunpack.c.l.b16 %v4089
      %v4121 = vunpack.c.l.b16 %v4093
      %v4122 = vunpack.c.l.b16 %v4097
      %v4123 = vpack.c.b16 %v4116, %v4115
      %v4124 = vpack.c.b16 %v4118, %v4117
      %v4125 = vpack.c.b16 %v4120, %v4119
      %v4126 = vpack.c.b16 %v4122, %v4121
      %v4147 = vunpack.c.l.b16 %v4099
      %v4148 = vunpack.c.l.b16 %v4100
      %v4149 = vunpack.c.l.b16 %v4101
      %v4150 = vunpack.c.l.b16 %v4102
      %v4151 = vunpack.c.l.b16 %v4103
      %v4152 = vunpack.c.l.b16 %v4104
      %v4153 = vunpack.c.l.b16 %v4105
      %v4154 = vunpack.c.l.b16 %v4106
      %v4155 = vunpack.c.l.b16 %v4107
      %v4156 = vunpack.c.l.b16 %v4108
      %v4157 = vunpack.c.l.b16 %v4109
      %v4158 = vunpack.c.l.b16 %v4110
      %v4159 = vunpack.c.l.b16 %v4111
      %v4160 = vunpack.c.l.b16 %v4112
      %v4161 = vunpack.c.l.b16 %v4113
      %v4162 = vunpack.c.l.b16 %v4114
      %v4163 = vpack.c.b16 %v4148, %v4147
      %v4164 = vpack.c.b16 %v4150, %v4149
      %v4165 = vpack.c.b16 %v4152, %v4151
      %v4166 = vpack.c.b16 %v4154, %v4153
      %v4167 = vpack.c.b16 %v4156, %v4155
      %v4168 = vpack.c.b16 %v4158, %v4157
      %v4169 = vpack.c.b16 %v4160, %v4159
      %v4170 = vpack.c.b16 %v4162, %v4161
      %4179 = vmatprep.subr.bf16.mxu0 0
      %4180 = vmatpush1.bf16.msra.mxu0 %v4163
      %4181 = vmatprep.subr.bf16.mxu0 0
      %4182 = vmatpush1.bf16.msra.mxu0 %v4164
      %4183 = vmatprep.subr.bf16.mxu0 0
      %4184 = vmatpush1.bf16.msra.mxu0 %v4165
      %4185 = vmatprep.subr.bf16.mxu0 0
      %4186 = vmatpush1.bf16.msra.mxu0 %v4166
      %4187 = vmatprep.subr.bf16.mxu0 0
      %4188 = vmatpush1.bf16.msra.mxu0 %v4167
      %4189 = vmatprep.subr.bf16.mxu0 0
      %4190 = vmatpush1.bf16.msra.mxu0 %v4168
      %4191 = vmatprep.subr.bf16.mxu0 0
      %4192 = vmatpush1.bf16.msra.mxu0 %v4169
      %4193 = vmatprep.subr.bf16.mxu0 0
      %4194 = vmatpush1.bf16.msra.mxu0 %v4170
      %4195 = vmatprep.subr.bf16.mxu0 0
      %4196 = vmatpush1.bf16.msra.mxu0 0
      %4197 = vmatprep.subr.bf16.mxu0 0
      %4198 = vmatpush1.bf16.msra.mxu0 0
      %4199 = vmatprep.subr.bf16.mxu0 0
      %4200 = vmatpush1.bf16.msra.mxu0 0
      %4201 = vmatprep.subr.bf16.mxu0 0
      %4202 = vmatpush1.bf16.msra.mxu0 0
      %4203 = vmatprep.subr.bf16.mxu0 0
      %4204 = vmatpush1.bf16.msra.mxu0 0
      %4205 = vmatprep.subr.bf16.mxu0 0
      %4206 = vmatpush1.bf16.msra.mxu0 0
      %4207 = vmatprep.subr.bf16.mxu0 0
      %4208 = vmatpush1.bf16.msra.mxu0 0
      %4209 = vmatprep.subr.bf16.mxu0 0
      %4210 = vmatpush1.bf16.msra.mxu0 0
      %4211 = vmatprep.mubr.bf16.mxu0 0
      %4212 = vmatmul.mubr.bf16.gmra.mrb[0].mxu0 %v4123
      %v4213 = vpop.f32.mrb[0].mxu0
      %v4214 = vadd.f32 0.0, %v4213
      %v4215 = vpop.f32.mrb[0].mxu0
      %v4216 = vpop.f32.mrb[0].mxu0
      %v4217 = vadd.f32 0.0, %v4216
      %v4218 = vpop.f32.mrb[0].mxu0
      %4219 = vmatprep.mubr.bf16.mxu0 0
      %4220 = vmatmul.mubr.bf16.gmra.mrb[0].mxu0 %v4124
      %v4221 = vpop.f32.mrb[0].mxu0
      %v4222 = vadd.f32 0.0, %v4221
      %v4223 = vpop.f32.mrb[0].mxu0
      %v4224 = vpop.f32.mrb[0].mxu0
      %v4225 = vadd.f32 0.0, %v4224
      %v4226 = vpop.f32.mrb[0].mxu0
      %4227 = vmatprep.mubr.bf16.mxu0 0
      %4228 = vmatmul.mubr.bf16.gmra.mrb[0].mxu0 %v4125
      %v4229 = vpop.f32.mrb[0].mxu0
      %v4230 = vadd.f32 0.0, %v4229
      %v4231 = vpop.f32.mrb[0].mxu0
      %v4232 = vpop.f32.mrb[0].mxu0
      %v4233 = vadd.f32 0.0, %v4232
      %v4234 = vpop.f32.mrb[0].mxu0
      %4235 = vmatprep.mubr.bf16.mxu0 0
      %4236 = vmatmul.mubr.bf16.gmra.mrb[0].mxu0 %v4126
      %v4237 = vpop.f32.mrb[0].mxu0
      %v4238 = vadd.f32 0.0, %v4237
      %v4239 = vpop.f32.mrb[0].mxu0
      %v4240 = vpop.f32.mrb[0].mxu0
      %v4241 = vadd.f32 0.0, %v4240
      %v4242 = vpop.f32.mrb[0].mxu0
      %4243 = vdwg.mxu0
      %v4244 = vadd.f32 %v4026, %v4214
      %v4245 = vadd.f32 %v4027, %v4217
      %v4246 = vadd.f32 %v4028, %v4222
      %v4247 = vadd.f32 %v4029, %v4225
      %v4248 = vadd.f32 %v4030, %v4230
      %v4249 = vadd.f32 %v4031, %v4233
      %v4250 = vadd.f32 %v4032, %v4238
      %v4251 = vadd.f32 %v4033, %v4241
      %s4252 = scalar_lea.vmem %s5, 832
      %v4253 = vld [vmem:[%s4252] sm:$0xf]
      %v4254 = vld [vmem:[%s4252 + $0x4] sm:$0xf]
      %v4255 = vld [vmem:[%s4252 + $0x8] sm:$0xf]
      %v4256 = vld [vmem:[%s4252 + $0xc] sm:$0xf]
      %v4257 = vld [vmem:[%s4252 + $0x10] sm:$0xf]
      %v4258 = vld [vmem:[%s4252 + $0x14] sm:$0xf]
      %v4259 = vld [vmem:[%s4252 + $0x18] sm:$0xf]
      %v4260 = vld [vmem:[%s4252 + $0x1c] sm:$0xf]
      %v4261 = vld [vmem:[%s4252 + $0x20] sm:$0xf]
      %v4262 = vld [vmem:[%s4252 + $0x24] sm:$0xf]
      %v4263 = vld [vmem:[%s4252 + $0x28] sm:$0xf]
      %v4264 = vld [vmem:[%s4252 + $0x2c] sm:$0xf]
      %v4265 = vld [vmem:[%s4252 + $0x30] sm:$0xf]
      %v4266 = vld [vmem:[%s4252 + $0x34] sm:$0xf]
      %v4267 = vld [vmem:[%s4252 + $0x38] sm:$0xf]
      %v4268 = vld [vmem:[%s4252 + $0x3c] sm:$0xf]
      %v4285 = vunpack.c.l.b16 %v4253
      %v4286 = vunpack.c.l.b16 %v4254
      %v4287 = vunpack.c.l.b16 %v4255
      %v4288 = vunpack.c.l.b16 %v4256
      %v4289 = vunpack.c.l.b16 %v4257
      %v4290 = vunpack.c.l.b16 %v4258
      %v4291 = vunpack.c.l.b16 %v4259
      %v4292 = vunpack.c.l.b16 %v4260
      %v4293 = vunpack.c.l.b16 %v4261
      %v4294 = vunpack.c.l.b16 %v4262
      %v4295 = vunpack.c.l.b16 %v4263
      %v4296 = vunpack.c.l.b16 %v4264
      %v4297 = vunpack.c.l.b16 %v4265
      %v4298 = vunpack.c.l.b16 %v4266
      %v4299 = vunpack.c.l.b16 %v4267
      %v4300 = vunpack.c.l.b16 %v4268
      %v4301 = vpack.c.b16 %v4286, %v4285
      %v4302 = vpack.c.b16 %v4288, %v4287
      %v4303 = vpack.c.b16 %v4290, %v4289
      %v4304 = vpack.c.b16 %v4292, %v4291
      %v4305 = vpack.c.b16 %v4294, %v4293
      %v4306 = vpack.c.b16 %v4296, %v4295
      %v4307 = vpack.c.b16 %v4298, %v4297
      %v4308 = vpack.c.b16 %v4300, %v4299
      %4317 = vmatprep.subr.bf16.mxu0 0
      %4318 = vmatpush1.bf16.msra.mxu0 %v4301
      %4319 = vmatprep.subr.bf16.mxu0 0
      %4320 = vmatpush1.bf16.msra.mxu0 %v4302
      %4321 = vmatprep.subr.bf16.mxu0 0
      %4322 = vmatpush1.bf16.msra.mxu0 %v4303
      %4323 = vmatprep.subr.bf16.mxu0 0
      %4324 = vmatpush1.bf16.msra.mxu0 %v4304
      %4325 = vmatprep.subr.bf16.mxu0 0
      %4326 = vmatpush1.bf16.msra.mxu0 %v4305
      %4327 = vmatprep.subr.bf16.mxu0 0
      %4328 = vmatpush1.bf16.msra.mxu0 %v4306
      %4329 = vmatprep.subr.bf16.mxu0 0
      %4330 = vmatpush1.bf16.msra.mxu0 %v4307
      %4331 = vmatprep.subr.bf16.mxu0 0
      %4332 = vmatpush1.bf16.msra.mxu0 %v4308
      %4333 = vmatprep.subr.bf16.mxu0 0
      %4334 = vmatpush1.bf16.msra.mxu0 0
      %4335 = vmatprep.subr.bf16.mxu0 0
      %4336 = vmatpush1.bf16.msra.mxu0 0
      %4337 = vmatprep.subr.bf16.mxu0 0
      %4338 = vmatpush1.bf16.msra.mxu0 0
      %4339 = vmatprep.subr.bf16.mxu0 0
      %4340 = vmatpush1.bf16.msra.mxu0 0
      %4341 = vmatprep.subr.bf16.mxu0 0
      %4342 = vmatpush1.bf16.msra.mxu0 0
      %4343 = vmatprep.subr.bf16.mxu0 0
      %4344 = vmatpush1.bf16.msra.mxu0 0
      %4345 = vmatprep.subr.bf16.mxu0 0
      %4346 = vmatpush1.bf16.msra.mxu0 0
      %4347 = vmatprep.subr.bf16.mxu0 0
      %4348 = vmatpush1.bf16.msra.mxu0 0
      %4349 = vmatprep.mubr.bf16.mxu0 0
      %4350 = vmatmul.mubr.bf16.gmra.mrb[0].mxu0 %v2459
      %v4351 = vpop.f32.mrb[0].mxu0
      %v4352 = vadd.f32 0.0, %v4351
      %v4353 = vpop.f32.mrb[0].mxu0
      %v4354 = vpop.f32.mrb[0].mxu0
      %v4355 = vadd.f32 0.0, %v4354
      %v4356 = vpop.f32.mrb[0].mxu0
      %4357 = vmatprep.mubr.bf16.mxu0 0
      %4358 = vmatmul.mubr.bf16.gmra.mrb[0].mxu0 %v2460
      %v4359 = vpop.f32.mrb[0].mxu0
      %v4360 = vadd.f32 0.0, %v4359
      %v4361 = vpop.f32.mrb[0].mxu0
      %v4362 = vpop.f32.mrb[0].mxu0
      %v4363 = vadd.f32 0.0, %v4362
      %v4364 = vpop.f32.mrb[0].mxu0
      %4365 = vmatprep.mubr.bf16.mxu0 0
      %4366 = vmatmul.mubr.bf16.gmra.mrb[0].mxu0 %v2461
      %v4367 = vpop.f32.mrb[0].mxu0
      %v4368 = vadd.f32 0.0, %v4367
      %v4369 = vpop.f32.mrb[0].mxu0
      %v4370 = vpop.f32.mrb[0].mxu0
      %v4371 = vadd.f32 0.0, %v4370
      %v4372 = vpop.f32.mrb[0].mxu0
      %4373 = vmatprep.mubr.bf16.mxu0 0
      %4374 = vmatmul.mubr.bf16.gmra.mrb[0].mxu0 %v2462
      %v4375 = vpop.f32.mrb[0].mxu0
      %v4376 = vadd.f32 0.0, %v4375
      %v4377 = vpop.f32.mrb[0].mxu0
      %v4378 = vpop.f32.mrb[0].mxu0
      %v4379 = vadd.f32 0.0, %v4378
      %v4380 = vpop.f32.mrb[0].mxu0
      %4381 = vdwg.mxu0
      %v4382 = vadd.f32 %v4244, %v4352
      %v4383 = vadd.f32 %v4245, %v4355
      %v4384 = vadd.f32 %v4246, %v4360
      %v4385 = vadd.f32 %v4247, %v4363
      %v4386 = vadd.f32 %v4248, %v4368
      %v4387 = vadd.f32 %v4249, %v4371
      %v4388 = vadd.f32 %v4250, %v4376
      %v4389 = vadd.f32 %v4251, %v4379
      %v4390 = vld [vmem:[%s1183 + $0x4] sm:$0xe]
      %v4391 = vld [vmem:[%s1183 + $0x8] sm:$0x1]
      %v4392 = vld [vmem:[%s1183 + $0x10] sm:$0xe]
      %v4393 = vld [vmem:[%s1183 + $0x14] sm:$0x1]
      %v4394 = vld [vmem:[%s1183 + $0x1c] sm:$0xe]
      %v4395 = vld [vmem:[%s1183 + $0x20] sm:$0x1]
      %v4396 = vld [vmem:[%s1183 + $0x28] sm:$0xe]
      %v4397 = vld [vmem:[%s1183 + $0x2c] sm:$0x1]
      %v4398 = vld [vmem:[%s1183 + $0x34] sm:$0xe]
      %v4399 = vld [vmem:[%s1183 + $0x38] sm:$0x1]
      %v4400 = vld [vmem:[%s1183 + $0x40] sm:$0xe]
      %v4401 = vld [vmem:[%s1183 + $0x44] sm:$0x1]
      %v4402 = vld [vmem:[%s1183 + $0x4c] sm:$0xe]
      %v4403 = vld [vmem:[%s1183 + $0x50] sm:$0x1]
      %v4404 = vld [vmem:[%s1183 + $0x58] sm:$0xe]
      %v4405 = vld [vmem:[%s1183 + $0x5c] sm:$0x1]
      %v4422 = vrot.slane %v4390, 5
      %v4423 = vrot.slane %v4422, 4
      %v4424 = vrot.slane %v4391, 5
      %v4425 = vsel %vm3427, %v4423, %v4424
      %v4426 = vrot.slane %v4392, 5
      %v4427 = vrot.slane %v4426, 4
      %v4428 = vrot.slane %v4393, 5
      %v4429 = vsel %vm3427, %v4427, %v4428
      %v4430 = vrot.slane %v4394, 5
      %v4431 = vrot.slane %v4430, 4
      %v4432 = vrot.slane %v4395, 5
      %v4433 = vsel %vm3427, %v4431, %v4432
      %v4434 = vrot.slane %v4396, 5
      %v4435 = vrot.slane %v4434, 4
      %v4436 = vrot.slane %v4397, 5
      %v4437 = vsel %vm3427, %v4435, %v4436
      %v4438 = vrot.slane %v4398, 5
      %v4439 = vrot.slane %v4438, 4
      %v4440 = vrot.slane %v4399, 5
      %v4441 = vsel %vm3427, %v4439, %v4440
      %v4442 = vrot.slane %v4400, 5
      %v4443 = vrot.slane %v4442, 4
      %v4444 = vrot.slane %v4401, 5
      %v4445 = vsel %vm3427, %v4443, %v4444
      %v4446 = vrot.slane %v4402, 5
      %v4447 = vrot.slane %v4446, 4
      %v4448 = vrot.slane %v4403, 5
      %v4449 = vsel %vm3427, %v4447, %v4448
      %v4450 = vrot.slane %v4404, 5
      %v4451 = vrot.slane %v4450, 4
      %v4452 = vrot.slane %v4405, 5
      %v4453 = vsel %vm3427, %v4451, %v4452
      %s4454 = scalar_lea.vmem %s5, 896
      %v4455 = vld [vmem:[%s4454] sm:$0xf]
      %v4456 = vld [vmem:[%s4454 + $0x4] sm:$0xf]
      %v4457 = vld [vmem:[%s4454 + $0x8] sm:$0xf]
      %v4458 = vld [vmem:[%s4454 + $0xc] sm:$0xf]
      %v4459 = vld [vmem:[%s4454 + $0x10] sm:$0xf]
      %v4460 = vld [vmem:[%s4454 + $0x14] sm:$0xf]
      %v4461 = vld [vmem:[%s4454 + $0x18] sm:$0xf]
      %v4462 = vld [vmem:[%s4454 + $0x1c] sm:$0xf]
      %v4463 = vld [vmem:[%s4454 + $0x20] sm:$0xf]
      %v4464 = vld [vmem:[%s4454 + $0x24] sm:$0xf]
      %v4465 = vld [vmem:[%s4454 + $0x28] sm:$0xf]
      %v4466 = vld [vmem:[%s4454 + $0x2c] sm:$0xf]
      %v4467 = vld [vmem:[%s4454 + $0x30] sm:$0xf]
      %v4468 = vld [vmem:[%s4454 + $0x34] sm:$0xf]
      %v4469 = vld [vmem:[%s4454 + $0x38] sm:$0xf]
      %v4470 = vld [vmem:[%s4454 + $0x3c] sm:$0xf]
      %v4471 = vunpack.c.l.b16 %v4425
      %v4472 = vunpack.c.l.b16 %v4429
      %v4473 = vunpack.c.l.b16 %v4433
      %v4474 = vunpack.c.l.b16 %v4437
      %v4475 = vunpack.c.l.b16 %v4441
      %v4476 = vunpack.c.l.b16 %v4445
      %v4477 = vunpack.c.l.b16 %v4449
      %v4478 = vunpack.c.l.b16 %v4453
      %v4479 = vpack.c.b16 %v4472, %v4471
      %v4480 = vpack.c.b16 %v4474, %v4473
      %v4481 = vpack.c.b16 %v4476, %v4475
      %v4482 = vpack.c.b16 %v4478, %v4477
      %v4503 = vunpack.c.l.b16 %v4455
      %v4504 = vunpack.c.l.b16 %v4456
      %v4505 = vunpack.c.l.b16 %v4457
      %v4506 = vunpack.c.l.b16 %v4458
      %v4507 = vunpack.c.l.b16 %v4459
      %v4508 = vunpack.c.l.b16 %v4460
      %v4509 = vunpack.c.l.b16 %v4461
      %v4510 = vunpack.c.l.b16 %v4462
      %v4511 = vunpack.c.l.b16 %v4463
      %v4512 = vunpack.c.l.b16 %v4464
      %v4513 = vunpack.c.l.b16 %v4465
      %v4514 = vunpack.c.l.b16 %v4466
      %v4515 = vunpack.c.l.b16 %v4467
      %v4516 = vunpack.c.l.b16 %v4468
      %v4517 = vunpack.c.l.b16 %v4469
      %v4518 = vunpack.c.l.b16 %v4470
      %v4519 = vpack.c.b16 %v4504, %v4503
      %v4520 = vpack.c.b16 %v4506, %v4505
      %v4521 = vpack.c.b16 %v4508, %v4507
      %v4522 = vpack.c.b16 %v4510, %v4509
      %v4523 = vpack.c.b16 %v4512, %v4511
      %v4524 = vpack.c.b16 %v4514, %v4513
      %v4525 = vpack.c.b16 %v4516, %v4515
      %v4526 = vpack.c.b16 %v4518, %v4517
      %4535 = vmatprep.subr.bf16.mxu0 0
      %4536 = vmatpush1.bf16.msra.mxu0 %v4519
      %4537 = vmatprep.subr.bf16.mxu0 0
      %4538 = vmatpush1.bf16.msra.mxu0 %v4520
      %4539 = vmatprep.subr.bf16.mxu0 0
      %4540 = vmatpush1.bf16.msra.mxu0 %v4521
      %4541 = vmatprep.subr.bf16.mxu0 0
      %4542 = vmatpush1.bf16.msra.mxu0 %v4522
      %4543 = vmatprep.subr.bf16.mxu0 0
      %4544 = vmatpush1.bf16.msra.mxu0 %v4523
      %4545 = vmatprep.subr.bf16.mxu0 0
      %4546 = vmatpush1.bf16.msra.mxu0 %v4524
      %4547 = vmatprep.subr.bf16.mxu0 0
      %4548 = vmatpush1.bf16.msra.mxu0 %v4525
      %4549 = vmatprep.subr.bf16.mxu0 0
      %4550 = vmatpush1.bf16.msra.mxu0 %v4526
      %4551 = vmatprep.subr.bf16.mxu0 0
      %4552 = vmatpush1.bf16.msra.mxu0 0
      %4553 = vmatprep.subr.bf16.mxu0 0
      %4554 = vmatpush1.bf16.msra.mxu0 0
      %4555 = vmatprep.subr.bf16.mxu0 0
      %4556 = vmatpush1.bf16.msra.mxu0 0
      %4557 = vmatprep.subr.bf16.mxu0 0
      %4558 = vmatpush1.bf16.msra.mxu0 0
      %4559 = vmatprep.subr.bf16.mxu0 0
      %4560 = vmatpush1.bf16.msra.mxu0 0
      %4561 = vmatprep.subr.bf16.mxu0 0
      %4562 = vmatpush1.bf16.msra.mxu0 0
      %4563 = vmatprep.subr.bf16.mxu0 0
      %4564 = vmatpush1.bf16.msra.mxu0 0
      %4565 = vmatprep.subr.bf16.mxu0 0
      %4566 = vmatpush1.bf16.msra.mxu0 0
      %4567 = vmatprep.mubr.bf16.mxu0 0
      %4568 = vmatmul.mubr.bf16.gmra.mrb[0].mxu0 %v4479
      %v4569 = vpop.f32.mrb[0].mxu0
      %v4570 = vadd.f32 0.0, %v4569
      %v4571 = vpop.f32.mrb[0].mxu0
      %v4572 = vpop.f32.mrb[0].mxu0
      %v4573 = vadd.f32 0.0, %v4572
      %v4574 = vpop.f32.mrb[0].mxu0
      %4575 = vmatprep.mubr.bf16.mxu0 0
      %4576 = vmatmul.mubr.bf16.gmra.mrb[0].mxu0 %v4480
      %v4577 = vpop.f32.mrb[0].mxu0
      %v4578 = vadd.f32 0.0, %v4577
      %v4579 = vpop.f32.mrb[0].mxu0
      %v4580 = vpop.f32.mrb[0].mxu0
      %v4581 = vadd.f32 0.0, %v4580
      %v4582 = vpop.f32.mrb[0].mxu0
      %4583 = vmatprep.mubr.bf16.mxu0 0
      %4584 = vmatmul.mubr.bf16.gmra.mrb[0].mxu0 %v4481
      %v4585 = vpop.f32.mrb[0].mxu0
      %v4586 = vadd.f32 0.0, %v4585
      %v4587 = vpop.f32.mrb[0].mxu0
      %v4588 = vpop.f32.mrb[0].mxu0
      %v4589 = vadd.f32 0.0, %v4588
      %v4590 = vpop.f32.mrb[0].mxu0
      %4591 = vmatprep.mubr.bf16.mxu0 0
      %4592 = vmatmul.mubr.bf16.gmra.mrb[0].mxu0 %v4482
      %v4593 = vpop.f32.mrb[0].mxu0
      %v4594 = vadd.f32 0.0, %v4593
      %v4595 = vpop.f32.mrb[0].mxu0
      %v4596 = vpop.f32.mrb[0].mxu0
      %v4597 = vadd.f32 0.0, %v4596
      %v4598 = vpop.f32.mrb[0].mxu0
      %4599 = vdwg.mxu0
      %v4600 = vadd.f32 %v4382, %v4570
      %v4601 = vadd.f32 %v4383, %v4573
      %v4602 = vadd.f32 %v4384, %v4578
      %v4603 = vadd.f32 %v4385, %v4581
      %v4604 = vadd.f32 %v4386, %v4586
      %v4605 = vadd.f32 %v4387, %v4589
      %v4606 = vadd.f32 %v4388, %v4594
      %v4607 = vadd.f32 %v4389, %v4597
      %s4608 = scalar_lea.vmem [#allocation2], 120
      %v4609 = vld [vmem:[%s4608] sm:$0xe]
      %v4610 = vld [vmem:[%s4608 + $0x4] sm:$0x1]
      %v4611 = vld [vmem:[%s4608 + $0xc] sm:$0xe]
      %v4612 = vld [vmem:[%s4608 + $0x10] sm:$0x1]
      %v4613 = vld [vmem:[%s4608 + $0x18] sm:$0xe]
      %v4614 = vld [vmem:[%s4608 + $0x1c] sm:$0x1]
      %v4615 = vld [vmem:[%s4608 + $0x24] sm:$0xe]
      %v4616 = vld [vmem:[%s4608 + $0x28] sm:$0x1]
      %v4617 = vld [vmem:[%s4608 + $0x30] sm:$0xe]
      %v4618 = vld [vmem:[%s4608 + $0x34] sm:$0x1]
      %v4619 = vld [vmem:[%s4608 + $0x3c] sm:$0xe]
      %v4620 = vld [vmem:[%s4608 + $0x40] sm:$0x1]
      %v4621 = vld [vmem:[%s4608 + $0x48] sm:$0xe]
      %v4622 = vld [vmem:[%s4608 + $0x4c] sm:$0x1]
      %v4623 = vld [vmem:[%s4608 + $0x54] sm:$0xe]
      %v4624 = vld [vmem:[%s4608 + $0x58] sm:$0x1]
      %v4641 = vrot.slane %v4609, 5
      %v4642 = vrot.slane %v4641, 4
      %v4643 = vrot.slane %v4610, 5
      %v4644 = vsel %vm3427, %v4642, %v4643
      %v4645 = vrot.slane %v4611, 5
      %v4646 = vrot.slane %v4645, 4
      %v4647 = vrot.slane %v4612, 5
      %v4648 = vsel %vm3427, %v4646, %v4647
      %v4649 = vrot.slane %v4613, 5
      %v4650 = vrot.slane %v4649, 4
      %v4651 = vrot.slane %v4614, 5
      %v4652 = vsel %vm3427, %v4650, %v4651
      %v4653 = vrot.slane %v4615, 5
      %v4654 = vrot.slane %v4653, 4
      %v4655 = vrot.slane %v4616, 5
      %v4656 = vsel %vm3427, %v4654, %v4655
      %v4657 = vrot.slane %v4617, 5
      %v4658 = vrot.slane %v4657, 4
      %v4659 = vrot.slane %v4618, 5
      %v4660 = vsel %vm3427, %v4658, %v4659
      %v4661 = vrot.slane %v4619, 5
      %v4662 = vrot.slane %v4661, 4
      %v4663 = vrot.slane %v4620, 5
      %v4664 = vsel %vm3427, %v4662, %v4663
      %v4665 = vrot.slane %v4621, 5
      %v4666 = vrot.slane %v4665, 4
      %v4667 = vrot.slane %v4622, 5
      %v4668 = vsel %vm3427, %v4666, %v4667
      %v4669 = vrot.slane %v4623, 5
      %v4670 = vrot.slane %v4669, 4
      %v4671 = vrot.slane %v4624, 5
      %v4672 = vsel %vm3427, %v4670, %v4671
      %s4673 = scalar_lea.vmem %s5, 960
      %v4674 = vld [vmem:[%s4673] sm:$0xf]
      %v4675 = vld [vmem:[%s4673 + $0x4] sm:$0xf]
      %v4676 = vld [vmem:[%s4673 + $0x8] sm:$0xf]
      %v4677 = vld [vmem:[%s4673 + $0xc] sm:$0xf]
      %v4678 = vld [vmem:[%s4673 + $0x10] sm:$0xf]
      %v4679 = vld [vmem:[%s4673 + $0x14] sm:$0xf]
      %v4680 = vld [vmem:[%s4673 + $0x18] sm:$0xf]
      %v4681 = vld [vmem:[%s4673 + $0x1c] sm:$0xf]
      %v4682 = vld [vmem:[%s4673 + $0x20] sm:$0xf]
      %v4683 = vld [vmem:[%s4673 + $0x24] sm:$0xf]
      %v4684 = vld [vmem:[%s4673 + $0x28] sm:$0xf]
      %v4685 = vld [vmem:[%s4673 + $0x2c] sm:$0xf]
      %v4686 = vld [vmem:[%s4673 + $0x30] sm:$0xf]
      %v4687 = vld [vmem:[%s4673 + $0x34] sm:$0xf]
      %v4688 = vld [vmem:[%s4673 + $0x38] sm:$0xf]
      %v4689 = vld [vmem:[%s4673 + $0x3c] sm:$0xf]
      %v4690 = vunpack.c.l.b16 %v4644
      %v4691 = vunpack.c.l.b16 %v4648
      %v4692 = vunpack.c.l.b16 %v4652
      %v4693 = vunpack.c.l.b16 %v4656
      %v4694 = vunpack.c.l.b16 %v4660
      %v4695 = vunpack.c.l.b16 %v4664
      %v4696 = vunpack.c.l.b16 %v4668
      %v4697 = vunpack.c.l.b16 %v4672
      %v4698 = vpack.c.b16 %v4691, %v4690
      %v4699 = vpack.c.b16 %v4693, %v4692
      %v4700 = vpack.c.b16 %v4695, %v4694
      %v4701 = vpack.c.b16 %v4697, %v4696
      %v4722 = vunpack.c.l.b16 %v4674
      %v4723 = vunpack.c.l.b16 %v4675
      %v4724 = vunpack.c.l.b16 %v4676
      %v4725 = vunpack.c.l.b16 %v4677
      %v4726 = vunpack.c.l.b16 %v4678
      %v4727 = vunpack.c.l.b16 %v4679
      %v4728 = vunpack.c.l.b16 %v4680
      %v4729 = vunpack.c.l.b16 %v4681
      %v4730 = vunpack.c.l.b16 %v4682
      %v4731 = vunpack.c.l.b16 %v4683
      %v4732 = vunpack.c.l.b16 %v4684
      %v4733 = vunpack.c.l.b16 %v4685
      %v4734 = vunpack.c.l.b16 %v4686
      %v4735 = vunpack.c.l.b16 %v4687
      %v4736 = vunpack.c.l.b16 %v4688
      %v4737 = vunpack.c.l.b16 %v4689
      %v4738 = vpack.c.b16 %v4723, %v4722
      %v4739 = vpack.c.b16 %v4725, %v4724
      %v4740 = vpack.c.b16 %v4727, %v4726
      %v4741 = vpack.c.b16 %v4729, %v4728
      %v4742 = vpack.c.b16 %v4731, %v4730
      %v4743 = vpack.c.b16 %v4733, %v4732
      %v4744 = vpack.c.b16 %v4735, %v4734
      %v4745 = vpack.c.b16 %v4737, %v4736
      %4754 = vmatprep.subr.bf16.mxu0 0
      %4755 = vmatpush1.bf16.msra.mxu0 %v4738
      %4756 = vmatprep.subr.bf16.mxu0 0
      %4757 = vmatpush1.bf16.msra.mxu0 %v4739
      %4758 = vmatprep.subr.bf16.mxu0 0
      %4759 = vmatpush1.bf16.msra.mxu0 %v4740
      %4760 = vmatprep.subr.bf16.mxu0 0
      %4761 = vmatpush1.bf16.msra.mxu0 %v4741
      %4762 = vmatprep.subr.bf16.mxu0 0
      %4763 = vmatpush1.bf16.msra.mxu0 %v4742
      %4764 = vmatprep.subr.bf16.mxu0 0
      %4765 = vmatpush1.bf16.msra.mxu0 %v4743
      %4766 = vmatprep.subr.bf16.mxu0 0
      %4767 = vmatpush1.bf16.msra.mxu0 %v4744
      %4768 = vmatprep.subr.bf16.mxu0 0
      %4769 = vmatpush1.bf16.msra.mxu0 %v4745
      %4770 = vmatprep.subr.bf16.mxu0 0
      %4771 = vmatpush1.bf16.msra.mxu0 0
      %4772 = vmatprep.subr.bf16.mxu0 0
      %4773 = vmatpush1.bf16.msra.mxu0 0
      %4774 = vmatprep.subr.bf16.mxu0 0
      %4775 = vmatpush1.bf16.msra.mxu0 0
      %4776 = vmatprep.subr.bf16.mxu0 0
      %4777 = vmatpush1.bf16.msra.mxu0 0
      %4778 = vmatprep.subr.bf16.mxu0 0
      %4779 = vmatpush1.bf16.msra.mxu0 0
      %4780 = vmatprep.subr.bf16.mxu0 0
      %4781 = vmatpush1.bf16.msra.mxu0 0
      %4782 = vmatprep.subr.bf16.mxu0 0
      %4783 = vmatpush1.bf16.msra.mxu0 0
      %4784 = vmatprep.subr.bf16.mxu0 0
      %4785 = vmatpush1.bf16.msra.mxu0 0
      %4786 = vmatprep.mubr.bf16.mxu0 0
      %4787 = vmatmul.mubr.bf16.gmra.mrb[0].mxu0 %v4698
      %v4788 = vpop.f32.mrb[0].mxu0
      %v4789 = vadd.f32 0.0, %v4788
      %v4790 = vpop.f32.mrb[0].mxu0
      %v4791 = vpop.f32.mrb[0].mxu0
      %v4792 = vadd.f32 0.0, %v4791
      %v4793 = vpop.f32.mrb[0].mxu0
      %4794 = vmatprep.mubr.bf16.mxu0 0
      %4795 = vmatmul.mubr.bf16.gmra.mrb[0].mxu0 %v4699
      %v4796 = vpop.f32.mrb[0].mxu0
      %v4797 = vadd.f32 0.0, %v4796
      %v4798 = vpop.f32.mrb[0].mxu0
      %v4799 = vpop.f32.mrb[0].mxu0
      %v4800 = vadd.f32 0.0, %v4799
      %v4801 = vpop.f32.mrb[0].mxu0
      %4802 = vmatprep.mubr.bf16.mxu0 0
      %4803 = vmatmul.mubr.bf16.gmra.mrb[0].mxu0 %v4700
      %v4804 = vpop.f32.mrb[0].mxu0
      %v4805 = vadd.f32 0.0, %v4804
      %v4806 = vpop.f32.mrb[0].mxu0
      %v4807 = vpop.f32.mrb[0].mxu0
      %v4808 = vadd.f32 0.0, %v4807
      %v4809 = vpop.f32.mrb[0].mxu0
      %4810 = vmatprep.mubr.bf16.mxu0 0
      %4811 = vmatmul.mubr.bf16.gmra.mrb[0].mxu0 %v4701
      %v4812 = vpop.f32.mrb[0].mxu0
      %v4813 = vadd.f32 0.0, %v4812
      %v4814 = vpop.f32.mrb[0].mxu0
      %v4815 = vpop.f32.mrb[0].mxu0
      %v4816 = vadd.f32 0.0, %v4815
      %v4817 = vpop.f32.mrb[0].mxu0
      %4818 = vdwg.mxu0
      %v4819 = vadd.f32 %v4600, %v4789
      %v4820 = vadd.f32 %v4601, %v4792
      %v4821 = vadd.f32 %v4602, %v4797
      %v4822 = vadd.f32 %v4603, %v4800
      %v4823 = vadd.f32 %v4604, %v4805
      %v4824 = vadd.f32 %v4605, %v4808
      %v4825 = vadd.f32 %v4606, %v4813
      %v4826 = vadd.f32 %v4607, %v4816
      %v4827 = vld [vmem:[%s4608] sm:$0x8]
      %v4828 = vld [vmem:[%s4608 + $0x4] sm:$0x7]
      %v4829 = vld [vmem:[%s4608 + $0xc] sm:$0x8]
      %v4830 = vld [vmem:[%s4608 + $0x10] sm:$0x7]
      %v4831 = vld [vmem:[%s4608 + $0x18] sm:$0x8]
      %v4832 = vld [vmem:[%s4608 + $0x1c] sm:$0x7]
      %v4833 = vld [vmem:[%s4608 + $0x24] sm:$0x8]
      %v4834 = vld [vmem:[%s4608 + $0x28] sm:$0x7]
      %v4835 = vld [vmem:[%s4608 + $0x30] sm:$0x8]
      %v4836 = vld [vmem:[%s4608 + $0x34] sm:$0x7]
      %v4837 = vld [vmem:[%s4608 + $0x3c] sm:$0x8]
      %v4838 = vld [vmem:[%s4608 + $0x40] sm:$0x7]
      %v4839 = vld [vmem:[%s4608 + $0x48] sm:$0x8]
      %v4840 = vld [vmem:[%s4608 + $0x4c] sm:$0x7]
      %v4841 = vld [vmem:[%s4608 + $0x54] sm:$0x8]
      %v4842 = vld [vmem:[%s4608 + $0x58] sm:$0x7]
      %v4859 = vrot.slane %v4827, 7
      %v4860 = vrot.slane %v4859, 4
      %v4861 = vrot.slane %v4828, 7
      %v4862 = vsel %vm1674, %v4860, %v4861
      %v4863 = vrot.slane %v4829, 7
      %v4864 = vrot.slane %v4863, 4
      %v4865 = vrot.slane %v4830, 7
      %v4866 = vsel %vm1674, %v4864, %v4865
      %v4867 = vrot.slane %v4831, 7
      %v4868 = vrot.slane %v4867, 4
      %v4869 = vrot.slane %v4832, 7
      %v4870 = vsel %vm1674, %v4868, %v4869
      %v4871 = vrot.slane %v4833, 7
      %v4872 = vrot.slane %v4871, 4
      %v4873 = vrot.slane %v4834, 7
      %v4874 = vsel %vm1674, %v4872, %v4873
      %v4875 = vrot.slane %v4835, 7
      %v4876 = vrot.slane %v4875, 4
      %v4877 = vrot.slane %v4836, 7
      %v4878 = vsel %vm1674, %v4876, %v4877
      %v4879 = vrot.slane %v4837, 7
      %v4880 = vrot.slane %v4879, 4
      %v4881 = vrot.slane %v4838, 7
      %v4882 = vsel %vm1674, %v4880, %v4881
      %v4883 = vrot.slane %v4839, 7
      %v4884 = vrot.slane %v4883, 4
      %v4885 = vrot.slane %v4840, 7
      %v4886 = vsel %vm1674, %v4884, %v4885
      %v4887 = vrot.slane %v4841, 7
      %v4888 = vrot.slane %v4887, 4
      %v4889 = vrot.slane %v4842, 7
      %v4890 = vsel %vm1674, %v4888, %v4889
      %s4891 = scalar_lea.vmem %s5, 1024
      %v4892 = vld [vmem:[%s4891] sm:$0xf]
      %v4893 = vld [vmem:[%s4891 + $0x4] sm:$0xf]
      %v4894 = vld [vmem:[%s4891 + $0x8] sm:$0xf]
      %v4895 = vld [vmem:[%s4891 + $0xc] sm:$0xf]
      %v4896 = vld [vmem:[%s4891 + $0x10] sm:$0xf]
      %v4897 = vld [vmem:[%s4891 + $0x14] sm:$0xf]
      %v4898 = vld [vmem:[%s4891 + $0x18] sm:$0xf]
      %v4899 = vld [vmem:[%s4891 + $0x1c] sm:$0xf]
      %v4900 = vld [vmem:[%s4891 + $0x20] sm:$0xf]
      %v4901 = vld [vmem:[%s4891 + $0x24] sm:$0xf]
      %v4902 = vld [vmem:[%s4891 + $0x28] sm:$0xf]
      %v4903 = vld [vmem:[%s4891 + $0x2c] sm:$0xf]
      %v4904 = vld [vmem:[%s4891 + $0x30] sm:$0xf]
      %v4905 = vld [vmem:[%s4891 + $0x34] sm:$0xf]
      %v4906 = vld [vmem:[%s4891 + $0x38] sm:$0xf]
      %v4907 = vld [vmem:[%s4891 + $0x3c] sm:$0xf]
      %v4908 = vunpack.c.l.b16 %v4862
      %v4909 = vunpack.c.l.b16 %v4866
      %v4910 = vunpack.c.l.b16 %v4870
      %v4911 = vunpack.c.l.b16 %v4874
      %v4912 = vunpack.c.l.b16 %v4878
      %v4913 = vunpack.c.l.b16 %v4882
      %v4914 = vunpack.c.l.b16 %v4886
      %v4915 = vunpack.c.l.b16 %v4890
      %v4916 = vpack.c.b16 %v4909, %v4908
      %v4917 = vpack.c.b16 %v4911, %v4910
      %v4918 = vpack.c.b16 %v4913, %v4912
      %v4919 = vpack.c.b16 %v4915, %v4914
      %v4940 = vunpack.c.l.b16 %v4892
      %v4941 = vunpack.c.l.b16 %v4893
      %v4942 = vunpack.c.l.b16 %v4894
      %v4943 = vunpack.c.l.b16 %v4895
      %v4944 = vunpack.c.l.b16 %v4896
      %v4945 = vunpack.c.l.b16 %v4897
      %v4946 = vunpack.c.l.b16 %v4898
      %v4947 = vunpack.c.l.b16 %v4899
      %v4948 = vunpack.c.l.b16 %v4900
      %v4949 = vunpack.c.l.b16 %v4901
      %v4950 = vunpack.c.l.b16 %v4902
      %v4951 = vunpack.c.l.b16 %v4903
      %v4952 = vunpack.c.l.b16 %v4904
      %v4953 = vunpack.c.l.b16 %v4905
      %v4954 = vunpack.c.l.b16 %v4906
      %v4955 = vunpack.c.l.b16 %v4907
      %v4956 = vpack.c.b16 %v4941, %v4940
      %v4957 = vpack.c.b16 %v4943, %v4942
      %v4958 = vpack.c.b16 %v4945, %v4944
      %v4959 = vpack.c.b16 %v4947, %v4946
      %v4960 = vpack.c.b16 %v4949, %v4948
      %v4961 = vpack.c.b16 %v4951, %v4950
      %v4962 = vpack.c.b16 %v4953, %v4952
      %v4963 = vpack.c.b16 %v4955, %v4954
      %4972 = vmatprep.subr.bf16.mxu0 0
      %4973 = vmatpush1.bf16.msra.mxu0 %v4956
      %4974 = vmatprep.subr.bf16.mxu0 0
      %4975 = vmatpush1.bf16.msra.mxu0 %v4957
      %4976 = vmatprep.subr.bf16.mxu0 0
      %4977 = vmatpush1.bf16.msra.mxu0 %v4958
      %4978 = vmatprep.subr.bf16.mxu0 0
      %4979 = vmatpush1.bf16.msra.mxu0 %v4959
      %4980 = vmatprep.subr.bf16.mxu0 0
      %4981 = vmatpush1.bf16.msra.mxu0 %v4960
      %4982 = vmatprep.subr.bf16.mxu0 0
      %4983 = vmatpush1.bf16.msra.mxu0 %v4961
      %4984 = vmatprep.subr.bf16.mxu0 0
      %4985 = vmatpush1.bf16.msra.mxu0 %v4962
      %4986 = vmatprep.subr.bf16.mxu0 0
      %4987 = vmatpush1.bf16.msra.mxu0 %v4963
      %4988 = vmatprep.subr.bf16.mxu0 0
      %4989 = vmatpush1.bf16.msra.mxu0 0
      %4990 = vmatprep.subr.bf16.mxu0 0
      %4991 = vmatpush1.bf16.msra.mxu0 0
      %4992 = vmatprep.subr.bf16.mxu0 0
      %4993 = vmatpush1.bf16.msra.mxu0 0
      %4994 = vmatprep.subr.bf16.mxu0 0
      %4995 = vmatpush1.bf16.msra.mxu0 0
      %4996 = vmatprep.subr.bf16.mxu0 0
      %4997 = vmatpush1.bf16.msra.mxu0 0
      %4998 = vmatprep.subr.bf16.mxu0 0
      %4999 = vmatpush1.bf16.msra.mxu0 0
      %5000 = vmatprep.subr.bf16.mxu0 0
      %5001 = vmatpush1.bf16.msra.mxu0 0
      %5002 = vmatprep.subr.bf16.mxu0 0
      %5003 = vmatpush1.bf16.msra.mxu0 0
      %5004 = vmatprep.mubr.bf16.mxu0 0
      %5005 = vmatmul.mubr.bf16.gmra.mrb[0].mxu0 %v4916
      %v5006 = vpop.f32.mrb[0].mxu0
      %v5007 = vadd.f32 0.0, %v5006
      %v5008 = vpop.f32.mrb[0].mxu0
      %v5009 = vpop.f32.mrb[0].mxu0
      %v5010 = vadd.f32 0.0, %v5009
      %v5011 = vpop.f32.mrb[0].mxu0
      %5012 = vmatprep.mubr.bf16.mxu0 0
      %5013 = vmatmul.mubr.bf16.gmra.mrb[0].mxu0 %v4917
      %v5014 = vpop.f32.mrb[0].mxu0
      %v5015 = vadd.f32 0.0, %v5014
      %v5016 = vpop.f32.mrb[0].mxu0
      %v5017 = vpop.f32.mrb[0].mxu0
      %v5018 = vadd.f32 0.0, %v5017
      %v5019 = vpop.f32.mrb[0].mxu0
      %5020 = vmatprep.mubr.bf16.mxu0 0
      %5021 = vmatmul.mubr.bf16.gmra.mrb[0].mxu0 %v4918
      %v5022 = vpop.f32.mrb[0].mxu0
      %v5023 = vadd.f32 0.0, %v5022
      %v5024 = vpop.f32.mrb[0].mxu0
      %v5025 = vpop.f32.mrb[0].mxu0
      %v5026 = vadd.f32 0.0, %v5025
      %v5027 = vpop.f32.mrb[0].mxu0
      %5028 = vmatprep.mubr.bf16.mxu0 0
      %5029 = vmatmul.mubr.bf16.gmra.mrb[0].mxu0 %v4919
      %v5030 = vpop.f32.mrb[0].mxu0
      %v5031 = vadd.f32 0.0, %v5030
      %v5032 = vpop.f32.mrb[0].mxu0
      %v5033 = vpop.f32.mrb[0].mxu0
      %v5034 = vadd.f32 0.0, %v5033
      %v5035 = vpop.f32.mrb[0].mxu0
      %5036 = vdwg.mxu0
      %v5037 = vadd.f32 %v4819, %v5007
      %v5038 = vadd.f32 %v4820, %v5010
      %v5039 = vadd.f32 %v4821, %v5015
      %v5040 = vadd.f32 %v4822, %v5018
      %v5041 = vadd.f32 %v4823, %v5023
      %v5042 = vadd.f32 %v4824, %v5026
      %v5043 = vadd.f32 %v4825, %v5031
      %v5044 = vadd.f32 %v4826, %v5034
      %v5045 = vld [vmem:[%s4608 + $0x4] sm:$0xe]
      %v5046 = vld [vmem:[%s4608 + $0x8] sm:$0x1]
      %v5047 = vld [vmem:[%s4608 + $0x10] sm:$0xe]
      %v5048 = vld [vmem:[%s4608 + $0x14] sm:$0x1]
      %v5049 = vld [vmem:[%s4608 + $0x1c] sm:$0xe]
      %v5050 = vld [vmem:[%s4608 + $0x20] sm:$0x1]
      %v5051 = vld [vmem:[%s4608 + $0x28] sm:$0xe]
      %v5052 = vld [vmem:[%s4608 + $0x2c] sm:$0x1]
      %v5053 = vld [vmem:[%s4608 + $0x34] sm:$0xe]
      %v5054 = vld [vmem:[%s4608 + $0x38] sm:$0x1]
      %v5055 = vld [vmem:[%s4608 + $0x40] sm:$0xe]
      %v5056 = vld [vmem:[%s4608 + $0x44] sm:$0x1]
      %v5057 = vld [vmem:[%s4608 + $0x4c] sm:$0xe]
      %v5058 = vld [vmem:[%s4608 + $0x50] sm:$0x1]
      %v5059 = vld [vmem:[%s4608 + $0x58] sm:$0xe]
      %v5060 = vld [vmem:[%s4608 + $0x5c] sm:$0x1]
      %v5077 = vrot.slane %v5045, 5
      %v5078 = vrot.slane %v5077, 4
      %v5079 = vrot.slane %v5046, 5
      %v5080 = vsel %vm3427, %v5078, %v5079
      %v5081 = vrot.slane %v5047, 5
      %v5082 = vrot.slane %v5081, 4
      %v5083 = vrot.slane %v5048, 5
      %v5084 = vsel %vm3427, %v5082, %v5083
      %v5085 = vrot.slane %v5049, 5
      %v5086 = vrot.slane %v5085, 4
      %v5087 = vrot.slane %v5050, 5
      %v5088 = vsel %vm3427, %v5086, %v5087
      %v5089 = vrot.slane %v5051, 5
      %v5090 = vrot.slane %v5089, 4
      %v5091 = vrot.slane %v5052, 5
      %v5092 = vsel %vm3427, %v5090, %v5091
      %v5093 = vrot.slane %v5053, 5
      %v5094 = vrot.slane %v5093, 4
      %v5095 = vrot.slane %v5054, 5
      %v5096 = vsel %vm3427, %v5094, %v5095
      %v5097 = vrot.slane %v5055, 5
      %v5098 = vrot.slane %v5097, 4
      %v5099 = vrot.slane %v5056, 5
      %v5100 = vsel %vm3427, %v5098, %v5099
      %v5101 = vrot.slane %v5057, 5
      %v5102 = vrot.slane %v5101, 4
      %v5103 = vrot.slane %v5058, 5
      %v5104 = vsel %vm3427, %v5102, %v5103
      %v5105 = vrot.slane %v5059, 5
      %v5106 = vrot.slane %v5105, 4
      %v5107 = vrot.slane %v5060, 5
      %v5108 = vsel %vm3427, %v5106, %v5107
      %s5109 = scalar_lea.vmem %s5, 1088
      %v5110 = vld [vmem:[%s5109] sm:$0xf]
      %v5111 = vld [vmem:[%s5109 + $0x4] sm:$0xf]
      %v5112 = vld [vmem:[%s5109 + $0x8] sm:$0xf]
      %v5113 = vld [vmem:[%s5109 + $0xc] sm:$0xf]
      %v5114 = vld [vmem:[%s5109 + $0x10] sm:$0xf]
      %v5115 = vld [vmem:[%s5109 + $0x14] sm:$0xf]
      %v5116 = vld [vmem:[%s5109 + $0x18] sm:$0xf]
      %v5117 = vld [vmem:[%s5109 + $0x1c] sm:$0xf]
      %v5118 = vld [vmem:[%s5109 + $0x20] sm:$0xf]
      %v5119 = vld [vmem:[%s5109 + $0x24] sm:$0xf]
      %v5120 = vld [vmem:[%s5109 + $0x28] sm:$0xf]
      %v5121 = vld [vmem:[%s5109 + $0x2c] sm:$0xf]
      %v5122 = vld [vmem:[%s5109 + $0x30] sm:$0xf]
      %v5123 = vld [vmem:[%s5109 + $0x34] sm:$0xf]
      %v5124 = vld [vmem:[%s5109 + $0x38] sm:$0xf]
      %v5125 = vld [vmem:[%s5109 + $0x3c] sm:$0xf]
      %v5126 = vunpack.c.l.b16 %v5080
      %v5127 = vunpack.c.l.b16 %v5084
      %v5128 = vunpack.c.l.b16 %v5088
      %v5129 = vunpack.c.l.b16 %v5092
      %v5130 = vunpack.c.l.b16 %v5096
      %v5131 = vunpack.c.l.b16 %v5100
      %v5132 = vunpack.c.l.b16 %v5104
      %v5133 = vunpack.c.l.b16 %v5108
      %v5134 = vpack.c.b16 %v5127, %v5126
      %v5135 = vpack.c.b16 %v5129, %v5128
      %v5136 = vpack.c.b16 %v5131, %v5130
      %v5137 = vpack.c.b16 %v5133, %v5132
      %v5158 = vunpack.c.l.b16 %v5110
      %v5159 = vunpack.c.l.b16 %v5111
      %v5160 = vunpack.c.l.b16 %v5112
      %v5161 = vunpack.c.l.b16 %v5113
      %v5162 = vunpack.c.l.b16 %v5114
      %v5163 = vunpack.c.l.b16 %v5115
      %v5164 = vunpack.c.l.b16 %v5116
      %v5165 = vunpack.c.l.b16 %v5117
      %v5166 = vunpack.c.l.b16 %v5118
      %v5167 = vunpack.c.l.b16 %v5119
      %v5168 = vunpack.c.l.b16 %v5120
      %v5169 = vunpack.c.l.b16 %v5121
      %v5170 = vunpack.c.l.b16 %v5122
      %v5171 = vunpack.c.l.b16 %v5123
      %v5172 = vunpack.c.l.b16 %v5124
      %v5173 = vunpack.c.l.b16 %v5125
      %v5174 = vpack.c.b16 %v5159, %v5158
      %v5175 = vpack.c.b16 %v5161, %v5160
      %v5176 = vpack.c.b16 %v5163, %v5162
      %v5177 = vpack.c.b16 %v5165, %v5164
      %v5178 = vpack.c.b16 %v5167, %v5166
      %v5179 = vpack.c.b16 %v5169, %v5168
      %v5180 = vpack.c.b16 %v5171, %v5170
      %v5181 = vpack.c.b16 %v5173, %v5172
      %5190 = vmatprep.subr.bf16.mxu0 0
      %5191 = vmatpush1.bf16.msra.mxu0 %v5174
      %5192 = vmatprep.subr.bf16.mxu0 0
      %5193 = vmatpush1.bf16.msra.mxu0 %v5175
      %5194 = vmatprep.subr.bf16.mxu0 0
      %5195 = vmatpush1.bf16.msra.mxu0 %v5176
      %5196 = vmatprep.subr.bf16.mxu0 0
      %5197 = vmatpush1.bf16.msra.mxu0 %v5177
      %5198 = vmatprep.subr.bf16.mxu0 0
      %5199 = vmatpush1.bf16.msra.mxu0 %v5178
      %5200 = vmatprep.subr.bf16.mxu0 0
      %5201 = vmatpush1.bf16.msra.mxu0 %v5179
      %5202 = vmatprep.subr.bf16.mxu0 0
      %5203 = vmatpush1.bf16.msra.mxu0 %v5180
      %5204 = vmatprep.subr.bf16.mxu0 0
      %5205 = vmatpush1.bf16.msra.mxu0 %v5181
      %5206 = vmatprep.subr.bf16.mxu0 0
      %5207 = vmatpush1.bf16.msra.mxu0 0
      %5208 = vmatprep.subr.bf16.mxu0 0
      %5209 = vmatpush1.bf16.msra.mxu0 0
      %5210 = vmatprep.subr.bf16.mxu0 0
      %5211 = vmatpush1.bf16.msra.mxu0 0
      %5212 = vmatprep.subr.bf16.mxu0 0
      %5213 = vmatpush1.bf16.msra.mxu0 0
      %5214 = vmatprep.subr.bf16.mxu0 0
      %5215 = vmatpush1.bf16.msra.mxu0 0
      %5216 = vmatprep.subr.bf16.mxu0 0
      %5217 = vmatpush1.bf16.msra.mxu0 0
      %5218 = vmatprep.subr.bf16.mxu0 0
      %5219 = vmatpush1.bf16.msra.mxu0 0
      %5220 = vmatprep.subr.bf16.mxu0 0
      %5221 = vmatpush1.bf16.msra.mxu0 0
      %5222 = vmatprep.mubr.bf16.mxu0 0
      %5223 = vmatmul.mubr.bf16.gmra.mrb[0].mxu0 %v5134
      %v5224 = vpop.f32.mrb[0].mxu0
      %v5225 = vadd.f32 0.0, %v5224
      %v5226 = vpop.f32.mrb[0].mxu0
      %v5227 = vpop.f32.mrb[0].mxu0
      %v5228 = vadd.f32 0.0, %v5227
      %v5229 = vpop.f32.mrb[0].mxu0
      %5230 = vmatprep.mubr.bf16.mxu0 0
      %5231 = vmatmul.mubr.bf16.gmra.mrb[0].mxu0 %v5135
      %v5232 = vpop.f32.mrb[0].mxu0
      %v5233 = vadd.f32 0.0, %v5232
      %v5234 = vpop.f32.mrb[0].mxu0
      %v5235 = vpop.f32.mrb[0].mxu0
      %v5236 = vadd.f32 0.0, %v5235
      %v5237 = vpop.f32.mrb[0].mxu0
      %5238 = vmatprep.mubr.bf16.mxu0 0
      %5239 = vmatmul.mubr.bf16.gmra.mrb[0].mxu0 %v5136
      %v5240 = vpop.f32.mrb[0].mxu0
      %v5241 = vadd.f32 0.0, %v5240
      %v5242 = vpop.f32.mrb[0].mxu0
      %v5243 = vpop.f32.mrb[0].mxu0
      %v5244 = vadd.f32 0.0, %v5243
      %v5245 = vpop.f32.mrb[0].mxu0
      %5246 = vmatprep.mubr.bf16.mxu0 0
      %5247 = vmatmul.mubr.bf16.gmra.mrb[0].mxu0 %v5137
      %v5248 = vpop.f32.mrb[0].mxu0
      %v5249 = vadd.f32 0.0, %v5248
      %v5250 = vpop.f32.mrb[0].mxu0
      %v5251 = vpop.f32.mrb[0].mxu0
      %v5252 = vadd.f32 0.0, %v5251
      %v5253 = vpop.f32.mrb[0].mxu0
      %5254 = vdwg.mxu0
      %v5255 = vadd.f32 %v5037, %v5225
      %v5256 = vadd.f32 %v5038, %v5228
      %v5257 = vadd.f32 %v5039, %v5233
      %v5258 = vadd.f32 %v5040, %v5236
      %v5259 = vadd.f32 %v5041, %v5241
      %v5260 = vadd.f32 %v5042, %v5244
      %v5261 = vadd.f32 %v5043, %v5249
      %v5262 = vadd.f32 %v5044, %v5252
      %s5263 = scalar_lea.vmem %s6, 1
      %v5264 = vld [vmem:[%s5263] sm:$0x1]
      %v5266 = vlaneseq
      %v5267 = vshrl.u32 %v5266, 7
      %v5268 = vsub.s32 0, %v5267
      %v5269 = vrot.slane %v5264, %v5268
      %v5271 = vadd.f32 %v5255, %v5269
      %v5272 = vadd.f32 %v5256, %v5269
      %v5273 = vadd.f32 %v5257, %v5269
      %v5274 = vadd.f32 %v5258, %v5269
      %v5275 = vadd.f32 %v5259, %v5269
      %v5276 = vadd.f32 %v5260, %v5269
      %v5277 = vadd.f32 %v5261, %v5269
      %v5278 = vadd.f32 %v5262, %v5269
      %v5279 = vmax.f32 %v5271, 0.0
      %v5280 = vmax.f32 %v5272, 0.0
      %v5281 = vmax.f32 %v5273, 0.0
      %v5282 = vmax.f32 %v5274, 0.0
      %v5283 = vmax.f32 %v5275, 0.0
      %v5284 = vmax.f32 %v5276, 0.0
      %v5285 = vmax.f32 %v5277, 0.0
      %v5286 = vmax.f32 %v5278, 0.0
      %v5287 = vpack.c.bf16 %v5280, %v5279
      %v5288 = vpack.c.bf16 %v5282, %v5281
      %v5289 = vpack.c.bf16 %v5284, %v5283
      %v5290 = vpack.c.bf16 %v5286, %v5285
      %v5291 = vld [vmem:[#allocation2] sm:$0xf]
      %v5292 = vld [vmem:[#allocation2 + $0xc] sm:$0xf]
      %v5293 = vld [vmem:[#allocation2 + $0x18] sm:$0xf]
      %v5294 = vld [vmem:[#allocation2 + $0x24] sm:$0xf]
      %v5295 = vld [vmem:[#allocation2 + $0x30] sm:$0xf]
      %v5296 = vld [vmem:[#allocation2 + $0x3c] sm:$0xf]
      %v5297 = vld [vmem:[#allocation2 + $0x48] sm:$0xf]
      %v5298 = vld [vmem:[#allocation2 + $0x54] sm:$0xf]
      %s5299 = scalar_lea.vmem %s5, 1152
      %v5300 = vld [vmem:[%s5299] sm:$0xf]
      %v5301 = vld [vmem:[%s5299 + $0x4] sm:$0xf]
      %v5302 = vld [vmem:[%s5299 + $0x8] sm:$0xf]
      %v5303 = vld [vmem:[%s5299 + $0xc] sm:$0xf]
      %v5304 = vld [vmem:[%s5299 + $0x10] sm:$0xf]
      %v5305 = vld [vmem:[%s5299 + $0x14] sm:$0xf]
      %v5306 = vld [vmem:[%s5299 + $0x18] sm:$0xf]
      %v5307 = vld [vmem:[%s5299 + $0x1c] sm:$0xf]
      %v5308 = vld [vmem:[%s5299 + $0x20] sm:$0xf]
      %v5309 = vld [vmem:[%s5299 + $0x24] sm:$0xf]
      %v5310 = vld [vmem:[%s5299 + $0x28] sm:$0xf]
      %v5311 = vld [vmem:[%s5299 + $0x2c] sm:$0xf]
      %v5312 = vld [vmem:[%s5299 + $0x30] sm:$0xf]
      %v5313 = vld [vmem:[%s5299 + $0x34] sm:$0xf]
      %v5314 = vld [vmem:[%s5299 + $0x38] sm:$0xf]
      %v5315 = vld [vmem:[%s5299 + $0x3c] sm:$0xf]
      %v5316 = vld [vmem:[#allocation2] sm:$0x8]
      %v5317 = vld [vmem:[#allocation2 + $0x4] sm:$0x7]
      %v5318 = vld [vmem:[#allocation2 + $0xc] sm:$0x8]
      %v5319 = vld [vmem:[#allocation2 + $0x10] sm:$0x7]
      %v5320 = vld [vmem:[#allocation2 + $0x18] sm:$0x8]
      %v5321 = vld [vmem:[#allocation2 + $0x1c] sm:$0x7]
      %v5322 = vld [vmem:[#allocation2 + $0x24] sm:$0x8]
      %v5323 = vld [vmem:[#allocation2 + $0x28] sm:$0x7]
      %v5324 = vld [vmem:[#allocation2 + $0x30] sm:$0x8]
      %v5325 = vld [vmem:[#allocation2 + $0x34] sm:$0x7]
      %v5326 = vld [vmem:[#allocation2 + $0x3c] sm:$0x8]
      %v5327 = vld [vmem:[#allocation2 + $0x40] sm:$0x7]
      %v5328 = vld [vmem:[#allocation2 + $0x48] sm:$0x8]
      %v5329 = vld [vmem:[#allocation2 + $0x4c] sm:$0x7]
      %v5330 = vld [vmem:[#allocation2 + $0x54] sm:$0x8]
      %v5331 = vld [vmem:[#allocation2 + $0x58] sm:$0x7]
      %v5348 = vrot.slane %v5316, 7
      %v5349 = vrot.slane %v5348, 4
      %v5350 = vrot.slane %v5317, 7
      %v5351 = vsel %vm1674, %v5349, %v5350
      %v5352 = vrot.slane %v5318, 7
      %v5353 = vrot.slane %v5352, 4
      %v5354 = vrot.slane %v5319, 7
      %v5355 = vsel %vm1674, %v5353, %v5354
      %v5356 = vrot.slane %v5320, 7
      %v5357 = vrot.slane %v5356, 4
      %v5358 = vrot.slane %v5321, 7
      %v5359 = vsel %vm1674, %v5357, %v5358
      %v5360 = vrot.slane %v5322, 7
      %v5361 = vrot.slane %v5360, 4
      %v5362 = vrot.slane %v5323, 7
      %v5363 = vsel %vm1674, %v5361, %v5362
      %v5364 = vrot.slane %v5324, 7
      %v5365 = vrot.slane %v5364, 4
      %v5366 = vrot.slane %v5325, 7
      %v5367 = vsel %vm1674, %v5365, %v5366
      %v5368 = vrot.slane %v5326, 7
      %v5369 = vrot.slane %v5368, 4
      %v5370 = vrot.slane %v5327, 7
      %v5371 = vsel %vm1674, %v5369, %v5370
      %v5372 = vrot.slane %v5328, 7
      %v5373 = vrot.slane %v5372, 4
      %v5374 = vrot.slane %v5329, 7
      %v5375 = vsel %vm1674, %v5373, %v5374
      %v5376 = vrot.slane %v5330, 7
      %v5377 = vrot.slane %v5376, 4
      %v5378 = vrot.slane %v5331, 7
      %v5379 = vsel %vm1674, %v5377, %v5378
      %s5380 = scalar_lea.vmem %s5, 1216
      %v5381 = vld [vmem:[%s5380] sm:$0xf]
      %v5382 = vld [vmem:[%s5380 + $0x4] sm:$0xf]
      %v5383 = vld [vmem:[%s5380 + $0x8] sm:$0xf]
      %v5384 = vld [vmem:[%s5380 + $0xc] sm:$0xf]
      %v5385 = vld [vmem:[%s5380 + $0x10] sm:$0xf]
      %v5386 = vld [vmem:[%s5380 + $0x14] sm:$0xf]
      %v5387 = vld [vmem:[%s5380 + $0x18] sm:$0xf]
      %v5388 = vld [vmem:[%s5380 + $0x1c] sm:$0xf]
      %v5389 = vld [vmem:[%s5380 + $0x20] sm:$0xf]
      %v5390 = vld [vmem:[%s5380 + $0x24] sm:$0xf]
      %v5391 = vld [vmem:[%s5380 + $0x28] sm:$0xf]
      %v5392 = vld [vmem:[%s5380 + $0x2c] sm:$0xf]
      %v5393 = vld [vmem:[%s5380 + $0x30] sm:$0xf]
      %v5394 = vld [vmem:[%s5380 + $0x34] sm:$0xf]
      %v5395 = vld [vmem:[%s5380 + $0x38] sm:$0xf]
      %v5396 = vld [vmem:[%s5380 + $0x3c] sm:$0xf]
      %v5397 = vunpack.c.l.b16 %v5351
      %v5398 = vunpack.c.l.b16 %v5355
      %v5399 = vunpack.c.l.b16 %v5359
      %v5400 = vunpack.c.l.b16 %v5363
      %v5401 = vunpack.c.l.b16 %v5367
      %v5402 = vunpack.c.l.b16 %v5371
      %v5403 = vunpack.c.l.b16 %v5375
      %v5404 = vunpack.c.l.b16 %v5379
      %v5405 = vpack.c.b16 %v5398, %v5397
      %v5406 = vpack.c.b16 %v5400, %v5399
      %v5407 = vpack.c.b16 %v5402, %v5401
      %v5408 = vpack.c.b16 %v5404, %v5403
      %v5429 = vunpack.c.l.b16 %v5381
      %v5430 = vunpack.c.l.b16 %v5382
      %v5431 = vunpack.c.l.b16 %v5383
      %v5432 = vunpack.c.l.b16 %v5384
      %v5433 = vunpack.c.l.b16 %v5385
      %v5434 = vunpack.c.l.b16 %v5386
      %v5435 = vunpack.c.l.b16 %v5387
      %v5436 = vunpack.c.l.b16 %v5388
      %v5437 = vunpack.c.l.b16 %v5389
      %v5438 = vunpack.c.l.b16 %v5390
      %v5439 = vunpack.c.l.b16 %v5391
      %v5440 = vunpack.c.l.b16 %v5392
      %v5441 = vunpack.c.l.b16 %v5393
      %v5442 = vunpack.c.l.b16 %v5394
      %v5443 = vunpack.c.l.b16 %v5395
      %v5444 = vunpack.c.l.b16 %v5396
      %v5445 = vpack.c.b16 %v5430, %v5429
      %v5446 = vpack.c.b16 %v5432, %v5431
      %v5447 = vpack.c.b16 %v5434, %v5433
      %v5448 = vpack.c.b16 %v5436, %v5435
      %v5449 = vpack.c.b16 %v5438, %v5437
      %v5450 = vpack.c.b16 %v5440, %v5439
      %v5451 = vpack.c.b16 %v5442, %v5441
      %v5452 = vpack.c.b16 %v5444, %v5443
      %5461 = vmatprep.subr.bf16.mxu0 0
      %5462 = vmatpush1.bf16.msra.mxu0 %v5445
      %5463 = vmatprep.subr.bf16.mxu0 0
      %5464 = vmatpush1.bf16.msra.mxu0 %v5446
      %5465 = vmatprep.subr.bf16.mxu0 0
      %5466 = vmatpush1.bf16.msra.mxu0 %v5447
      %5467 = vmatprep.subr.bf16.mxu0 0
      %5468 = vmatpush1.bf16.msra.mxu0 %v5448
      %5469 = vmatprep.subr.bf16.mxu0 0
      %5470 = vmatpush1.bf16.msra.mxu0 %v5449
      %5471 = vmatprep.subr.bf16.mxu0 0
      %5472 = vmatpush1.bf16.msra.mxu0 %v5450
      %5473 = vmatprep.subr.bf16.mxu0 0
      %5474 = vmatpush1.bf16.msra.mxu0 %v5451
      %5475 = vmatprep.subr.bf16.mxu0 0
      %5476 = vmatpush1.bf16.msra.mxu0 %v5452
      %5477 = vmatprep.subr.bf16.mxu0 0
      %5478 = vmatpush1.bf16.msra.mxu0 0
      %5479 = vmatprep.subr.bf16.mxu0 0
      %5480 = vmatpush1.bf16.msra.mxu0 0
      %5481 = vmatprep.subr.bf16.mxu0 0
      %5482 = vmatpush1.bf16.msra.mxu0 0
      %5483 = vmatprep.subr.bf16.mxu0 0
      %5484 = vmatpush1.bf16.msra.mxu0 0
      %5485 = vmatprep.subr.bf16.mxu0 0
      %5486 = vmatpush1.bf16.msra.mxu0 0
      %5487 = vmatprep.subr.bf16.mxu0 0
      %5488 = vmatpush1.bf16.msra.mxu0 0
      %5489 = vmatprep.subr.bf16.mxu0 0
      %5490 = vmatpush1.bf16.msra.mxu0 0
      %5491 = vmatprep.subr.bf16.mxu0 0
      %5492 = vmatpush1.bf16.msra.mxu0 0
      %5493 = vmatprep.mubr.bf16.mxu0 0
      %5494 = vmatmul.mubr.bf16.gmra.mrb[0].mxu0 %v5405
      %v5495 = vpop.f32.mrb[0].mxu0
      %v5496 = vadd.f32 0.0, %v5495
      %v5497 = vpop.f32.mrb[0].mxu0
      %v5498 = vpop.f32.mrb[0].mxu0
      %v5499 = vadd.f32 0.0, %v5498
      %v5500 = vpop.f32.mrb[0].mxu0
      %5501 = vmatprep.mubr.bf16.mxu0 0
      %5502 = vmatmul.mubr.bf16.gmra.mrb[0].mxu0 %v5406
      %v5503 = vpop.f32.mrb[0].mxu0
      %v5504 = vadd.f32 0.0, %v5503
      %v5505 = vpop.f32.mrb[0].mxu0
      %v5506 = vpop.f32.mrb[0].mxu0
      %v5507 = vadd.f32 0.0, %v5506
      %v5508 = vpop.f32.mrb[0].mxu0
      %5509 = vmatprep.mubr.bf16.mxu0 0
      %5510 = vmatmul.mubr.bf16.gmra.mrb[0].mxu0 %v5407
      %v5511 = vpop.f32.mrb[0].mxu0
      %v5512 = vadd.f32 0.0, %v5511
      %v5513 = vpop.f32.mrb[0].mxu0
      %v5514 = vpop.f32.mrb[0].mxu0
      %v5515 = vadd.f32 0.0, %v5514
      %v5516 = vpop.f32.mrb[0].mxu0
      %5517 = vmatprep.mubr.bf16.mxu0 0
      %5518 = vmatmul.mubr.bf16.gmra.mrb[0].mxu0 %v5408
      %v5519 = vpop.f32.mrb[0].mxu0
      %v5520 = vadd.f32 0.0, %v5519
      %v5521 = vpop.f32.mrb[0].mxu0
      %v5522 = vpop.f32.mrb[0].mxu0
      %v5523 = vadd.f32 0.0, %v5522
      %v5524 = vpop.f32.mrb[0].mxu0
      %5525 = vdwg.mxu0
      %v5534 = vunpack.c.l.b16 %v5291
      %v5535 = vunpack.c.l.b16 %v5292
      %v5536 = vunpack.c.l.b16 %v5293
      %v5537 = vunpack.c.l.b16 %v5294
      %v5538 = vunpack.c.l.b16 %v5295
      %v5539 = vunpack.c.l.b16 %v5296
      %v5540 = vunpack.c.l.b16 %v5297
      %v5541 = vunpack.c.l.b16 %v5298
      %v5542 = vpack.c.b16 %v5535, %v5534
      %v5543 = vpack.c.b16 %v5537, %v5536
      %v5544 = vpack.c.b16 %v5539, %v5538
      %v5545 = vpack.c.b16 %v5541, %v5540
      %v5566 = vunpack.c.l.b16 %v5300
      %v5567 = vunpack.c.l.b16 %v5301
      %v5568 = vunpack.c.l.b16 %v5302
      %v5569 = vunpack.c.l.b16 %v5303
      %v5570 = vunpack.c.l.b16 %v5304
      %v5571 = vunpack.c.l.b16 %v5305
      %v5572 = vunpack.c.l.b16 %v5306
      %v5573 = vunpack.c.l.b16 %v5307
      %v5574 = vunpack.c.l.b16 %v5308
      %v5575 = vunpack.c.l.b16 %v5309
      %v5576 = vunpack.c.l.b16 %v5310
      %v5577 = vunpack.c.l.b16 %v5311
      %v5578 = vunpack.c.l.b16 %v5312
      %v5579 = vunpack.c.l.b16 %v5313
      %v5580 = vunpack.c.l.b16 %v5314
      %v5581 = vunpack.c.l.b16 %v5315
      %v5582 = vpack.c.b16 %v5567, %v5566
      %v5583 = vpack.c.b16 %v5569, %v5568
      %v5584 = vpack.c.b16 %v5571, %v5570
      %v5585 = vpack.c.b16 %v5573, %v5572
      %v5586 = vpack.c.b16 %v5575, %v5574
      %v5587 = vpack.c.b16 %v5577, %v5576
      %v5588 = vpack.c.b16 %v5579, %v5578
      %v5589 = vpack.c.b16 %v5581, %v5580
      %5598 = vmatprep.subr.bf16.mxu0 0
      %5599 = vmatpush1.bf16.msra.mxu0 %v5582
      %5600 = vmatprep.subr.bf16.mxu0 0
      %5601 = vmatpush1.bf16.msra.mxu0 %v5583
      %5602 = vmatprep.subr.bf16.mxu0 0
      %5603 = vmatpush1.bf16.msra.mxu0 %v5584
      %5604 = vmatprep.subr.bf16.mxu0 0
      %5605 = vmatpush1.bf16.msra.mxu0 %v5585
      %5606 = vmatprep.subr.bf16.mxu0 0
      %5607 = vmatpush1.bf16.msra.mxu0 %v5586
      %5608 = vmatprep.subr.bf16.mxu0 0
      %5609 = vmatpush1.bf16.msra.mxu0 %v5587
      %5610 = vmatprep.subr.bf16.mxu0 0
      %5611 = vmatpush1.bf16.msra.mxu0 %v5588
      %5612 = vmatprep.subr.bf16.mxu0 0
      %5613 = vmatpush1.bf16.msra.mxu0 %v5589
      %5614 = vmatprep.subr.bf16.mxu0 0
      %5615 = vmatpush1.bf16.msra.mxu0 0
      %5616 = vmatprep.subr.bf16.mxu0 0
      %5617 = vmatpush1.bf16.msra.mxu0 0
      %5618 = vmatprep.subr.bf16.mxu0 0
      %5619 = vmatpush1.bf16.msra.mxu0 0
      %5620 = vmatprep.subr.bf16.mxu0 0
      %5621 = vmatpush1.bf16.msra.mxu0 0
      %5622 = vmatprep.subr.bf16.mxu0 0
      %5623 = vmatpush1.bf16.msra.mxu0 0
      %5624 = vmatprep.subr.bf16.mxu0 0
      %5625 = vmatpush1.bf16.msra.mxu0 0
      %5626 = vmatprep.subr.bf16.mxu0 0
      %5627 = vmatpush1.bf16.msra.mxu0 0
      %5628 = vmatprep.subr.bf16.mxu0 0
      %5629 = vmatpush1.bf16.msra.mxu0 0
      %5630 = vmatprep.mubr.bf16.mxu0 0
      %5631 = vmatmul.mubr.bf16.gmra.mrb[0].mxu0 %v5542
      %v5632 = vpop.f32.mrb[0].mxu0
      %v5633 = vadd.f32 %v5496, %v5632
      %v5634 = vpop.f32.mrb[0].mxu0
      %v5635 = vpop.f32.mrb[0].mxu0
      %v5636 = vadd.f32 %v5499, %v5635
      %v5637 = vpop.f32.mrb[0].mxu0
      %5638 = vmatprep.mubr.bf16.mxu0 0
      %5639 = vmatmul.mubr.bf16.gmra.mrb[0].mxu0 %v5543
      %v5640 = vpop.f32.mrb[0].mxu0
      %v5641 = vadd.f32 %v5504, %v5640
      %v5642 = vpop.f32.mrb[0].mxu0
      %v5643 = vpop.f32.mrb[0].mxu0
      %v5644 = vadd.f32 %v5507, %v5643
      %v5645 = vpop.f32.mrb[0].mxu0
      %5646 = vmatprep.mubr.bf16.mxu0 0
      %5647 = vmatmul.mubr.bf16.gmra.mrb[0].mxu0 %v5544
      %v5648 = vpop.f32.mrb[0].mxu0
      %v5649 = vadd.f32 %v5512, %v5648
      %v5650 = vpop.f32.mrb[0].mxu0
      %v5651 = vpop.f32.mrb[0].mxu0
      %v5652 = vadd.f32 %v5515, %v5651
      %v5653 = vpop.f32.mrb[0].mxu0
      %5654 = vmatprep.mubr.bf16.mxu0 0
      %5655 = vmatmul.mubr.bf16.gmra.mrb[0].mxu0 %v5545
      %v5656 = vpop.f32.mrb[0].mxu0
      %v5657 = vadd.f32 %v5520, %v5656
      %v5658 = vpop.f32.mrb[0].mxu0
      %v5659 = vpop.f32.mrb[0].mxu0
      %v5660 = vadd.f32 %v5523, %v5659
      %v5661 = vpop.f32.mrb[0].mxu0
      %5662 = vdwg.mxu0
      %v5663 = vld [vmem:[#allocation2 + $0x4] sm:$0xc]
      %v5664 = vld [vmem:[#allocation2 + $0x8] sm:$0x3]
      %v5665 = vld [vmem:[#allocation2 + $0x10] sm:$0xc]
      %v5666 = vld [vmem:[#allocation2 + $0x14] sm:$0x3]
      %v5667 = vld [vmem:[#allocation2 + $0x1c] sm:$0xc]
      %v5668 = vld [vmem:[#allocation2 + $0x20] sm:$0x3]
      %v5669 = vld [vmem:[#allocation2 + $0x28] sm:$0xc]
      %v5670 = vld [vmem:[#allocation2 + $0x2c] sm:$0x3]
      %v5671 = vld [vmem:[#allocation2 + $0x34] sm:$0xc]
      %v5672 = vld [vmem:[#allocation2 + $0x38] sm:$0x3]
      %v5673 = vld [vmem:[#allocation2 + $0x40] sm:$0xc]
      %v5674 = vld [vmem:[#allocation2 + $0x44] sm:$0x3]
      %v5675 = vld [vmem:[#allocation2 + $0x4c] sm:$0xc]
      %v5676 = vld [vmem:[#allocation2 + $0x50] sm:$0x3]
      %v5677 = vld [vmem:[#allocation2 + $0x58] sm:$0xc]
      %v5678 = vld [vmem:[#allocation2 + $0x5c] sm:$0x3]
      %v5695 = vrot.slane %v5663, 6
      %v5696 = vrot.slane %v5695, 4
      %v5697 = vrot.slane %v5664, 6
      %v5698 = vsel %vm1591, %v5696, %v5697
      %v5699 = vrot.slane %v5665, 6
      %v5700 = vrot.slane %v5699, 4
      %v5701 = vrot.slane %v5666, 6
      %v5702 = vsel %vm1591, %v5700, %v5701
      %v5703 = vrot.slane %v5667, 6
      %v5704 = vrot.slane %v5703, 4
      %v5705 = vrot.slane %v5668, 6
      %v5706 = vsel %vm1591, %v5704, %v5705
      %v5707 = vrot.slane %v5669, 6
      %v5708 = vrot.slane %v5707, 4
      %v5709 = vrot.slane %v5670, 6
      %v5710 = vsel %vm1591, %v5708, %v5709
      %v5711 = vrot.slane %v5671, 6
      %v5712 = vrot.slane %v5711, 4
      %v5713 = vrot.slane %v5672, 6
      %v5714 = vsel %vm1591, %v5712, %v5713
      %v5715 = vrot.slane %v5673, 6
      %v5716 = vrot.slane %v5715, 4
      %v5717 = vrot.slane %v5674, 6
      %v5718 = vsel %vm1591, %v5716, %v5717
      %v5719 = vrot.slane %v5675, 6
      %v5720 = vrot.slane %v5719, 4
      %v5721 = vrot.slane %v5676, 6
      %v5722 = vsel %vm1591, %v5720, %v5721
      %v5723 = vrot.slane %v5677, 6
      %v5724 = vrot.slane %v5723, 4
      %v5725 = vrot.slane %v5678, 6
      %v5726 = vsel %vm1591, %v5724, %v5725
      %s5727 = scalar_lea.vmem %s5, 1280
      %v5728 = vld [vmem:[%s5727] sm:$0xf]
      %v5729 = vld [vmem:[%s5727 + $0x4] sm:$0xf]
      %v5730 = vld [vmem:[%s5727 + $0x8] sm:$0xf]
      %v5731 = vld [vmem:[%s5727 + $0xc] sm:$0xf]
      %v5732 = vld [vmem:[%s5727 + $0x10] sm:$0xf]
      %v5733 = vld [vmem:[%s5727 + $0x14] sm:$0xf]
      %v5734 = vld [vmem:[%s5727 + $0x18] sm:$0xf]
      %v5735 = vld [vmem:[%s5727 + $0x1c] sm:$0xf]
      %v5736 = vld [vmem:[%s5727 + $0x20] sm:$0xf]
      %v5737 = vld [vmem:[%s5727 + $0x24] sm:$0xf]
      %v5738 = vld [vmem:[%s5727 + $0x28] sm:$0xf]
      %v5739 = vld [vmem:[%s5727 + $0x2c] sm:$0xf]
      %v5740 = vld [vmem:[%s5727 + $0x30] sm:$0xf]
      %v5741 = vld [vmem:[%s5727 + $0x34] sm:$0xf]
      %v5742 = vld [vmem:[%s5727 + $0x38] sm:$0xf]
      %v5743 = vld [vmem:[%s5727 + $0x3c] sm:$0xf]
      %v5744 = vunpack.c.l.b16 %v5698
      %v5745 = vunpack.c.l.b16 %v5702
      %v5746 = vunpack.c.l.b16 %v5706
      %v5747 = vunpack.c.l.b16 %v5710
      %v5748 = vunpack.c.l.b16 %v5714
      %v5749 = vunpack.c.l.b16 %v5718
      %v5750 = vunpack.c.l.b16 %v5722
      %v5751 = vunpack.c.l.b16 %v5726
      %v5752 = vpack.c.b16 %v5745, %v5744
      %v5753 = vpack.c.b16 %v5747, %v5746
      %v5754 = vpack.c.b16 %v5749, %v5748
      %v5755 = vpack.c.b16 %v5751, %v5750
      %v5776 = vunpack.c.l.b16 %v5728
      %v5777 = vunpack.c.l.b16 %v5729
      %v5778 = vunpack.c.l.b16 %v5730
      %v5779 = vunpack.c.l.b16 %v5731
      %v5780 = vunpack.c.l.b16 %v5732
      %v5781 = vunpack.c.l.b16 %v5733
      %v5782 = vunpack.c.l.b16 %v5734
      %v5783 = vunpack.c.l.b16 %v5735
      %v5784 = vunpack.c.l.b16 %v5736
      %v5785 = vunpack.c.l.b16 %v5737
      %v5786 = vunpack.c.l.b16 %v5738
      %v5787 = vunpack.c.l.b16 %v5739
      %v5788 = vunpack.c.l.b16 %v5740
      %v5789 = vunpack.c.l.b16 %v5741
      %v5790 = vunpack.c.l.b16 %v5742
      %v5791 = vunpack.c.l.b16 %v5743
      %v5792 = vpack.c.b16 %v5777, %v5776
      %v5793 = vpack.c.b16 %v5779, %v5778
      %v5794 = vpack.c.b16 %v5781, %v5780
      %v5795 = vpack.c.b16 %v5783, %v5782
      %v5796 = vpack.c.b16 %v5785, %v5784
      %v5797 = vpack.c.b16 %v5787, %v5786
      %v5798 = vpack.c.b16 %v5789, %v5788
      %v5799 = vpack.c.b16 %v5791, %v5790
      %5808 = vmatprep.subr.bf16.mxu0 0
      %5809 = vmatpush1.bf16.msra.mxu0 %v5792
      %5810 = vmatprep.subr.bf16.mxu0 0
      %5811 = vmatpush1.bf16.msra.mxu0 %v5793
      %5812 = vmatprep.subr.bf16.mxu0 0
      %5813 = vmatpush1.bf16.msra.mxu0 %v5794
      %5814 = vmatprep.subr.bf16.mxu0 0
      %5815 = vmatpush1.bf16.msra.mxu0 %v5795
      %5816 = vmatprep.subr.bf16.mxu0 0
      %5817 = vmatpush1.bf16.msra.mxu0 %v5796
      %5818 = vmatprep.subr.bf16.mxu0 0
      %5819 = vmatpush1.bf16.msra.mxu0 %v5797
      %5820 = vmatprep.subr.bf16.mxu0 0
      %5821 = vmatpush1.bf16.msra.mxu0 %v5798
      %5822 = vmatprep.subr.bf16.mxu0 0
      %5823 = vmatpush1.bf16.msra.mxu0 %v5799
      %5824 = vmatprep.subr.bf16.mxu0 0
      %5825 = vmatpush1.bf16.msra.mxu0 0
      %5826 = vmatprep.subr.bf16.mxu0 0
      %5827 = vmatpush1.bf16.msra.mxu0 0
      %5828 = vmatprep.subr.bf16.mxu0 0
      %5829 = vmatpush1.bf16.msra.mxu0 0
      %5830 = vmatprep.subr.bf16.mxu0 0
      %5831 = vmatpush1.bf16.msra.mxu0 0
      %5832 = vmatprep.subr.bf16.mxu0 0
      %5833 = vmatpush1.bf16.msra.mxu0 0
      %5834 = vmatprep.subr.bf16.mxu0 0
      %5835 = vmatpush1.bf16.msra.mxu0 0
      %5836 = vmatprep.subr.bf16.mxu0 0
      %5837 = vmatpush1.bf16.msra.mxu0 0
      %5838 = vmatprep.subr.bf16.mxu0 0
      %5839 = vmatpush1.bf16.msra.mxu0 0
      %5840 = vmatprep.mubr.bf16.mxu0 0
      %5841 = vmatmul.mubr.bf16.gmra.mrb[0].mxu0 %v5752
      %v5842 = vpop.f32.mrb[0].mxu0
      %v5843 = vadd.f32 0.0, %v5842
      %v5844 = vpop.f32.mrb[0].mxu0
      %v5845 = vpop.f32.mrb[0].mxu0
      %v5846 = vadd.f32 0.0, %v5845
      %v5847 = vpop.f32.mrb[0].mxu0
      %5848 = vmatprep.mubr.bf16.mxu0 0
      %5849 = vmatmul.mubr.bf16.gmra.mrb[0].mxu0 %v5753
      %v5850 = vpop.f32.mrb[0].mxu0
      %v5851 = vadd.f32 0.0, %v5850
      %v5852 = vpop.f32.mrb[0].mxu0
      %v5853 = vpop.f32.mrb[0].mxu0
      %v5854 = vadd.f32 0.0, %v5853
      %v5855 = vpop.f32.mrb[0].mxu0
      %5856 = vmatprep.mubr.bf16.mxu0 0
      %5857 = vmatmul.mubr.bf16.gmra.mrb[0].mxu0 %v5754
      %v5858 = vpop.f32.mrb[0].mxu0
      %v5859 = vadd.f32 0.0, %v5858
      %v5860 = vpop.f32.mrb[0].mxu0
      %v5861 = vpop.f32.mrb[0].mxu0
      %v5862 = vadd.f32 0.0, %v5861
      %v5863 = vpop.f32.mrb[0].mxu0
      %5864 = vmatprep.mubr.bf16.mxu0 0
      %5865 = vmatmul.mubr.bf16.gmra.mrb[0].mxu0 %v5755
      %v5866 = vpop.f32.mrb[0].mxu0
      %v5867 = vadd.f32 0.0, %v5866
      %v5868 = vpop.f32.mrb[0].mxu0
      %v5869 = vpop.f32.mrb[0].mxu0
      %v5870 = vadd.f32 0.0, %v5869
      %v5871 = vpop.f32.mrb[0].mxu0
      %5872 = vdwg.mxu0
      %v5873 = vadd.f32 %v5633, %v5843
      %v5874 = vadd.f32 %v5636, %v5846
      %v5875 = vadd.f32 %v5641, %v5851
      %v5876 = vadd.f32 %v5644, %v5854
      %v5877 = vadd.f32 %v5649, %v5859
      %v5878 = vadd.f32 %v5652, %v5862
      %v5879 = vadd.f32 %v5657, %v5867
      %v5880 = vadd.f32 %v5660, %v5870
      %v5881 = vld [vmem:[%s1183] sm:$0xf]
      %v5882 = vld [vmem:[%s1183 + $0xc] sm:$0xf]
      %v5883 = vld [vmem:[%s1183 + $0x18] sm:$0xf]
      %v5884 = vld [vmem:[%s1183 + $0x24] sm:$0xf]
      %v5885 = vld [vmem:[%s1183 + $0x30] sm:$0xf]
      %v5886 = vld [vmem:[%s1183 + $0x3c] sm:$0xf]
      %v5887 = vld [vmem:[%s1183 + $0x48] sm:$0xf]
      %v5888 = vld [vmem:[%s1183 + $0x54] sm:$0xf]
      %s5889 = scalar_lea.vmem %s5, 1344
      %v5890 = vld [vmem:[%s5889] sm:$0xf]
      %v5891 = vld [vmem:[%s5889 + $0x4] sm:$0xf]
      %v5892 = vld [vmem:[%s5889 + $0x8] sm:$0xf]
      %v5893 = vld [vmem:[%s5889 + $0xc] sm:$0xf]
      %v5894 = vld [vmem:[%s5889 + $0x10] sm:$0xf]
      %v5895 = vld [vmem:[%s5889 + $0x14] sm:$0xf]
      %v5896 = vld [vmem:[%s5889 + $0x18] sm:$0xf]
      %v5897 = vld [vmem:[%s5889 + $0x1c] sm:$0xf]
      %v5898 = vld [vmem:[%s5889 + $0x20] sm:$0xf]
      %v5899 = vld [vmem:[%s5889 + $0x24] sm:$0xf]
      %v5900 = vld [vmem:[%s5889 + $0x28] sm:$0xf]
      %v5901 = vld [vmem:[%s5889 + $0x2c] sm:$0xf]
      %v5902 = vld [vmem:[%s5889 + $0x30] sm:$0xf]
      %v5903 = vld [vmem:[%s5889 + $0x34] sm:$0xf]
      %v5904 = vld [vmem:[%s5889 + $0x38] sm:$0xf]
      %v5905 = vld [vmem:[%s5889 + $0x3c] sm:$0xf]
      %v5914 = vunpack.c.l.b16 %v5881
      %v5915 = vunpack.c.l.b16 %v5882
      %v5916 = vunpack.c.l.b16 %v5883
      %v5917 = vunpack.c.l.b16 %v5884
      %v5918 = vunpack.c.l.b16 %v5885
      %v5919 = vunpack.c.l.b16 %v5886
      %v5920 = vunpack.c.l.b16 %v5887
      %v5921 = vunpack.c.l.b16 %v5888
      %v5922 = vpack.c.b16 %v5915, %v5914
      %v5923 = vpack.c.b16 %v5917, %v5916
      %v5924 = vpack.c.b16 %v5919, %v5918
      %v5925 = vpack.c.b16 %v5921, %v5920
      %v5946 = vunpack.c.l.b16 %v5890
      %v5947 = vunpack.c.l.b16 %v5891
      %v5948 = vunpack.c.l.b16 %v5892
      %v5949 = vunpack.c.l.b16 %v5893
      %v5950 = vunpack.c.l.b16 %v5894
      %v5951 = vunpack.c.l.b16 %v5895
      %v5952 = vunpack.c.l.b16 %v5896
      %v5953 = vunpack.c.l.b16 %v5897
      %v5954 = vunpack.c.l.b16 %v5898
      %v5955 = vunpack.c.l.b16 %v5899
      %v5956 = vunpack.c.l.b16 %v5900
      %v5957 = vunpack.c.l.b16 %v5901
      %v5958 = vunpack.c.l.b16 %v5902
      %v5959 = vunpack.c.l.b16 %v5903
      %v5960 = vunpack.c.l.b16 %v5904
      %v5961 = vunpack.c.l.b16 %v5905
      %v5962 = vpack.c.b16 %v5947, %v5946
      %v5963 = vpack.c.b16 %v5949, %v5948
      %v5964 = vpack.c.b16 %v5951, %v5950
      %v5965 = vpack.c.b16 %v5953, %v5952
      %v5966 = vpack.c.b16 %v5955, %v5954
      %v5967 = vpack.c.b16 %v5957, %v5956
      %v5968 = vpack.c.b16 %v5959, %v5958
      %v5969 = vpack.c.b16 %v5961, %v5960
      %5978 = vmatprep.subr.bf16.mxu0 0
      %5979 = vmatpush1.bf16.msra.mxu0 %v5962
      %5980 = vmatprep.subr.bf16.mxu0 0
      %5981 = vmatpush1.bf16.msra.mxu0 %v5963
      %5982 = vmatprep.subr.bf16.mxu0 0
      %5983 = vmatpush1.bf16.msra.mxu0 %v5964
      %5984 = vmatprep.subr.bf16.mxu0 0
      %5985 = vmatpush1.bf16.msra.mxu0 %v5965
      %5986 = vmatprep.subr.bf16.mxu0 0
      %5987 = vmatpush1.bf16.msra.mxu0 %v5966
      %5988 = vmatprep.subr.bf16.mxu0 0
      %5989 = vmatpush1.bf16.msra.mxu0 %v5967
      %5990 = vmatprep.subr.bf16.mxu0 0
      %5991 = vmatpush1.bf16.msra.mxu0 %v5968
      %5992 = vmatprep.subr.bf16.mxu0 0
      %5993 = vmatpush1.bf16.msra.mxu0 %v5969
      %5994 = vmatprep.subr.bf16.mxu0 0
      %5995 = vmatpush1.bf16.msra.mxu0 0
      %5996 = vmatprep.subr.bf16.mxu0 0
      %5997 = vmatpush1.bf16.msra.mxu0 0
      %5998 = vmatprep.subr.bf16.mxu0 0
      %5999 = vmatpush1.bf16.msra.mxu0 0
      %6000 = vmatprep.subr.bf16.mxu0 0
      %6001 = vmatpush1.bf16.msra.mxu0 0
      %6002 = vmatprep.subr.bf16.mxu0 0
      %6003 = vmatpush1.bf16.msra.mxu0 0
      %6004 = vmatprep.subr.bf16.mxu0 0
      %6005 = vmatpush1.bf16.msra.mxu0 0
      %6006 = vmatprep.subr.bf16.mxu0 0
      %6007 = vmatpush1.bf16.msra.mxu0 0
      %6008 = vmatprep.subr.bf16.mxu0 0
      %6009 = vmatpush1.bf16.msra.mxu0 0
      %6010 = vmatprep.mubr.bf16.mxu0 0
      %6011 = vmatmul.mubr.bf16.gmra.mrb[0].mxu0 %v5922
      %v6012 = vpop.f32.mrb[0].mxu0
      %v6013 = vadd.f32 0.0, %v6012
      %v6014 = vpop.f32.mrb[0].mxu0
      %v6015 = vpop.f32.mrb[0].mxu0
      %v6016 = vadd.f32 0.0, %v6015
      %v6017 = vpop.f32.mrb[0].mxu0
      %6018 = vmatprep.mubr.bf16.mxu0 0
      %6019 = vmatmul.mubr.bf16.gmra.mrb[0].mxu0 %v5923
      %v6020 = vpop.f32.mrb[0].mxu0
      %v6021 = vadd.f32 0.0, %v6020
      %v6022 = vpop.f32.mrb[0].mxu0
      %v6023 = vpop.f32.mrb[0].mxu0
      %v6024 = vadd.f32 0.0, %v6023
      %v6025 = vpop.f32.mrb[0].mxu0
      %6026 = vmatprep.mubr.bf16.mxu0 0
      %6027 = vmatmul.mubr.bf16.gmra.mrb[0].mxu0 %v5924
      %v6028 = vpop.f32.mrb[0].mxu0
      %v6029 = vadd.f32 0.0, %v6028
      %v6030 = vpop.f32.mrb[0].mxu0
      %v6031 = vpop.f32.mrb[0].mxu0
      %v6032 = vadd.f32 0.0, %v6031
      %v6033 = vpop.f32.mrb[0].mxu0
      %6034 = vmatprep.mubr.bf16.mxu0 0
      %6035 = vmatmul.mubr.bf16.gmra.mrb[0].mxu0 %v5925
      %v6036 = vpop.f32.mrb[0].mxu0
      %v6037 = vadd.f32 0.0, %v6036
      %v6038 = vpop.f32.mrb[0].mxu0
      %v6039 = vpop.f32.mrb[0].mxu0
      %v6040 = vadd.f32 0.0, %v6039
      %v6041 = vpop.f32.mrb[0].mxu0
      %6042 = vdwg.mxu0
      %v6043 = vadd.f32 %v5873, %v6013
      %v6044 = vadd.f32 %v5874, %v6016
      %v6045 = vadd.f32 %v5875, %v6021
      %v6046 = vadd.f32 %v5876, %v6024
      %v6047 = vadd.f32 %v5877, %v6029
      %v6048 = vadd.f32 %v5878, %v6032
      %v6049 = vadd.f32 %v5879, %v6037
      %v6050 = vadd.f32 %v5880, %v6040
      %s6051 = scalar_lea.vmem %s5, 1408
      %v6052 = vld [vmem:[%s6051] sm:$0xf]
      %v6053 = vld [vmem:[%s6051 + $0x4] sm:$0xf]
      %v6054 = vld [vmem:[%s6051 + $0x8] sm:$0xf]
      %v6055 = vld [vmem:[%s6051 + $0xc] sm:$0xf]
      %v6056 = vld [vmem:[%s6051 + $0x10] sm:$0xf]
      %v6057 = vld [vmem:[%s6051 + $0x14] sm:$0xf]
      %v6058 = vld [vmem:[%s6051 + $0x18] sm:$0xf]
      %v6059 = vld [vmem:[%s6051 + $0x1c] sm:$0xf]
      %v6060 = vld [vmem:[%s6051 + $0x20] sm:$0xf]
      %v6061 = vld [vmem:[%s6051 + $0x24] sm:$0xf]
      %v6062 = vld [vmem:[%s6051 + $0x28] sm:$0xf]
      %v6063 = vld [vmem:[%s6051 + $0x2c] sm:$0xf]
      %v6064 = vld [vmem:[%s6051 + $0x30] sm:$0xf]
      %v6065 = vld [vmem:[%s6051 + $0x34] sm:$0xf]
      %v6066 = vld [vmem:[%s6051 + $0x38] sm:$0xf]
      %v6067 = vld [vmem:[%s6051 + $0x3c] sm:$0xf]
      %v6084 = vunpack.c.l.b16 %v6052
      %v6085 = vunpack.c.l.b16 %v6053
      %v6086 = vunpack.c.l.b16 %v6054
      %v6087 = vunpack.c.l.b16 %v6055
      %v6088 = vunpack.c.l.b16 %v6056
      %v6089 = vunpack.c.l.b16 %v6057
      %v6090 = vunpack.c.l.b16 %v6058
      %v6091 = vunpack.c.l.b16 %v6059
      %v6092 = vunpack.c.l.b16 %v6060
      %v6093 = vunpack.c.l.b16 %v6061
      %v6094 = vunpack.c.l.b16 %v6062
      %v6095 = vunpack.c.l.b16 %v6063
      %v6096 = vunpack.c.l.b16 %v6064
      %v6097 = vunpack.c.l.b16 %v6065
      %v6098 = vunpack.c.l.b16 %v6066
      %v6099 = vunpack.c.l.b16 %v6067
      %v6100 = vpack.c.b16 %v6085, %v6084
      %v6101 = vpack.c.b16 %v6087, %v6086
      %v6102 = vpack.c.b16 %v6089, %v6088
      %v6103 = vpack.c.b16 %v6091, %v6090
      %v6104 = vpack.c.b16 %v6093, %v6092
      %v6105 = vpack.c.b16 %v6095, %v6094
      %v6106 = vpack.c.b16 %v6097, %v6096
      %v6107 = vpack.c.b16 %v6099, %v6098
      %6116 = vmatprep.subr.bf16.mxu0 0
      %6117 = vmatpush1.bf16.msra.mxu0 %v6100
      %6118 = vmatprep.subr.bf16.mxu0 0
      %6119 = vmatpush1.bf16.msra.mxu0 %v6101
      %6120 = vmatprep.subr.bf16.mxu0 0
      %6121 = vmatpush1.bf16.msra.mxu0 %v6102
      %6122 = vmatprep.subr.bf16.mxu0 0
      %6123 = vmatpush1.bf16.msra.mxu0 %v6103
      %6124 = vmatprep.subr.bf16.mxu0 0
      %6125 = vmatpush1.bf16.msra.mxu0 %v6104
      %6126 = vmatprep.subr.bf16.mxu0 0
      %6127 = vmatpush1.bf16.msra.mxu0 %v6105
      %6128 = vmatprep.subr.bf16.mxu0 0
      %6129 = vmatpush1.bf16.msra.mxu0 %v6106
      %6130 = vmatprep.subr.bf16.mxu0 0
      %6131 = vmatpush1.bf16.msra.mxu0 %v6107
      %6132 = vmatprep.subr.bf16.mxu0 0
      %6133 = vmatpush1.bf16.msra.mxu0 0
      %6134 = vmatprep.subr.bf16.mxu0 0
      %6135 = vmatpush1.bf16.msra.mxu0 0
      %6136 = vmatprep.subr.bf16.mxu0 0
      %6137 = vmatpush1.bf16.msra.mxu0 0
      %6138 = vmatprep.subr.bf16.mxu0 0
      %6139 = vmatpush1.bf16.msra.mxu0 0
      %6140 = vmatprep.subr.bf16.mxu0 0
      %6141 = vmatpush1.bf16.msra.mxu0 0
      %6142 = vmatprep.subr.bf16.mxu0 0
      %6143 = vmatpush1.bf16.msra.mxu0 0
      %6144 = vmatprep.subr.bf16.mxu0 0
      %6145 = vmatpush1.bf16.msra.mxu0 0
      %6146 = vmatprep.subr.bf16.mxu0 0
      %6147 = vmatpush1.bf16.msra.mxu0 0
      %6148 = vmatprep.mubr.bf16.mxu0 0
      %6149 = vmatmul.mubr.bf16.gmra.mrb[0].mxu0 %v2459
      %v6150 = vpop.f32.mrb[0].mxu0
      %v6151 = vadd.f32 0.0, %v6150
      %v6152 = vpop.f32.mrb[0].mxu0
      %v6153 = vpop.f32.mrb[0].mxu0
      %v6154 = vadd.f32 0.0, %v6153
      %v6155 = vpop.f32.mrb[0].mxu0
      %6156 = vmatprep.mubr.bf16.mxu0 0
      %6157 = vmatmul.mubr.bf16.gmra.mrb[0].mxu0 %v2460
      %v6158 = vpop.f32.mrb[0].mxu0
      %v6159 = vadd.f32 0.0, %v6158
      %v6160 = vpop.f32.mrb[0].mxu0
      %v6161 = vpop.f32.mrb[0].mxu0
      %v6162 = vadd.f32 0.0, %v6161
      %v6163 = vpop.f32.mrb[0].mxu0
      %6164 = vmatprep.mubr.bf16.mxu0 0
      %6165 = vmatmul.mubr.bf16.gmra.mrb[0].mxu0 %v2461
      %v6166 = vpop.f32.mrb[0].mxu0
      %v6167 = vadd.f32 0.0, %v6166
      %v6168 = vpop.f32.mrb[0].mxu0
      %v6169 = vpop.f32.mrb[0].mxu0
      %v6170 = vadd.f32 0.0, %v6169
      %v6171 = vpop.f32.mrb[0].mxu0
      %6172 = vmatprep.mubr.bf16.mxu0 0
      %6173 = vmatmul.mubr.bf16.gmra.mrb[0].mxu0 %v2462
      %v6174 = vpop.f32.mrb[0].mxu0
      %v6175 = vadd.f32 0.0, %v6174
      %v6176 = vpop.f32.mrb[0].mxu0
      %v6177 = vpop.f32.mrb[0].mxu0
      %v6178 = vadd.f32 0.0, %v6177
      %v6179 = vpop.f32.mrb[0].mxu0
      %6180 = vdwg.mxu0
      %v6181 = vadd.f32 %v6043, %v6151
      %v6182 = vadd.f32 %v6044, %v6154
      %v6183 = vadd.f32 %v6045, %v6159
      %v6184 = vadd.f32 %v6046, %v6162
      %v6185 = vadd.f32 %v6047, %v6167
      %v6186 = vadd.f32 %v6048, %v6170
      %v6187 = vadd.f32 %v6049, %v6175
      %v6188 = vadd.f32 %v6050, %v6178
      %v6189 = vld [vmem:[%s1183 + $0x4] sm:$0xc]
      %v6190 = vld [vmem:[%s1183 + $0x8] sm:$0x3]
      %v6191 = vld [vmem:[%s1183 + $0x10] sm:$0xc]
      %v6192 = vld [vmem:[%s1183 + $0x14] sm:$0x3]
      %v6193 = vld [vmem:[%s1183 + $0x1c] sm:$0xc]
      %v6194 = vld [vmem:[%s1183 + $0x20] sm:$0x3]
      %v6195 = vld [vmem:[%s1183 + $0x28] sm:$0xc]
      %v6196 = vld [vmem:[%s1183 + $0x2c] sm:$0x3]
      %v6197 = vld [vmem:[%s1183 + $0x34] sm:$0xc]
      %v6198 = vld [vmem:[%s1183 + $0x38] sm:$0x3]
      %v6199 = vld [vmem:[%s1183 + $0x40] sm:$0xc]
      %v6200 = vld [vmem:[%s1183 + $0x44] sm:$0x3]
      %v6201 = vld [vmem:[%s1183 + $0x4c] sm:$0xc]
      %v6202 = vld [vmem:[%s1183 + $0x50] sm:$0x3]
      %v6203 = vld [vmem:[%s1183 + $0x58] sm:$0xc]
      %v6204 = vld [vmem:[%s1183 + $0x5c] sm:$0x3]
      %v6221 = vrot.slane %v6189, 6
      %v6222 = vrot.slane %v6221, 4
      %v6223 = vrot.slane %v6190, 6
      %v6224 = vsel %vm1591, %v6222, %v6223
      %v6225 = vrot.slane %v6191, 6
      %v6226 = vrot.slane %v6225, 4
      %v6227 = vrot.slane %v6192, 6
      %v6228 = vsel %vm1591, %v6226, %v6227
      %v6229 = vrot.slane %v6193, 6
      %v6230 = vrot.slane %v6229, 4
      %v6231 = vrot.slane %v6194, 6
      %v6232 = vsel %vm1591, %v6230, %v6231
      %v6233 = vrot.slane %v6195, 6
      %v6234 = vrot.slane %v6233, 4
      %v6235 = vrot.slane %v6196, 6
      %v6236 = vsel %vm1591, %v6234, %v6235
      %v6237 = vrot.slane %v6197, 6
      %v6238 = vrot.slane %v6237, 4
      %v6239 = vrot.slane %v6198, 6
      %v6240 = vsel %vm1591, %v6238, %v6239
      %v6241 = vrot.slane %v6199, 6
      %v6242 = vrot.slane %v6241, 4
      %v6243 = vrot.slane %v6200, 6
      %v6244 = vsel %vm1591, %v6242, %v6243
      %v6245 = vrot.slane %v6201, 6
      %v6246 = vrot.slane %v6245, 4
      %v6247 = vrot.slane %v6202, 6
      %v6248 = vsel %vm1591, %v6246, %v6247
      %v6249 = vrot.slane %v6203, 6
      %v6250 = vrot.slane %v6249, 4
      %v6251 = vrot.slane %v6204, 6
      %v6252 = vsel %vm1591, %v6250, %v6251
      %s6253 = scalar_lea.vmem %s5, 1472
      %v6254 = vld [vmem:[%s6253] sm:$0xf]
      %v6255 = vld [vmem:[%s6253 + $0x4] sm:$0xf]
      %v6256 = vld [vmem:[%s6253 + $0x8] sm:$0xf]
      %v6257 = vld [vmem:[%s6253 + $0xc] sm:$0xf]
      %v6258 = vld [vmem:[%s6253 + $0x10] sm:$0xf]
      %v6259 = vld [vmem:[%s6253 + $0x14] sm:$0xf]
      %v6260 = vld [vmem:[%s6253 + $0x18] sm:$0xf]
      %v6261 = vld [vmem:[%s6253 + $0x1c] sm:$0xf]
      %v6262 = vld [vmem:[%s6253 + $0x20] sm:$0xf]
      %v6263 = vld [vmem:[%s6253 + $0x24] sm:$0xf]
      %v6264 = vld [vmem:[%s6253 + $0x28] sm:$0xf]
      %v6265 = vld [vmem:[%s6253 + $0x2c] sm:$0xf]
      %v6266 = vld [vmem:[%s6253 + $0x30] sm:$0xf]
      %v6267 = vld [vmem:[%s6253 + $0x34] sm:$0xf]
      %v6268 = vld [vmem:[%s6253 + $0x38] sm:$0xf]
      %v6269 = vld [vmem:[%s6253 + $0x3c] sm:$0xf]
      %v6270 = vunpack.c.l.b16 %v6224
      %v6271 = vunpack.c.l.b16 %v6228
      %v6272 = vunpack.c.l.b16 %v6232
      %v6273 = vunpack.c.l.b16 %v6236
      %v6274 = vunpack.c.l.b16 %v6240
      %v6275 = vunpack.c.l.b16 %v6244
      %v6276 = vunpack.c.l.b16 %v6248
      %v6277 = vunpack.c.l.b16 %v6252
      %v6278 = vpack.c.b16 %v6271, %v6270
      %v6279 = vpack.c.b16 %v6273, %v6272
      %v6280 = vpack.c.b16 %v6275, %v6274
      %v6281 = vpack.c.b16 %v6277, %v6276
      %v6302 = vunpack.c.l.b16 %v6254
      %v6303 = vunpack.c.l.b16 %v6255
      %v6304 = vunpack.c.l.b16 %v6256
      %v6305 = vunpack.c.l.b16 %v6257
      %v6306 = vunpack.c.l.b16 %v6258
      %v6307 = vunpack.c.l.b16 %v6259
      %v6308 = vunpack.c.l.b16 %v6260
      %v6309 = vunpack.c.l.b16 %v6261
      %v6310 = vunpack.c.l.b16 %v6262
      %v6311 = vunpack.c.l.b16 %v6263
      %v6312 = vunpack.c.l.b16 %v6264
      %v6313 = vunpack.c.l.b16 %v6265
      %v6314 = vunpack.c.l.b16 %v6266
      %v6315 = vunpack.c.l.b16 %v6267
      %v6316 = vunpack.c.l.b16 %v6268
      %v6317 = vunpack.c.l.b16 %v6269
      %v6318 = vpack.c.b16 %v6303, %v6302
      %v6319 = vpack.c.b16 %v6305, %v6304
      %v6320 = vpack.c.b16 %v6307, %v6306
      %v6321 = vpack.c.b16 %v6309, %v6308
      %v6322 = vpack.c.b16 %v6311, %v6310
      %v6323 = vpack.c.b16 %v6313, %v6312
      %v6324 = vpack.c.b16 %v6315, %v6314
      %v6325 = vpack.c.b16 %v6317, %v6316
      %6334 = vmatprep.subr.bf16.mxu0 0
      %6335 = vmatpush1.bf16.msra.mxu0 %v6318
      %6336 = vmatprep.subr.bf16.mxu0 0
      %6337 = vmatpush1.bf16.msra.mxu0 %v6319
      %6338 = vmatprep.subr.bf16.mxu0 0
      %6339 = vmatpush1.bf16.msra.mxu0 %v6320
      %6340 = vmatprep.subr.bf16.mxu0 0
      %6341 = vmatpush1.bf16.msra.mxu0 %v6321
      %6342 = vmatprep.subr.bf16.mxu0 0
      %6343 = vmatpush1.bf16.msra.mxu0 %v6322
      %6344 = vmatprep.subr.bf16.mxu0 0
      %6345 = vmatpush1.bf16.msra.mxu0 %v6323
      %6346 = vmatprep.subr.bf16.mxu0 0
      %6347 = vmatpush1.bf16.msra.mxu0 %v6324
      %6348 = vmatprep.subr.bf16.mxu0 0
      %6349 = vmatpush1.bf16.msra.mxu0 %v6325
      %6350 = vmatprep.subr.bf16.mxu0 0
      %6351 = vmatpush1.bf16.msra.mxu0 0
      %6352 = vmatprep.subr.bf16.mxu0 0
      %6353 = vmatpush1.bf16.msra.mxu0 0
      %6354 = vmatprep.subr.bf16.mxu0 0
      %6355 = vmatpush1.bf16.msra.mxu0 0
      %6356 = vmatprep.subr.bf16.mxu0 0
      %6357 = vmatpush1.bf16.msra.mxu0 0
      %6358 = vmatprep.subr.bf16.mxu0 0
      %6359 = vmatpush1.bf16.msra.mxu0 0
      %6360 = vmatprep.subr.bf16.mxu0 0
      %6361 = vmatpush1.bf16.msra.mxu0 0
      %6362 = vmatprep.subr.bf16.mxu0 0
      %6363 = vmatpush1.bf16.msra.mxu0 0
      %6364 = vmatprep.subr.bf16.mxu0 0
      %6365 = vmatpush1.bf16.msra.mxu0 0
      %6366 = vmatprep.mubr.bf16.mxu0 0
      %6367 = vmatmul.mubr.bf16.gmra.mrb[0].mxu0 %v6278
      %v6368 = vpop.f32.mrb[0].mxu0
      %v6369 = vadd.f32 0.0, %v6368
      %v6370 = vpop.f32.mrb[0].mxu0
      %v6371 = vpop.f32.mrb[0].mxu0
      %v6372 = vadd.f32 0.0, %v6371
      %v6373 = vpop.f32.mrb[0].mxu0
      %6374 = vmatprep.mubr.bf16.mxu0 0
      %6375 = vmatmul.mubr.bf16.gmra.mrb[0].mxu0 %v6279
      %v6376 = vpop.f32.mrb[0].mxu0
      %v6377 = vadd.f32 0.0, %v6376
      %v6378 = vpop.f32.mrb[0].mxu0
      %v6379 = vpop.f32.mrb[0].mxu0
      %v6380 = vadd.f32 0.0, %v6379
      %v6381 = vpop.f32.mrb[0].mxu0
      %6382 = vmatprep.mubr.bf16.mxu0 0
      %6383 = vmatmul.mubr.bf16.gmra.mrb[0].mxu0 %v6280
      %v6384 = vpop.f32.mrb[0].mxu0
      %v6385 = vadd.f32 0.0, %v6384
      %v6386 = vpop.f32.mrb[0].mxu0
      %v6387 = vpop.f32.mrb[0].mxu0
      %v6388 = vadd.f32 0.0, %v6387
      %v6389 = vpop.f32.mrb[0].mxu0
      %6390 = vmatprep.mubr.bf16.mxu0 0
      %6391 = vmatmul.mubr.bf16.gmra.mrb[0].mxu0 %v6281
      %v6392 = vpop.f32.mrb[0].mxu0
      %v6393 = vadd.f32 0.0, %v6392
      %v6394 = vpop.f32.mrb[0].mxu0
      %v6395 = vpop.f32.mrb[0].mxu0
      %v6396 = vadd.f32 0.0, %v6395
      %v6397 = vpop.f32.mrb[0].mxu0
      %6398 = vdwg.mxu0
      %v6399 = vadd.f32 %v6181, %v6369
      %v6400 = vadd.f32 %v6182, %v6372
      %v6401 = vadd.f32 %v6183, %v6377
      %v6402 = vadd.f32 %v6184, %v6380
      %v6403 = vadd.f32 %v6185, %v6385
      %v6404 = vadd.f32 %v6186, %v6388
      %v6405 = vadd.f32 %v6187, %v6393
      %v6406 = vadd.f32 %v6188, %v6396
      %s6407 = scalar_lea.vmem [#allocation2], 144
      %v6408 = vld [vmem:[%s6407] sm:$0xf]
      %v6409 = vld [vmem:[%s6407 + $0xc] sm:$0xf]
      %v6410 = vld [vmem:[%s6407 + $0x18] sm:$0xf]
      %v6411 = vld [vmem:[%s6407 + $0x24] sm:$0xf]
      %v6412 = vld [vmem:[%s6407 + $0x30] sm:$0xf]
      %v6413 = vld [vmem:[%s6407 + $0x3c] sm:$0xf]
      %v6414 = vld [vmem:[%s6407 + $0x48] sm:$0xf]
      %v6415 = vld [vmem:[%s6407 + $0x54] sm:$0xf]
      %s6416 = scalar_lea.vmem %s5, 1536
      %v6417 = vld [vmem:[%s6416] sm:$0xf]
      %v6418 = vld [vmem:[%s6416 + $0x4] sm:$0xf]
      %v6419 = vld [vmem:[%s6416 + $0x8] sm:$0xf]
      %v6420 = vld [vmem:[%s6416 + $0xc] sm:$0xf]
      %v6421 = vld [vmem:[%s6416 + $0x10] sm:$0xf]
      %v6422 = vld [vmem:[%s6416 + $0x14] sm:$0xf]
      %v6423 = vld [vmem:[%s6416 + $0x18] sm:$0xf]
      %v6424 = vld [vmem:[%s6416 + $0x1c] sm:$0xf]
      %v6425 = vld [vmem:[%s6416 + $0x20] sm:$0xf]
      %v6426 = vld [vmem:[%s6416 + $0x24] sm:$0xf]
      %v6427 = vld [vmem:[%s6416 + $0x28] sm:$0xf]
      %v6428 = vld [vmem:[%s6416 + $0x2c] sm:$0xf]
      %v6429 = vld [vmem:[%s6416 + $0x30] sm:$0xf]
      %v6430 = vld [vmem:[%s6416 + $0x34] sm:$0xf]
      %v6431 = vld [vmem:[%s6416 + $0x38] sm:$0xf]
      %v6432 = vld [vmem:[%s6416 + $0x3c] sm:$0xf]
      %v6441 = vunpack.c.l.b16 %v6408
      %v6442 = vunpack.c.l.b16 %v6409
      %v6443 = vunpack.c.l.b16 %v6410
      %v6444 = vunpack.c.l.b16 %v6411
      %v6445 = vunpack.c.l.b16 %v6412
      %v6446 = vunpack.c.l.b16 %v6413
      %v6447 = vunpack.c.l.b16 %v6414
      %v6448 = vunpack.c.l.b16 %v6415
      %v6449 = vpack.c.b16 %v6442, %v6441
      %v6450 = vpack.c.b16 %v6444, %v6443
      %v6451 = vpack.c.b16 %v6446, %v6445
      %v6452 = vpack.c.b16 %v6448, %v6447
      %v6473 = vunpack.c.l.b16 %v6417
      %v6474 = vunpack.c.l.b16 %v6418
      %v6475 = vunpack.c.l.b16 %v6419
      %v6476 = vunpack.c.l.b16 %v6420
      %v6477 = vunpack.c.l.b16 %v6421
      %v6478 = vunpack.c.l.b16 %v6422
      %v6479 = vunpack.c.l.b16 %v6423
      %v6480 = vunpack.c.l.b16 %v6424
      %v6481 = vunpack.c.l.b16 %v6425
      %v6482 = vunpack.c.l.b16 %v6426
      %v6483 = vunpack.c.l.b16 %v6427
      %v6484 = vunpack.c.l.b16 %v6428
      %v6485 = vunpack.c.l.b16 %v6429
      %v6486 = vunpack.c.l.b16 %v6430
      %v6487 = vunpack.c.l.b16 %v6431
      %v6488 = vunpack.c.l.b16 %v6432
      %v6489 = vpack.c.b16 %v6474, %v6473
      %v6490 = vpack.c.b16 %v6476, %v6475
      %v6491 = vpack.c.b16 %v6478, %v6477
      %v6492 = vpack.c.b16 %v6480, %v6479
      %v6493 = vpack.c.b16 %v6482, %v6481
      %v6494 = vpack.c.b16 %v6484, %v6483
      %v6495 = vpack.c.b16 %v6486, %v6485
      %v6496 = vpack.c.b16 %v6488, %v6487
      %6505 = vmatprep.subr.bf16.mxu0 0
      %6506 = vmatpush1.bf16.msra.mxu0 %v6489
      %6507 = vmatprep.subr.bf16.mxu0 0
      %6508 = vmatpush1.bf16.msra.mxu0 %v6490
      %6509 = vmatprep.subr.bf16.mxu0 0
      %6510 = vmatpush1.bf16.msra.mxu0 %v6491
      %6511 = vmatprep.subr.bf16.mxu0 0
      %6512 = vmatpush1.bf16.msra.mxu0 %v6492
      %6513 = vmatprep.subr.bf16.mxu0 0
      %6514 = vmatpush1.bf16.msra.mxu0 %v6493
      %6515 = vmatprep.subr.bf16.mxu0 0
      %6516 = vmatpush1.bf16.msra.mxu0 %v6494
      %6517 = vmatprep.subr.bf16.mxu0 0
      %6518 = vmatpush1.bf16.msra.mxu0 %v6495
      %6519 = vmatprep.subr.bf16.mxu0 0
      %6520 = vmatpush1.bf16.msra.mxu0 %v6496
      %6521 = vmatprep.subr.bf16.mxu0 0
      %6522 = vmatpush1.bf16.msra.mxu0 0
      %6523 = vmatprep.subr.bf16.mxu0 0
      %6524 = vmatpush1.bf16.msra.mxu0 0
      %6525 = vmatprep.subr.bf16.mxu0 0
      %6526 = vmatpush1.bf16.msra.mxu0 0
      %6527 = vmatprep.subr.bf16.mxu0 0
      %6528 = vmatpush1.bf16.msra.mxu0 0
      %6529 = vmatprep.subr.bf16.mxu0 0
      %6530 = vmatpush1.bf16.msra.mxu0 0
      %6531 = vmatprep.subr.bf16.mxu0 0
      %6532 = vmatpush1.bf16.msra.mxu0 0
      %6533 = vmatprep.subr.bf16.mxu0 0
      %6534 = vmatpush1.bf16.msra.mxu0 0
      %6535 = vmatprep.subr.bf16.mxu0 0
      %6536 = vmatpush1.bf16.msra.mxu0 0
      %6537 = vmatprep.mubr.bf16.mxu0 0
      %6538 = vmatmul.mubr.bf16.gmra.mrb[0].mxu0 %v6449
      %v6539 = vpop.f32.mrb[0].mxu0
      %v6540 = vadd.f32 0.0, %v6539
      %v6541 = vpop.f32.mrb[0].mxu0
      %v6542 = vpop.f32.mrb[0].mxu0
      %v6543 = vadd.f32 0.0, %v6542
      %v6544 = vpop.f32.mrb[0].mxu0
      %6545 = vmatprep.mubr.bf16.mxu0 0
      %6546 = vmatmul.mubr.bf16.gmra.mrb[0].mxu0 %v6450
      %v6547 = vpop.f32.mrb[0].mxu0
      %v6548 = vadd.f32 0.0, %v6547
      %v6549 = vpop.f32.mrb[0].mxu0
      %v6550 = vpop.f32.mrb[0].mxu0
      %v6551 = vadd.f32 0.0, %v6550
      %v6552 = vpop.f32.mrb[0].mxu0
      %6553 = vmatprep.mubr.bf16.mxu0 0
      %6554 = vmatmul.mubr.bf16.gmra.mrb[0].mxu0 %v6451
      %v6555 = vpop.f32.mrb[0].mxu0
      %v6556 = vadd.f32 0.0, %v6555
      %v6557 = vpop.f32.mrb[0].mxu0
      %v6558 = vpop.f32.mrb[0].mxu0
      %v6559 = vadd.f32 0.0, %v6558
      %v6560 = vpop.f32.mrb[0].mxu0
      %6561 = vmatprep.mubr.bf16.mxu0 0
      %6562 = vmatmul.mubr.bf16.gmra.mrb[0].mxu0 %v6452
      %v6563 = vpop.f32.mrb[0].mxu0
      %v6564 = vadd.f32 0.0, %v6563
      %v6565 = vpop.f32.mrb[0].mxu0
      %v6566 = vpop.f32.mrb[0].mxu0
      %v6567 = vadd.f32 0.0, %v6566
      %v6568 = vpop.f32.mrb[0].mxu0
      %6569 = vdwg.mxu0
      %v6570 = vadd.f32 %v6399, %v6540
      %v6571 = vadd.f32 %v6400, %v6543
      %v6572 = vadd.f32 %v6401, %v6548
      %v6573 = vadd.f32 %v6402, %v6551
      %v6574 = vadd.f32 %v6403, %v6556
      %v6575 = vadd.f32 %v6404, %v6559
      %v6576 = vadd.f32 %v6405, %v6564
      %v6577 = vadd.f32 %v6406, %v6567
      %v6578 = vld [vmem:[%s6407] sm:$0x8]
      %v6579 = vld [vmem:[%s6407 + $0x4] sm:$0x7]
      %v6580 = vld [vmem:[%s6407 + $0xc] sm:$0x8]
      %v6581 = vld [vmem:[%s6407 + $0x10] sm:$0x7]
      %v6582 = vld [vmem:[%s6407 + $0x18] sm:$0x8]
      %v6583 = vld [vmem:[%s6407 + $0x1c] sm:$0x7]
      %v6584 = vld [vmem:[%s6407 + $0x24] sm:$0x8]
      %v6585 = vld [vmem:[%s6407 + $0x28] sm:$0x7]
      %v6586 = vld [vmem:[%s6407 + $0x30] sm:$0x8]
      %v6587 = vld [vmem:[%s6407 + $0x34] sm:$0x7]
      %v6588 = vld [vmem:[%s6407 + $0x3c] sm:$0x8]
      %v6589 = vld [vmem:[%s6407 + $0x40] sm:$0x7]
      %v6590 = vld [vmem:[%s6407 + $0x48] sm:$0x8]
      %v6591 = vld [vmem:[%s6407 + $0x4c] sm:$0x7]
      %v6592 = vld [vmem:[%s6407 + $0x54] sm:$0x8]
      %v6593 = vld [vmem:[%s6407 + $0x58] sm:$0x7]
      %v6610 = vrot.slane %v6578, 7
      %v6611 = vrot.slane %v6610, 4
      %v6612 = vrot.slane %v6579, 7
      %v6613 = vsel %vm1674, %v6611, %v6612
      %v6614 = vrot.slane %v6580, 7
      %v6615 = vrot.slane %v6614, 4
      %v6616 = vrot.slane %v6581, 7
      %v6617 = vsel %vm1674, %v6615, %v6616
      %v6618 = vrot.slane %v6582, 7
      %v6619 = vrot.slane %v6618, 4
      %v6620 = vrot.slane %v6583, 7
      %v6621 = vsel %vm1674, %v6619, %v6620
      %v6622 = vrot.slane %v6584, 7
      %v6623 = vrot.slane %v6622, 4
      %v6624 = vrot.slane %v6585, 7
      %v6625 = vsel %vm1674, %v6623, %v6624
      %v6626 = vrot.slane %v6586, 7
      %v6627 = vrot.slane %v6626, 4
      %v6628 = vrot.slane %v6587, 7
      %v6629 = vsel %vm1674, %v6627, %v6628
      %v6630 = vrot.slane %v6588, 7
      %v6631 = vrot.slane %v6630, 4
      %v6632 = vrot.slane %v6589, 7
      %v6633 = vsel %vm1674, %v6631, %v6632
      %v6634 = vrot.slane %v6590, 7
      %v6635 = vrot.slane %v6634, 4
      %v6636 = vrot.slane %v6591, 7
      %v6637 = vsel %vm1674, %v6635, %v6636
      %v6638 = vrot.slane %v6592, 7
      %v6639 = vrot.slane %v6638, 4
      %v6640 = vrot.slane %v6593, 7
      %v6641 = vsel %vm1674, %v6639, %v6640
      %s6642 = scalar_lea.vmem %s5, 1600
      %v6643 = vld [vmem:[%s6642] sm:$0xf]
      %v6644 = vld [vmem:[%s6642 + $0x4] sm:$0xf]
      %v6645 = vld [vmem:[%s6642 + $0x8] sm:$0xf]
      %v6646 = vld [vmem:[%s6642 + $0xc] sm:$0xf]
      %v6647 = vld [vmem:[%s6642 + $0x10] sm:$0xf]
      %v6648 = vld [vmem:[%s6642 + $0x14] sm:$0xf]
      %v6649 = vld [vmem:[%s6642 + $0x18] sm:$0xf]
      %v6650 = vld [vmem:[%s6642 + $0x1c] sm:$0xf]
      %v6651 = vld [vmem:[%s6642 + $0x20] sm:$0xf]
      %v6652 = vld [vmem:[%s6642 + $0x24] sm:$0xf]
      %v6653 = vld [vmem:[%s6642 + $0x28] sm:$0xf]
      %v6654 = vld [vmem:[%s6642 + $0x2c] sm:$0xf]
      %v6655 = vld [vmem:[%s6642 + $0x30] sm:$0xf]
      %v6656 = vld [vmem:[%s6642 + $0x34] sm:$0xf]
      %v6657 = vld [vmem:[%s6642 + $0x38] sm:$0xf]
      %v6658 = vld [vmem:[%s6642 + $0x3c] sm:$0xf]
      %v6659 = vunpack.c.l.b16 %v6613
      %v6660 = vunpack.c.l.b16 %v6617
      %v6661 = vunpack.c.l.b16 %v6621
      %v6662 = vunpack.c.l.b16 %v6625
      %v6663 = vunpack.c.l.b16 %v6629
      %v6664 = vunpack.c.l.b16 %v6633
      %v6665 = vunpack.c.l.b16 %v6637
      %v6666 = vunpack.c.l.b16 %v6641
      %v6667 = vpack.c.b16 %v6660, %v6659
      %v6668 = vpack.c.b16 %v6662, %v6661
      %v6669 = vpack.c.b16 %v6664, %v6663
      %v6670 = vpack.c.b16 %v6666, %v6665
      %v6691 = vunpack.c.l.b16 %v6643
      %v6692 = vunpack.c.l.b16 %v6644
      %v6693 = vunpack.c.l.b16 %v6645
      %v6694 = vunpack.c.l.b16 %v6646
      %v6695 = vunpack.c.l.b16 %v6647
      %v6696 = vunpack.c.l.b16 %v6648
      %v6697 = vunpack.c.l.b16 %v6649
      %v6698 = vunpack.c.l.b16 %v6650
      %v6699 = vunpack.c.l.b16 %v6651
      %v6700 = vunpack.c.l.b16 %v6652
      %v6701 = vunpack.c.l.b16 %v6653
      %v6702 = vunpack.c.l.b16 %v6654
      %v6703 = vunpack.c.l.b16 %v6655
      %v6704 = vunpack.c.l.b16 %v6656
      %v6705 = vunpack.c.l.b16 %v6657
      %v6706 = vunpack.c.l.b16 %v6658
      %v6707 = vpack.c.b16 %v6692, %v6691
      %v6708 = vpack.c.b16 %v6694, %v6693
      %v6709 = vpack.c.b16 %v6696, %v6695
      %v6710 = vpack.c.b16 %v6698, %v6697
      %v6711 = vpack.c.b16 %v6700, %v6699
      %v6712 = vpack.c.b16 %v6702, %v6701
      %v6713 = vpack.c.b16 %v6704, %v6703
      %v6714 = vpack.c.b16 %v6706, %v6705
      %6723 = vmatprep.subr.bf16.mxu0 0
      %6724 = vmatpush1.bf16.msra.mxu0 %v6707
      %6725 = vmatprep.subr.bf16.mxu0 0
      %6726 = vmatpush1.bf16.msra.mxu0 %v6708
      %6727 = vmatprep.subr.bf16.mxu0 0
      %6728 = vmatpush1.bf16.msra.mxu0 %v6709
      %6729 = vmatprep.subr.bf16.mxu0 0
      %6730 = vmatpush1.bf16.msra.mxu0 %v6710
      %6731 = vmatprep.subr.bf16.mxu0 0
      %6732 = vmatpush1.bf16.msra.mxu0 %v6711
      %6733 = vmatprep.subr.bf16.mxu0 0
      %6734 = vmatpush1.bf16.msra.mxu0 %v6712
      %6735 = vmatprep.subr.bf16.mxu0 0
      %6736 = vmatpush1.bf16.msra.mxu0 %v6713
      %6737 = vmatprep.subr.bf16.mxu0 0
      %6738 = vmatpush1.bf16.msra.mxu0 %v6714
      %6739 = vmatprep.subr.bf16.mxu0 0
      %6740 = vmatpush1.bf16.msra.mxu0 0
      %6741 = vmatprep.subr.bf16.mxu0 0
      %6742 = vmatpush1.bf16.msra.mxu0 0
      %6743 = vmatprep.subr.bf16.mxu0 0
      %6744 = vmatpush1.bf16.msra.mxu0 0
      %6745 = vmatprep.subr.bf16.mxu0 0
      %6746 = vmatpush1.bf16.msra.mxu0 0
      %6747 = vmatprep.subr.bf16.mxu0 0
      %6748 = vmatpush1.bf16.msra.mxu0 0
      %6749 = vmatprep.subr.bf16.mxu0 0
      %6750 = vmatpush1.bf16.msra.mxu0 0
      %6751 = vmatprep.subr.bf16.mxu0 0
      %6752 = vmatpush1.bf16.msra.mxu0 0
      %6753 = vmatprep.subr.bf16.mxu0 0
      %6754 = vmatpush1.bf16.msra.mxu0 0
      %6755 = vmatprep.mubr.bf16.mxu0 0
      %6756 = vmatmul.mubr.bf16.gmra.mrb[0].mxu0 %v6667
      %v6757 = vpop.f32.mrb[0].mxu0
      %v6758 = vadd.f32 0.0, %v6757
      %v6759 = vpop.f32.mrb[0].mxu0
      %v6760 = vpop.f32.mrb[0].mxu0
      %v6761 = vadd.f32 0.0, %v6760
      %v6762 = vpop.f32.mrb[0].mxu0
      %6763 = vmatprep.mubr.bf16.mxu0 0
      %6764 = vmatmul.mubr.bf16.gmra.mrb[0].mxu0 %v6668
      %v6765 = vpop.f32.mrb[0].mxu0
      %v6766 = vadd.f32 0.0, %v6765
      %v6767 = vpop.f32.mrb[0].mxu0
      %v6768 = vpop.f32.mrb[0].mxu0
      %v6769 = vadd.f32 0.0, %v6768
      %v6770 = vpop.f32.mrb[0].mxu0
      %6771 = vmatprep.mubr.bf16.mxu0 0
      %6772 = vmatmul.mubr.bf16.gmra.mrb[0].mxu0 %v6669
      %v6773 = vpop.f32.mrb[0].mxu0
      %v6774 = vadd.f32 0.0, %v6773
      %v6775 = vpop.f32.mrb[0].mxu0
      %v6776 = vpop.f32.mrb[0].mxu0
      %v6777 = vadd.f32 0.0, %v6776
      %v6778 = vpop.f32.mrb[0].mxu0
      %6779 = vmatprep.mubr.bf16.mxu0 0
      %6780 = vmatmul.mubr.bf16.gmra.mrb[0].mxu0 %v6670
      %v6781 = vpop.f32.mrb[0].mxu0
      %v6782 = vadd.f32 0.0, %v6781
      %v6783 = vpop.f32.mrb[0].mxu0
      %v6784 = vpop.f32.mrb[0].mxu0
      %v6785 = vadd.f32 0.0, %v6784
      %v6786 = vpop.f32.mrb[0].mxu0
      %6787 = vdwg.mxu0
      %v6788 = vadd.f32 %v6570, %v6758
      %v6789 = vadd.f32 %v6571, %v6761
      %v6790 = vadd.f32 %v6572, %v6766
      %v6791 = vadd.f32 %v6573, %v6769
      %v6792 = vadd.f32 %v6574, %v6774
      %v6793 = vadd.f32 %v6575, %v6777
      %v6794 = vadd.f32 %v6576, %v6782
      %v6795 = vadd.f32 %v6577, %v6785
      %v6796 = vld [vmem:[%s6407 + $0x4] sm:$0xc]
      %v6797 = vld [vmem:[%s6407 + $0x8] sm:$0x3]
      %v6798 = vld [vmem:[%s6407 + $0x10] sm:$0xc]
      %v6799 = vld [vmem:[%s6407 + $0x14] sm:$0x3]
      %v6800 = vld [vmem:[%s6407 + $0x1c] sm:$0xc]
      %v6801 = vld [vmem:[%s6407 + $0x20] sm:$0x3]
      %v6802 = vld [vmem:[%s6407 + $0x28] sm:$0xc]
      %v6803 = vld [vmem:[%s6407 + $0x2c] sm:$0x3]
      %v6804 = vld [vmem:[%s6407 + $0x34] sm:$0xc]
      %v6805 = vld [vmem:[%s6407 + $0x38] sm:$0x3]
      %v6806 = vld [vmem:[%s6407 + $0x40] sm:$0xc]
      %v6807 = vld [vmem:[%s6407 + $0x44] sm:$0x3]
      %v6808 = vld [vmem:[%s6407 + $0x4c] sm:$0xc]
      %v6809 = vld [vmem:[%s6407 + $0x50] sm:$0x3]
      %v6810 = vld [vmem:[%s6407 + $0x58] sm:$0xc]
      %v6811 = vld [vmem:[%s6407 + $0x5c] sm:$0x3]
      %v6828 = vrot.slane %v6796, 6
      %v6829 = vrot.slane %v6828, 4
      %v6830 = vrot.slane %v6797, 6
      %v6831 = vsel %vm1591, %v6829, %v6830
      %v6832 = vrot.slane %v6798, 6
      %v6833 = vrot.slane %v6832, 4
      %v6834 = vrot.slane %v6799, 6
      %v6835 = vsel %vm1591, %v6833, %v6834
      %v6836 = vrot.slane %v6800, 6
      %v6837 = vrot.slane %v6836, 4
      %v6838 = vrot.slane %v6801, 6
      %v6839 = vsel %vm1591, %v6837, %v6838
      %v6840 = vrot.slane %v6802, 6
      %v6841 = vrot.slane %v6840, 4
      %v6842 = vrot.slane %v6803, 6
      %v6843 = vsel %vm1591, %v6841, %v6842
      %v6844 = vrot.slane %v6804, 6
      %v6845 = vrot.slane %v6844, 4
      %v6846 = vrot.slane %v6805, 6
      %v6847 = vsel %vm1591, %v6845, %v6846
      %v6848 = vrot.slane %v6806, 6
      %v6849 = vrot.slane %v6848, 4
      %v6850 = vrot.slane %v6807, 6
      %v6851 = vsel %vm1591, %v6849, %v6850
      %v6852 = vrot.slane %v6808, 6
      %v6853 = vrot.slane %v6852, 4
      %v6854 = vrot.slane %v6809, 6
      %v6855 = vsel %vm1591, %v6853, %v6854
      %v6856 = vrot.slane %v6810, 6
      %v6857 = vrot.slane %v6856, 4
      %v6858 = vrot.slane %v6811, 6
      %v6859 = vsel %vm1591, %v6857, %v6858
      %s6860 = scalar_lea.vmem %s5, 1664
      %v6861 = vld [vmem:[%s6860] sm:$0xf]
      %v6862 = vld [vmem:[%s6860 + $0x4] sm:$0xf]
      %v6863 = vld [vmem:[%s6860 + $0x8] sm:$0xf]
      %v6864 = vld [vmem:[%s6860 + $0xc] sm:$0xf]
      %v6865 = vld [vmem:[%s6860 + $0x10] sm:$0xf]
      %v6866 = vld [vmem:[%s6860 + $0x14] sm:$0xf]
      %v6867 = vld [vmem:[%s6860 + $0x18] sm:$0xf]
      %v6868 = vld [vmem:[%s6860 + $0x1c] sm:$0xf]
      %v6869 = vld [vmem:[%s6860 + $0x20] sm:$0xf]
      %v6870 = vld [vmem:[%s6860 + $0x24] sm:$0xf]
      %v6871 = vld [vmem:[%s6860 + $0x28] sm:$0xf]
      %v6872 = vld [vmem:[%s6860 + $0x2c] sm:$0xf]
      %v6873 = vld [vmem:[%s6860 + $0x30] sm:$0xf]
      %v6874 = vld [vmem:[%s6860 + $0x34] sm:$0xf]
      %v6875 = vld [vmem:[%s6860 + $0x38] sm:$0xf]
      %v6876 = vld [vmem:[%s6860 + $0x3c] sm:$0xf]
      %v6877 = vunpack.c.l.b16 %v6831
      %v6878 = vunpack.c.l.b16 %v6835
      %v6879 = vunpack.c.l.b16 %v6839
      %v6880 = vunpack.c.l.b16 %v6843
      %v6881 = vunpack.c.l.b16 %v6847
      %v6882 = vunpack.c.l.b16 %v6851
      %v6883 = vunpack.c.l.b16 %v6855
      %v6884 = vunpack.c.l.b16 %v6859
      %v6885 = vpack.c.b16 %v6878, %v6877
      %v6886 = vpack.c.b16 %v6880, %v6879
      %v6887 = vpack.c.b16 %v6882, %v6881
      %v6888 = vpack.c.b16 %v6884, %v6883
      %v6909 = vunpack.c.l.b16 %v6861
      %v6910 = vunpack.c.l.b16 %v6862
      %v6911 = vunpack.c.l.b16 %v6863
      %v6912 = vunpack.c.l.b16 %v6864
      %v6913 = vunpack.c.l.b16 %v6865
      %v6914 = vunpack.c.l.b16 %v6866
      %v6915 = vunpack.c.l.b16 %v6867
      %v6916 = vunpack.c.l.b16 %v6868
      %v6917 = vunpack.c.l.b16 %v6869
      %v6918 = vunpack.c.l.b16 %v6870
      %v6919 = vunpack.c.l.b16 %v6871
      %v6920 = vunpack.c.l.b16 %v6872
      %v6921 = vunpack.c.l.b16 %v6873
      %v6922 = vunpack.c.l.b16 %v6874
      %v6923 = vunpack.c.l.b16 %v6875
      %v6924 = vunpack.c.l.b16 %v6876
      %v6925 = vpack.c.b16 %v6910, %v6909
      %v6926 = vpack.c.b16 %v6912, %v6911
      %v6927 = vpack.c.b16 %v6914, %v6913
      %v6928 = vpack.c.b16 %v6916, %v6915
      %v6929 = vpack.c.b16 %v6918, %v6917
      %v6930 = vpack.c.b16 %v6920, %v6919
      %v6931 = vpack.c.b16 %v6922, %v6921
      %v6932 = vpack.c.b16 %v6924, %v6923
      %6941 = vmatprep.subr.bf16.mxu0 0
      %6942 = vmatpush1.bf16.msra.mxu0 %v6925
      %6943 = vmatprep.subr.bf16.mxu0 0
      %6944 = vmatpush1.bf16.msra.mxu0 %v6926
      %6945 = vmatprep.subr.bf16.mxu0 0
      %6946 = vmatpush1.bf16.msra.mxu0 %v6927
      %6947 = vmatprep.subr.bf16.mxu0 0
      %6948 = vmatpush1.bf16.msra.mxu0 %v6928
      %6949 = vmatprep.subr.bf16.mxu0 0
      %6950 = vmatpush1.bf16.msra.mxu0 %v6929
      %6951 = vmatprep.subr.bf16.mxu0 0
      %6952 = vmatpush1.bf16.msra.mxu0 %v6930
      %6953 = vmatprep.subr.bf16.mxu0 0
      %6954 = vmatpush1.bf16.msra.mxu0 %v6931
      %6955 = vmatprep.subr.bf16.mxu0 0
      %6956 = vmatpush1.bf16.msra.mxu0 %v6932
      %6957 = vmatprep.subr.bf16.mxu0 0
      %6958 = vmatpush1.bf16.msra.mxu0 0
      %6959 = vmatprep.subr.bf16.mxu0 0
      %6960 = vmatpush1.bf16.msra.mxu0 0
      %6961 = vmatprep.subr.bf16.mxu0 0
      %6962 = vmatpush1.bf16.msra.mxu0 0
      %6963 = vmatprep.subr.bf16.mxu0 0
      %6964 = vmatpush1.bf16.msra.mxu0 0
      %6965 = vmatprep.subr.bf16.mxu0 0
      %6966 = vmatpush1.bf16.msra.mxu0 0
      %6967 = vmatprep.subr.bf16.mxu0 0
      %6968 = vmatpush1.bf16.msra.mxu0 0
      %6969 = vmatprep.subr.bf16.mxu0 0
      %6970 = vmatpush1.bf16.msra.mxu0 0
      %6971 = vmatprep.subr.bf16.mxu0 0
      %6972 = vmatpush1.bf16.msra.mxu0 0
      %6973 = vmatprep.mubr.bf16.mxu0 0
      %6974 = vmatmul.mubr.bf16.gmra.mrb[0].mxu0 %v6885
      %v6975 = vpop.f32.mrb[0].mxu0
      %v6976 = vadd.f32 0.0, %v6975
      %v6977 = vpop.f32.mrb[0].mxu0
      %v6978 = vpop.f32.mrb[0].mxu0
      %v6979 = vadd.f32 0.0, %v6978
      %v6980 = vpop.f32.mrb[0].mxu0
      %6981 = vmatprep.mubr.bf16.mxu0 0
      %6982 = vmatmul.mubr.bf16.gmra.mrb[0].mxu0 %v6886
      %v6983 = vpop.f32.mrb[0].mxu0
      %v6984 = vadd.f32 0.0, %v6983
      %v6985 = vpop.f32.mrb[0].mxu0
      %v6986 = vpop.f32.mrb[0].mxu0
      %v6987 = vadd.f32 0.0, %v6986
      %v6988 = vpop.f32.mrb[0].mxu0
      %6989 = vmatprep.mubr.bf16.mxu0 0
      %6990 = vmatmul.mubr.bf16.gmra.mrb[0].mxu0 %v6887
      %v6991 = vpop.f32.mrb[0].mxu0
      %v6992 = vadd.f32 0.0, %v6991
      %v6993 = vpop.f32.mrb[0].mxu0
      %v6994 = vpop.f32.mrb[0].mxu0
      %v6995 = vadd.f32 0.0, %v6994
      %v6996 = vpop.f32.mrb[0].mxu0
      %6997 = vmatprep.mubr.bf16.mxu0 0
      %6998 = vmatmul.mubr.bf16.gmra.mrb[0].mxu0 %v6888
      %v6999 = vpop.f32.mrb[0].mxu0
      %v7000 = vadd.f32 0.0, %v6999
      %v7001 = vpop.f32.mrb[0].mxu0
      %v7002 = vpop.f32.mrb[0].mxu0
      %v7003 = vadd.f32 0.0, %v7002
      %v7004 = vpop.f32.mrb[0].mxu0
      %7005 = vdwg.mxu0
      %v7006 = vadd.f32 %v6788, %v6976
      %v7007 = vadd.f32 %v6789, %v6979
      %v7008 = vadd.f32 %v6790, %v6984
      %v7009 = vadd.f32 %v6791, %v6987
      %v7010 = vadd.f32 %v6792, %v6992
      %v7011 = vadd.f32 %v6793, %v6995
      %v7012 = vadd.f32 %v6794, %v7000
      %v7013 = vadd.f32 %v6795, %v7003
      %s7014 = scalar_lea.vmem %s6, 2
      %v7015 = vld [vmem:[%s7014] sm:$0x1]
      %v7017 = vlaneseq
      %v7018 = vshrl.u32 %v7017, 7
      %v7019 = vsub.s32 0, %v7018
      %v7020 = vrot.slane %v7015, %v7019
      %v7022 = vadd.f32 %v7006, %v7020
      %v7023 = vadd.f32 %v7007, %v7020
      %v7024 = vadd.f32 %v7008, %v7020
      %v7025 = vadd.f32 %v7009, %v7020
      %v7026 = vadd.f32 %v7010, %v7020
      %v7027 = vadd.f32 %v7011, %v7020
      %v7028 = vadd.f32 %v7012, %v7020
      %v7029 = vadd.f32 %v7013, %v7020
      %v7030 = vmax.f32 %v7022, 0.0
      %v7031 = vmax.f32 %v7023, 0.0
      %v7032 = vmax.f32 %v7024, 0.0
      %v7033 = vmax.f32 %v7025, 0.0
      %v7034 = vmax.f32 %v7026, 0.0
      %v7035 = vmax.f32 %v7027, 0.0
      %v7036 = vmax.f32 %v7028, 0.0
      %v7037 = vmax.f32 %v7029, 0.0
      %v7038 = vpack.c.bf16 %v7031, %v7030
      %v7039 = vpack.c.bf16 %v7033, %v7032
      %v7040 = vpack.c.bf16 %v7035, %v7034
      %v7041 = vpack.c.bf16 %v7037, %v7036
      %7046 = vrot.lane.b32.xlu0 %v3388, 64
      %v7047 = vpop.permute.xlu0 %7046
      %7048 = vrot.lane.b32.xlu0 %v3389, 64
      %v7049 = vpop.permute.xlu0 %7048
      %7050 = vrot.lane.b32.xlu0 %v3390, 64
      %v7051 = vpop.permute.xlu0 %7050
      %7052 = vrot.lane.b32.xlu0 %v3391, 64
      %v7053 = vpop.permute.xlu0 %7052
      %7058 = vrot.lane.b32.xlu0 %v7038, 64
      %v7059 = vpop.permute.xlu0 %7058
      %7060 = vrot.lane.b32.xlu0 %v7039, 64
      %v7061 = vpop.permute.xlu0 %7060
      %7062 = vrot.lane.b32.xlu0 %v7040, 64
      %v7063 = vpop.permute.xlu0 %7062
      %7064 = vrot.lane.b32.xlu0 %v7041, 64
      %v7065 = vpop.permute.xlu0 %7064
      %v7068 = vsel %vm799, %v1552, %v7047
      %v7072 = vsel %vm799, %v1553, %v7049
      %v7076 = vsel %vm799, %v1554, %v7051
      %v7080 = vsel %vm799, %v1555, %v7053
      %v7084 = vsel %vm799, %v5287, %v7059
      %v7088 = vsel %vm799, %v5288, %v7061
      %v7092 = vsel %vm799, %v5289, %v7063
      %v7096 = vsel %vm799, %v5290, %v7065
      %v7098 = vld [vmem:[%s9] sm:$0xf]
      %v7099 = vld [vmem:[%s9 + $0x4] sm:$0xf]
      %v7100 = vld [vmem:[%s9 + $0x8] sm:$0xf]
      %v7101 = vld [vmem:[%s9 + $0xc] sm:$0xf]
      %v7102 = vld [vmem:[%s9 + $0x10] sm:$0xf]
      %v7103 = vld [vmem:[%s9 + $0x14] sm:$0xf]
      %v7104 = vld [vmem:[%s9 + $0x18] sm:$0xf]
      %v7105 = vld [vmem:[%s9 + $0x1c] sm:$0xf]
      %v7106 = vld [vmem:[%s9 + $0x20] sm:$0xf]
      %v7107 = vld [vmem:[%s9 + $0x24] sm:$0xf]
      %v7108 = vld [vmem:[%s9 + $0x28] sm:$0xf]
      %v7109 = vld [vmem:[%s9 + $0x2c] sm:$0xf]
      %v7110 = vld [vmem:[%s9 + $0x30] sm:$0xf]
      %v7111 = vld [vmem:[%s9 + $0x34] sm:$0xf]
      %v7112 = vld [vmem:[%s9 + $0x38] sm:$0xf]
      %v7113 = vld [vmem:[%s9 + $0x3c] sm:$0xf]
      %v7114 = vld [vmem:[%s9 + $0x40] sm:$0xf]
      %v7115 = vld [vmem:[%s9 + $0x44] sm:$0xf]
      %v7116 = vld [vmem:[%s9 + $0x48] sm:$0xf]
      %v7117 = vld [vmem:[%s9 + $0x4c] sm:$0xf]
      %v7118 = vld [vmem:[%s9 + $0x50] sm:$0xf]
      %v7119 = vld [vmem:[%s9 + $0x54] sm:$0xf]
      %v7120 = vld [vmem:[%s9 + $0x58] sm:$0xf]
      %v7121 = vld [vmem:[%s9 + $0x5c] sm:$0xf]
      %v7122 = vld [vmem:[%s9 + $0x60] sm:$0xf]
      %v7123 = vld [vmem:[%s9 + $0x64] sm:$0xf]
      %v7124 = vld [vmem:[%s9 + $0x68] sm:$0xf]
      %v7125 = vld [vmem:[%s9 + $0x6c] sm:$0xf]
      %v7126 = vld [vmem:[%s9 + $0x70] sm:$0xf]
      %v7127 = vld [vmem:[%s9 + $0x74] sm:$0xf]
      %v7128 = vld [vmem:[%s9 + $0x78] sm:$0xf]
      %v7129 = vld [vmem:[%s9 + $0x7c] sm:$0xf]
      %v7131 = vlaneseq
      %v7132 = vshrl.u32 %v7131, 7
      %v7133 = vsub.s32 0, %v7132
      %v7134 = vrot.slane %v1407, %v7133
      %v7168 = vunpack.c.l.b16 %v7098
      %v7169 = vunpack.c.l.b16 %v7099
      %v7170 = vunpack.c.l.b16 %v7100
      %v7171 = vunpack.c.l.b16 %v7101
      %v7172 = vunpack.c.l.b16 %v7102
      %v7173 = vunpack.c.l.b16 %v7103
      %v7174 = vunpack.c.l.b16 %v7104
      %v7175 = vunpack.c.l.b16 %v7105
      %v7176 = vunpack.c.l.b16 %v7106
      %v7177 = vunpack.c.l.b16 %v7107
      %v7178 = vunpack.c.l.b16 %v7108
      %v7179 = vunpack.c.l.b16 %v7109
      %v7180 = vunpack.c.l.b16 %v7110
      %v7181 = vunpack.c.l.b16 %v7111
      %v7182 = vunpack.c.l.b16 %v7112
      %v7183 = vunpack.c.l.b16 %v7113
      %v7184 = vunpack.c.l.b16 %v7114
      %v7185 = vunpack.c.l.b16 %v7115
      %v7186 = vunpack.c.l.b16 %v7116
      %v7187 = vunpack.c.l.b16 %v7117
      %v7188 = vunpack.c.l.b16 %v7118
      %v7189 = vunpack.c.l.b16 %v7119
      %v7190 = vunpack.c.l.b16 %v7120
      %v7191 = vunpack.c.l.b16 %v7121
      %v7192 = vunpack.c.l.b16 %v7122
      %v7193 = vunpack.c.l.b16 %v7123
      %v7194 = vunpack.c.l.b16 %v7124
      %v7195 = vunpack.c.l.b16 %v7125
      %v7196 = vunpack.c.l.b16 %v7126
      %v7197 = vunpack.c.l.b16 %v7127
      %v7198 = vunpack.c.l.b16 %v7128
      %v7199 = vunpack.c.l.b16 %v7129
      %v7200 = vpack.c.b16 %v7169, %v7168
      %v7201 = vpack.c.b16 %v7171, %v7170
      %v7202 = vpack.c.b16 %v7173, %v7172
      %v7203 = vpack.c.b16 %v7175, %v7174
      %v7204 = vpack.c.b16 %v7177, %v7176
      %v7205 = vpack.c.b16 %v7179, %v7178
      %v7206 = vpack.c.b16 %v7181, %v7180
      %v7207 = vpack.c.b16 %v7183, %v7182
      %v7208 = vpack.c.b16 %v7185, %v7184
      %v7209 = vpack.c.b16 %v7187, %v7186
      %v7210 = vpack.c.b16 %v7189, %v7188
      %v7211 = vpack.c.b16 %v7191, %v7190
      %v7212 = vpack.c.b16 %v7193, %v7192
      %v7213 = vpack.c.b16 %v7195, %v7194
      %v7214 = vpack.c.b16 %v7197, %v7196
      %v7215 = vpack.c.b16 %v7199, %v7198
      %7232 = vmatprep.subr.bf16.mxu0 0
      %7233 = vmatpush1.bf16.msra.mxu0 %v7200
      %7234 = vmatprep.subr.bf16.mxu0 0
      %7235 = vmatpush1.bf16.msra.mxu0 %v7201
      %7236 = vmatprep.subr.bf16.mxu0 0
      %7237 = vmatpush1.bf16.msra.mxu0 %v7202
      %7238 = vmatprep.subr.bf16.mxu0 0
      %7239 = vmatpush1.bf16.msra.mxu0 %v7203
      %7240 = vmatprep.subr.bf16.mxu0 0
      %7241 = vmatpush1.bf16.msra.mxu0 %v7204
      %7242 = vmatprep.subr.bf16.mxu0 0
      %7243 = vmatpush1.bf16.msra.mxu0 %v7205
      %7244 = vmatprep.subr.bf16.mxu0 0
      %7245 = vmatpush1.bf16.msra.mxu0 %v7206
      %7246 = vmatprep.subr.bf16.mxu0 0
      %7247 = vmatpush1.bf16.msra.mxu0 %v7207
      %7248 = vmatprep.subr.bf16.mxu0 0
      %7249 = vmatpush1.bf16.msra.mxu0 %v7208
      %7250 = vmatprep.subr.bf16.mxu0 0
      %7251 = vmatpush1.bf16.msra.mxu0 %v7209
      %7252 = vmatprep.subr.bf16.mxu0 0
      %7253 = vmatpush1.bf16.msra.mxu0 %v7210
      %7254 = vmatprep.subr.bf16.mxu0 0
      %7255 = vmatpush1.bf16.msra.mxu0 %v7211
      %7256 = vmatprep.subr.bf16.mxu0 0
      %7257 = vmatpush1.bf16.msra.mxu0 %v7212
      %7258 = vmatprep.subr.bf16.mxu0 0
      %7259 = vmatpush1.bf16.msra.mxu0 %v7213
      %7260 = vmatprep.subr.bf16.mxu0 0
      %7261 = vmatpush1.bf16.msra.mxu0 %v7214
      %7262 = vmatprep.subr.bf16.mxu0 0
      %7263 = vmatpush1.bf16.msra.mxu0 %v7215
      %7264 = vmatprep.mubr.bf16.mxu0 %v7084
      %7265 = vmatmul.mubr.bf16.gmra.mrb[0].mxu0 %v7068
      %v7266 = vpop.f32.mrb[0].mxu0
      %v7267 = vadd.f32 %v7134, %v7266
      %v7268 = vpop.f32.mrb[0].mxu0
      %v7269 = vpop.f32.mrb[0].mxu0
      %v7270 = vadd.f32 %v7134, %v7269
      %v7271 = vpop.f32.mrb[0].mxu0
      %7272 = vmatprep.mubr.bf16.mxu0 %v7088
      %7273 = vmatmul.mubr.bf16.gmra.mrb[0].mxu0 %v7072
      %v7274 = vpop.f32.mrb[0].mxu0
      %v7275 = vadd.f32 %v7134, %v7274
      %v7276 = vpop.f32.mrb[0].mxu0
      %v7277 = vpop.f32.mrb[0].mxu0
      %v7278 = vadd.f32 %v7134, %v7277
      %v7279 = vpop.f32.mrb[0].mxu0
      %7280 = vmatprep.mubr.bf16.mxu0 %v7092
      %7281 = vmatmul.mubr.bf16.gmra.mrb[0].mxu0 %v7076
      %v7282 = vpop.f32.mrb[0].mxu0
      %v7283 = vadd.f32 %v7134, %v7282
      %v7284 = vpop.f32.mrb[0].mxu0
      %v7285 = vpop.f32.mrb[0].mxu0
      %v7286 = vadd.f32 %v7134, %v7285
      %v7287 = vpop.f32.mrb[0].mxu0
      %7288 = vmatprep.mubr.bf16.mxu0 %v7096
      %7289 = vmatmul.mubr.bf16.gmra.mrb[0].mxu0 %v7080
      %v7290 = vpop.f32.mrb[0].mxu0
      %v7291 = vadd.f32 %v7134, %v7290
      %v7292 = vpop.f32.mrb[0].mxu0
      %v7293 = vpop.f32.mrb[0].mxu0
      %v7294 = vadd.f32 %v7134, %v7293
      %v7295 = vpop.f32.mrb[0].mxu0
      %7296 = vdwg.mxu0
      %v7297 = vmax.f32 %v7267, 0.0
      %v7298 = vmax.f32 %v7270, 0.0
      %v7299 = vmax.f32 %v7275, 0.0
      %v7300 = vmax.f32 %v7278, 0.0
      %v7301 = vmax.f32 %v7283, 0.0
      %v7302 = vmax.f32 %v7286, 0.0
      %v7303 = vmax.f32 %v7291, 0.0
      %v7304 = vmax.f32 %v7294, 0.0
      %v7305 = vpack.c.bf16 %v7298, %v7297
      %v7306 = vpack.c.bf16 %v7300, %v7299
      %v7307 = vpack.c.bf16 %v7302, %v7301
      %v7308 = vpack.c.bf16 %v7304, %v7303
      %v7309 = vld [vmem:[%s12] sm:$0xf]
      %v7310 = vld [vmem:[%s12 + $0x4] sm:$0xf]
      %v7311 = vld [vmem:[%s12 + $0x8] sm:$0xf]
      %v7312 = vld [vmem:[%s12 + $0xc] sm:$0xf]
      %v7313 = vld [vmem:[%s12 + $0x10] sm:$0xf]
      %v7314 = vld [vmem:[%s12 + $0x14] sm:$0xf]
      %v7315 = vld [vmem:[%s12 + $0x18] sm:$0xf]
      %v7316 = vld [vmem:[%s12 + $0x1c] sm:$0xf]
      %v7317 = vld [vmem:[%s12 + $0x20] sm:$0xf]
      %v7318 = vld [vmem:[%s12 + $0x24] sm:$0xf]
      %v7319 = vld [vmem:[%s12 + $0x28] sm:$0xf]
      %v7320 = vld [vmem:[%s12 + $0x2c] sm:$0xf]
      %v7321 = vld [vmem:[%s12 + $0x30] sm:$0xf]
      %v7322 = vld [vmem:[%s12 + $0x34] sm:$0xf]
      %v7323 = vld [vmem:[%s12 + $0x38] sm:$0xf]
      %v7324 = vld [vmem:[%s12 + $0x3c] sm:$0xf]
      %v7325 = vld [vmem:[%s13] sm:$0x1]
      %v7327 = vlaneseq
      %v7328 = vshrl.u32 %v7327, 7
      %v7329 = vsub.s32 0, %v7328
      %v7330 = vrot.slane %v7325, %v7329
      %v7348 = vunpack.c.l.b16 %v7309
      %v7349 = vunpack.c.l.b16 %v7310
      %v7350 = vunpack.c.l.b16 %v7311
      %v7351 = vunpack.c.l.b16 %v7312
      %v7352 = vunpack.c.l.b16 %v7313
      %v7353 = vunpack.c.l.b16 %v7314
      %v7354 = vunpack.c.l.b16 %v7315
      %v7355 = vunpack.c.l.b16 %v7316
      %v7356 = vunpack.c.l.b16 %v7317
      %v7357 = vunpack.c.l.b16 %v7318
      %v7358 = vunpack.c.l.b16 %v7319
      %v7359 = vunpack.c.l.b16 %v7320
      %v7360 = vunpack.c.l.b16 %v7321
      %v7361 = vunpack.c.l.b16 %v7322
      %v7362 = vunpack.c.l.b16 %v7323
      %v7363 = vunpack.c.l.b16 %v7324
      %v7364 = vpack.c.b16 %v7349, %v7348
      %v7365 = vpack.c.b16 %v7351, %v7350
      %v7366 = vpack.c.b16 %v7353, %v7352
      %v7367 = vpack.c.b16 %v7355, %v7354
      %v7368 = vpack.c.b16 %v7357, %v7356
      %v7369 = vpack.c.b16 %v7359, %v7358
      %v7370 = vpack.c.b16 %v7361, %v7360
      %v7371 = vpack.c.b16 %v7363, %v7362
      %7380 = vmatprep.subr.bf16.mxu0 0
      %7381 = vmatpush1.bf16.msra.mxu0 %v7364
      %7382 = vmatprep.subr.bf16.mxu0 0
      %7383 = vmatpush1.bf16.msra.mxu0 %v7365
      %7384 = vmatprep.subr.bf16.mxu0 0
      %7385 = vmatpush1.bf16.msra.mxu0 %v7366
      %7386 = vmatprep.subr.bf16.mxu0 0
      %7387 = vmatpush1.bf16.msra.mxu0 %v7367
      %7388 = vmatprep.subr.bf16.mxu0 0
      %7389 = vmatpush1.bf16.msra.mxu0 %v7368
      %7390 = vmatprep.subr.bf16.mxu0 0
      %7391 = vmatpush1.bf16.msra.mxu0 %v7369
      %7392 = vmatprep.subr.bf16.mxu0 0
      %7393 = vmatpush1.bf16.msra.mxu0 %v7370
      %7394 = vmatprep.subr.bf16.mxu0 0
      %7395 = vmatpush1.bf16.msra.mxu0 %v7371
      %7396 = vmatprep.subr.bf16.mxu0 0
      %7397 = vmatpush1.bf16.msra.mxu0 0
      %7398 = vmatprep.subr.bf16.mxu0 0
      %7399 = vmatpush1.bf16.msra.mxu0 0
      %7400 = vmatprep.subr.bf16.mxu0 0
      %7401 = vmatpush1.bf16.msra.mxu0 0
      %7402 = vmatprep.subr.bf16.mxu0 0
      %7403 = vmatpush1.bf16.msra.mxu0 0
      %7404 = vmatprep.subr.bf16.mxu0 0
      %7405 = vmatpush1.bf16.msra.mxu0 0
      %7406 = vmatprep.subr.bf16.mxu0 0
      %7407 = vmatpush1.bf16.msra.mxu0 0
      %7408 = vmatprep.subr.bf16.mxu0 0
      %7409 = vmatpush1.bf16.msra.mxu0 0
      %7410 = vmatprep.subr.bf16.mxu0 0
      %7411 = vmatpush1.bf16.msra.mxu0 0
      %7412 = vmatprep.mubr.bf16.mxu0 0
      %7413 = vmatmul.mubr.bf16.gmra.mrb[0].mxu0 %v7305
      %v7414 = vpop.f32.mrb[0].mxu0
      %v7415 = vadd.f32 %v7330, %v7414
      %v7416 = vpop.f32.mrb[0].mxu0
      %v7417 = vpop.f32.mrb[0].mxu0
      %v7418 = vadd.f32 %v7330, %v7417
      %v7419 = vpop.f32.mrb[0].mxu0
      %7420 = vmatprep.mubr.bf16.mxu0 0
      %7421 = vmatmul.mubr.bf16.gmra.mrb[0].mxu0 %v7306
      %v7422 = vpop.f32.mrb[0].mxu0
      %v7423 = vadd.f32 %v7330, %v7422
      %v7424 = vpop.f32.mrb[0].mxu0
      %v7425 = vpop.f32.mrb[0].mxu0
      %v7426 = vadd.f32 %v7330, %v7425
      %v7427 = vpop.f32.mrb[0].mxu0
      %7428 = vmatprep.mubr.bf16.mxu0 0
      %7429 = vmatmul.mubr.bf16.gmra.mrb[0].mxu0 %v7307
      %v7430 = vpop.f32.mrb[0].mxu0
      %v7431 = vadd.f32 %v7330, %v7430
      %v7432 = vpop.f32.mrb[0].mxu0
      %v7433 = vpop.f32.mrb[0].mxu0
      %v7434 = vadd.f32 %v7330, %v7433
      %v7435 = vpop.f32.mrb[0].mxu0
      %7436 = vmatprep.mubr.bf16.mxu0 0
      %7437 = vmatmul.mubr.bf16.gmra.mrb[0].mxu0 %v7308
      %v7438 = vpop.f32.mrb[0].mxu0
      %v7439 = vadd.f32 %v7330, %v7438
      %v7440 = vpop.f32.mrb[0].mxu0
      %v7441 = vpop.f32.mrb[0].mxu0
      %v7442 = vadd.f32 %v7330, %v7441
      %v7443 = vpop.f32.mrb[0].mxu0
      %7444 = vdwg.mxu0
      %7445 = vst [vmem:[%s467] sm:$0xff] %v7415
      %7446 = vst [vmem:[%s467 + $0x8] sm:$0xff] %v7418
      %7447 = vst [vmem:[%s467 + $0x10] sm:$0xff] %v7423
      %7448 = vst [vmem:[%s467 + $0x18] sm:$0xff] %v7426
      %7449 = vst [vmem:[%s467 + $0x20] sm:$0xff] %v7431
      %7450 = vst [vmem:[%s467 + $0x28] sm:$0xff] %v7434
      %7451 = vst [vmem:[%s467 + $0x30] sm:$0xff] %v7439
      %7452 = vst [vmem:[%s467 + $0x38] sm:$0xff] %v7442
      %p7453 = scmp.lt.s32.totalorder %s25, 1
      %s7454 = scalar_select %p7453, %s25, 1
      %s7455 = smul.addr %s7454, 8
      %s7456 = smul.addr %s7455, 8
      %s7457 = scalar_lea.vmem %s14, %s7456
      // Predicated region
      $region77: #{fold_conv_aspp_pallas.1} parent=75 // pred_check
        %p7458 = pneg %p342
      $region78: #{fold_conv_aspp_pallas.1} parent=75 // pred_check_branch
        %7460 = sbr.rel (%p7458) target = $region80
      $region79: #{fold_conv_aspp_pallas.1} parent=75 // pred_region
        _
      $region80: #{fold_conv_aspp_pallas.1} parent=75 // pred_fallthru
        _
    $region76: #{fold_conv_aspp_pallas.1} parent=5 // pred_fallthru
      _
    %p7461 = scmp.le.s32.totalorder 2, %s20
    // Predicated region
    $region81: #{fold_conv_aspp_pallas.1} parent=5 // pred_check
      %p7462 = pneg %p7461
    $region82: #{fold_conv_aspp_pallas.1} parent=5 // pred_check_branch
      %7464 = sbr.rel (%p7462) target = $region84
    $region83: #{fold_conv_aspp_pallas.1} parent=5 // pred_region
      %s7465 = ssub.s32 %s20, 2
      // Predicated region
      $region85: #{fold_conv_aspp_pallas.1} parent=83 // pred_check
        %p7466 = pneg %p348
      $region86: #{fold_conv_aspp_pallas.1} parent=83 // pred_check_branch
        %7468 = sbr.rel (%p7466) target = $region88
      $region87: #{fold_conv_aspp_pallas.1} parent=83 // pred_region
        %p7469 = scmp.lt.s32.totalorder %s26, 1
        %s7470 = scalar_select %p7469, %s26, 1
        %s7471 = smul.addr %s7470, 8
        %s7472 = smul.addr %s7471, 8
        %s7473 = scalar_lea.vmem %s14, %s7472
      $region88: #{fold_conv_aspp_pallas.1} parent=83 // pred_fallthru
        _
    $region84: #{fold_conv_aspp_pallas.1} parent=5 // pred_fallthru
      _
  $region6: #{fold_conv_aspp_pallas.1} parent=0 // loop_footer
    %s24 = sadd.s32 1, %s20
  $region7: #{fold_conv_aspp_pallas.1} parent=0 // loop_footer_branch
    %19 = sbr.rel target = $region3
  $region8: #{fold_conv_aspp_pallas.1} parent=0 // loop_exit
    _

</llo_original>
